<compile_context>
chip_gen: v7x
topology: tpu7x:2x2x1
jax: 0.10.0
libtpu: 0.0.40
codegen_flags: <defaults>
</compile_context>

<pallas_src>
from functools import partial

import jax
import jax.numpy as jnp
from jax.experimental import pallas as pl
from jax.experimental.pallas import tpu as pltpu

BN_EPS = 1e-5
LEAKY_SLOPE = 0.01  # pytorch-tools ABN leaky_relu default slope


def _round_up(a, b):
    return (a + b - 1) // b * b


# ----------------------------------------------------------------------------
# Pallas kernels: fused  out = act(X @ W + shift) [+ residual]
# ----------------------------------------------------------------------------
def _mm_bias_act_kernel(x_ref, w_ref, b_ref, o_ref, *, act, neg_slope):
    acc = jnp.dot(x_ref[...], w_ref[...], preferred_element_type=jnp.float32)
    y = acc + b_ref[...]
    if act:
        y = jnp.where(y >= 0.0, y, y * neg_slope)
    o_ref[...] = y.astype(o_ref.dtype)


def _mm_bias_act_res_kernel(x_ref, w_ref, b_ref, r_ref, o_ref, *,
                            act, neg_slope):
    acc = jnp.dot(x_ref[...], w_ref[...], preferred_element_type=jnp.float32)
    y = acc + b_ref[...]
    if act:
        y = jnp.where(y >= 0.0, y, y * neg_slope)
    y = y + r_ref[...].astype(jnp.float32)      # fused residual add
    o_ref[...] = y.astype(o_ref.dtype)


def pallas_matmul_fused(x, w, shift, act=True, neg_slope=LEAKY_SLOPE,
                        residual=None, out_dtype=jnp.bfloat16):
    """x: (M, K), w: (K, N) bf16, shift: (N,) f32 -> (M, N) out_dtype."""
    M, K = x.shape
    Kw, N = w.shape
    assert K == Kw

    x = x.astype(jnp.bfloat16)
    w = w.astype(jnp.bfloat16)
    shift = shift.reshape(1, N).astype(jnp.float32)

    # Tile selection: lane-dense N tiles (512/256/128) when the channel count
    # allows it, full-N block for small channel counts (full dim is always a
    # legal block).  M tiled by 128 (>=2 grid steps for megacore) or rounded
    # to the 8-sublane minimum; ragged blocks are masked by Pallas.  K is one
    # full block so no padding garbage enters the contraction.
    tn = N
    for cand in (512, 256, 128):
        if N % cand == 0:
            tn = cand
            break
    tm = 128 if M >= 128 else _round_up(M, 8)
    grid = (pl.cdiv(M, tm), N // tn)

    in_specs = [
        pl.BlockSpec((tm, K), lambda i, j: (i, 0)),   # full (un-padded) K block
        pl.BlockSpec((K, tn), lambda i, j: (0, j)),
        pl.BlockSpec((1, tn), lambda i, j: (0, j)),
    ]
    args = [x, w, shift]
    if residual is not None:
        in_specs.append(pl.BlockSpec((tm, tn), lambda i, j: (i, j)))
        args.append(residual.astype(jnp.bfloat16))
        kernel = partial(_mm_bias_act_res_kernel, act=act, neg_slope=neg_slope)
    else:
        kernel = partial(_mm_bias_act_kernel, act=act, neg_slope=neg_slope)

    out_itemsize = jnp.dtype(out_dtype).itemsize
    bytes_accessed = (x.size * 2 + w.size * 2 + N * 4 + M * N * out_itemsize
                      + (M * N * 2 if residual is not None else 0))

    return pl.pallas_call(
        kernel,
        out_shape=jax.ShapeDtypeStruct((M, N), out_dtype),
        grid=grid,
        in_specs=in_specs,
        out_specs=pl.BlockSpec((tm, tn), lambda i, j: (i, j)),
        compiler_params=pltpu.CompilerParams(
            dimension_semantics=("parallel", "parallel")),
        cost_estimate=pl.CostEstimate(
            flops=2 * M * N * K, transcendentals=0,
            bytes_accessed=int(bytes_accessed)),
    )(*args)


# ----------------------------------------------------------------------------
# Conv = (reshape | bf16 im2col) glue + fused Pallas GEMM hot path
# ----------------------------------------------------------------------------
def _im2col(x, kh, kw, stride, pad):
    """x: (B,H,W,C) -> (B,Ho,Wo,kh*kw*C) in bf16, feature order (kh, kw, C)."""
    x = x.astype(jnp.bfloat16)
    if pad:
        x = jnp.pad(x, ((0, 0), (pad, pad), (pad, pad), (0, 0)))
    B, H, W, C = x.shape
    Ho = (H - kh) // stride + 1
    Wo = (W - kw) // stride + 1
    patches = [x[:, i:i + Ho * stride:stride, j:j + Wo * stride:stride, :]
               for i in range(kh) for j in range(kw)]
    return jnp.concatenate(patches, axis=-1)


def conv_bn_act(x, w_mat, shift, *, kh, kw, stride, pad, act=True,
                residual=None):
    """x NHWC (bf16/f32); w_mat pre-transformed (kh*kw*I, O) bf16 (BN-folded)."""
    B, H, W, C = x.shape
    O = w_mat.shape[1]
    if kh == 1 and kw == 1:
        assert stride == 1 and pad == 0
        Ho, Wo = H, W
        patches = x.reshape(B * H * W, C)            # no im2col for 1x1
    else:
        p4 = _im2col(x, kh, kw, stride, pad)
        _, Ho, Wo, K = p4.shape
        patches = p4.reshape(B * Ho * Wo, K)
    res2d = residual.reshape(B * Ho * Wo, O) if residual is not None else None
    out = pallas_matmul_fused(patches, w_mat, shift, act=act, residual=res2d)
    return out.reshape(B, Ho, Wo, O)


def maxpool_3x3_s2(x):  # NHWC, kernel=3, stride=2, pad=1 (glue, not hot path)
    return jax.lax.reduce_window(
        x, jnp.array(-jnp.inf, dtype=x.dtype), jax.lax.max,
        window_dimensions=(1, 3, 3, 1),
        window_strides=(1, 2, 2, 1),
        padding=((0, 0), (1, 1), (1, 1), (0, 0)))


# ----------------------------------------------------------------------------
# Deterministic parameters (weights pre-transformed / BN pre-folded, hoisted)
# ----------------------------------------------------------------------------
def _bn_fold(c):
    # Freshly-initialized eval-mode BN: gamma=1, beta=0, mean=0, var=1.
    gamma = jnp.ones((c,), jnp.float32)
    beta = jnp.zeros((c,), jnp.float32)
    mean = jnp.zeros((c,), jnp.float32)
    var = jnp.ones((c,), jnp.float32)
    scale = gamma / jnp.sqrt(var + BN_EPS)
    shift = beta - mean * scale
    return scale, shift


def _conv_bn_params(key, out_c, in_c, kh, kw):
    """Returns (w_mat, shift) with BN scale folded into the weight columns."""
    fan_in = in_c * kh * kw
    std = (2.0 / fan_in) ** 0.5
    w = jax.random.normal(key, (out_c, in_c, kh, kw), jnp.float32) * std
    scale, shift = _bn_fold(out_c)
    # OIHW -> (kh, kw, I, O) -> (kh*kw*I, O); fold BN scale in f32, cast bf16.
    w_mat = jnp.transpose(w, (2, 3, 1, 0)).reshape(kh * kw * in_c, out_c)
    w_mat = (w_mat * scale[None, :]).astype(jnp.bfloat16)
    return w_mat, shift


def make_stage_params(key, in_chs, out_chs, num_blocks, bottle_ratio):
    keys = jax.random.split(key, 1 + 2 * num_blocks)
    mid = max(int(out_chs * bottle_ratio), 1)
    dw, db = _conv_bn_params(keys[0], out_chs, in_chs, 3, 3)
    p = {"down_w": dw, "down_b": db, "blocks": []}
    for b in range(num_blocks):
        w1, b1 = _conv_bn_params(keys[1 + 2 * b], mid, out_chs, 1, 1)
        w2, b2 = _conv_bn_params(keys[2 + 2 * b], out_chs, mid, 3, 3)
        p["blocks"].append({"w1": w1, "b1": b1, "w2": w2, "b2": b2})
    return p


def make_darknet_params(key, layers, channels, num_classes, bottle_ratio=0.25):
    ks = jax.random.split(key, 8)
    stem_width = 64
    stem_w, stem_b = _conv_bn_params(ks[0], stem_width, 3, 7, 7)
    params = {"stem_w": stem_w, "stem_b": stem_b, "stages": []}
    in_c = stem_width
    for s in range(4):
        params["stages"].append(
            make_stage_params(ks[1 + s], in_c, channels[s], layers[s],
                              bottle_ratio))
        in_c = channels[s]
    # head: channels[3] < 2048 and expand_before_head -> conv1x1(2048)+BN+act
    hw, hb = _conv_bn_params(ks[5], 2048, channels[3], 1, 1)
    params["head_conv_w"] = hw
    params["head_conv_b"] = hb
    fc_w = jax.random.normal(ks[6], (num_classes, 2048), jnp.float32) \
        * (1.0 / 2048.0) ** 0.5
    params["fc_w_t"] = jnp.transpose(fc_w).astype(jnp.bfloat16)   # (2048, nc)
    params["fc_b"] = jnp.zeros((num_classes,), jnp.float32)
    return params


# ----------------------------------------------------------------------------
# Forward pass (mirrors DarkNet.forward)
# ----------------------------------------------------------------------------
def stage_forward(x, p, stride):
    x = conv_bn_act(x, p["down_w"], p["down_b"], kh=3, kw=3, stride=stride,
                    pad=1)
    for blk in p["blocks"]:
        y = conv_bn_act(x, blk["w1"], blk["b1"], kh=1, kw=1, stride=1, pad=0)
        # residual add fused into the second conv's epilogue (keep_prob == 1.0)
        x = conv_bn_act(y, blk["w2"], blk["b2"], kh=3, kw=3, stride=1, pad=1,
                        residual=x)
    return x


def darknet_forward(params, x_nchw):
    x = jnp.transpose(x_nchw, (0, 2, 3, 1)).astype(jnp.bfloat16)  # NCHW->NHWC

    # stem: conv7x7 s2 p3 (no bias) + BN + leaky_relu + maxpool 3x3 s2 p1
    x = conv_bn_act(x, params["stem_w"], params["stem_b"], kh=7, kw=7,
                    stride=2, pad=3)
    x = maxpool_3x3_s2(x)

    # layer1 .. layer4 (first_stride=1 for default stem)
    strides = (1, 2, 2, 2)
    for stage_p, st in zip(params["stages"], strides):
        x = stage_forward(x, stage_p, st)

    # head: conv1x1 -> 2048 + BN + leaky_relu, global avg pool, Linear
    x = conv_bn_act(x, params["head_conv_w"], params["head_conv_b"],
                    kh=1, kw=1, stride=1, pad=0)
    x = jnp.mean(x.astype(jnp.float32), axis=(1, 2))  # FastGlobalAvgPool2d
    logits = pallas_matmul_fused(
        x, params["fc_w_t"], shift=params["fc_b"], act=False,
        out_dtype=jnp.float32)
    return logits


if __name__ == "__main__":
    key = jax.random.PRNGKey(0)
    k_param, k_in = jax.random.split(key)

    layers = [1, 1, 1, 1]
    channels = [16, 32, 64, 128]
    num_classes = 16

    params = make_darknet_params(k_param, layers, channels, num_classes)

    # Input in PyTorch NCHW convention (stem conv is hard-wired to 3 channels).
    x = jax.random.normal(k_in, (2, 3, 32, 32), jnp.float32)

    fwd = jax.jit(darknet_forward)
    out = fwd(params, x)
    out = jax.block_until_ready(out)
    assert out.shape == (2, num_classes), out.shape
    assert jnp.all(jnp.isfinite(out))
    print("KERNEL_OK")
</pallas_src>

<mosaic_0001>
module attributes {stable_mosaic.version = 11 : i64} {
  func.func @_mm_bias_act_kernel(%arg0: i32, %arg1: i32, %arg2: memref<128x147xbf16, #tpu.memory_space<vmem>>, %arg3: memref<147x64xbf16, #tpu.memory_space<vmem>>, %arg4: memref<1x64xf32, #tpu.memory_space<vmem>>, %arg5: memref<128x64xbf16, #tpu.memory_space<vmem>>) attributes {dimension_semantics = [#tpu.dimension_semantics<parallel>, #tpu.dimension_semantics<parallel>], iteration_bounds = array<i64: 4, 1>, scalar_prefetch = 0 : i64, scratch_operands = 0 : i64, tpu.core_type = #tpu.core_type<tc>, window_params = [{transform_indices = @transform_0, window_bounds = array<i64: 128, 147>}, {transform_indices = @transform_1, window_bounds = array<i64: 147, 64>}, {transform_indices = @transform_2, window_bounds = array<i64: 1, 64>}, {transform_indices = @transform_3, window_bounds = array<i64: 128, 64>}]} {
    %c0 = arith.constant 0 : index
    %c0_0 = arith.constant 0 : index
    %0 = vector.load %arg2[%c0, %c0_0] : memref<128x147xbf16, #tpu.memory_space<vmem>>, vector<128x147xbf16>
    %c0_1 = arith.constant 0 : index
    %c0_2 = arith.constant 0 : index
    %1 = vector.load %arg3[%c0_1, %c0_2] : memref<147x64xbf16, #tpu.memory_space<vmem>>, vector<147x64xbf16>
    %cst = arith.constant dense<0.000000e+00> : vector<128x64xf32>
    %2 = tpu.matmul %0, %1, %cst {dimension_numbers = #tpu.dot_dimension_numbers<[1], [0], [0], [1], [0, 0, 1, 1], [], []>} : vector<128x147xbf16>, vector<147x64xbf16>, vector<128x64xf32> -> vector<128x64xf32>
    %c0_3 = arith.constant 0 : index
    %c0_4 = arith.constant 0 : index
    %3 = vector.load %arg4[%c0_3, %c0_4] : memref<1x64xf32, #tpu.memory_space<vmem>>, vector<1x64xf32>
    %4 = vector.broadcast %3 : vector<1x64xf32> to vector<128x64xf32>
    %5 = arith.addf %2, %4 : vector<128x64xf32>
    %cst_5 = arith.constant 0.000000e+00 : f32
    %6 = vector.broadcast %cst_5 : f32 to vector<128x64xf32>
    %7 = arith.cmpf oge, %5, %6 : vector<128x64xf32>
    %cst_6 = arith.constant 0.00999999977 : f32
    %8 = vector.broadcast %cst_6 : f32 to vector<128x64xf32>
    %9 = arith.mulf %5, %8 : vector<128x64xf32>
    %10 = arith.select %7, %5, %9 : vector<128x64xi1>, vector<128x64xf32>
    %11 = arith.truncf %10 : vector<128x64xf32> to vector<128x64xbf16>
    %c0_7 = arith.constant 0 : index
    %c0_8 = arith.constant 0 : index
    %12 = vector.load %arg5[%c0_7, %c0_8] : memref<128x64xbf16, #tpu.memory_space<vmem>>, vector<128x64xbf16>
    tpu.vector_store %arg5[%c0_7, %c0_8], %11 {strides = array<i32>} : memref<128x64xbf16, #tpu.memory_space<vmem>>, vector<128x64xbf16>,
    return
  }
  func.func @transform_0(%arg0: i32, %arg1: i32) -> (i32, i32) {
    %c0_i32 = arith.constant 0 : i32
    %c0_i32_0 = arith.constant 0 : i32
    return %arg0, %c0_i32 : i32, i32
  }
  func.func @transform_1(%arg0: i32, %arg1: i32) -> (i32, i32) {
    %c0_i32 = arith.constant 0 : i32
    %c0_i32_0 = arith.constant 0 : i32
    return %c0_i32, %arg1 : i32, i32
  }
  func.func @transform_2(%arg0: i32, %arg1: i32) -> (i32, i32) {
    %c0_i32 = arith.constant 0 : i32
    %c0_i32_0 = arith.constant 0 : i32
    return %c0_i32, %arg1 : i32, i32
  }
  func.func @transform_3(%arg0: i32, %arg1: i32) -> (i32, i32) {
    %c0_i32 = arith.constant 0 : i32
    return %arg0, %arg1 : i32, i32
  }
}

module attributes {stable_mosaic.version = 11 : i64} {
  func.func @_mm_bias_act_kernel(%arg0: i32, %arg1: i32, %arg2: memref<128x576xbf16, #tpu.memory_space<vmem>>, %arg3: memref<576x16xbf16, #tpu.memory_space<vmem>>, %arg4: memref<1x16xf32, #tpu.memory_space<vmem>>, %arg5: memref<128x16xbf16, #tpu.memory_space<vmem>>) attributes {dimension_semantics = [#tpu.dimension_semantics<parallel>, #tpu.dimension_semantics<parallel>], iteration_bounds = array<i64: 1, 1>, scalar_prefetch = 0 : i64, scratch_operands = 0 : i64, tpu.core_type = #tpu.core_type<tc>, window_params = [{transform_indices = @transform_0, window_bounds = array<i64: 128, 576>}, {transform_indices = @transform_1, window_bounds = array<i64: 576, 16>}, {transform_indices = @transform_2, window_bounds = array<i64: 1, 16>}, {transform_indices = @transform_3, window_bounds = array<i64: 128, 16>}]} {
    %c0 = arith.constant 0 : index
    %c0_0 = arith.constant 0 : index
    %0 = vector.load %arg2[%c0, %c0_0] : memref<128x576xbf16, #tpu.memory_space<vmem>>, vector<128x576xbf16>
    %c0_1 = arith.constant 0 : index
    %c0_2 = arith.constant 0 : index
    %1 = vector.load %arg3[%c0_1, %c0_2] : memref<576x16xbf16, #tpu.memory_space<vmem>>, vector<576x16xbf16>
    %cst = arith.constant dense<0.000000e+00> : vector<128x16xf32>
    %2 = tpu.matmul %0, %1, %cst {dimension_numbers = #tpu.dot_dimension_numbers<[1], [0], [0], [1], [0, 0, 1, 1], [], []>} : vector<128x576xbf16>, vector<576x16xbf16>, vector<128x16xf32> -> vector<128x16xf32>
    %c0_3 = arith.constant 0 : index
    %c0_4 = arith.constant 0 : index
    %3 = vector.load %arg4[%c0_3, %c0_4] : memref<1x16xf32, #tpu.memory_space<vmem>>, vector<1x16xf32>
    %4 = vector.broadcast %3 : vector<1x16xf32> to vector<128x16xf32>
    %5 = arith.addf %2, %4 : vector<128x16xf32>
    %cst_5 = arith.constant 0.000000e+00 : f32
    %6 = vector.broadcast %cst_5 : f32 to vector<128x16xf32>
    %7 = arith.cmpf oge, %5, %6 : vector<128x16xf32>
    %cst_6 = arith.constant 0.00999999977 : f32
    %8 = vector.broadcast %cst_6 : f32 to vector<128x16xf32>
    %9 = arith.mulf %5, %8 : vector<128x16xf32>
    %10 = arith.select %7, %5, %9 : vector<128x16xi1>, vector<128x16xf32>
    %11 = arith.truncf %10 : vector<128x16xf32> to vector<128x16xbf16>
    %c0_7 = arith.constant 0 : index
    %c0_8 = arith.constant 0 : index
    %12 = vector.load %arg5[%c0_7, %c0_8] : memref<128x16xbf16, #tpu.memory_space<vmem>>, vector<128x16xbf16>
    tpu.vector_store %arg5[%c0_7, %c0_8], %11 {strides = array<i32>} : memref<128x16xbf16, #tpu.memory_space<vmem>>, vector<128x16xbf16>,
    return
  }
  func.func @transform_0(%arg0: i32, %arg1: i32) -> (i32, i32) {
    %c0_i32 = arith.constant 0 : i32
    %c0_i32_0 = arith.constant 0 : i32
    return %arg0, %c0_i32 : i32, i32
  }
  func.func @transform_1(%arg0: i32, %arg1: i32) -> (i32, i32) {
    %c0_i32 = arith.constant 0 : i32
    %c0_i32_0 = arith.constant 0 : i32
    return %c0_i32, %arg1 : i32, i32
  }
  func.func @transform_2(%arg0: i32, %arg1: i32) -> (i32, i32) {
    %c0_i32 = arith.constant 0 : i32
    %c0_i32_0 = arith.constant 0 : i32
    return %c0_i32, %arg1 : i32, i32
  }
  func.func @transform_3(%arg0: i32, %arg1: i32) -> (i32, i32) {
    %c0_i32 = arith.constant 0 : i32
    return %arg0, %arg1 : i32, i32
  }
}

module attributes {stable_mosaic.version = 11 : i64} {
  func.func @_mm_bias_act_kernel(%arg0: i32, %arg1: i32, %arg2: memref<128x16xbf16, #tpu.memory_space<vmem>>, %arg3: memref<16x4xbf16, #tpu.memory_space<vmem>>, %arg4: memref<1x4xf32, #tpu.memory_space<vmem>>, %arg5: memref<128x4xbf16, #tpu.memory_space<vmem>>) attributes {dimension_semantics = [#tpu.dimension_semantics<parallel>, #tpu.dimension_semantics<parallel>], iteration_bounds = array<i64: 1, 1>, scalar_prefetch = 0 : i64, scratch_operands = 0 : i64, tpu.core_type = #tpu.core_type<tc>, window_params = [{transform_indices = @transform_0, window_bounds = array<i64: 128, 16>}, {transform_indices = @transform_1, window_bounds = array<i64: 16, 4>}, {transform_indices = @transform_2, window_bounds = array<i64: 1, 4>}, {transform_indices = @transform_3, window_bounds = array<i64: 128, 4>}]} {
    %c0 = arith.constant 0 : index
    %c0_0 = arith.constant 0 : index
    %0 = vector.load %arg2[%c0, %c0_0] : memref<128x16xbf16, #tpu.memory_space<vmem>>, vector<128x16xbf16>
    %c0_1 = arith.constant 0 : index
    %c0_2 = arith.constant 0 : index
    %1 = vector.load %arg3[%c0_1, %c0_2] : memref<16x4xbf16, #tpu.memory_space<vmem>>, vector<16x4xbf16>
    %cst = arith.constant dense<0.000000e+00> : vector<128x4xf32>
    %2 = tpu.matmul %0, %1, %cst {dimension_numbers = #tpu.dot_dimension_numbers<[1], [0], [0], [1], [0, 0, 1, 1], [], []>} : vector<128x16xbf16>, vector<16x4xbf16>, vector<128x4xf32> -> vector<128x4xf32>
    %c0_3 = arith.constant 0 : index
    %c0_4 = arith.constant 0 : index
    %3 = vector.load %arg4[%c0_3, %c0_4] : memref<1x4xf32, #tpu.memory_space<vmem>>, vector<1x4xf32>
    %4 = vector.broadcast %3 : vector<1x4xf32> to vector<128x4xf32>
    %5 = arith.addf %2, %4 : vector<128x4xf32>
    %cst_5 = arith.constant 0.000000e+00 : f32
    %6 = vector.broadcast %cst_5 : f32 to vector<128x4xf32>
    %7 = arith.cmpf oge, %5, %6 : vector<128x4xf32>
    %cst_6 = arith.constant 0.00999999977 : f32
    %8 = vector.broadcast %cst_6 : f32 to vector<128x4xf32>
    %9 = arith.mulf %5, %8 : vector<128x4xf32>
    %10 = arith.select %7, %5, %9 : vector<128x4xi1>, vector<128x4xf32>
    %11 = arith.truncf %10 : vector<128x4xf32> to vector<128x4xbf16>
    %c0_7 = arith.constant 0 : index
    %c0_8 = arith.constant 0 : index
    %12 = vector.load %arg5[%c0_7, %c0_8] : memref<128x4xbf16, #tpu.memory_space<vmem>>, vector<128x4xbf16>
    tpu.vector_store %arg5[%c0_7, %c0_8], %11 {strides = array<i32>} : memref<128x4xbf16, #tpu.memory_space<vmem>>, vector<128x4xbf16>,
    return
  }
  func.func @transform_0(%arg0: i32, %arg1: i32) -> (i32, i32) {
    %c0_i32 = arith.constant 0 : i32
    %c0_i32_0 = arith.constant 0 : i32
    return %arg0, %c0_i32 : i32, i32
  }
  func.func @transform_1(%arg0: i32, %arg1: i32) -> (i32, i32) {
    %c0_i32 = arith.constant 0 : i32
    %c0_i32_0 = arith.constant 0 : i32
    return %c0_i32, %arg1 : i32, i32
  }
  func.func @transform_2(%arg0: i32, %arg1: i32) -> (i32, i32) {
    %c0_i32 = arith.constant 0 : i32
    %c0_i32_0 = arith.constant 0 : i32
    return %c0_i32, %arg1 : i32, i32
  }
  func.func @transform_3(%arg0: i32, %arg1: i32) -> (i32, i32) {
    %c0_i32 = arith.constant 0 : i32
    return %arg0, %arg1 : i32, i32
  }
}

module attributes {stable_mosaic.version = 11 : i64} {
  func.func @_mm_bias_act_res_kernel(%arg0: i32, %arg1: i32, %arg2: memref<128x36xbf16, #tpu.memory_space<vmem>>, %arg3: memref<36x16xbf16, #tpu.memory_space<vmem>>, %arg4: memref<1x16xf32, #tpu.memory_space<vmem>>, %arg5: memref<128x16xbf16, #tpu.memory_space<vmem>>, %arg6: memref<128x16xbf16, #tpu.memory_space<vmem>>) attributes {dimension_semantics = [#tpu.dimension_semantics<parallel>, #tpu.dimension_semantics<parallel>], iteration_bounds = array<i64: 1, 1>, scalar_prefetch = 0 : i64, scratch_operands = 0 : i64, tpu.core_type = #tpu.core_type<tc>, window_params = [{transform_indices = @transform_0, window_bounds = array<i64: 128, 36>}, {transform_indices = @transform_1, window_bounds = array<i64: 36, 16>}, {transform_indices = @transform_2, window_bounds = array<i64: 1, 16>}, {transform_indices = @transform_3, window_bounds = array<i64: 128, 16>}, {transform_indices = @transform_4, window_bounds = array<i64: 128, 16>}]} {
    %c0 = arith.constant 0 : index
    %c0_0 = arith.constant 0 : index
    %0 = vector.load %arg2[%c0, %c0_0] : memref<128x36xbf16, #tpu.memory_space<vmem>>, vector<128x36xbf16>
    %c0_1 = arith.constant 0 : index
    %c0_2 = arith.constant 0 : index
    %1 = vector.load %arg3[%c0_1, %c0_2] : memref<36x16xbf16, #tpu.memory_space<vmem>>, vector<36x16xbf16>
    %cst = arith.constant dense<0.000000e+00> : vector<128x16xf32>
    %2 = tpu.matmul %0, %1, %cst {dimension_numbers = #tpu.dot_dimension_numbers<[1], [0], [0], [1], [0, 0, 1, 1], [], []>} : vector<128x36xbf16>, vector<36x16xbf16>, vector<128x16xf32> -> vector<128x16xf32>
    %c0_3 = arith.constant 0 : index
    %c0_4 = arith.constant 0 : index
    %3 = vector.load %arg4[%c0_3, %c0_4] : memref<1x16xf32, #tpu.memory_space<vmem>>, vector<1x16xf32>
    %4 = vector.broadcast %3 : vector<1x16xf32> to vector<128x16xf32>
    %5 = arith.addf %2, %4 : vector<128x16xf32>
    %cst_5 = arith.constant 0.000000e+00 : f32
    %6 = vector.broadcast %cst_5 : f32 to vector<128x16xf32>
    %7 = arith.cmpf oge, %5, %6 : vector<128x16xf32>
    %cst_6 = arith.constant 0.00999999977 : f32
    %8 = vector.broadcast %cst_6 : f32 to vector<128x16xf32>
    %9 = arith.mulf %5, %8 : vector<128x16xf32>
    %10 = arith.select %7, %5, %9 : vector<128x16xi1>, vector<128x16xf32>
    %c0_7 = arith.constant 0 : index
    %c0_8 = arith.constant 0 : index
    %11 = vector.load %arg5[%c0_7, %c0_8] : memref<128x16xbf16, #tpu.memory_space<vmem>>, vector<128x16xbf16>
    %12 = arith.extf %11 : vector<128x16xbf16> to vector<128x16xf32>
    %13 = arith.addf %10, %12 : vector<128x16xf32>
    %14 = arith.truncf %13 : vector<128x16xf32> to vector<128x16xbf16>
    %c0_9 = arith.constant 0 : index
    %c0_10 = arith.constant 0 : index
    %15 = vector.load %arg6[%c0_9, %c0_10] : memref<128x16xbf16, #tpu.memory_space<vmem>>, vector<128x16xbf16>
    tpu.vector_store %arg6[%c0_9, %c0_10], %14 {strides = array<i32>} : memref<128x16xbf16, #tpu.memory_space<vmem>>, vector<128x16xbf16>,
    return
  }
  func.func @transform_0(%arg0: i32, %arg1: i32) -> (i32, i32) {
    %c0_i32 = arith.constant 0 : i32
    %c0_i32_0 = arith.constant 0 : i32
    return %arg0, %c0_i32 : i32, i32
  }
  func.func @transform_1(%arg0: i32, %arg1: i32) -> (i32, i32) {
    %c0_i32 = arith.constant 0 : i32
    %c0_i32_0 = arith.constant 0 : i32
    return %c0_i32, %arg1 : i32, i32
  }
  func.func @transform_2(%arg0: i32, %arg1: i32) -> (i32, i32) {
    %c0_i32 = arith.constant 0 : i32
    %c0_i32_0 = arith.constant 0 : i32
    return %c0_i32, %arg1 : i32, i32
  }
  func.func @transform_3(%arg0: i32, %arg1: i32) -> (i32, i32) {
    %c0_i32 = arith.constant 0 : i32
    return %arg0, %arg1 : i32, i32
  }
  func.func @transform_4(%arg0: i32, %arg1: i32) -> (i32, i32) {
    %c0_i32 = arith.constant 0 : i32
    return %arg0, %arg1 : i32, i32
  }
}

module attributes {stable_mosaic.version = 11 : i64} {
  func.func @_mm_bias_act_kernel(%arg0: i32, %arg1: i32, %arg2: memref<32x144xbf16, #tpu.memory_space<vmem>>, %arg3: memref<144x32xbf16, #tpu.memory_space<vmem>>, %arg4: memref<1x32xf32, #tpu.memory_space<vmem>>, %arg5: memref<32x32xbf16, #tpu.memory_space<vmem>>) attributes {dimension_semantics = [#tpu.dimension_semantics<parallel>, #tpu.dimension_semantics<parallel>], iteration_bounds = array<i64: 1, 1>, scalar_prefetch = 0 : i64, scratch_operands = 0 : i64, tpu.core_type = #tpu.core_type<tc>, window_params = [{transform_indices = @transform_0, window_bounds = array<i64: 32, 144>}, {transform_indices = @transform_1, window_bounds = array<i64: 144, 32>}, {transform_indices = @transform_2, window_bounds = array<i64: 1, 32>}, {transform_indices = @transform_3, window_bounds = array<i64: 32, 32>}]} {
    %c0 = arith.constant 0 : index
    %c0_0 = arith.constant 0 : index
    %0 = vector.load %arg2[%c0, %c0_0] : memref<32x144xbf16, #tpu.memory_space<vmem>>, vector<32x144xbf16>
    %c0_1 = arith.constant 0 : index
    %c0_2 = arith.constant 0 : index
    %1 = vector.load %arg3[%c0_1, %c0_2] : memref<144x32xbf16, #tpu.memory_space<vmem>>, vector<144x32xbf16>
    %cst = arith.constant dense<0.000000e+00> : vector<32x32xf32>
    %2 = tpu.matmul %0, %1, %cst {dimension_numbers = #tpu.dot_dimension_numbers<[1], [0], [0], [1], [0, 0, 1, 1], [], []>} : vector<32x144xbf16>, vector<144x32xbf16>, vector<32x32xf32> -> vector<32x32xf32>
    %c0_3 = arith.constant 0 : index
    %c0_4 = arith.constant 0 : index
    %3 = vector.load %arg4[%c0_3, %c0_4] : memref<1x32xf32, #tpu.memory_space<vmem>>, vector<1x32xf32>
    %4 = vector.broadcast %3 : vector<1x32xf32> to vector<32x32xf32>
    %5 = arith.addf %2, %4 : vector<32x32xf32>
    %cst_5 = arith.constant 0.000000e+00 : f32
    %6 = vector.broadcast %cst_5 : f32 to vector<32x32xf32>
    %7 = arith.cmpf oge, %5, %6 : vector<32x32xf32>
    %cst_6 = arith.constant 0.00999999977 : f32
    %8 = vector.broadcast %cst_6 : f32 to vector<32x32xf32>
    %9 = arith.mulf %5, %8 : vector<32x32xf32>
    %10 = arith.select %7, %5, %9 : vector<32x32xi1>, vector<32x32xf32>
    %11 = arith.truncf %10 : vector<32x32xf32> to vector<32x32xbf16>
    %c0_7 = arith.constant 0 : index
    %c0_8 = arith.constant 0 : index
    %12 = vector.load %arg5[%c0_7, %c0_8] : memref<32x32xbf16, #tpu.memory_space<vmem>>, vector<32x32xbf16>
    tpu.vector_store %arg5[%c0_7, %c0_8], %11 {strides = array<i32>} : memref<32x32xbf16, #tpu.memory_space<vmem>>, vector<32x32xbf16>,
    return
  }
  func.func @transform_0(%arg0: i32, %arg1: i32) -> (i32, i32) {
    %c0_i32 = arith.constant 0 : i32
    %c0_i32_0 = arith.constant 0 : i32
    return %arg0, %c0_i32 : i32, i32
  }
  func.func @transform_1(%arg0: i32, %arg1: i32) -> (i32, i32) {
    %c0_i32 = arith.constant 0 : i32
    %c0_i32_0 = arith.constant 0 : i32
    return %c0_i32, %arg1 : i32, i32
  }
  func.func @transform_2(%arg0: i32, %arg1: i32) -> (i32, i32) {
    %c0_i32 = arith.constant 0 : i32
    %c0_i32_0 = arith.constant 0 : i32
    return %c0_i32, %arg1 : i32, i32
  }
  func.func @transform_3(%arg0: i32, %arg1: i32) -> (i32, i32) {
    %c0_i32 = arith.constant 0 : i32
    return %arg0, %arg1 : i32, i32
  }
}

module attributes {stable_mosaic.version = 11 : i64} {
  func.func @_mm_bias_act_kernel(%arg0: i32, %arg1: i32, %arg2: memref<32x32xbf16, #tpu.memory_space<vmem>>, %arg3: memref<32x8xbf16, #tpu.memory_space<vmem>>, %arg4: memref<1x8xf32, #tpu.memory_space<vmem>>, %arg5: memref<32x8xbf16, #tpu.memory_space<vmem>>) attributes {dimension_semantics = [#tpu.dimension_semantics<parallel>, #tpu.dimension_semantics<parallel>], iteration_bounds = array<i64: 1, 1>, scalar_prefetch = 0 : i64, scratch_operands = 0 : i64, tpu.core_type = #tpu.core_type<tc>, window_params = [{transform_indices = @transform_0, window_bounds = array<i64: 32, 32>}, {transform_indices = @transform_1, window_bounds = array<i64: 32, 8>}, {transform_indices = @transform_2, window_bounds = array<i64: 1, 8>}, {transform_indices = @transform_3, window_bounds = array<i64: 32, 8>}]} {
    %c0 = arith.constant 0 : index
    %c0_0 = arith.constant 0 : index
    %0 = vector.load %arg2[%c0, %c0_0] : memref<32x32xbf16, #tpu.memory_space<vmem>>, vector<32x32xbf16>
    %c0_1 = arith.constant 0 : index
    %c0_2 = arith.constant 0 : index
    %1 = vector.load %arg3[%c0_1, %c0_2] : memref<32x8xbf16, #tpu.memory_space<vmem>>, vector<32x8xbf16>
    %cst = arith.constant dense<0.000000e+00> : vector<32x8xf32>
    %2 = tpu.matmul %0, %1, %cst {dimension_numbers = #tpu.dot_dimension_numbers<[1], [0], [0], [1], [0, 0, 1, 1], [], []>} : vector<32x32xbf16>, vector<32x8xbf16>, vector<32x8xf32> -> vector<32x8xf32>
    %c0_3 = arith.constant 0 : index
    %c0_4 = arith.constant 0 : index
    %3 = vector.load %arg4[%c0_3, %c0_4] : memref<1x8xf32, #tpu.memory_space<vmem>>, vector<1x8xf32>
    %4 = vector.broadcast %3 : vector<1x8xf32> to vector<32x8xf32>
    %5 = arith.addf %2, %4 : vector<32x8xf32>
    %cst_5 = arith.constant 0.000000e+00 : f32
    %6 = vector.broadcast %cst_5 : f32 to vector<32x8xf32>
    %7 = arith.cmpf oge, %5, %6 : vector<32x8xf32>
    %cst_6 = arith.constant 0.00999999977 : f32
    %8 = vector.broadcast %cst_6 : f32 to vector<32x8xf32>
    %9 = arith.mulf %5, %8 : vector<32x8xf32>
    %10 = arith.select %7, %5, %9 : vector<32x8xi1>, vector<32x8xf32>
    %11 = arith.truncf %10 : vector<32x8xf32> to vector<32x8xbf16>
    %c0_7 = arith.constant 0 : index
    %c0_8 = arith.constant 0 : index
    %12 = vector.load %arg5[%c0_7, %c0_8] : memref<32x8xbf16, #tpu.memory_space<vmem>>, vector<32x8xbf16>
    tpu.vector_store %arg5[%c0_7, %c0_8], %11 {strides = array<i32>} : memref<32x8xbf16, #tpu.memory_space<vmem>>, vector<32x8xbf16>,
    return
  }
  func.func @transform_0(%arg0: i32, %arg1: i32) -> (i32, i32) {
    %c0_i32 = arith.constant 0 : i32
    %c0_i32_0 = arith.constant 0 : i32
    return %arg0, %c0_i32 : i32, i32
  }
  func.func @transform_1(%arg0: i32, %arg1: i32) -> (i32, i32) {
    %c0_i32 = arith.constant 0 : i32
    %c0_i32_0 = arith.constant 0 : i32
    return %c0_i32, %arg1 : i32, i32
  }
  func.func @transform_2(%arg0: i32, %arg1: i32) -> (i32, i32) {
    %c0_i32 = arith.constant 0 : i32
    %c0_i32_0 = arith.constant 0 : i32
    return %c0_i32, %arg1 : i32, i32
  }
  func.func @transform_3(%arg0: i32, %arg1: i32) -> (i32, i32) {
    %c0_i32 = arith.constant 0 : i32
    return %arg0, %arg1 : i32, i32
  }
}

module attributes {stable_mosaic.version = 11 : i64} {
  func.func @_mm_bias_act_res_kernel(%arg0: i32, %arg1: i32, %arg2: memref<32x72xbf16, #tpu.memory_space<vmem>>, %arg3: memref<72x32xbf16, #tpu.memory_space<vmem>>, %arg4: memref<1x32xf32, #tpu.memory_space<vmem>>, %arg5: memref<32x32xbf16, #tpu.memory_space<vmem>>, %arg6: memref<32x32xbf16, #tpu.memory_space<vmem>>) attributes {dimension_semantics = [#tpu.dimension_semantics<parallel>, #tpu.dimension_semantics<parallel>], iteration_bounds = array<i64: 1, 1>, scalar_prefetch = 0 : i64, scratch_operands = 0 : i64, tpu.core_type = #tpu.core_type<tc>, window_params = [{transform_indices = @transform_0, window_bounds = array<i64: 32, 72>}, {transform_indices = @transform_1, window_bounds = array<i64: 72, 32>}, {transform_indices = @transform_2, window_bounds = array<i64: 1, 32>}, {transform_indices = @transform_3, window_bounds = array<i64: 32, 32>}, {transform_indices = @transform_4, window_bounds = array<i64: 32, 32>}]} {
    %c0 = arith.constant 0 : index
    %c0_0 = arith.constant 0 : index
    %0 = vector.load %arg2[%c0, %c0_0] : memref<32x72xbf16, #tpu.memory_space<vmem>>, vector<32x72xbf16>
    %c0_1 = arith.constant 0 : index
    %c0_2 = arith.constant 0 : index
    %1 = vector.load %arg3[%c0_1, %c0_2] : memref<72x32xbf16, #tpu.memory_space<vmem>>, vector<72x32xbf16>
    %cst = arith.constant dense<0.000000e+00> : vector<32x32xf32>
    %2 = tpu.matmul %0, %1, %cst {dimension_numbers = #tpu.dot_dimension_numbers<[1], [0], [0], [1], [0, 0, 1, 1], [], []>} : vector<32x72xbf16>, vector<72x32xbf16>, vector<32x32xf32> -> vector<32x32xf32>
    %c0_3 = arith.constant 0 : index
    %c0_4 = arith.constant 0 : index
    %3 = vector.load %arg4[%c0_3, %c0_4] : memref<1x32xf32, #tpu.memory_space<vmem>>, vector<1x32xf32>
    %4 = vector.broadcast %3 : vector<1x32xf32> to vector<32x32xf32>
    %5 = arith.addf %2, %4 : vector<32x32xf32>
    %cst_5 = arith.constant 0.000000e+00 : f32
    %6 = vector.broadcast %cst_5 : f32 to vector<32x32xf32>
    %7 = arith.cmpf oge, %5, %6 : vector<32x32xf32>
    %cst_6 = arith.constant 0.00999999977 : f32
    %8 = vector.broadcast %cst_6 : f32 to vector<32x32xf32>
    %9 = arith.mulf %5, %8 : vector<32x32xf32>
    %10 = arith.select %7, %5, %9 : vector<32x32xi1>, vector<32x32xf32>
    %c0_7 = arith.constant 0 : index
    %c0_8 = arith.constant 0 : index
    %11 = vector.load %arg5[%c0_7, %c0_8] : memref<32x32xbf16, #tpu.memory_space<vmem>>, vector<32x32xbf16>
    %12 = arith.extf %11 : vector<32x32xbf16> to vector<32x32xf32>
    %13 = arith.addf %10, %12 : vector<32x32xf32>
    %14 = arith.truncf %13 : vector<32x32xf32> to vector<32x32xbf16>
    %c0_9 = arith.constant 0 : index
    %c0_10 = arith.constant 0 : index
    %15 = vector.load %arg6[%c0_9, %c0_10] : memref<32x32xbf16, #tpu.memory_space<vmem>>, vector<32x32xbf16>
    tpu.vector_store %arg6[%c0_9, %c0_10], %14 {strides = array<i32>} : memref<32x32xbf16, #tpu.memory_space<vmem>>, vector<32x32xbf16>,
    return
  }
  func.func @transform_0(%arg0: i32, %arg1: i32) -> (i32, i32) {
    %c0_i32 = arith.constant 0 : i32
    %c0_i32_0 = arith.constant 0 : i32
    return %arg0, %c0_i32 : i32, i32
  }
  func.func @transform_1(%arg0: i32, %arg1: i32) -> (i32, i32) {
    %c0_i32 = arith.constant 0 : i32
    %c0_i32_0 = arith.constant 0 : i32
    return %c0_i32, %arg1 : i32, i32
  }
  func.func @transform_2(%arg0: i32, %arg1: i32) -> (i32, i32) {
    %c0_i32 = arith.constant 0 : i32
    %c0_i32_0 = arith.constant 0 : i32
    return %c0_i32, %arg1 : i32, i32
  }
  func.func @transform_3(%arg0: i32, %arg1: i32) -> (i32, i32) {
    %c0_i32 = arith.constant 0 : i32
    return %arg0, %arg1 : i32, i32
  }
  func.func @transform_4(%arg0: i32, %arg1: i32) -> (i32, i32) {
    %c0_i32 = arith.constant 0 : i32
    return %arg0, %arg1 : i32, i32
  }
}

module attributes {stable_mosaic.version = 11 : i64} {
  func.func @_mm_bias_act_kernel(%arg0: i32, %arg1: i32, %arg2: memref<8x288xbf16, #tpu.memory_space<vmem>>, %arg3: memref<288x64xbf16, #tpu.memory_space<vmem>>, %arg4: memref<1x64xf32, #tpu.memory_space<vmem>>, %arg5: memref<8x64xbf16, #tpu.memory_space<vmem>>) attributes {dimension_semantics = [#tpu.dimension_semantics<parallel>, #tpu.dimension_semantics<parallel>], iteration_bounds = array<i64: 1, 1>, scalar_prefetch = 0 : i64, scratch_operands = 0 : i64, tpu.core_type = #tpu.core_type<tc>, window_params = [{transform_indices = @transform_0, window_bounds = array<i64: 8, 288>}, {transform_indices = @transform_1, window_bounds = array<i64: 288, 64>}, {transform_indices = @transform_2, window_bounds = array<i64: 1, 64>}, {transform_indices = @transform_3, window_bounds = array<i64: 8, 64>}]} {
    %c0 = arith.constant 0 : index
    %c0_0 = arith.constant 0 : index
    %0 = vector.load %arg2[%c0, %c0_0] : memref<8x288xbf16, #tpu.memory_space<vmem>>, vector<8x288xbf16>
    %c0_1 = arith.constant 0 : index
    %c0_2 = arith.constant 0 : index
    %1 = vector.load %arg3[%c0_1, %c0_2] : memref<288x64xbf16, #tpu.memory_space<vmem>>, vector<288x64xbf16>
    %cst = arith.constant dense<0.000000e+00> : vector<8x64xf32>
    %2 = tpu.matmul %0, %1, %cst {dimension_numbers = #tpu.dot_dimension_numbers<[1], [0], [0], [1], [0, 0, 1, 1], [], []>} : vector<8x288xbf16>, vector<288x64xbf16>, vector<8x64xf32> -> vector<8x64xf32>
    %c0_3 = arith.constant 0 : index
    %c0_4 = arith.constant 0 : index
    %3 = vector.load %arg4[%c0_3, %c0_4] : memref<1x64xf32, #tpu.memory_space<vmem>>, vector<1x64xf32>
    %4 = vector.broadcast %3 : vector<1x64xf32> to vector<8x64xf32>
    %5 = arith.addf %2, %4 : vector<8x64xf32>
    %cst_5 = arith.constant 0.000000e+00 : f32
    %6 = vector.broadcast %cst_5 : f32 to vector<8x64xf32>
    %7 = arith.cmpf oge, %5, %6 : vector<8x64xf32>
    %cst_6 = arith.constant 0.00999999977 : f32
    %8 = vector.broadcast %cst_6 : f32 to vector<8x64xf32>
    %9 = arith.mulf %5, %8 : vector<8x64xf32>
    %10 = arith.select %7, %5, %9 : vector<8x64xi1>, vector<8x64xf32>
    %11 = arith.truncf %10 : vector<8x64xf32> to vector<8x64xbf16>
    %c0_7 = arith.constant 0 : index
    %c0_8 = arith.constant 0 : index
    %12 = vector.load %arg5[%c0_7, %c0_8] : memref<8x64xbf16, #tpu.memory_space<vmem>>, vector<8x64xbf16>
    tpu.vector_store %arg5[%c0_7, %c0_8], %11 {strides = array<i32>} : memref<8x64xbf16, #tpu.memory_space<vmem>>, vector<8x64xbf16>,
    return
  }
  func.func @transform_0(%arg0: i32, %arg1: i32) -> (i32, i32) {
    %c0_i32 = arith.constant 0 : i32
    %c0_i32_0 = arith.constant 0 : i32
    return %arg0, %c0_i32 : i32, i32
  }
  func.func @transform_1(%arg0: i32, %arg1: i32) -> (i32, i32) {
    %c0_i32 = arith.constant 0 : i32
    %c0_i32_0 = arith.constant 0 : i32
    return %c0_i32, %arg1 : i32, i32
  }
  func.func @transform_2(%arg0: i32, %arg1: i32) -> (i32, i32) {
    %c0_i32 = arith.constant 0 : i32
    %c0_i32_0 = arith.constant 0 : i32
    return %c0_i32, %arg1 : i32, i32
  }
  func.func @transform_3(%arg0: i32, %arg1: i32) -> (i32, i32) {
    %c0_i32 = arith.constant 0 : i32
    return %arg0, %arg1 : i32, i32
  }
}

module attributes {stable_mosaic.version = 11 : i64} {
  func.func @_mm_bias_act_kernel(%arg0: i32, %arg1: i32, %arg2: memref<8x64xbf16, #tpu.memory_space<vmem>>, %arg3: memref<64x16xbf16, #tpu.memory_space<vmem>>, %arg4: memref<1x16xf32, #tpu.memory_space<vmem>>, %arg5: memref<8x16xbf16, #tpu.memory_space<vmem>>) attributes {dimension_semantics = [#tpu.dimension_semantics<parallel>, #tpu.dimension_semantics<parallel>], iteration_bounds = array<i64: 1, 1>, scalar_prefetch = 0 : i64, scratch_operands = 0 : i64, tpu.core_type = #tpu.core_type<tc>, window_params = [{transform_indices = @transform_0, window_bounds = array<i64: 8, 64>}, {transform_indices = @transform_1, window_bounds = array<i64: 64, 16>}, {transform_indices = @transform_2, window_bounds = array<i64: 1, 16>}, {transform_indices = @transform_3, window_bounds = array<i64: 8, 16>}]} {
    %c0 = arith.constant 0 : index
    %c0_0 = arith.constant 0 : index
    %0 = vector.load %arg2[%c0, %c0_0] : memref<8x64xbf16, #tpu.memory_space<vmem>>, vector<8x64xbf16>
    %c0_1 = arith.constant 0 : index
    %c0_2 = arith.constant 0 : index
    %1 = vector.load %arg3[%c0_1, %c0_2] : memref<64x16xbf16, #tpu.memory_space<vmem>>, vector<64x16xbf16>
    %cst = arith.constant dense<0.000000e+00> : vector<8x16xf32>
    %2 = tpu.matmul %0, %1, %cst {dimension_numbers = #tpu.dot_dimension_numbers<[1], [0], [0], [1], [0, 0, 1, 1], [], []>} : vector<8x64xbf16>, vector<64x16xbf16>, vector<8x16xf32> -> vector<8x16xf32>
    %c0_3 = arith.constant 0 : index
    %c0_4 = arith.constant 0 : index
    %3 = vector.load %arg4[%c0_3, %c0_4] : memref<1x16xf32, #tpu.memory_space<vmem>>, vector<1x16xf32>
    %4 = vector.broadcast %3 : vector<1x16xf32> to vector<8x16xf32>
    %5 = arith.addf %2, %4 : vector<8x16xf32>
    %cst_5 = arith.constant 0.000000e+00 : f32
    %6 = vector.broadcast %cst_5 : f32 to vector<8x16xf32>
    %7 = arith.cmpf oge, %5, %6 : vector<8x16xf32>
    %cst_6 = arith.constant 0.00999999977 : f32
    %8 = vector.broadcast %cst_6 : f32 to vector<8x16xf32>
    %9 = arith.mulf %5, %8 : vector<8x16xf32>
    %10 = arith.select %7, %5, %9 : vector<8x16xi1>, vector<8x16xf32>
    %11 = arith.truncf %10 : vector<8x16xf32> to vector<8x16xbf16>
    %c0_7 = arith.constant 0 : index
    %c0_8 = arith.constant 0 : index
    %12 = vector.load %arg5[%c0_7, %c0_8] : memref<8x16xbf16, #tpu.memory_space<vmem>>, vector<8x16xbf16>
    tpu.vector_store %arg5[%c0_7, %c0_8], %11 {strides = array<i32>} : memref<8x16xbf16, #tpu.memory_space<vmem>>, vector<8x16xbf16>,
    return
  }
  func.func @transform_0(%arg0: i32, %arg1: i32) -> (i32, i32) {
    %c0_i32 = arith.constant 0 : i32
    %c0_i32_0 = arith.constant 0 : i32
    return %arg0, %c0_i32 : i32, i32
  }
  func.func @transform_1(%arg0: i32, %arg1: i32) -> (i32, i32) {
    %c0_i32 = arith.constant 0 : i32
    %c0_i32_0 = arith.constant 0 : i32
    return %c0_i32, %arg1 : i32, i32
  }
  func.func @transform_2(%arg0: i32, %arg1: i32) -> (i32, i32) {
    %c0_i32 = arith.constant 0 : i32
    %c0_i32_0 = arith.constant 0 : i32
    return %c0_i32, %arg1 : i32, i32
  }
  func.func @transform_3(%arg0: i32, %arg1: i32) -> (i32, i32) {
    %c0_i32 = arith.constant 0 : i32
    return %arg0, %arg1 : i32, i32
  }
}

module attributes {stable_mosaic.version = 11 : i64} {
  func.func @_mm_bias_act_res_kernel(%arg0: i32, %arg1: i32, %arg2: memref<8x144xbf16, #tpu.memory_space<vmem>>, %arg3: memref<144x64xbf16, #tpu.memory_space<vmem>>, %arg4: memref<1x64xf32, #tpu.memory_space<vmem>>, %arg5: memref<8x64xbf16, #tpu.memory_space<vmem>>, %arg6: memref<8x64xbf16, #tpu.memory_space<vmem>>) attributes {dimension_semantics = [#tpu.dimension_semantics<parallel>, #tpu.dimension_semantics<parallel>], iteration_bounds = array<i64: 1, 1>, scalar_prefetch = 0 : i64, scratch_operands = 0 : i64, tpu.core_type = #tpu.core_type<tc>, window_params = [{transform_indices = @transform_0, window_bounds = array<i64: 8, 144>}, {transform_indices = @transform_1, window_bounds = array<i64: 144, 64>}, {transform_indices = @transform_2, window_bounds = array<i64: 1, 64>}, {transform_indices = @transform_3, window_bounds = array<i64: 8, 64>}, {transform_indices = @transform_4, window_bounds = array<i64: 8, 64>}]} {
    %c0 = arith.constant 0 : index
    %c0_0 = arith.constant 0 : index
    %0 = vector.load %arg2[%c0, %c0_0] : memref<8x144xbf16, #tpu.memory_space<vmem>>, vector<8x144xbf16>
    %c0_1 = arith.constant 0 : index
    %c0_2 = arith.constant 0 : index
    %1 = vector.load %arg3[%c0_1, %c0_2] : memref<144x64xbf16, #tpu.memory_space<vmem>>, vector<144x64xbf16>
    %cst = arith.constant dense<0.000000e+00> : vector<8x64xf32>
    %2 = tpu.matmul %0, %1, %cst {dimension_numbers = #tpu.dot_dimension_numbers<[1], [0], [0], [1], [0, 0, 1, 1], [], []>} : vector<8x144xbf16>, vector<144x64xbf16>, vector<8x64xf32> -> vector<8x64xf32>
    %c0_3 = arith.constant 0 : index
    %c0_4 = arith.constant 0 : index
    %3 = vector.load %arg4[%c0_3, %c0_4] : memref<1x64xf32, #tpu.memory_space<vmem>>, vector<1x64xf32>
    %4 = vector.broadcast %3 : vector<1x64xf32> to vector<8x64xf32>
    %5 = arith.addf %2, %4 : vector<8x64xf32>
    %cst_5 = arith.constant 0.000000e+00 : f32
    %6 = vector.broadcast %cst_5 : f32 to vector<8x64xf32>
    %7 = arith.cmpf oge, %5, %6 : vector<8x64xf32>
    %cst_6 = arith.constant 0.00999999977 : f32
    %8 = vector.broadcast %cst_6 : f32 to vector<8x64xf32>
    %9 = arith.mulf %5, %8 : vector<8x64xf32>
    %10 = arith.select %7, %5, %9 : vector<8x64xi1>, vector<8x64xf32>
    %c0_7 = arith.constant 0 : index
    %c0_8 = arith.constant 0 : index
    %11 = vector.load %arg5[%c0_7, %c0_8] : memref<8x64xbf16, #tpu.memory_space<vmem>>, vector<8x64xbf16>
    %12 = arith.extf %11 : vector<8x64xbf16> to vector<8x64xf32>
    %13 = arith.addf %10, %12 : vector<8x64xf32>
    %14 = arith.truncf %13 : vector<8x64xf32> to vector<8x64xbf16>
    %c0_9 = arith.constant 0 : index
    %c0_10 = arith.constant 0 : index
    %15 = vector.load %arg6[%c0_9, %c0_10] : memref<8x64xbf16, #tpu.memory_space<vmem>>, vector<8x64xbf16>
    tpu.vector_store %arg6[%c0_9, %c0_10], %14 {strides = array<i32>} : memref<8x64xbf16, #tpu.memory_space<vmem>>, vector<8x64xbf16>,
    return
  }
  func.func @transform_0(%arg0: i32, %arg1: i32) -> (i32, i32) {
    %c0_i32 = arith.constant 0 : i32
    %c0_i32_0 = arith.constant 0 : i32
    return %arg0, %c0_i32 : i32, i32
  }
  func.func @transform_1(%arg0: i32, %arg1: i32) -> (i32, i32) {
    %c0_i32 = arith.constant 0 : i32
    %c0_i32_0 = arith.constant 0 : i32
    return %c0_i32, %arg1 : i32, i32
  }
  func.func @transform_2(%arg0: i32, %arg1: i32) -> (i32, i32) {
    %c0_i32 = arith.constant 0 : i32
    %c0_i32_0 = arith.constant 0 : i32
    return %c0_i32, %arg1 : i32, i32
  }
  func.func @transform_3(%arg0: i32, %arg1: i32) -> (i32, i32) {
    %c0_i32 = arith.constant 0 : i32
    return %arg0, %arg1 : i32, i32
  }
  func.func @transform_4(%arg0: i32, %arg1: i32) -> (i32, i32) {
    %c0_i32 = arith.constant 0 : i32
    return %arg0, %arg1 : i32, i32
  }
}

module attributes {stable_mosaic.version = 11 : i64} {
  func.func @_mm_bias_act_kernel(%arg0: i32, %arg1: i32, %arg2: memref<8x576xbf16, #tpu.memory_space<vmem>>, %arg3: memref<576x128xbf16, #tpu.memory_space<vmem>>, %arg4: memref<1x128xf32, #tpu.memory_space<vmem>>, %arg5: memref<8x128xbf16, #tpu.memory_space<vmem>>) attributes {dimension_semantics = [#tpu.dimension_semantics<parallel>, #tpu.dimension_semantics<parallel>], iteration_bounds = array<i64: 1, 1>, scalar_prefetch = 0 : i64, scratch_operands = 0 : i64, tpu.core_type = #tpu.core_type<tc>, window_params = [{transform_indices = @transform_0, window_bounds = array<i64: 8, 576>}, {transform_indices = @transform_1, window_bounds = array<i64: 576, 128>}, {transform_indices = @transform_2, window_bounds = array<i64: 1, 128>}, {transform_indices = @transform_3, window_bounds = array<i64: 8, 128>}]} {
    %c0 = arith.constant 0 : index
    %c0_0 = arith.constant 0 : index
    %0 = vector.load %arg2[%c0, %c0_0] : memref<8x576xbf16, #tpu.memory_space<vmem>>, vector<8x576xbf16>
    %c0_1 = arith.constant 0 : index
    %c0_2 = arith.constant 0 : index
    %1 = vector.load %arg3[%c0_1, %c0_2] : memref<576x128xbf16, #tpu.memory_space<vmem>>, vector<576x128xbf16>
    %cst = arith.constant dense<0.000000e+00> : vector<8x128xf32>
    %2 = tpu.matmul %0, %1, %cst {dimension_numbers = #tpu.dot_dimension_numbers<[1], [0], [0], [1], [0, 0, 1, 1], [], []>} : vector<8x576xbf16>, vector<576x128xbf16>, vector<8x128xf32> -> vector<8x128xf32>
    %c0_3 = arith.constant 0 : index
    %c0_4 = arith.constant 0 : index
    %3 = vector.load %arg4[%c0_3, %c0_4] : memref<1x128xf32, #tpu.memory_space<vmem>>, vector<1x128xf32>
    %4 = vector.broadcast %3 : vector<1x128xf32> to vector<8x128xf32>
    %5 = arith.addf %2, %4 : vector<8x128xf32>
    %cst_5 = arith.constant 0.000000e+00 : f32
    %6 = vector.broadcast %cst_5 : f32 to vector<8x128xf32>
    %7 = arith.cmpf oge, %5, %6 : vector<8x128xf32>
    %cst_6 = arith.constant 0.00999999977 : f32
    %8 = vector.broadcast %cst_6 : f32 to vector<8x128xf32>
    %9 = arith.mulf %5, %8 : vector<8x128xf32>
    %10 = arith.select %7, %5, %9 : vector<8x128xi1>, vector<8x128xf32>
    %11 = arith.truncf %10 : vector<8x128xf32> to vector<8x128xbf16>
    %c0_7 = arith.constant 0 : index
    %c0_8 = arith.constant 0 : index
    %12 = vector.load %arg5[%c0_7, %c0_8] : memref<8x128xbf16, #tpu.memory_space<vmem>>, vector<8x128xbf16>
    tpu.vector_store %arg5[%c0_7, %c0_8], %11 {strides = array<i32>} : memref<8x128xbf16, #tpu.memory_space<vmem>>, vector<8x128xbf16>,
    return
  }
  func.func @transform_0(%arg0: i32, %arg1: i32) -> (i32, i32) {
    %c0_i32 = arith.constant 0 : i32
    %c0_i32_0 = arith.constant 0 : i32
    return %arg0, %c0_i32 : i32, i32
  }
  func.func @transform_1(%arg0: i32, %arg1: i32) -> (i32, i32) {
    %c0_i32 = arith.constant 0 : i32
    %c0_i32_0 = arith.constant 0 : i32
    return %c0_i32, %arg1 : i32, i32
  }
  func.func @transform_2(%arg0: i32, %arg1: i32) -> (i32, i32) {
    %c0_i32 = arith.constant 0 : i32
    %c0_i32_0 = arith.constant 0 : i32
    return %c0_i32, %arg1 : i32, i32
  }
  func.func @transform_3(%arg0: i32, %arg1: i32) -> (i32, i32) {
    %c0_i32 = arith.constant 0 : i32
    return %arg0, %arg1 : i32, i32
  }
}

module attributes {stable_mosaic.version = 11 : i64} {
  func.func @_mm_bias_act_kernel(%arg0: i32, %arg1: i32, %arg2: memref<8x128xbf16, #tpu.memory_space<vmem>>, %arg3: memref<128x32xbf16, #tpu.memory_space<vmem>>, %arg4: memref<1x32xf32, #tpu.memory_space<vmem>>, %arg5: memref<8x32xbf16, #tpu.memory_space<vmem>>) attributes {dimension_semantics = [#tpu.dimension_semantics<parallel>, #tpu.dimension_semantics<parallel>], iteration_bounds = array<i64: 1, 1>, scalar_prefetch = 0 : i64, scratch_operands = 0 : i64, tpu.core_type = #tpu.core_type<tc>, window_params = [{transform_indices = @transform_0, window_bounds = array<i64: 8, 128>}, {transform_indices = @transform_1, window_bounds = array<i64: 128, 32>}, {transform_indices = @transform_2, window_bounds = array<i64: 1, 32>}, {transform_indices = @transform_3, window_bounds = array<i64: 8, 32>}]} {
    %c0 = arith.constant 0 : index
    %c0_0 = arith.constant 0 : index
    %0 = vector.load %arg2[%c0, %c0_0] : memref<8x128xbf16, #tpu.memory_space<vmem>>, vector<8x128xbf16>
    %c0_1 = arith.constant 0 : index
    %c0_2 = arith.constant 0 : index
    %1 = vector.load %arg3[%c0_1, %c0_2] : memref<128x32xbf16, #tpu.memory_space<vmem>>, vector<128x32xbf16>
    %cst = arith.constant dense<0.000000e+00> : vector<8x32xf32>
    %2 = tpu.matmul %0, %1, %cst {dimension_numbers = #tpu.dot_dimension_numbers<[1], [0], [0], [1], [0, 0, 1, 1], [], []>} : vector<8x128xbf16>, vector<128x32xbf16>, vector<8x32xf32> -> vector<8x32xf32>
    %c0_3 = arith.constant 0 : index
    %c0_4 = arith.constant 0 : index
    %3 = vector.load %arg4[%c0_3, %c0_4] : memref<1x32xf32, #tpu.memory_space<vmem>>, vector<1x32xf32>
    %4 = vector.broadcast %3 : vector<1x32xf32> to vector<8x32xf32>
    %5 = arith.addf %2, %4 : vector<8x32xf32>
    %cst_5 = arith.constant 0.000000e+00 : f32
    %6 = vector.broadcast %cst_5 : f32 to vector<8x32xf32>
    %7 = arith.cmpf oge, %5, %6 : vector<8x32xf32>
    %cst_6 = arith.constant 0.00999999977 : f32
    %8 = vector.broadcast %cst_6 : f32 to vector<8x32xf32>
    %9 = arith.mulf %5, %8 : vector<8x32xf32>
    %10 = arith.select %7, %5, %9 : vector<8x32xi1>, vector<8x32xf32>
    %11 = arith.truncf %10 : vector<8x32xf32> to vector<8x32xbf16>
    %c0_7 = arith.constant 0 : index
    %c0_8 = arith.constant 0 : index
    %12 = vector.load %arg5[%c0_7, %c0_8] : memref<8x32xbf16, #tpu.memory_space<vmem>>, vector<8x32xbf16>
    tpu.vector_store %arg5[%c0_7, %c0_8], %11 {strides = array<i32>} : memref<8x32xbf16, #tpu.memory_space<vmem>>, vector<8x32xbf16>,
    return
  }
  func.func @transform_0(%arg0: i32, %arg1: i32) -> (i32, i32) {
    %c0_i32 = arith.constant 0 : i32
    %c0_i32_0 = arith.constant 0 : i32
    return %arg0, %c0_i32 : i32, i32
  }
  func.func @transform_1(%arg0: i32, %arg1: i32) -> (i32, i32) {
    %c0_i32 = arith.constant 0 : i32
    %c0_i32_0 = arith.constant 0 : i32
    return %c0_i32, %arg1 : i32, i32
  }
  func.func @transform_2(%arg0: i32, %arg1: i32) -> (i32, i32) {
    %c0_i32 = arith.constant 0 : i32
    %c0_i32_0 = arith.constant 0 : i32
    return %c0_i32, %arg1 : i32, i32
  }
  func.func @transform_3(%arg0: i32, %arg1: i32) -> (i32, i32) {
    %c0_i32 = arith.constant 0 : i32
    return %arg0, %arg1 : i32, i32
  }
}

module attributes {stable_mosaic.version = 11 : i64} {
  func.func @_mm_bias_act_res_kernel(%arg0: i32, %arg1: i32, %arg2: memref<8x288xbf16, #tpu.memory_space<vmem>>, %arg3: memref<288x128xbf16, #tpu.memory_space<vmem>>, %arg4: memref<1x128xf32, #tpu.memory_space<vmem>>, %arg5: memref<8x128xbf16, #tpu.memory_space<vmem>>, %arg6: memref<8x128xbf16, #tpu.memory_space<vmem>>) attributes {dimension_semantics = [#tpu.dimension_semantics<parallel>, #tpu.dimension_semantics<parallel>], iteration_bounds = array<i64: 1, 1>, scalar_prefetch = 0 : i64, scratch_operands = 0 : i64, tpu.core_type = #tpu.core_type<tc>, window_params = [{transform_indices = @transform_0, window_bounds = array<i64: 8, 288>}, {transform_indices = @transform_1, window_bounds = array<i64: 288, 128>}, {transform_indices = @transform_2, window_bounds = array<i64: 1, 128>}, {transform_indices = @transform_3, window_bounds = array<i64: 8, 128>}, {transform_indices = @transform_4, window_bounds = array<i64: 8, 128>}]} {
    %c0 = arith.constant 0 : index
    %c0_0 = arith.constant 0 : index
    %0 = vector.load %arg2[%c0, %c0_0] : memref<8x288xbf16, #tpu.memory_space<vmem>>, vector<8x288xbf16>
    %c0_1 = arith.constant 0 : index
    %c0_2 = arith.constant 0 : index
    %1 = vector.load %arg3[%c0_1, %c0_2] : memref<288x128xbf16, #tpu.memory_space<vmem>>, vector<288x128xbf16>
    %cst = arith.constant dense<0.000000e+00> : vector<8x128xf32>
    %2 = tpu.matmul %0, %1, %cst {dimension_numbers = #tpu.dot_dimension_numbers<[1], [0], [0], [1], [0, 0, 1, 1], [], []>} : vector<8x288xbf16>, vector<288x128xbf16>, vector<8x128xf32> -> vector<8x128xf32>
    %c0_3 = arith.constant 0 : index
    %c0_4 = arith.constant 0 : index
    %3 = vector.load %arg4[%c0_3, %c0_4] : memref<1x128xf32, #tpu.memory_space<vmem>>, vector<1x128xf32>
    %4 = vector.broadcast %3 : vector<1x128xf32> to vector<8x128xf32>
    %5 = arith.addf %2, %4 : vector<8x128xf32>
    %cst_5 = arith.constant 0.000000e+00 : f32
    %6 = vector.broadcast %cst_5 : f32 to vector<8x128xf32>
    %7 = arith.cmpf oge, %5, %6 : vector<8x128xf32>
    %cst_6 = arith.constant 0.00999999977 : f32
    %8 = vector.broadcast %cst_6 : f32 to vector<8x128xf32>
    %9 = arith.mulf %5, %8 : vector<8x128xf32>
    %10 = arith.select %7, %5, %9 : vector<8x128xi1>, vector<8x128xf32>
    %c0_7 = arith.constant 0 : index
    %c0_8 = arith.constant 0 : index
    %11 = vector.load %arg5[%c0_7, %c0_8] : memref<8x128xbf16, #tpu.memory_space<vmem>>, vector<8x128xbf16>
    %12 = arith.extf %11 : vector<8x128xbf16> to vector<8x128xf32>
    %13 = arith.addf %10, %12 : vector<8x128xf32>
    %14 = arith.truncf %13 : vector<8x128xf32> to vector<8x128xbf16>
    %c0_9 = arith.constant 0 : index
    %c0_10 = arith.constant 0 : index
    %15 = vector.load %arg6[%c0_9, %c0_10] : memref<8x128xbf16, #tpu.memory_space<vmem>>, vector<8x128xbf16>
    tpu.vector_store %arg6[%c0_9, %c0_10], %14 {strides = array<i32>} : memref<8x128xbf16, #tpu.memory_space<vmem>>, vector<8x128xbf16>,
    return
  }
  func.func @transform_0(%arg0: i32, %arg1: i32) -> (i32, i32) {
    %c0_i32 = arith.constant 0 : i32
    %c0_i32_0 = arith.constant 0 : i32
    return %arg0, %c0_i32 : i32, i32
  }
  func.func @transform_1(%arg0: i32, %arg1: i32) -> (i32, i32) {
    %c0_i32 = arith.constant 0 : i32
    %c0_i32_0 = arith.constant 0 : i32
    return %c0_i32, %arg1 : i32, i32
  }
  func.func @transform_2(%arg0: i32, %arg1: i32) -> (i32, i32) {
    %c0_i32 = arith.constant 0 : i32
    %c0_i32_0 = arith.constant 0 : i32
    return %c0_i32, %arg1 : i32, i32
  }
  func.func @transform_3(%arg0: i32, %arg1: i32) -> (i32, i32) {
    %c0_i32 = arith.constant 0 : i32
    return %arg0, %arg1 : i32, i32
  }
  func.func @transform_4(%arg0: i32, %arg1: i32) -> (i32, i32) {
    %c0_i32 = arith.constant 0 : i32
    return %arg0, %arg1 : i32, i32
  }
}

module attributes {stable_mosaic.version = 11 : i64} {
  func.func @_mm_bias_act_kernel(%arg0: i32, %arg1: i32, %arg2: memref<8x128xbf16, #tpu.memory_space<vmem>>, %arg3: memref<128x512xbf16, #tpu.memory_space<vmem>>, %arg4: memref<1x512xf32, #tpu.memory_space<vmem>>, %arg5: memref<8x512xbf16, #tpu.memory_space<vmem>>) attributes {dimension_semantics = [#tpu.dimension_semantics<parallel>, #tpu.dimension_semantics<parallel>], iteration_bounds = array<i64: 1, 4>, scalar_prefetch = 0 : i64, scratch_operands = 0 : i64, tpu.core_type = #tpu.core_type<tc>, window_params = [{transform_indices = @transform_0, window_bounds = array<i64: 8, 128>}, {transform_indices = @transform_1, window_bounds = array<i64: 128, 512>}, {transform_indices = @transform_2, window_bounds = array<i64: 1, 512>}, {transform_indices = @transform_3, window_bounds = array<i64: 8, 512>}]} {
    %c0 = arith.constant 0 : index
    %c0_0 = arith.constant 0 : index
    %0 = vector.load %arg2[%c0, %c0_0] : memref<8x128xbf16, #tpu.memory_space<vmem>>, vector<8x128xbf16>
    %c0_1 = arith.constant 0 : index
    %c0_2 = arith.constant 0 : index
    %1 = vector.load %arg3[%c0_1, %c0_2] : memref<128x512xbf16, #tpu.memory_space<vmem>>, vector<128x512xbf16>
    %cst = arith.constant dense<0.000000e+00> : vector<8x512xf32>
    %2 = tpu.matmul %0, %1, %cst {dimension_numbers = #tpu.dot_dimension_numbers<[1], [0], [0], [1], [0, 0, 1, 1], [], []>} : vector<8x128xbf16>, vector<128x512xbf16>, vector<8x512xf32> -> vector<8x512xf32>
    %c0_3 = arith.constant 0 : index
    %c0_4 = arith.constant 0 : index
    %3 = vector.load %arg4[%c0_3, %c0_4] : memref<1x512xf32, #tpu.memory_space<vmem>>, vector<1x512xf32>
    %4 = vector.broadcast %3 : vector<1x512xf32> to vector<8x512xf32>
    %5 = arith.addf %2, %4 : vector<8x512xf32>
    %cst_5 = arith.constant 0.000000e+00 : f32
    %6 = vector.broadcast %cst_5 : f32 to vector<8x512xf32>
    %7 = arith.cmpf oge, %5, %6 : vector<8x512xf32>
    %cst_6 = arith.constant 0.00999999977 : f32
    %8 = vector.broadcast %cst_6 : f32 to vector<8x512xf32>
    %9 = arith.mulf %5, %8 : vector<8x512xf32>
    %10 = arith.select %7, %5, %9 : vector<8x512xi1>, vector<8x512xf32>
    %11 = arith.truncf %10 : vector<8x512xf32> to vector<8x512xbf16>
    %c0_7 = arith.constant 0 : index
    %c0_8 = arith.constant 0 : index
    %12 = vector.load %arg5[%c0_7, %c0_8] : memref<8x512xbf16, #tpu.memory_space<vmem>>, vector<8x512xbf16>
    tpu.vector_store %arg5[%c0_7, %c0_8], %11 {strides = array<i32>} : memref<8x512xbf16, #tpu.memory_space<vmem>>, vector<8x512xbf16>,
    return
  }
  func.func @transform_0(%arg0: i32, %arg1: i32) -> (i32, i32) {
    %c0_i32 = arith.constant 0 : i32
    %c0_i32_0 = arith.constant 0 : i32
    return %arg0, %c0_i32 : i32, i32
  }
  func.func @transform_1(%arg0: i32, %arg1: i32) -> (i32, i32) {
    %c0_i32 = arith.constant 0 : i32
    %c0_i32_0 = arith.constant 0 : i32
    return %c0_i32, %arg1 : i32, i32
  }
  func.func @transform_2(%arg0: i32, %arg1: i32) -> (i32, i32) {
    %c0_i32 = arith.constant 0 : i32
    %c0_i32_0 = arith.constant 0 : i32
    return %c0_i32, %arg1 : i32, i32
  }
  func.func @transform_3(%arg0: i32, %arg1: i32) -> (i32, i32) {
    %c0_i32 = arith.constant 0 : i32
    return %arg0, %arg1 : i32, i32
  }
}

module attributes {stable_mosaic.version = 11 : i64} {
  func.func @_mm_bias_act_kernel(%arg0: i32, %arg1: i32, %arg2: memref<8x2048xbf16, #tpu.memory_space<vmem>>, %arg3: memref<2048x16xbf16, #tpu.memory_space<vmem>>, %arg4: memref<1x16xf32, #tpu.memory_space<vmem>>, %arg5: memref<8x16xf32, #tpu.memory_space<vmem>>) attributes {dimension_semantics = [#tpu.dimension_semantics<parallel>, #tpu.dimension_semantics<parallel>], iteration_bounds = array<i64: 1, 1>, scalar_prefetch = 0 : i64, scratch_operands = 0 : i64, tpu.core_type = #tpu.core_type<tc>, window_params = [{transform_indices = @transform_0, window_bounds = array<i64: 8, 2048>}, {transform_indices = @transform_1, window_bounds = array<i64: 2048, 16>}, {transform_indices = @transform_2, window_bounds = array<i64: 1, 16>}, {transform_indices = @transform_3, window_bounds = array<i64: 8, 16>}]} {
    %c0 = arith.constant 0 : index
    %c0_0 = arith.constant 0 : index
    %0 = vector.load %arg2[%c0, %c0_0] : memref<8x2048xbf16, #tpu.memory_space<vmem>>, vector<8x2048xbf16>
    %c0_1 = arith.constant 0 : index
    %c0_2 = arith.constant 0 : index
    %1 = vector.load %arg3[%c0_1, %c0_2] : memref<2048x16xbf16, #tpu.memory_space<vmem>>, vector<2048x16xbf16>
    %cst = arith.constant dense<0.000000e+00> : vector<8x16xf32>
    %2 = tpu.matmul %0, %1, %cst {dimension_numbers = #tpu.dot_dimension_numbers<[1], [0], [0], [1], [0, 0, 1, 1], [], []>} : vector<8x2048xbf16>, vector<2048x16xbf16>, vector<8x16xf32> -> vector<8x16xf32>
    %c0_3 = arith.constant 0 : index
    %c0_4 = arith.constant 0 : index
    %3 = vector.load %arg4[%c0_3, %c0_4] : memref<1x16xf32, #tpu.memory_space<vmem>>, vector<1x16xf32>
    %4 = vector.broadcast %3 : vector<1x16xf32> to vector<8x16xf32>
    %5 = arith.addf %2, %4 : vector<8x16xf32>
    %c0_5 = arith.constant 0 : index
    %c0_6 = arith.constant 0 : index
    %6 = vector.load %arg5[%c0_5, %c0_6] : memref<8x16xf32, #tpu.memory_space<vmem>>, vector<8x16xf32>
    tpu.vector_store %arg5[%c0_5, %c0_6], %5 {strides = array<i32>} : memref<8x16xf32, #tpu.memory_space<vmem>>, vector<8x16xf32>,
    return
  }
  func.func @transform_0(%arg0: i32, %arg1: i32) -> (i32, i32) {
    %c0_i32 = arith.constant 0 : i32
    %c0_i32_0 = arith.constant 0 : i32
    return %arg0, %c0_i32 : i32, i32
  }
  func.func @transform_1(%arg0: i32, %arg1: i32) -> (i32, i32) {
    %c0_i32 = arith.constant 0 : i32
    %c0_i32_0 = arith.constant 0 : i32
    return %c0_i32, %arg1 : i32, i32
  }
  func.func @transform_2(%arg0: i32, %arg1: i32) -> (i32, i32) {
    %c0_i32 = arith.constant 0 : i32
    %c0_i32_0 = arith.constant 0 : i32
    return %c0_i32, %arg1 : i32, i32
  }
  func.func @transform_3(%arg0: i32, %arg1: i32) -> (i32, i32) {
    %c0_i32 = arith.constant 0 : i32
    return %arg0, %arg1 : i32, i32
  }
}

</mosaic_0001>

<llo_original>
// kernel: darknet_forward.15
$region0: #{darknet_forward.15}
  #allocation0 [shape = 'u32[]', space=smem, size = 0x4, offset = 0x4, fixed_abs, tag = 'smem constant byte address 0x4 - core index']
  #allocation1 [shape = 'u32[144,128]{1,0:T(1,128)}', space=vmem, size = 0x12000, scoped, tag = 'internal scratch']
  %s0 = inlined_call_operand.vmem [shape: bf16[512,147], index: 0, kind: input, shape index: {}]
  %s1 = inlined_call_operand.vmem [shape: bf16[147,64], index: 1, kind: input, shape index: {}]
  %s2 = inlined_call_operand.vmem [shape: f32[1,64], index: 2, kind: input, shape index: {}]
  %s3 = inlined_call_operand.vmem [shape: bf16[512,64], index: 3, kind: output, shape index: {}]
  %s4 = sld [smem:[#allocation0]]
  $region45: #{darknet_forward.15} parent=0
    _
  %s6 = ssub.s32 1, %s4
  %s7 = scalar_select 0, %s6, %s4
  loop: start=0, step=1, limit=6
  $region2: #{darknet_forward.15} parent=0 // loop_pre_header
    _
  $region3: #{darknet_forward.15} parent=0 // loop_header
    %s9 = sphi 0, %s13
    %p10 = scmp.ge.s32.totalorder %s9, 6
    %s16 = sphi 0, %s28
    %s17 = sphi 0, %s24
    %s18 = sphi 0, %s16
    %s19 = sphi 0, %s17
    %s20 = sphi 0, %s18
    %s21 = sphi 0, %s19
    %s31 = sphi 0, %s33
    %s34 = sphi 0, %s31
    %s35 = sphi 0, %s34
    %s51 = sphi 0, %s35
    %s57 = sphi 0, %s59
    %s60 = sphi 0, %s57
    %s61 = sphi 0, %s60
    %s77 = sphi 0, %s61
    %s83 = sphi 0, %s85
    %s86 = sphi 0, %s83
    %s87 = sphi 0, %s86
    %s103 = sphi 0, %s87
    %s111 = sphi 0, %s113
    %s114 = sphi 0, %s111
    %s115 = sphi 0, %s114
    %s131 = sphi 0, %s115
  $region4: #{darknet_forward.15} parent=0 // loop_header_branch
    %12 = sbr.rel (%p10) target = $region8
  $region5: #{darknet_forward.15} parent=0 // loop_body
    %s14 = ssub.s32 %s9, 1
    %s15 = ssub.s32 %s9, 2
    %s22 = sadd.s32 1, %s17
    %p23 = scmp.ge.s32.totalorder %s22, 1
    %s24 = scalar_select %p23, 0, %s22
    %s25 = sadd.s32 1, %s16
    %s26 = scalar_select %p23, %s25, %s16
    %p27 = scmp.ge.s32.totalorder %s26, 4
    %s28 = scalar_select %p27, 0, %s26
    %s29 = ssub.s32 %s16, %s28
    %p30 = scmp.eq.s32.totalorder %s29, 0
    %s32 = sadd.s32 %s31, 1
    %s33 = scalar_select %p30, %s31, %s32
    %p36 = pneg %p30
    %p37 = scmp.eq.s32.totalorder %s9, 3
    %p38 = por %p36, %p37
    %p39 = scmp.ne.s32.totalorder %s31, %s34
    %p40 = scmp.eq.s32.totalorder %s9, 0
    %p41 = por %p39, %p40
    %p42 = scmp.ne.s32.totalorder %s31, %s34
    %p43 = scmp.eq.s32.totalorder %s14, 3
    %p44 = por %p42, %p43
    %p45 = scmp.ne.s32.totalorder %s34, %s35
    %p46 = scmp.eq.s32.totalorder %s14, 0
    %p47 = por %p45, %p46
    %p48 = scmp.ne.s32.totalorder %s34, %s35
    %p49 = scmp.eq.s32.totalorder %s15, 3
    %p50 = por %p48, %p49
    %p52 = scmp.ne.s32.totalorder %s35, %s51
    %p53 = scmp.eq.s32.totalorder %s15, 0
    %p54 = por %p52, %p53
    %s55 = ssub.s32 %s17, %s24
    %p56 = scmp.eq.s32.totalorder %s55, 0
    %s58 = sadd.s32 %s57, 1
    %s59 = scalar_select %p56, %s57, %s58
    %p62 = pneg %p56
    %p63 = scmp.eq.s32.totalorder %s9, 3
    %p64 = por %p62, %p63
    %p65 = scmp.ne.s32.totalorder %s57, %s60
    %p66 = scmp.eq.s32.totalorder %s9, 0
    %p67 = por %p65, %p66
    %p68 = scmp.ne.s32.totalorder %s57, %s60
    %p69 = scmp.eq.s32.totalorder %s14, 3
    %p70 = por %p68, %p69
    %p71 = scmp.ne.s32.totalorder %s60, %s61
    %p72 = scmp.eq.s32.totalorder %s14, 0
    %p73 = por %p71, %p72
    %p74 = scmp.ne.s32.totalorder %s60, %s61
    %p75 = scmp.eq.s32.totalorder %s15, 3
    %p76 = por %p74, %p75
    %p78 = scmp.ne.s32.totalorder %s61, %s77
    %p79 = scmp.eq.s32.totalorder %s15, 0
    %p80 = por %p78, %p79
    %s81 = ssub.s32 %s17, %s24
    %p82 = scmp.eq.s32.totalorder %s81, 0
    %s84 = sadd.s32 %s83, 1
    %s85 = scalar_select %p82, %s83, %s84
    %p88 = pneg %p82
    %p89 = scmp.eq.s32.totalorder %s9, 3
    %p90 = por %p88, %p89
    %p91 = scmp.ne.s32.totalorder %s83, %s86
    %p92 = scmp.eq.s32.totalorder %s9, 0
    %p93 = por %p91, %p92
    %p94 = scmp.ne.s32.totalorder %s83, %s86
    %p95 = scmp.eq.s32.totalorder %s14, 3
    %p96 = por %p94, %p95
    %p97 = scmp.ne.s32.totalorder %s86, %s87
    %p98 = scmp.eq.s32.totalorder %s14, 0
    %p99 = por %p97, %p98
    %p100 = scmp.ne.s32.totalorder %s86, %s87
    %p101 = scmp.eq.s32.totalorder %s15, 3
    %p102 = por %p100, %p101
    %p104 = scmp.ne.s32.totalorder %s87, %s103
    %p105 = scmp.eq.s32.totalorder %s15, 0
    %p106 = por %p104, %p105
    %s107 = ssub.s32 %s16, %s28
    %s108 = ssub.s32 %s17, %s24
    %s109 = sor.u32 %s107, %s108
    %p110 = scmp.eq.s32.totalorder %s109, 0
    %s112 = sadd.s32 %s111, 1
    %s113 = scalar_select %p110, %s111, %s112
    %p116 = pneg %p110
    %p117 = scmp.eq.s32.totalorder %s9, 3
    %p118 = por %p116, %p117
    %p119 = scmp.ne.s32.totalorder %s111, %s114
    %p120 = scmp.eq.s32.totalorder %s9, 0
    %p121 = por %p119, %p120
    %p122 = scmp.ne.s32.totalorder %s111, %s114
    %p123 = scmp.eq.s32.totalorder %s14, 3
    %p124 = por %p122, %p123
    %p125 = scmp.ne.s32.totalorder %s114, %s115
    %p126 = scmp.eq.s32.totalorder %s14, 0
    %p127 = por %p125, %p126
    %p128 = scmp.ne.s32.totalorder %s114, %s115
    %p129 = scmp.eq.s32.totalorder %s15, 3
    %p130 = por %p128, %p129
    %p132 = scmp.ne.s32.totalorder %s115, %s131
    %p133 = scmp.eq.s32.totalorder %s15, 0
    %p134 = por %p132, %p133
    %p135 = scmp.le.s32.totalorder 1, %s9
    %p136 = scmp.lt.s32.totalorder %s9, 5
    %p137 = pnand %p135, %p136
    %p138 = pneg %p137
    // Predicated region
    $region9: #{darknet_forward.15} parent=5 // pred_check
      _
    $region10: #{darknet_forward.15} parent=5 // pred_check_branch
      %140 = sbr.rel (%p137) target = $region12
    $region11: #{darknet_forward.15} parent=5 // pred_region
      %s141 = ssub.s32 %s9, 1
      // Predicated region
      $region13: #{darknet_forward.15} parent=11 // pred_check
        %p142 = pneg %p73
      $region14: #{darknet_forward.15} parent=11 // pred_check_branch
        %144 = sbr.rel (%p142) target = $region16
      $region15: #{darknet_forward.15} parent=11 // pred_region
        %p145 = scmp.lt.s32.totalorder %s19, 0
        %s146 = scalar_select %p145, %s19, 0
        %s147 = smul.addr %s146, 4
        %s148 = scalar_lea.vmem %s1, %s147
      $region16: #{darknet_forward.15} parent=11 // pred_fallthru
        _
      // Predicated region
      $region17: #{darknet_forward.15} parent=11 // pred_check
        %p149 = pneg %p99
      $region18: #{darknet_forward.15} parent=11 // pred_check_branch
        %151 = sbr.rel (%p149) target = $region20
      $region19: #{darknet_forward.15} parent=11 // pred_region
        %p152 = scmp.lt.s32.totalorder %s19, 0
        %s153 = scalar_select %p152, %s19, 0
        %s154 = scalar_lea.vmem %s2, %s153
      $region20: #{darknet_forward.15} parent=11 // pred_fallthru
        _
    $region12: #{darknet_forward.15} parent=5 // pred_fallthru
      _
    %p155 = scmp.lt.s32.totalorder %s9, 4
    // Predicated region
    $region21: #{darknet_forward.15} parent=5 // pred_check
      %p156 = pneg %p155
    $region22: #{darknet_forward.15} parent=5 // pred_check_branch
      %158 = sbr.rel (%p156) target = $region24
    $region23: #{darknet_forward.15} parent=5 // pred_region
      // Predicated region
      $region25: #{darknet_forward.15} parent=23 // pred_check
        %p159 = pneg %p41
      $region26: #{darknet_forward.15} parent=23 // pred_check_branch
        %161 = sbr.rel (%p159) target = $region28
      $region27: #{darknet_forward.15} parent=23 // pred_region
        %s162 = smul.u32 16, %s16
        %p163 = scmp.lt.s32.totalorder %s162, 63
        %s164 = scalar_select %p163, %s162, 63
        %s165 = smul.addr %s164, 2
        %s166 = smul.addr %s165, 4
        %s167 = scalar_lea.vmem %s0, %s166
        %s168 = smul.u32 16, %s16
      $region28: #{darknet_forward.15} parent=23 // pred_fallthru
        _
    $region24: #{darknet_forward.15} parent=5 // pred_fallthru
      _
    %p169 = scmp.le.s32.totalorder 1, %s9
    %p170 = scmp.lt.s32.totalorder %s9, 5
    %p171 = pnand %p169, %p170
    %p172 = pneg %p171
    // Predicated region
    $region29: #{darknet_forward.15} parent=5 // pred_check
      _
    $region30: #{darknet_forward.15} parent=5 // pred_check_branch
      %174 = sbr.rel (%p171) target = $region32
    $region31: #{darknet_forward.15} parent=5 // pred_region
      %s175 = ssub.s32 %s9, 1
      %s176 = smul.u32 16, %s18
      %p177 = scmp.lt.s32.totalorder %s176, 63
      %s178 = scalar_select %p177, %s176, 63
      %s179 = smul.addr %s178, 2
      %s180 = smul.addr %s179, 4
      %s181 = scalar_lea.vmem %s0, %s180
      %p182 = pneg %p47
      %p183 = pneg %p44
      %p184 = scmp.lt.s32.totalorder %s19, 0
      %s185 = scalar_select %p184, %s19, 0
      %s186 = smul.addr %s185, 4
      %s187 = scalar_lea.vmem %s1, %s186
      %p188 = pneg %p73
      %p189 = pneg %p70
      %p190 = scmp.lt.s32.totalorder %s19, 0
      %s191 = scalar_select %p190, %s19, 0
      %s192 = scalar_lea.vmem %s2, %s191
      %p193 = pneg %p99
      %p194 = pneg %p96
      %p195 = pneg %p127
      %p196 = pneg %p124
      %s197 = smul.u32 16, %s18
      %p198 = scmp.lt.s32.totalorder %s197, 63
      %s199 = scalar_select %p198, %s197, 63
      %p200 = scmp.lt.s32.totalorder %s19, 0
      %s201 = scalar_select %p200, %s19, 0
      %s202 = sadd.s32 %s201, %s199
      %s203 = smul.addr %s202, 4
      %s204 = scalar_lea.vmem %s3, %s203
      %s205 = smul.u32 16, %s18
      %p206 = scmp.lt.s32.totalorder %s205, 63
      %s207 = scalar_select %p206, %s205, 63
      %s208 = smul.addr %s207, 2
      %s209 = smul.addr %s208, 4
      %s210 = scalar_lea.vmem %s0, %s209
      %s211 = smul.u32 16, %s18
      %p212 = scmp.lt.s32.totalorder %s19, 0
      %s213 = scalar_select %p212, %s19, 0
      %s214 = smul.addr %s213, 4
      %s215 = scalar_lea.vmem %s1, %s214
      %p216 = scmp.lt.s32.totalorder %s19, 0
      %s217 = scalar_select %p216, %s19, 0
      %s218 = scalar_lea.vmem %s2, %s217
      %s219 = smul.u32 16, %s18
      %p220 = scmp.lt.s32.totalorder %s219, 63
      %s221 = scalar_select %p220, %s219, 63
      %p222 = scmp.lt.s32.totalorder %s19, 0
      %s223 = scalar_select %p222, %s19, 0
      %s224 = sadd.s32 %s223, %s221
      %s225 = smul.addr %s224, 4
      %s226 = scalar_lea.vmem %s3, %s225
      %s227 = smul.u32 16, %s18
      %v229 = vld [vmem:[%s210] sm:$0xff]
      %v230 = vld [vmem:[%s210 + $0x8] sm:$0xff]
      %v231 = vld [vmem:[%s210 + $0x10] sm:$0xff]
      %v232 = vld [vmem:[%s210 + $0x18] sm:$0xff]
      %v233 = vld [vmem:[%s210 + $0x20] sm:$0xff]
      %v234 = vld [vmem:[%s210 + $0x28] sm:$0xff]
      %v235 = vld [vmem:[%s210 + $0x30] sm:$0xff]
      %v236 = vld [vmem:[%s210 + $0x38] sm:$0xff]
      %v237 = vld [vmem:[%s210 + $0x40] sm:$0xff]
      %v238 = vld [vmem:[%s210 + $0x48] sm:$0xff]
      %v239 = vld [vmem:[%s210 + $0x50] sm:$0xff]
      %v240 = vld [vmem:[%s210 + $0x58] sm:$0xff]
      %v241 = vld [vmem:[%s210 + $0x60] sm:$0xff]
      %v242 = vld [vmem:[%s210 + $0x68] sm:$0xff]
      %v243 = vld [vmem:[%s210 + $0x70] sm:$0xff]
      %v244 = vld [vmem:[%s210 + $0x78] sm:$0xff]
      %v245 = vld [vmem:[%s215] sm:$0xf]
      %v246 = vld [vmem:[%s215 + $0x4] sm:$0xf]
      %v247 = vld [vmem:[%s215 + $0x8] sm:$0xf]
      %v248 = vld [vmem:[%s215 + $0xc] sm:$0xf]
      %v249 = vld [vmem:[%s215 + $0x10] sm:$0xf]
      %v250 = vld [vmem:[%s215 + $0x14] sm:$0xf]
      %v251 = vld [vmem:[%s215 + $0x18] sm:$0xf]
      %v252 = vld [vmem:[%s215 + $0x1c] sm:$0xf]
      %v253 = vld [vmem:[%s215 + $0x20] sm:$0xf]
      %v254 = vld [vmem:[%s215 + $0x24] sm:$0xf]
      %v255 = vld [vmem:[%s215 + $0x28] sm:$0xf]
      %v256 = vld [vmem:[%s215 + $0x2c] sm:$0xf]
      %v257 = vld [vmem:[%s215 + $0x30] sm:$0xf]
      %v258 = vld [vmem:[%s215 + $0x34] sm:$0xf]
      %v259 = vld [vmem:[%s215 + $0x38] sm:$0xf]
      %v260 = vld [vmem:[%s215 + $0x3c] sm:$0xf]
      %v261 = vld [vmem:[%s215 + $0x40] sm:$0xf]
      %v262 = vld [vmem:[%s215 + $0x44] sm:$0xf]
      %v263 = vld [vmem:[%s215 + $0x48] sm:$0x3]
      %v264 = vld [vmem:[%s218] sm:$0x1]
      %v266 = vlaneseq
      %v267 = vshrl.u32 %v266, 7
      %v268 = vsub.s32 0, %v267
      %v269 = vrot.slane %v264, %v268
      %v287 = vunpack.c.l.b16 %v229
      %v288 = vunpack.c.h.b16 %v229
      %v289 = vunpack.c.l.b16 %v230
      %v290 = vunpack.c.h.b16 %v230
      %v291 = vunpack.c.l.b16 %v231
      %v292 = vunpack.c.h.b16 %v231
      %v293 = vunpack.c.l.b16 %v232
      %v294 = vunpack.c.h.b16 %v232
      %v295 = vunpack.c.l.b16 %v233
      %v296 = vunpack.c.h.b16 %v233
      %v297 = vunpack.c.l.b16 %v234
      %v298 = vunpack.c.h.b16 %v234
      %v299 = vunpack.c.l.b16 %v235
      %v300 = vunpack.c.h.b16 %v235
      %v301 = vunpack.c.l.b16 %v236
      %v302 = vunpack.c.h.b16 %v236
      %v303 = vunpack.c.l.b16 %v237
      %v304 = vunpack.c.h.b16 %v237
      %v305 = vunpack.c.l.b16 %v238
      %v306 = vunpack.c.h.b16 %v238
      %v307 = vunpack.c.l.b16 %v239
      %v308 = vunpack.c.h.b16 %v239
      %v309 = vunpack.c.l.b16 %v240
      %v310 = vunpack.c.h.b16 %v240
      %v311 = vunpack.c.l.b16 %v241
      %v312 = vunpack.c.h.b16 %v241
      %v313 = vunpack.c.l.b16 %v242
      %v314 = vunpack.c.h.b16 %v242
      %v315 = vunpack.c.l.b16 %v243
      %v316 = vunpack.c.h.b16 %v243
      %v317 = vunpack.c.l.b16 %v244
      %v318 = vunpack.c.h.b16 %v244
      %v319 = vpack.c.b16 %v289, %v287
      %v320 = vpack.c.b16 %v290, %v288
      %v321 = vpack.c.b16 %v293, %v291
      %v322 = vpack.c.b16 %v294, %v292
      %v323 = vpack.c.b16 %v297, %v295
      %v324 = vpack.c.b16 %v298, %v296
      %v325 = vpack.c.b16 %v301, %v299
      %v326 = vpack.c.b16 %v302, %v300
      %v327 = vpack.c.b16 %v305, %v303
      %v328 = vpack.c.b16 %v306, %v304
      %v329 = vpack.c.b16 %v309, %v307
      %v330 = vpack.c.b16 %v310, %v308
      %v331 = vpack.c.b16 %v313, %v311
      %v332 = vpack.c.b16 %v314, %v312
      %v333 = vpack.c.b16 %v317, %v315
      %v334 = vpack.c.b16 %v318, %v316
      %v362 = vunpack.c.l.b16 %v245
      %v363 = vunpack.c.l.b16 %v246
      %v364 = vunpack.c.l.b16 %v247
      %v365 = vunpack.c.l.b16 %v248
      %v366 = vunpack.c.l.b16 %v249
      %v367 = vunpack.c.l.b16 %v250
      %v368 = vunpack.c.l.b16 %v251
      %v369 = vunpack.c.l.b16 %v252
      %v370 = vunpack.c.l.b16 %v253
      %v371 = vunpack.c.l.b16 %v254
      %v372 = vunpack.c.l.b16 %v255
      %v373 = vunpack.c.l.b16 %v256
      %v374 = vunpack.c.l.b16 %v257
      %v375 = vunpack.c.l.b16 %v258
      %v376 = vunpack.c.l.b16 %v259
      %v377 = vunpack.c.l.b16 %v260
      %v378 = vunpack.c.l.b16 %v261
      %v379 = vunpack.c.l.b16 %v262
      %v380 = vunpack.c.l.b16 %v263
      %v381 = vpack.c.b16 %v363, %v362
      %v382 = vpack.c.b16 %v365, %v364
      %v383 = vpack.c.b16 %v367, %v366
      %v384 = vpack.c.b16 %v369, %v368
      %v385 = vpack.c.b16 %v371, %v370
      %v386 = vpack.c.b16 %v373, %v372
      %v387 = vpack.c.b16 %v375, %v374
      %v388 = vpack.c.b16 %v377, %v376
      %v389 = vpack.c.b16 %v379, %v378
      %v390 = vpack.c.b16 %v380, %v380
      %vm400 = vcmask 154624
      %v402 = vsel %vm400, %v320, 0
      %v405 = vsel %vm400, %v322, 0
      %v408 = vsel %vm400, %v324, 0
      %v411 = vsel %vm400, %v326, 0
      %v414 = vsel %vm400, %v328, 0
      %v417 = vsel %vm400, %v330, 0
      %v420 = vsel %vm400, %v332, 0
      %v423 = vsel %vm400, %v334, 0
      %vm425 = vcmask 1040384
      %vm426 = vcmask 1041408
      %v427 = vsel %vm425, 4294967295, 65535
      %v428 = vsel %vm426, %v427, 0
      %v430 = vand.u32 %v390, %v428
      %432 = vmatprep.subr.bf16.mxu0 0
      %433 = vmatpush1.bf16.msra.mxu0 %v381
      %434 = vmatprep.subr.bf16.mxu0 0
      %435 = vmatpush1.bf16.msra.mxu0 %v382
      %436 = vmatprep.subr.bf16.mxu0 0
      %437 = vmatpush1.bf16.msra.mxu0 %v383
      %438 = vmatprep.subr.bf16.mxu0 0
      %439 = vmatpush1.bf16.msra.mxu0 %v384
      %440 = vmatprep.subr.bf16.mxu0 0
      %441 = vmatpush1.bf16.msra.mxu0 %v385
      %442 = vmatprep.subr.bf16.mxu0 0
      %443 = vmatpush1.bf16.msra.mxu0 %v386
      %444 = vmatprep.subr.bf16.mxu0 0
      %445 = vmatpush1.bf16.msra.mxu0 %v387
      %446 = vmatprep.subr.bf16.mxu0 0
      %447 = vmatpush1.bf16.msra.mxu0 %v388
      %448 = vmatprep.subr.bf16.mxu0 0
      %449 = vmatpush1.bf16.msra.mxu0 %v389
      %450 = vmatprep.subr.bf16.mxu0 0
      %451 = vmatpush1.bf16.msra.mxu0 %v430
      %452 = vmatprep.subr.bf16.mxu0 0
      %453 = vmatpush1.bf16.msra.mxu0 0
      %454 = vmatprep.subr.bf16.mxu0 0
      %455 = vmatpush1.bf16.msra.mxu0 0
      %456 = vmatprep.subr.bf16.mxu0 0
      %457 = vmatpush1.bf16.msra.mxu0 0
      %458 = vmatprep.subr.bf16.mxu0 0
      %459 = vmatpush1.bf16.msra.mxu0 0
      %460 = vmatprep.subr.bf16.mxu0 0
      %461 = vmatpush1.bf16.msra.mxu0 0
      %462 = vmatprep.subr.bf16.mxu0 0
      %463 = vmatpush1.bf16.msra.mxu0 0
      %464 = vmatprep.mubr.bf16.mxu0 %v402
      %465 = vmatmul.mubr.bf16.gmra.mrb[0].mxu0 %v319
      %v466 = vpop.f32.mrb[0].mxu0
      %v467 = vadd.f32 %v269, %v466
      %v468 = vpop.f32.mrb[0].mxu0
      %v469 = vpop.f32.mrb[0].mxu0
      %v470 = vadd.f32 %v269, %v469
      %v471 = vpop.f32.mrb[0].mxu0
      %472 = vmatprep.mubr.bf16.mxu0 %v405
      %473 = vmatmul.mubr.bf16.gmra.mrb[0].mxu0 %v321
      %v474 = vpop.f32.mrb[0].mxu0
      %v475 = vadd.f32 %v269, %v474
      %v476 = vpop.f32.mrb[0].mxu0
      %v477 = vpop.f32.mrb[0].mxu0
      %v478 = vadd.f32 %v269, %v477
      %v479 = vpop.f32.mrb[0].mxu0
      %480 = vmatprep.mubr.bf16.mxu0 %v408
      %481 = vmatmul.mubr.bf16.gmra.mrb[0].mxu0 %v323
      %v482 = vpop.f32.mrb[0].mxu0
      %v483 = vadd.f32 %v269, %v482
      %v484 = vpop.f32.mrb[0].mxu0
      %v485 = vpop.f32.mrb[0].mxu0
      %v486 = vadd.f32 %v269, %v485
      %v487 = vpop.f32.mrb[0].mxu0
      %488 = vmatprep.mubr.bf16.mxu0 %v411
      %489 = vmatmul.mubr.bf16.gmra.mrb[0].mxu0 %v325
      %v490 = vpop.f32.mrb[0].mxu0
      %v491 = vadd.f32 %v269, %v490
      %v492 = vpop.f32.mrb[0].mxu0
      %v493 = vpop.f32.mrb[0].mxu0
      %v494 = vadd.f32 %v269, %v493
      %v495 = vpop.f32.mrb[0].mxu0
      %496 = vmatprep.mubr.bf16.mxu0 %v414
      %497 = vmatmul.mubr.bf16.gmra.mrb[0].mxu0 %v327
      %v498 = vpop.f32.mrb[0].mxu0
      %v499 = vadd.f32 %v269, %v498
      %v500 = vpop.f32.mrb[0].mxu0
      %v501 = vpop.f32.mrb[0].mxu0
      %v502 = vadd.f32 %v269, %v501
      %v503 = vpop.f32.mrb[0].mxu0
      %504 = vmatprep.mubr.bf16.mxu0 %v417
      %505 = vmatmul.mubr.bf16.gmra.mrb[0].mxu0 %v329
      %v506 = vpop.f32.mrb[0].mxu0
      %v507 = vadd.f32 %v269, %v506
      %v508 = vpop.f32.mrb[0].mxu0
      %v509 = vpop.f32.mrb[0].mxu0
      %v510 = vadd.f32 %v269, %v509
      %v511 = vpop.f32.mrb[0].mxu0
      %512 = vmatprep.mubr.bf16.mxu0 %v420
      %513 = vmatmul.mubr.bf16.gmra.mrb[0].mxu0 %v331
      %v514 = vpop.f32.mrb[0].mxu0
      %v515 = vadd.f32 %v269, %v514
      %v516 = vpop.f32.mrb[0].mxu0
      %v517 = vpop.f32.mrb[0].mxu0
      %v518 = vadd.f32 %v269, %v517
      %v519 = vpop.f32.mrb[0].mxu0
      %520 = vmatprep.mubr.bf16.mxu0 %v423
      %521 = vmatmul.mubr.bf16.gmra.mrb[0].mxu0 %v333
      %v522 = vpop.f32.mrb[0].mxu0
      %v523 = vadd.f32 %v269, %v522
      %v524 = vpop.f32.mrb[0].mxu0
      %v525 = vpop.f32.mrb[0].mxu0
      %v526 = vadd.f32 %v269, %v525
      %v527 = vpop.f32.mrb[0].mxu0
      %528 = vdwg.mxu0
      %vm529 = vcmp.ge.f32.partialorder %v467, 0.0
      %vm530 = vcmp.ge.f32.partialorder %v470, 0.0
      %vm531 = vcmp.ge.f32.partialorder %v475, 0.0
      %vm532 = vcmp.ge.f32.partialorder %v478, 0.0
      %vm533 = vcmp.ge.f32.partialorder %v483, 0.0
      %vm534 = vcmp.ge.f32.partialorder %v486, 0.0
      %vm535 = vcmp.ge.f32.partialorder %v491, 0.0
      %vm536 = vcmp.ge.f32.partialorder %v494, 0.0
      %vm537 = vcmp.ge.f32.partialorder %v499, 0.0
      %vm538 = vcmp.ge.f32.partialorder %v502, 0.0
      %vm539 = vcmp.ge.f32.partialorder %v507, 0.0
      %vm540 = vcmp.ge.f32.partialorder %v510, 0.0
      %vm541 = vcmp.ge.f32.partialorder %v515, 0.0
      %vm542 = vcmp.ge.f32.partialorder %v518, 0.0
      %vm543 = vcmp.ge.f32.partialorder %v523, 0.0
      %vm544 = vcmp.ge.f32.partialorder %v526, 0.0
      %v545 = vmul.f32 %v467, 0.01
      %v546 = vmul.f32 %v470, 0.01
      %v547 = vmul.f32 %v475, 0.01
      %v548 = vmul.f32 %v478, 0.01
      %v549 = vmul.f32 %v483, 0.01
      %v550 = vmul.f32 %v486, 0.01
      %v551 = vmul.f32 %v491, 0.01
      %v552 = vmul.f32 %v494, 0.01
      %v553 = vmul.f32 %v499, 0.01
      %v554 = vmul.f32 %v502, 0.01
      %v555 = vmul.f32 %v507, 0.01
      %v556 = vmul.f32 %v510, 0.01
      %v557 = vmul.f32 %v515, 0.01
      %v558 = vmul.f32 %v518, 0.01
      %v559 = vmul.f32 %v523, 0.01
      %v560 = vmul.f32 %v526, 0.01
      %v561 = vsel %vm529, %v467, %v545
      %v562 = vsel %vm530, %v470, %v546
      %v563 = vsel %vm531, %v475, %v547
      %v564 = vsel %vm532, %v478, %v548
      %v565 = vsel %vm533, %v483, %v549
      %v566 = vsel %vm534, %v486, %v550
      %v567 = vsel %vm535, %v491, %v551
      %v568 = vsel %vm536, %v494, %v552
      %v569 = vsel %vm537, %v499, %v553
      %v570 = vsel %vm538, %v502, %v554
      %v571 = vsel %vm539, %v507, %v555
      %v572 = vsel %vm540, %v510, %v556
      %v573 = vsel %vm541, %v515, %v557
      %v574 = vsel %vm542, %v518, %v558
      %v575 = vsel %vm543, %v523, %v559
      %v576 = vsel %vm544, %v526, %v560
      %v577 = vpack.c.bf16 %v562, %v561
      %v578 = vpack.c.bf16 %v564, %v563
      %v579 = vpack.c.bf16 %v566, %v565
      %v580 = vpack.c.bf16 %v568, %v567
      %v581 = vpack.c.bf16 %v570, %v569
      %v582 = vpack.c.bf16 %v572, %v571
      %v583 = vpack.c.bf16 %v574, %v573
      %v584 = vpack.c.bf16 %v576, %v575
      %v593 = vunpack.c.l.b16 %v577
      %v594 = vunpack.c.h.b16 %v577
      %v595 = vunpack.c.l.b16 %v578
      %v596 = vunpack.c.h.b16 %v578
      %v597 = vunpack.c.l.b16 %v579
      %v598 = vunpack.c.h.b16 %v579
      %v599 = vunpack.c.l.b16 %v580
      %v600 = vunpack.c.h.b16 %v580
      %v601 = vunpack.c.l.b16 %v581
      %v602 = vunpack.c.h.b16 %v581
      %v603 = vunpack.c.l.b16 %v582
      %v604 = vunpack.c.h.b16 %v582
      %v605 = vunpack.c.l.b16 %v583
      %v606 = vunpack.c.h.b16 %v583
      %v607 = vunpack.c.l.b16 %v584
      %v608 = vunpack.c.h.b16 %v584
      %v609 = vpack.c.b16 %v593, %v593
      %v610 = vpack.c.b16 %v594, %v594
      %v611 = vpack.c.b16 %v595, %v595
      %v612 = vpack.c.b16 %v596, %v596
      %v613 = vpack.c.b16 %v597, %v597
      %v614 = vpack.c.b16 %v598, %v598
      %v615 = vpack.c.b16 %v599, %v599
      %v616 = vpack.c.b16 %v600, %v600
      %v617 = vpack.c.b16 %v601, %v601
      %v618 = vpack.c.b16 %v602, %v602
      %v619 = vpack.c.b16 %v603, %v603
      %v620 = vpack.c.b16 %v604, %v604
      %v621 = vpack.c.b16 %v605, %v605
      %v622 = vpack.c.b16 %v606, %v606
      %v623 = vpack.c.b16 %v607, %v607
      %v624 = vpack.c.b16 %v608, %v608
      %vm641 = vcmask 519168
      %642 = vst.msk [vmem:[%s226] sm:$0xf] %vm641, %v609
      %643 = vst.msk [vmem:[%s226 + $0x4] sm:$0xf] %vm641, %v610
      %644 = vst.msk [vmem:[%s226 + $0x8] sm:$0xf] %vm641, %v611
      %645 = vst.msk [vmem:[%s226 + $0xc] sm:$0xf] %vm641, %v612
      %646 = vst.msk [vmem:[%s226 + $0x10] sm:$0xf] %vm641, %v613
      %647 = vst.msk [vmem:[%s226 + $0x14] sm:$0xf] %vm641, %v614
      %648 = vst.msk [vmem:[%s226 + $0x18] sm:$0xf] %vm641, %v615
      %649 = vst.msk [vmem:[%s226 + $0x1c] sm:$0xf] %vm641, %v616
      %650 = vst.msk [vmem:[%s226 + $0x20] sm:$0xf] %vm641, %v617
      %651 = vst.msk [vmem:[%s226 + $0x24] sm:$0xf] %vm641, %v618
      %652 = vst.msk [vmem:[%s226 + $0x28] sm:$0xf] %vm641, %v619
      %653 = vst.msk [vmem:[%s226 + $0x2c] sm:$0xf] %vm641, %v620
      %654 = vst.msk [vmem:[%s226 + $0x30] sm:$0xf] %vm641, %v621
      %655 = vst.msk [vmem:[%s226 + $0x34] sm:$0xf] %vm641, %v622
      %656 = vst.msk [vmem:[%s226 + $0x38] sm:$0xf] %vm641, %v623
      %657 = vst.msk [vmem:[%s226 + $0x3c] sm:$0xf] %vm641, %v624
      %s658 = smul.u32 16, %s18
      %p659 = scmp.lt.s32.totalorder %s658, 63
      %s660 = scalar_select %p659, %s658, 63
      %p661 = scmp.lt.s32.totalorder %s19, 0
      %s662 = scalar_select %p661, %s19, 0
      %s663 = sadd.s32 %s662, %s660
      %s664 = smul.addr %s663, 4
      %s665 = scalar_lea.vmem %s3, %s664
      // Predicated region
      $region33: #{darknet_forward.15} parent=31 // pred_check
        %p666 = pneg %p124
      $region34: #{darknet_forward.15} parent=31 // pred_check_branch
        %668 = sbr.rel (%p666) target = $region36
      $region35: #{darknet_forward.15} parent=31 // pred_region
        %s669 = smul.u32 16, %s18
      $region36: #{darknet_forward.15} parent=31 // pred_fallthru
        _
    $region32: #{darknet_forward.15} parent=5 // pred_fallthru
      _
    %p670 = scmp.le.s32.totalorder 2, %s9
    // Predicated region
    $region37: #{darknet_forward.15} parent=5 // pred_check
      %p671 = pneg %p670
    $region38: #{darknet_forward.15} parent=5 // pred_check_branch
      %673 = sbr.rel (%p671) target = $region40
    $region39: #{darknet_forward.15} parent=5 // pred_region
      %s674 = ssub.s32 %s9, 2
      // Predicated region
      $region41: #{darknet_forward.15} parent=39 // pred_check
        %p675 = pneg %p130
      $region42: #{darknet_forward.15} parent=39 // pred_check_branch
        %677 = sbr.rel (%p675) target = $region44
      $region43: #{darknet_forward.15} parent=39 // pred_region
        %s678 = smul.u32 16, %s20
        %p679 = scmp.lt.s32.totalorder %s678, 63
        %s680 = scalar_select %p679, %s678, 63
        %p681 = scmp.lt.s32.totalorder %s21, 0
        %s682 = scalar_select %p681, %s21, 0
        %s683 = sadd.s32 %s682, %s680
        %s684 = smul.addr %s683, 4
        %s685 = scalar_lea.vmem %s3, %s684
      $region44: #{darknet_forward.15} parent=39 // pred_fallthru
        _
    $region40: #{darknet_forward.15} parent=5 // pred_fallthru
      _
  $region6: #{darknet_forward.15} parent=0 // loop_footer
    %s13 = sadd.s32 1, %s9
  $region7: #{darknet_forward.15} parent=0 // loop_footer_branch
    %8 = sbr.rel target = $region3
  $region8: #{darknet_forward.15} parent=0 // loop_exit
    _

// kernel: darknet_forward.16
$region0: #{darknet_forward.16}
  #allocation0 [shape = 'u32[]', space=smem, size = 0x4, offset = 0x4, fixed_abs, tag = 'smem constant byte address 0x4 - core index']
  #allocation1 [shape = 'u32[144,128]{1,0:T(1,128)}', space=vmem, size = 0x12000, scoped, tag = 'internal scratch']
  %s0 = inlined_call_operand.vmem [shape: bf16[128,576], index: 0, kind: input, shape index: {}]
  %s1 = inlined_call_operand.vmem [shape: bf16[576,16], index: 1, kind: input, shape index: {}]
  %s2 = inlined_call_operand.vmem [shape: f32[1,16], index: 2, kind: input, shape index: {}]
  %s3 = inlined_call_operand.vmem [shape: bf16[128,16], index: 3, kind: output, shape index: {}]
  %s4 = sld [smem:[#allocation0]]
  $region22: #{darknet_forward.16} parent=0
    _
  %s6 = ssub.s32 1, %s4
  %s7 = scalar_select 0, %s6, %s4
  // Predicated region
  $region2: #{darknet_forward.16} parent=0 // pred_check
    _
  $region3: #{darknet_forward.16} parent=0 // pred_check_branch
    %9 = sbr.rel (0) target = $region5
  $region4: #{darknet_forward.16} parent=0 // pred_region
    _
  $region5: #{darknet_forward.16} parent=0 // pred_fallthru
    _
  // Predicated region
  $region6: #{darknet_forward.16} parent=0 // pred_check
    _
  $region7: #{darknet_forward.16} parent=0 // pred_check_branch
    %11 = sbr.rel (0) target = $region9
  $region8: #{darknet_forward.16} parent=0 // pred_region
    _
  $region9: #{darknet_forward.16} parent=0 // pred_fallthru
    _
  // Predicated region
  $region10: #{darknet_forward.16} parent=0 // pred_check
    _
  $region11: #{darknet_forward.16} parent=0 // pred_check_branch
    %13 = sbr.rel (0) target = $region13
  $region12: #{darknet_forward.16} parent=0 // pred_region
    _
  $region13: #{darknet_forward.16} parent=0 // pred_fallthru
    _
  %v15 = vld [vmem:[%s0] sm:$0xff]
  %v16 = vld [vmem:[%s0 + $0x8] sm:$0xff]
  %v17 = vld [vmem:[%s0 + $0x10] sm:$0xf]
  %v18 = vld [vmem:[%s0 + $0x14] sm:$0xff]
  %v19 = vld [vmem:[%s0 + $0x1c] sm:$0xff]
  %v20 = vld [vmem:[%s0 + $0x24] sm:$0xf]
  %v21 = vld [vmem:[%s0 + $0x28] sm:$0xff]
  %v22 = vld [vmem:[%s0 + $0x30] sm:$0xff]
  %v23 = vld [vmem:[%s0 + $0x38] sm:$0xf]
  %v24 = vld [vmem:[%s0 + $0x3c] sm:$0xff]
  %v25 = vld [vmem:[%s0 + $0x44] sm:$0xff]
  %v26 = vld [vmem:[%s0 + $0x4c] sm:$0xf]
  %v27 = vld [vmem:[%s0 + $0x50] sm:$0xff]
  %v28 = vld [vmem:[%s0 + $0x58] sm:$0xff]
  %v29 = vld [vmem:[%s0 + $0x60] sm:$0xf]
  %v30 = vld [vmem:[%s0 + $0x64] sm:$0xff]
  %v31 = vld [vmem:[%s0 + $0x6c] sm:$0xff]
  %v32 = vld [vmem:[%s0 + $0x74] sm:$0xf]
  %v33 = vld [vmem:[%s0 + $0x78] sm:$0xff]
  %v34 = vld [vmem:[%s0 + $0x80] sm:$0xff]
  %v35 = vld [vmem:[%s0 + $0x88] sm:$0xf]
  %v36 = vld [vmem:[%s0 + $0x8c] sm:$0xff]
  %v37 = vld [vmem:[%s0 + $0x94] sm:$0xff]
  %v38 = vld [vmem:[%s0 + $0x9c] sm:$0xf]
  %v39 = vld [vmem:[%s0 + $0xa0] sm:$0xff]
  %v40 = vld [vmem:[%s0 + $0xa8] sm:$0xff]
  %v41 = vld [vmem:[%s0 + $0xb0] sm:$0xf]
  %v42 = vld [vmem:[%s0 + $0xb4] sm:$0xff]
  %v43 = vld [vmem:[%s0 + $0xbc] sm:$0xff]
  %v44 = vld [vmem:[%s0 + $0xc4] sm:$0xf]
  %v45 = vld [vmem:[%s0 + $0xc8] sm:$0xff]
  %v46 = vld [vmem:[%s0 + $0xd0] sm:$0xff]
  %v47 = vld [vmem:[%s0 + $0xd8] sm:$0xf]
  %v48 = vld [vmem:[%s0 + $0xdc] sm:$0xff]
  %v49 = vld [vmem:[%s0 + $0xe4] sm:$0xff]
  %v50 = vld [vmem:[%s0 + $0xec] sm:$0xf]
  %v51 = vld [vmem:[%s0 + $0xf0] sm:$0xff]
  %v52 = vld [vmem:[%s0 + $0xf8] sm:$0xff]
  %v53 = vld [vmem:[%s0 + $0x100] sm:$0xf]
  %v54 = vld [vmem:[%s0 + $0x104] sm:$0xff]
  %v55 = vld [vmem:[%s0 + $0x10c] sm:$0xff]
  %v56 = vld [vmem:[%s0 + $0x114] sm:$0xf]
  %v57 = vld [vmem:[%s0 + $0x118] sm:$0xff]
  %v58 = vld [vmem:[%s0 + $0x120] sm:$0xff]
  %v59 = vld [vmem:[%s0 + $0x128] sm:$0xf]
  %v60 = vld [vmem:[%s0 + $0x12c] sm:$0xff]
  %v61 = vld [vmem:[%s0 + $0x134] sm:$0xff]
  %v62 = vld [vmem:[%s0 + $0x13c] sm:$0xf]
  %v63 = vld [vmem:[%s1] sm:$0xf]
  %v64 = vld [vmem:[%s1 + $0x4] sm:$0xf]
  %v65 = vld [vmem:[%s1 + $0x8] sm:$0xf]
  %v66 = vld [vmem:[%s1 + $0xc] sm:$0xf]
  %v67 = vld [vmem:[%s1 + $0x10] sm:$0xf]
  %v68 = vld [vmem:[%s1 + $0x14] sm:$0xf]
  %v69 = vld [vmem:[%s1 + $0x18] sm:$0xf]
  %v70 = vld [vmem:[%s1 + $0x1c] sm:$0xf]
  %v71 = vld [vmem:[%s1 + $0x20] sm:$0xf]
  %v72 = vld [vmem:[%s1 + $0x24] sm:$0xf]
  %v73 = vld [vmem:[%s1 + $0x28] sm:$0xf]
  %v74 = vld [vmem:[%s1 + $0x2c] sm:$0xf]
  %v75 = vld [vmem:[%s1 + $0x30] sm:$0xf]
  %v76 = vld [vmem:[%s1 + $0x34] sm:$0xf]
  %v77 = vld [vmem:[%s1 + $0x38] sm:$0xf]
  %v78 = vld [vmem:[%s1 + $0x3c] sm:$0xf]
  %v79 = vld [vmem:[%s1 + $0x40] sm:$0xf]
  %v80 = vld [vmem:[%s1 + $0x44] sm:$0xf]
  %v81 = vld [vmem:[%s1 + $0x48] sm:$0xf]
  %v82 = vld [vmem:[%s1 + $0x4c] sm:$0xf]
  %v83 = vld [vmem:[%s1 + $0x50] sm:$0xf]
  %v84 = vld [vmem:[%s1 + $0x54] sm:$0xf]
  %v85 = vld [vmem:[%s1 + $0x58] sm:$0xf]
  %v86 = vld [vmem:[%s1 + $0x5c] sm:$0xf]
  %v87 = vld [vmem:[%s1 + $0x60] sm:$0xf]
  %v88 = vld [vmem:[%s1 + $0x64] sm:$0xf]
  %v89 = vld [vmem:[%s1 + $0x68] sm:$0xf]
  %v90 = vld [vmem:[%s1 + $0x6c] sm:$0xf]
  %v91 = vld [vmem:[%s1 + $0x70] sm:$0xf]
  %v92 = vld [vmem:[%s1 + $0x74] sm:$0xf]
  %v93 = vld [vmem:[%s1 + $0x78] sm:$0xf]
  %v94 = vld [vmem:[%s1 + $0x7c] sm:$0xf]
  %v95 = vld [vmem:[%s1 + $0x80] sm:$0xf]
  %v96 = vld [vmem:[%s1 + $0x84] sm:$0xf]
  %v97 = vld [vmem:[%s1 + $0x88] sm:$0xf]
  %v98 = vld [vmem:[%s1 + $0x8c] sm:$0xf]
  %v99 = vld [vmem:[%s1 + $0x90] sm:$0xf]
  %v100 = vld [vmem:[%s1 + $0x94] sm:$0xf]
  %v101 = vld [vmem:[%s1 + $0x98] sm:$0xf]
  %v102 = vld [vmem:[%s1 + $0x9c] sm:$0xf]
  %v103 = vld [vmem:[%s1 + $0xa0] sm:$0xf]
  %v104 = vld [vmem:[%s1 + $0xa4] sm:$0xf]
  %v105 = vld [vmem:[%s1 + $0xa8] sm:$0xf]
  %v106 = vld [vmem:[%s1 + $0xac] sm:$0xf]
  %v107 = vld [vmem:[%s1 + $0xb0] sm:$0xf]
  %v108 = vld [vmem:[%s1 + $0xb4] sm:$0xf]
  %v109 = vld [vmem:[%s1 + $0xb8] sm:$0xf]
  %v110 = vld [vmem:[%s1 + $0xbc] sm:$0xf]
  %v111 = vld [vmem:[%s1 + $0xc0] sm:$0xf]
  %v112 = vld [vmem:[%s1 + $0xc4] sm:$0xf]
  %v113 = vld [vmem:[%s1 + $0xc8] sm:$0xf]
  %v114 = vld [vmem:[%s1 + $0xcc] sm:$0xf]
  %v115 = vld [vmem:[%s1 + $0xd0] sm:$0xf]
  %v116 = vld [vmem:[%s1 + $0xd4] sm:$0xf]
  %v117 = vld [vmem:[%s1 + $0xd8] sm:$0xf]
  %v118 = vld [vmem:[%s1 + $0xdc] sm:$0xf]
  %v119 = vld [vmem:[%s1 + $0xe0] sm:$0xf]
  %v120 = vld [vmem:[%s1 + $0xe4] sm:$0xf]
  %v121 = vld [vmem:[%s1 + $0xe8] sm:$0xf]
  %v122 = vld [vmem:[%s1 + $0xec] sm:$0xf]
  %v123 = vld [vmem:[%s1 + $0xf0] sm:$0xf]
  %v124 = vld [vmem:[%s1 + $0xf4] sm:$0xf]
  %v125 = vld [vmem:[%s1 + $0xf8] sm:$0xf]
  %v126 = vld [vmem:[%s1 + $0xfc] sm:$0xf]
  %v127 = vld [vmem:[%s1 + $0x100] sm:$0xf]
  %v128 = vld [vmem:[%s1 + $0x104] sm:$0xf]
  %v129 = vld [vmem:[%s1 + $0x108] sm:$0xf]
  %v130 = vld [vmem:[%s1 + $0x10c] sm:$0xf]
  %v131 = vld [vmem:[%s1 + $0x110] sm:$0xf]
  %v132 = vld [vmem:[%s1 + $0x114] sm:$0xf]
  %v133 = vld [vmem:[%s1 + $0x118] sm:$0xf]
  %v134 = vld [vmem:[%s1 + $0x11c] sm:$0xf]
  %v135 = vld [vmem:[%s2] sm:$0x1]
  %v137 = vlaneseq
  %v138 = vshrl.u32 %v137, 7
  %v139 = vsub.s32 0, %v138
  %v140 = vrot.slane %v135, %v139
  %v190 = vunpack.c.l.b16 %v15
  %v191 = vunpack.c.h.b16 %v15
  %v192 = vunpack.c.l.b16 %v16
  %v193 = vunpack.c.h.b16 %v16
  %v194 = vunpack.c.l.b16 %v17
  %v195 = vunpack.c.l.b16 %v18
  %v196 = vunpack.c.h.b16 %v18
  %v197 = vunpack.c.l.b16 %v19
  %v198 = vunpack.c.h.b16 %v19
  %v199 = vunpack.c.l.b16 %v20
  %v200 = vunpack.c.l.b16 %v21
  %v201 = vunpack.c.h.b16 %v21
  %v202 = vunpack.c.l.b16 %v22
  %v203 = vunpack.c.h.b16 %v22
  %v204 = vunpack.c.l.b16 %v23
  %v205 = vunpack.c.l.b16 %v24
  %v206 = vunpack.c.h.b16 %v24
  %v207 = vunpack.c.l.b16 %v25
  %v208 = vunpack.c.h.b16 %v25
  %v209 = vunpack.c.l.b16 %v26
  %v210 = vunpack.c.l.b16 %v27
  %v211 = vunpack.c.h.b16 %v27
  %v212 = vunpack.c.l.b16 %v28
  %v213 = vunpack.c.h.b16 %v28
  %v214 = vunpack.c.l.b16 %v29
  %v215 = vunpack.c.l.b16 %v30
  %v216 = vunpack.c.h.b16 %v30
  %v217 = vunpack.c.l.b16 %v31
  %v218 = vunpack.c.h.b16 %v31
  %v219 = vunpack.c.l.b16 %v32
  %v220 = vunpack.c.l.b16 %v33
  %v221 = vunpack.c.h.b16 %v33
  %v222 = vunpack.c.l.b16 %v34
  %v223 = vunpack.c.h.b16 %v34
  %v224 = vunpack.c.l.b16 %v35
  %v225 = vunpack.c.l.b16 %v36
  %v226 = vunpack.c.h.b16 %v36
  %v227 = vunpack.c.l.b16 %v37
  %v228 = vunpack.c.h.b16 %v37
  %v229 = vunpack.c.l.b16 %v38
  %v230 = vunpack.c.l.b16 %v39
  %v231 = vunpack.c.h.b16 %v39
  %v232 = vunpack.c.l.b16 %v40
  %v233 = vunpack.c.h.b16 %v40
  %v234 = vunpack.c.l.b16 %v41
  %v235 = vunpack.c.l.b16 %v42
  %v236 = vunpack.c.h.b16 %v42
  %v237 = vunpack.c.l.b16 %v43
  %v238 = vunpack.c.h.b16 %v43
  %v239 = vunpack.c.l.b16 %v44
  %v240 = vunpack.c.l.b16 %v45
  %v241 = vunpack.c.h.b16 %v45
  %v242 = vunpack.c.l.b16 %v46
  %v243 = vunpack.c.h.b16 %v46
  %v244 = vunpack.c.l.b16 %v47
  %v245 = vunpack.c.l.b16 %v48
  %v246 = vunpack.c.h.b16 %v48
  %v247 = vunpack.c.l.b16 %v49
  %v248 = vunpack.c.h.b16 %v49
  %v249 = vunpack.c.l.b16 %v50
  %v250 = vunpack.c.l.b16 %v51
  %v251 = vunpack.c.h.b16 %v51
  %v252 = vunpack.c.l.b16 %v52
  %v253 = vunpack.c.h.b16 %v52
  %v254 = vunpack.c.l.b16 %v53
  %v255 = vunpack.c.l.b16 %v54
  %v256 = vunpack.c.h.b16 %v54
  %v257 = vunpack.c.l.b16 %v55
  %v258 = vunpack.c.h.b16 %v55
  %v259 = vunpack.c.l.b16 %v56
  %v260 = vunpack.c.l.b16 %v57
  %v261 = vunpack.c.h.b16 %v57
  %v262 = vunpack.c.l.b16 %v58
  %v263 = vunpack.c.h.b16 %v58
  %v264 = vunpack.c.l.b16 %v59
  %v265 = vunpack.c.l.b16 %v60
  %v266 = vunpack.c.h.b16 %v60
  %v267 = vunpack.c.l.b16 %v61
  %v268 = vunpack.c.h.b16 %v61
  %v269 = vunpack.c.l.b16 %v62
  %v270 = vpack.c.b16 %v195, %v190
  %v271 = vpack.c.b16 %v196, %v191
  %v272 = vpack.c.b16 %v197, %v192
  %v273 = vpack.c.b16 %v198, %v193
  %v274 = vpack.c.b16 %v199, %v194
  %v275 = vpack.c.b16 %v205, %v200
  %v276 = vpack.c.b16 %v206, %v201
  %v277 = vpack.c.b16 %v207, %v202
  %v278 = vpack.c.b16 %v208, %v203
  %v279 = vpack.c.b16 %v209, %v204
  %v280 = vpack.c.b16 %v215, %v210
  %v281 = vpack.c.b16 %v216, %v211
  %v282 = vpack.c.b16 %v217, %v212
  %v283 = vpack.c.b16 %v218, %v213
  %v284 = vpack.c.b16 %v219, %v214
  %v285 = vpack.c.b16 %v225, %v220
  %v286 = vpack.c.b16 %v226, %v221
  %v287 = vpack.c.b16 %v227, %v222
  %v288 = vpack.c.b16 %v228, %v223
  %v289 = vpack.c.b16 %v229, %v224
  %v290 = vpack.c.b16 %v235, %v230
  %v291 = vpack.c.b16 %v236, %v231
  %v292 = vpack.c.b16 %v237, %v232
  %v293 = vpack.c.b16 %v238, %v233
  %v294 = vpack.c.b16 %v239, %v234
  %v295 = vpack.c.b16 %v245, %v240
  %v296 = vpack.c.b16 %v246, %v241
  %v297 = vpack.c.b16 %v247, %v242
  %v298 = vpack.c.b16 %v248, %v243
  %v299 = vpack.c.b16 %v249, %v244
  %v300 = vpack.c.b16 %v255, %v250
  %v301 = vpack.c.b16 %v256, %v251
  %v302 = vpack.c.b16 %v257, %v252
  %v303 = vpack.c.b16 %v258, %v253
  %v304 = vpack.c.b16 %v259, %v254
  %v305 = vpack.c.b16 %v265, %v260
  %v306 = vpack.c.b16 %v266, %v261
  %v307 = vpack.c.b16 %v267, %v262
  %v308 = vpack.c.b16 %v268, %v263
  %v309 = vpack.c.b16 %v269, %v264
  %v414 = vunpack.c.l.b16 %v63
  %v415 = vunpack.c.l.b16 %v64
  %v416 = vunpack.c.l.b16 %v65
  %v417 = vunpack.c.l.b16 %v66
  %v418 = vunpack.c.l.b16 %v67
  %v419 = vunpack.c.l.b16 %v68
  %v420 = vunpack.c.l.b16 %v69
  %v421 = vunpack.c.l.b16 %v70
  %v422 = vunpack.c.l.b16 %v71
  %v423 = vunpack.c.l.b16 %v72
  %v424 = vunpack.c.l.b16 %v73
  %v425 = vunpack.c.l.b16 %v74
  %v426 = vunpack.c.l.b16 %v75
  %v427 = vunpack.c.l.b16 %v76
  %v428 = vunpack.c.l.b16 %v77
  %v429 = vunpack.c.l.b16 %v78
  %v430 = vunpack.c.l.b16 %v79
  %v431 = vunpack.c.l.b16 %v80
  %v432 = vunpack.c.l.b16 %v81
  %v433 = vunpack.c.l.b16 %v82
  %v434 = vunpack.c.l.b16 %v83
  %v435 = vunpack.c.l.b16 %v84
  %v436 = vunpack.c.l.b16 %v85
  %v437 = vunpack.c.l.b16 %v86
  %v438 = vunpack.c.l.b16 %v87
  %v439 = vunpack.c.l.b16 %v88
  %v440 = vunpack.c.l.b16 %v89
  %v441 = vunpack.c.l.b16 %v90
  %v442 = vunpack.c.l.b16 %v91
  %v443 = vunpack.c.l.b16 %v92
  %v444 = vunpack.c.l.b16 %v93
  %v445 = vunpack.c.l.b16 %v94
  %v446 = vunpack.c.l.b16 %v95
  %v447 = vunpack.c.l.b16 %v96
  %v448 = vunpack.c.l.b16 %v97
  %v449 = vunpack.c.l.b16 %v98
  %v450 = vunpack.c.l.b16 %v99
  %v451 = vunpack.c.l.b16 %v100
  %v452 = vunpack.c.l.b16 %v101
  %v453 = vunpack.c.l.b16 %v102
  %v454 = vunpack.c.l.b16 %v103
  %v455 = vunpack.c.l.b16 %v104
  %v456 = vunpack.c.l.b16 %v105
  %v457 = vunpack.c.l.b16 %v106
  %v458 = vunpack.c.l.b16 %v107
  %v459 = vunpack.c.l.b16 %v108
  %v460 = vunpack.c.l.b16 %v109
  %v461 = vunpack.c.l.b16 %v110
  %v462 = vunpack.c.l.b16 %v111
  %v463 = vunpack.c.l.b16 %v112
  %v464 = vunpack.c.l.b16 %v113
  %v465 = vunpack.c.l.b16 %v114
  %v466 = vunpack.c.l.b16 %v115
  %v467 = vunpack.c.l.b16 %v116
  %v468 = vunpack.c.l.b16 %v117
  %v469 = vunpack.c.l.b16 %v118
  %v470 = vunpack.c.l.b16 %v119
  %v471 = vunpack.c.l.b16 %v120
  %v472 = vunpack.c.l.b16 %v121
  %v473 = vunpack.c.l.b16 %v122
  %v474 = vunpack.c.l.b16 %v123
  %v475 = vunpack.c.l.b16 %v124
  %v476 = vunpack.c.l.b16 %v125
  %v477 = vunpack.c.l.b16 %v126
  %v478 = vunpack.c.l.b16 %v127
  %v479 = vunpack.c.l.b16 %v128
  %v480 = vunpack.c.l.b16 %v129
  %v481 = vunpack.c.l.b16 %v130
  %v482 = vunpack.c.l.b16 %v131
  %v483 = vunpack.c.l.b16 %v132
  %v484 = vunpack.c.l.b16 %v133
  %v485 = vunpack.c.l.b16 %v134
  %v486 = vpack.c.b16 %v415, %v414
  %v487 = vpack.c.b16 %v417, %v416
  %v488 = vpack.c.b16 %v419, %v418
  %v489 = vpack.c.b16 %v421, %v420
  %v490 = vpack.c.b16 %v423, %v422
  %v491 = vpack.c.b16 %v425, %v424
  %v492 = vpack.c.b16 %v427, %v426
  %v493 = vpack.c.b16 %v429, %v428
  %v494 = vpack.c.b16 %v431, %v430
  %v495 = vpack.c.b16 %v433, %v432
  %v496 = vpack.c.b16 %v435, %v434
  %v497 = vpack.c.b16 %v437, %v436
  %v498 = vpack.c.b16 %v439, %v438
  %v499 = vpack.c.b16 %v441, %v440
  %v500 = vpack.c.b16 %v443, %v442
  %v501 = vpack.c.b16 %v445, %v444
  %v502 = vpack.c.b16 %v447, %v446
  %v503 = vpack.c.b16 %v449, %v448
  %v504 = vpack.c.b16 %v451, %v450
  %v505 = vpack.c.b16 %v453, %v452
  %v506 = vpack.c.b16 %v455, %v454
  %v507 = vpack.c.b16 %v457, %v456
  %v508 = vpack.c.b16 %v459, %v458
  %v509 = vpack.c.b16 %v461, %v460
  %v510 = vpack.c.b16 %v463, %v462
  %v511 = vpack.c.b16 %v465, %v464
  %v512 = vpack.c.b16 %v467, %v466
  %v513 = vpack.c.b16 %v469, %v468
  %v514 = vpack.c.b16 %v471, %v470
  %v515 = vpack.c.b16 %v473, %v472
  %v516 = vpack.c.b16 %v475, %v474
  %v517 = vpack.c.b16 %v477, %v476
  %v518 = vpack.c.b16 %v479, %v478
  %v519 = vpack.c.b16 %v481, %v480
  %v520 = vpack.c.b16 %v483, %v482
  %v521 = vpack.c.b16 %v485, %v484
  %vm558 = vcmask 523264
  %v560 = vsel %vm558, %v274, 0
  %v563 = vsel %vm558, %v279, 0
  %v566 = vsel %vm558, %v284, 0
  %v569 = vsel %vm558, %v289, 0
  %v572 = vsel %vm558, %v294, 0
  %v575 = vsel %vm558, %v299, 0
  %v578 = vsel %vm558, %v304, 0
  %v581 = vsel %vm558, %v309, 0
  %583 = vmatprep.subr.bf16.mxu0 0
  %584 = vmatpush1.bf16.msra.mxu0 %v486
  %585 = vmatprep.subr.bf16.mxu0 0
  %586 = vmatpush1.bf16.msra.mxu0 %v487
  %587 = vmatprep.subr.bf16.mxu0 0
  %588 = vmatpush1.bf16.msra.mxu0 %v488
  %589 = vmatprep.subr.bf16.mxu0 0
  %590 = vmatpush1.bf16.msra.mxu0 %v489
  %591 = vmatprep.subr.bf16.mxu0 0
  %592 = vmatpush1.bf16.msra.mxu0 %v490
  %593 = vmatprep.subr.bf16.mxu0 0
  %594 = vmatpush1.bf16.msra.mxu0 %v491
  %595 = vmatprep.subr.bf16.mxu0 0
  %596 = vmatpush1.bf16.msra.mxu0 %v492
  %597 = vmatprep.subr.bf16.mxu0 0
  %598 = vmatpush1.bf16.msra.mxu0 %v493
  %599 = vmatprep.subr.bf16.mxu0 0
  %600 = vmatpush1.bf16.msra.mxu0 %v494
  %601 = vmatprep.subr.bf16.mxu0 0
  %602 = vmatpush1.bf16.msra.mxu0 %v495
  %603 = vmatprep.subr.bf16.mxu0 0
  %604 = vmatpush1.bf16.msra.mxu0 %v496
  %605 = vmatprep.subr.bf16.mxu0 0
  %606 = vmatpush1.bf16.msra.mxu0 %v497
  %607 = vmatprep.subr.bf16.mxu0 0
  %608 = vmatpush1.bf16.msra.mxu0 %v498
  %609 = vmatprep.subr.bf16.mxu0 0
  %610 = vmatpush1.bf16.msra.mxu0 %v499
  %611 = vmatprep.subr.bf16.mxu0 0
  %612 = vmatpush1.bf16.msra.mxu0 %v500
  %613 = vmatprep.subr.bf16.mxu0 0
  %614 = vmatpush1.bf16.msra.mxu0 %v501
  %615 = vmatprep.mubr.bf16.mxu0 %v271
  %616 = vmatmul.mubr.bf16.gmra.mrb[0].mxu0 %v270
  %v617 = vpop.f32.mrb[0].mxu0
  %v618 = vadd.f32 %v140, %v617
  %v619 = vpop.f32.mrb[0].mxu0
  %v620 = vpop.f32.mrb[0].mxu0
  %v621 = vadd.f32 %v140, %v620
  %v622 = vpop.f32.mrb[0].mxu0
  %623 = vmatprep.mubr.bf16.mxu0 %v276
  %624 = vmatmul.mubr.bf16.gmra.mrb[0].mxu0 %v275
  %v625 = vpop.f32.mrb[0].mxu0
  %v626 = vadd.f32 %v140, %v625
  %v627 = vpop.f32.mrb[0].mxu0
  %v628 = vpop.f32.mrb[0].mxu0
  %v629 = vadd.f32 %v140, %v628
  %v630 = vpop.f32.mrb[0].mxu0
  %631 = vmatprep.mubr.bf16.mxu0 %v281
  %632 = vmatmul.mubr.bf16.gmra.mrb[0].mxu0 %v280
  %v633 = vpop.f32.mrb[0].mxu0
  %v634 = vadd.f32 %v140, %v633
  %v635 = vpop.f32.mrb[0].mxu0
  %v636 = vpop.f32.mrb[0].mxu0
  %v637 = vadd.f32 %v140, %v636
  %v638 = vpop.f32.mrb[0].mxu0
  %639 = vmatprep.mubr.bf16.mxu0 %v286
  %640 = vmatmul.mubr.bf16.gmra.mrb[0].mxu0 %v285
  %v641 = vpop.f32.mrb[0].mxu0
  %v642 = vadd.f32 %v140, %v641
  %v643 = vpop.f32.mrb[0].mxu0
  %v644 = vpop.f32.mrb[0].mxu0
  %v645 = vadd.f32 %v140, %v644
  %v646 = vpop.f32.mrb[0].mxu0
  %647 = vmatprep.mubr.bf16.mxu0 %v291
  %648 = vmatmul.mubr.bf16.gmra.mrb[0].mxu0 %v290
  %v649 = vpop.f32.mrb[0].mxu0
  %v650 = vadd.f32 %v140, %v649
  %v651 = vpop.f32.mrb[0].mxu0
  %v652 = vpop.f32.mrb[0].mxu0
  %v653 = vadd.f32 %v140, %v652
  %v654 = vpop.f32.mrb[0].mxu0
  %655 = vmatprep.mubr.bf16.mxu0 %v296
  %656 = vmatmul.mubr.bf16.gmra.mrb[0].mxu0 %v295
  %v657 = vpop.f32.mrb[0].mxu0
  %v658 = vadd.f32 %v140, %v657
  %v659 = vpop.f32.mrb[0].mxu0
  %v660 = vpop.f32.mrb[0].mxu0
  %v661 = vadd.f32 %v140, %v660
  %v662 = vpop.f32.mrb[0].mxu0
  %663 = vmatprep.mubr.bf16.mxu0 %v301
  %664 = vmatmul.mubr.bf16.gmra.mrb[0].mxu0 %v300
  %v665 = vpop.f32.mrb[0].mxu0
  %v666 = vadd.f32 %v140, %v665
  %v667 = vpop.f32.mrb[0].mxu0
  %v668 = vpop.f32.mrb[0].mxu0
  %v669 = vadd.f32 %v140, %v668
  %v670 = vpop.f32.mrb[0].mxu0
  %671 = vmatprep.mubr.bf16.mxu0 %v306
  %672 = vmatmul.mubr.bf16.gmra.mrb[0].mxu0 %v305
  %v673 = vpop.f32.mrb[0].mxu0
  %v674 = vadd.f32 %v140, %v673
  %v675 = vpop.f32.mrb[0].mxu0
  %v676 = vpop.f32.mrb[0].mxu0
  %v677 = vadd.f32 %v140, %v676
  %v678 = vpop.f32.mrb[0].mxu0
  %679 = vdwg.mxu0
  %680 = vmatprep.subr.bf16.mxu0 0
  %681 = vmatpush1.bf16.msra.mxu0 %v502
  %682 = vmatprep.subr.bf16.mxu0 0
  %683 = vmatpush1.bf16.msra.mxu0 %v503
  %684 = vmatprep.subr.bf16.mxu0 0
  %685 = vmatpush1.bf16.msra.mxu0 %v504
  %686 = vmatprep.subr.bf16.mxu0 0
  %687 = vmatpush1.bf16.msra.mxu0 %v505
  %688 = vmatprep.subr.bf16.mxu0 0
  %689 = vmatpush1.bf16.msra.mxu0 %v506
  %690 = vmatprep.subr.bf16.mxu0 0
  %691 = vmatpush1.bf16.msra.mxu0 %v507
  %692 = vmatprep.subr.bf16.mxu0 0
  %693 = vmatpush1.bf16.msra.mxu0 %v508
  %694 = vmatprep.subr.bf16.mxu0 0
  %695 = vmatpush1.bf16.msra.mxu0 %v509
  %696 = vmatprep.subr.bf16.mxu0 0
  %697 = vmatpush1.bf16.msra.mxu0 %v510
  %698 = vmatprep.subr.bf16.mxu0 0
  %699 = vmatpush1.bf16.msra.mxu0 %v511
  %700 = vmatprep.subr.bf16.mxu0 0
  %701 = vmatpush1.bf16.msra.mxu0 %v512
  %702 = vmatprep.subr.bf16.mxu0 0
  %703 = vmatpush1.bf16.msra.mxu0 %v513
  %704 = vmatprep.subr.bf16.mxu0 0
  %705 = vmatpush1.bf16.msra.mxu0 %v514
  %706 = vmatprep.subr.bf16.mxu0 0
  %707 = vmatpush1.bf16.msra.mxu0 %v515
  %708 = vmatprep.subr.bf16.mxu0 0
  %709 = vmatpush1.bf16.msra.mxu0 %v516
  %710 = vmatprep.subr.bf16.mxu0 0
  %711 = vmatpush1.bf16.msra.mxu0 %v517
  %712 = vmatprep.mubr.bf16.mxu0 %v273
  %713 = vmatmul.mubr.bf16.gmra.mrb[0].mxu0 %v272
  %v714 = vpop.f32.mrb[0].mxu0
  %v715 = vadd.f32 %v618, %v714
  %v716 = vpop.f32.mrb[0].mxu0
  %v717 = vpop.f32.mrb[0].mxu0
  %v718 = vadd.f32 %v621, %v717
  %v719 = vpop.f32.mrb[0].mxu0
  %720 = vmatprep.mubr.bf16.mxu0 %v278
  %721 = vmatmul.mubr.bf16.gmra.mrb[0].mxu0 %v277
  %v722 = vpop.f32.mrb[0].mxu0
  %v723 = vadd.f32 %v626, %v722
  %v724 = vpop.f32.mrb[0].mxu0
  %v725 = vpop.f32.mrb[0].mxu0
  %v726 = vadd.f32 %v629, %v725
  %v727 = vpop.f32.mrb[0].mxu0
  %728 = vmatprep.mubr.bf16.mxu0 %v283
  %729 = vmatmul.mubr.bf16.gmra.mrb[0].mxu0 %v282
  %v730 = vpop.f32.mrb[0].mxu0
  %v731 = vadd.f32 %v634, %v730
  %v732 = vpop.f32.mrb[0].mxu0
  %v733 = vpop.f32.mrb[0].mxu0
  %v734 = vadd.f32 %v637, %v733
  %v735 = vpop.f32.mrb[0].mxu0
  %736 = vmatprep.mubr.bf16.mxu0 %v288
  %737 = vmatmul.mubr.bf16.gmra.mrb[0].mxu0 %v287
  %v738 = vpop.f32.mrb[0].mxu0
  %v739 = vadd.f32 %v642, %v738
  %v740 = vpop.f32.mrb[0].mxu0
  %v741 = vpop.f32.mrb[0].mxu0
  %v742 = vadd.f32 %v645, %v741
  %v743 = vpop.f32.mrb[0].mxu0
  %744 = vmatprep.mubr.bf16.mxu0 %v293
  %745 = vmatmul.mubr.bf16.gmra.mrb[0].mxu0 %v292
  %v746 = vpop.f32.mrb[0].mxu0
  %v747 = vadd.f32 %v650, %v746
  %v748 = vpop.f32.mrb[0].mxu0
  %v749 = vpop.f32.mrb[0].mxu0
  %v750 = vadd.f32 %v653, %v749
  %v751 = vpop.f32.mrb[0].mxu0
  %752 = vmatprep.mubr.bf16.mxu0 %v298
  %753 = vmatmul.mubr.bf16.gmra.mrb[0].mxu0 %v297
  %v754 = vpop.f32.mrb[0].mxu0
  %v755 = vadd.f32 %v658, %v754
  %v756 = vpop.f32.mrb[0].mxu0
  %v757 = vpop.f32.mrb[0].mxu0
  %v758 = vadd.f32 %v661, %v757
  %v759 = vpop.f32.mrb[0].mxu0
  %760 = vmatprep.mubr.bf16.mxu0 %v303
  %761 = vmatmul.mubr.bf16.gmra.mrb[0].mxu0 %v302
  %v762 = vpop.f32.mrb[0].mxu0
  %v763 = vadd.f32 %v666, %v762
  %v764 = vpop.f32.mrb[0].mxu0
  %v765 = vpop.f32.mrb[0].mxu0
  %v766 = vadd.f32 %v669, %v765
  %v767 = vpop.f32.mrb[0].mxu0
  %768 = vmatprep.mubr.bf16.mxu0 %v308
  %769 = vmatmul.mubr.bf16.gmra.mrb[0].mxu0 %v307
  %v770 = vpop.f32.mrb[0].mxu0
  %v771 = vadd.f32 %v674, %v770
  %v772 = vpop.f32.mrb[0].mxu0
  %v773 = vpop.f32.mrb[0].mxu0
  %v774 = vadd.f32 %v677, %v773
  %v775 = vpop.f32.mrb[0].mxu0
  %776 = vdwg.mxu0
  %777 = vmatprep.subr.bf16.mxu0 0
  %778 = vmatpush1.bf16.msra.mxu0 %v518
  %779 = vmatprep.subr.bf16.mxu0 0
  %780 = vmatpush1.bf16.msra.mxu0 %v519
  %781 = vmatprep.subr.bf16.mxu0 0
  %782 = vmatpush1.bf16.msra.mxu0 %v520
  %783 = vmatprep.subr.bf16.mxu0 0
  %784 = vmatpush1.bf16.msra.mxu0 %v521
  %785 = vmatprep.subr.bf16.mxu0 0
  %786 = vmatpush1.bf16.msra.mxu0 0
  %787 = vmatprep.subr.bf16.mxu0 0
  %788 = vmatpush1.bf16.msra.mxu0 0
  %789 = vmatprep.subr.bf16.mxu0 0
  %790 = vmatpush1.bf16.msra.mxu0 0
  %791 = vmatprep.subr.bf16.mxu0 0
  %792 = vmatpush1.bf16.msra.mxu0 0
  %793 = vmatprep.subr.bf16.mxu0 0
  %794 = vmatpush1.bf16.msra.mxu0 0
  %795 = vmatprep.subr.bf16.mxu0 0
  %796 = vmatpush1.bf16.msra.mxu0 0
  %797 = vmatprep.subr.bf16.mxu0 0
  %798 = vmatpush1.bf16.msra.mxu0 0
  %799 = vmatprep.subr.bf16.mxu0 0
  %800 = vmatpush1.bf16.msra.mxu0 0
  %801 = vmatprep.subr.bf16.mxu0 0
  %802 = vmatpush1.bf16.msra.mxu0 0
  %803 = vmatprep.subr.bf16.mxu0 0
  %804 = vmatpush1.bf16.msra.mxu0 0
  %805 = vmatprep.subr.bf16.mxu0 0
  %806 = vmatpush1.bf16.msra.mxu0 0
  %807 = vmatprep.subr.bf16.mxu0 0
  %808 = vmatpush1.bf16.msra.mxu0 0
  %809 = vmatprep.mubr.bf16.mxu0 0
  %810 = vmatmul.mubr.bf16.gmra.mrb[0].mxu0 %v560
  %v811 = vpop.f32.mrb[0].mxu0
  %v812 = vadd.f32 %v715, %v811
  %v813 = vpop.f32.mrb[0].mxu0
  %v814 = vpop.f32.mrb[0].mxu0
  %v815 = vadd.f32 %v718, %v814
  %v816 = vpop.f32.mrb[0].mxu0
  %817 = vmatprep.mubr.bf16.mxu0 0
  %818 = vmatmul.mubr.bf16.gmra.mrb[0].mxu0 %v563
  %v819 = vpop.f32.mrb[0].mxu0
  %v820 = vadd.f32 %v723, %v819
  %v821 = vpop.f32.mrb[0].mxu0
  %v822 = vpop.f32.mrb[0].mxu0
  %v823 = vadd.f32 %v726, %v822
  %v824 = vpop.f32.mrb[0].mxu0
  %825 = vmatprep.mubr.bf16.mxu0 0
  %826 = vmatmul.mubr.bf16.gmra.mrb[0].mxu0 %v566
  %v827 = vpop.f32.mrb[0].mxu0
  %v828 = vadd.f32 %v731, %v827
  %v829 = vpop.f32.mrb[0].mxu0
  %v830 = vpop.f32.mrb[0].mxu0
  %v831 = vadd.f32 %v734, %v830
  %v832 = vpop.f32.mrb[0].mxu0
  %833 = vmatprep.mubr.bf16.mxu0 0
  %834 = vmatmul.mubr.bf16.gmra.mrb[0].mxu0 %v569
  %v835 = vpop.f32.mrb[0].mxu0
  %v836 = vadd.f32 %v739, %v835
  %v837 = vpop.f32.mrb[0].mxu0
  %v838 = vpop.f32.mrb[0].mxu0
  %v839 = vadd.f32 %v742, %v838
  %v840 = vpop.f32.mrb[0].mxu0
  %841 = vmatprep.mubr.bf16.mxu0 0
  %842 = vmatmul.mubr.bf16.gmra.mrb[0].mxu0 %v572
  %v843 = vpop.f32.mrb[0].mxu0
  %v844 = vadd.f32 %v747, %v843
  %v845 = vpop.f32.mrb[0].mxu0
  %v846 = vpop.f32.mrb[0].mxu0
  %v847 = vadd.f32 %v750, %v846
  %v848 = vpop.f32.mrb[0].mxu0
  %849 = vmatprep.mubr.bf16.mxu0 0
  %850 = vmatmul.mubr.bf16.gmra.mrb[0].mxu0 %v575
  %v851 = vpop.f32.mrb[0].mxu0
  %v852 = vadd.f32 %v755, %v851
  %v853 = vpop.f32.mrb[0].mxu0
  %v854 = vpop.f32.mrb[0].mxu0
  %v855 = vadd.f32 %v758, %v854
  %v856 = vpop.f32.mrb[0].mxu0
  %857 = vmatprep.mubr.bf16.mxu0 0
  %858 = vmatmul.mubr.bf16.gmra.mrb[0].mxu0 %v578
  %v859 = vpop.f32.mrb[0].mxu0
  %v860 = vadd.f32 %v763, %v859
  %v861 = vpop.f32.mrb[0].mxu0
  %v862 = vpop.f32.mrb[0].mxu0
  %v863 = vadd.f32 %v766, %v862
  %v864 = vpop.f32.mrb[0].mxu0
  %865 = vmatprep.mubr.bf16.mxu0 0
  %866 = vmatmul.mubr.bf16.gmra.mrb[0].mxu0 %v581
  %v867 = vpop.f32.mrb[0].mxu0
  %v868 = vadd.f32 %v771, %v867
  %v869 = vpop.f32.mrb[0].mxu0
  %v870 = vpop.f32.mrb[0].mxu0
  %v871 = vadd.f32 %v774, %v870
  %v872 = vpop.f32.mrb[0].mxu0
  %873 = vdwg.mxu0
  %vm874 = vcmp.ge.f32.partialorder %v812, 0.0
  %vm875 = vcmp.ge.f32.partialorder %v815, 0.0
  %vm876 = vcmp.ge.f32.partialorder %v820, 0.0
  %vm877 = vcmp.ge.f32.partialorder %v823, 0.0
  %vm878 = vcmp.ge.f32.partialorder %v828, 0.0
  %vm879 = vcmp.ge.f32.partialorder %v831, 0.0
  %vm880 = vcmp.ge.f32.partialorder %v836, 0.0
  %vm881 = vcmp.ge.f32.partialorder %v839, 0.0
  %vm882 = vcmp.ge.f32.partialorder %v844, 0.0
  %vm883 = vcmp.ge.f32.partialorder %v847, 0.0
  %vm884 = vcmp.ge.f32.partialorder %v852, 0.0
  %vm885 = vcmp.ge.f32.partialorder %v855, 0.0
  %vm886 = vcmp.ge.f32.partialorder %v860, 0.0
  %vm887 = vcmp.ge.f32.partialorder %v863, 0.0
  %vm888 = vcmp.ge.f32.partialorder %v868, 0.0
  %vm889 = vcmp.ge.f32.partialorder %v871, 0.0
  %v890 = vmul.f32 %v812, 0.01
  %v891 = vmul.f32 %v815, 0.01
  %v892 = vmul.f32 %v820, 0.01
  %v893 = vmul.f32 %v823, 0.01
  %v894 = vmul.f32 %v828, 0.01
  %v895 = vmul.f32 %v831, 0.01
  %v896 = vmul.f32 %v836, 0.01
  %v897 = vmul.f32 %v839, 0.01
  %v898 = vmul.f32 %v844, 0.01
  %v899 = vmul.f32 %v847, 0.01
  %v900 = vmul.f32 %v852, 0.01
  %v901 = vmul.f32 %v855, 0.01
  %v902 = vmul.f32 %v860, 0.01
  %v903 = vmul.f32 %v863, 0.01
  %v904 = vmul.f32 %v868, 0.01
  %v905 = vmul.f32 %v871, 0.01
  %v906 = vsel %vm874, %v812, %v890
  %v907 = vsel %vm875, %v815, %v891
  %v908 = vsel %vm876, %v820, %v892
  %v909 = vsel %vm877, %v823, %v893
  %v910 = vsel %vm878, %v828, %v894
  %v911 = vsel %vm879, %v831, %v895
  %v912 = vsel %vm880, %v836, %v896
  %v913 = vsel %vm881, %v839, %v897
  %v914 = vsel %vm882, %v844, %v898
  %v915 = vsel %vm883, %v847, %v899
  %v916 = vsel %vm884, %v852, %v900
  %v917 = vsel %vm885, %v855, %v901
  %v918 = vsel %vm886, %v860, %v902
  %v919 = vsel %vm887, %v863, %v903
  %v920 = vsel %vm888, %v868, %v904
  %v921 = vsel %vm889, %v871, %v905
  %v922 = vpack.c.bf16 %v907, %v906
  %v923 = vpack.c.bf16 %v909, %v908
  %v924 = vpack.c.bf16 %v911, %v910
  %v925 = vpack.c.bf16 %v913, %v912
  %v926 = vpack.c.bf16 %v915, %v914
  %v927 = vpack.c.bf16 %v917, %v916
  %v928 = vpack.c.bf16 %v919, %v918
  %v929 = vpack.c.bf16 %v921, %v920
  %v938 = vunpack.c.l.b16 %v922
  %v939 = vunpack.c.h.b16 %v922
  %v940 = vunpack.c.l.b16 %v923
  %v941 = vunpack.c.h.b16 %v923
  %v942 = vunpack.c.l.b16 %v924
  %v943 = vunpack.c.h.b16 %v924
  %v944 = vunpack.c.l.b16 %v925
  %v945 = vunpack.c.h.b16 %v925
  %v946 = vunpack.c.l.b16 %v926
  %v947 = vunpack.c.h.b16 %v926
  %v948 = vunpack.c.l.b16 %v927
  %v949 = vunpack.c.h.b16 %v927
  %v950 = vunpack.c.l.b16 %v928
  %v951 = vunpack.c.h.b16 %v928
  %v952 = vunpack.c.l.b16 %v929
  %v953 = vunpack.c.h.b16 %v929
  %v954 = vpack.c.b16 %v938, %v938
  %v955 = vpack.c.b16 %v939, %v939
  %v956 = vpack.c.b16 %v940, %v940
  %v957 = vpack.c.b16 %v941, %v941
  %v958 = vpack.c.b16 %v942, %v942
  %v959 = vpack.c.b16 %v943, %v943
  %v960 = vpack.c.b16 %v944, %v944
  %v961 = vpack.c.b16 %v945, %v945
  %v962 = vpack.c.b16 %v946, %v946
  %v963 = vpack.c.b16 %v947, %v947
  %v964 = vpack.c.b16 %v948, %v948
  %v965 = vpack.c.b16 %v949, %v949
  %v966 = vpack.c.b16 %v950, %v950
  %v967 = vpack.c.b16 %v951, %v951
  %v968 = vpack.c.b16 %v952, %v952
  %v969 = vpack.c.b16 %v953, %v953
  %vm986 = vcmask 125952
  %987 = vst.msk [vmem:[%s3] sm:$0xf] %vm986, %v954
  %988 = vst.msk [vmem:[%s3 + $0x4] sm:$0xf] %vm986, %v955
  %989 = vst.msk [vmem:[%s3 + $0x8] sm:$0xf] %vm986, %v956
  %990 = vst.msk [vmem:[%s3 + $0xc] sm:$0xf] %vm986, %v957
  %991 = vst.msk [vmem:[%s3 + $0x10] sm:$0xf] %vm986, %v958
  %992 = vst.msk [vmem:[%s3 + $0x14] sm:$0xf] %vm986, %v959
  %993 = vst.msk [vmem:[%s3 + $0x18] sm:$0xf] %vm986, %v960
  %994 = vst.msk [vmem:[%s3 + $0x1c] sm:$0xf] %vm986, %v961
  %995 = vst.msk [vmem:[%s3 + $0x20] sm:$0xf] %vm986, %v962
  %996 = vst.msk [vmem:[%s3 + $0x24] sm:$0xf] %vm986, %v963
  %997 = vst.msk [vmem:[%s3 + $0x28] sm:$0xf] %vm986, %v964
  %998 = vst.msk [vmem:[%s3 + $0x2c] sm:$0xf] %vm986, %v965
  %999 = vst.msk [vmem:[%s3 + $0x30] sm:$0xf] %vm986, %v966
  %1000 = vst.msk [vmem:[%s3 + $0x34] sm:$0xf] %vm986, %v967
  %1001 = vst.msk [vmem:[%s3 + $0x38] sm:$0xf] %vm986, %v968
  %1002 = vst.msk [vmem:[%s3 + $0x3c] sm:$0xf] %vm986, %v969
  // Predicated region
  $region14: #{darknet_forward.16} parent=0 // pred_check
    _
  $region15: #{darknet_forward.16} parent=0 // pred_check_branch
    %1004 = sbr.rel (0) target = $region17
  $region16: #{darknet_forward.16} parent=0 // pred_region
    _
  $region17: #{darknet_forward.16} parent=0 // pred_fallthru
    _
  // Predicated region
  $region18: #{darknet_forward.16} parent=0 // pred_check
    _
  $region19: #{darknet_forward.16} parent=0 // pred_check_branch
    %1006 = sbr.rel (0) target = $region21
  $region20: #{darknet_forward.16} parent=0 // pred_region
    _
  $region21: #{darknet_forward.16} parent=0 // pred_fallthru
    _

// kernel: darknet_forward.17
$region0: #{darknet_forward.17}
  #allocation0 [shape = 'u32[]', space=smem, size = 0x4, offset = 0x4, fixed_abs, tag = 'smem constant byte address 0x4 - core index']
  #allocation1 [shape = 'u32[144,128]{1,0:T(1,128)}', space=vmem, size = 0x12000, scoped, tag = 'internal scratch']
  %s0 = inlined_call_operand.vmem [shape: bf16[128,16], index: 0, kind: input, shape index: {}]
  %s1 = inlined_call_operand.vmem [shape: bf16[16,4], index: 1, kind: input, shape index: {}]
  %s2 = inlined_call_operand.vmem [shape: f32[1,4], index: 2, kind: input, shape index: {}]
  %s3 = inlined_call_operand.vmem [shape: bf16[128,4], index: 3, kind: output, shape index: {}]
  %s4 = sld [smem:[#allocation0]]
  $region22: #{darknet_forward.17} parent=0
    _
  %s6 = ssub.s32 1, %s4
  %s7 = scalar_select 0, %s6, %s4
  // Predicated region
  $region2: #{darknet_forward.17} parent=0 // pred_check
    _
  $region3: #{darknet_forward.17} parent=0 // pred_check_branch
    %9 = sbr.rel (0) target = $region5
  $region4: #{darknet_forward.17} parent=0 // pred_region
    _
  $region5: #{darknet_forward.17} parent=0 // pred_fallthru
    _
  // Predicated region
  $region6: #{darknet_forward.17} parent=0 // pred_check
    _
  $region7: #{darknet_forward.17} parent=0 // pred_check_branch
    %11 = sbr.rel (0) target = $region9
  $region8: #{darknet_forward.17} parent=0 // pred_region
    _
  $region9: #{darknet_forward.17} parent=0 // pred_fallthru
    _
  // Predicated region
  $region10: #{darknet_forward.17} parent=0 // pred_check
    _
  $region11: #{darknet_forward.17} parent=0 // pred_check_branch
    %13 = sbr.rel (0) target = $region13
  $region12: #{darknet_forward.17} parent=0 // pred_region
    _
  $region13: #{darknet_forward.17} parent=0 // pred_fallthru
    _
  %v15 = vld [vmem:[%s0] sm:$0xf]
  %v16 = vld [vmem:[%s0 + $0x4] sm:$0xf]
  %v17 = vld [vmem:[%s0 + $0x8] sm:$0xf]
  %v18 = vld [vmem:[%s0 + $0xc] sm:$0xf]
  %v19 = vld [vmem:[%s0 + $0x10] sm:$0xf]
  %v20 = vld [vmem:[%s0 + $0x14] sm:$0xf]
  %v21 = vld [vmem:[%s0 + $0x18] sm:$0xf]
  %v22 = vld [vmem:[%s0 + $0x1c] sm:$0xf]
  %v23 = vld [vmem:[%s0 + $0x20] sm:$0xf]
  %v24 = vld [vmem:[%s0 + $0x24] sm:$0xf]
  %v25 = vld [vmem:[%s0 + $0x28] sm:$0xf]
  %v26 = vld [vmem:[%s0 + $0x2c] sm:$0xf]
  %v27 = vld [vmem:[%s0 + $0x30] sm:$0xf]
  %v28 = vld [vmem:[%s0 + $0x34] sm:$0xf]
  %v29 = vld [vmem:[%s0 + $0x38] sm:$0xf]
  %v30 = vld [vmem:[%s0 + $0x3c] sm:$0xf]
  %v31 = vld [vmem:[%s1] sm:$0xf]
  %v32 = vld [vmem:[%s1 + $0x4] sm:$0xf]
  %v33 = vld [vmem:[%s2] sm:$0x1]
  %v35 = vlaneseq
  %v36 = vshrl.u32 %v35, 7
  %v37 = vsub.s32 0, %v36
  %v38 = vrot.slane %v33, %v37
  %v56 = vunpack.c.l.b16 %v15
  %v57 = vunpack.c.l.b16 %v16
  %v58 = vunpack.c.l.b16 %v17
  %v59 = vunpack.c.l.b16 %v18
  %v60 = vunpack.c.l.b16 %v19
  %v61 = vunpack.c.l.b16 %v20
  %v62 = vunpack.c.l.b16 %v21
  %v63 = vunpack.c.l.b16 %v22
  %v64 = vunpack.c.l.b16 %v23
  %v65 = vunpack.c.l.b16 %v24
  %v66 = vunpack.c.l.b16 %v25
  %v67 = vunpack.c.l.b16 %v26
  %v68 = vunpack.c.l.b16 %v27
  %v69 = vunpack.c.l.b16 %v28
  %v70 = vunpack.c.l.b16 %v29
  %v71 = vunpack.c.l.b16 %v30
  %v72 = vpack.c.b16 %v57, %v56
  %v73 = vpack.c.b16 %v59, %v58
  %v74 = vpack.c.b16 %v61, %v60
  %v75 = vpack.c.b16 %v63, %v62
  %v76 = vpack.c.b16 %v65, %v64
  %v77 = vpack.c.b16 %v67, %v66
  %v78 = vpack.c.b16 %v69, %v68
  %v79 = vpack.c.b16 %v71, %v70
  %v82 = vunpack.c.l.b16 %v31
  %v83 = vunpack.c.l.b16 %v32
  %v84 = vpack.c.b16 %v83, %v82
  %vm86 = vcmask 130048
  %v88 = vsel %vm86, %v72, 0
  %v91 = vsel %vm86, %v73, 0
  %v94 = vsel %vm86, %v74, 0
  %v97 = vsel %vm86, %v75, 0
  %v100 = vsel %vm86, %v76, 0
  %v103 = vsel %vm86, %v77, 0
  %v106 = vsel %vm86, %v78, 0
  %v109 = vsel %vm86, %v79, 0
  %111 = vmatprep.subr.bf16.mxu0 0
  %112 = vmatpush1.bf16.msra.mxu0 %v84
  %113 = vmatprep.subr.bf16.mxu0 0
  %114 = vmatpush1.bf16.msra.mxu0 0
  %115 = vmatprep.subr.bf16.mxu0 0
  %116 = vmatpush1.bf16.msra.mxu0 0
  %117 = vmatprep.subr.bf16.mxu0 0
  %118 = vmatpush1.bf16.msra.mxu0 0
  %119 = vmatprep.subr.bf16.mxu0 0
  %120 = vmatpush1.bf16.msra.mxu0 0
  %121 = vmatprep.subr.bf16.mxu0 0
  %122 = vmatpush1.bf16.msra.mxu0 0
  %123 = vmatprep.subr.bf16.mxu0 0
  %124 = vmatpush1.bf16.msra.mxu0 0
  %125 = vmatprep.subr.bf16.mxu0 0
  %126 = vmatpush1.bf16.msra.mxu0 0
  %127 = vmatprep.subr.bf16.mxu0 0
  %128 = vmatpush1.bf16.msra.mxu0 0
  %129 = vmatprep.subr.bf16.mxu0 0
  %130 = vmatpush1.bf16.msra.mxu0 0
  %131 = vmatprep.subr.bf16.mxu0 0
  %132 = vmatpush1.bf16.msra.mxu0 0
  %133 = vmatprep.subr.bf16.mxu0 0
  %134 = vmatpush1.bf16.msra.mxu0 0
  %135 = vmatprep.subr.bf16.mxu0 0
  %136 = vmatpush1.bf16.msra.mxu0 0
  %137 = vmatprep.subr.bf16.mxu0 0
  %138 = vmatpush1.bf16.msra.mxu0 0
  %139 = vmatprep.subr.bf16.mxu0 0
  %140 = vmatpush1.bf16.msra.mxu0 0
  %141 = vmatprep.subr.bf16.mxu0 0
  %142 = vmatpush1.bf16.msra.mxu0 0
  %143 = vmatprep.mubr.bf16.mxu0 0
  %144 = vmatmul.mubr.bf16.gmra.mrb[0].mxu0 %v88
  %v145 = vpop.f32.mrb[0].mxu0
  %v146 = vadd.f32 %v38, %v145
  %v147 = vpop.f32.mrb[0].mxu0
  %v148 = vpop.f32.mrb[0].mxu0
  %v149 = vadd.f32 %v38, %v148
  %v150 = vpop.f32.mrb[0].mxu0
  %151 = vmatprep.mubr.bf16.mxu0 0
  %152 = vmatmul.mubr.bf16.gmra.mrb[0].mxu0 %v91
  %v153 = vpop.f32.mrb[0].mxu0
  %v154 = vadd.f32 %v38, %v153
  %v155 = vpop.f32.mrb[0].mxu0
  %v156 = vpop.f32.mrb[0].mxu0
  %v157 = vadd.f32 %v38, %v156
  %v158 = vpop.f32.mrb[0].mxu0
  %159 = vmatprep.mubr.bf16.mxu0 0
  %160 = vmatmul.mubr.bf16.gmra.mrb[0].mxu0 %v94
  %v161 = vpop.f32.mrb[0].mxu0
  %v162 = vadd.f32 %v38, %v161
  %v163 = vpop.f32.mrb[0].mxu0
  %v164 = vpop.f32.mrb[0].mxu0
  %v165 = vadd.f32 %v38, %v164
  %v166 = vpop.f32.mrb[0].mxu0
  %167 = vmatprep.mubr.bf16.mxu0 0
  %168 = vmatmul.mubr.bf16.gmra.mrb[0].mxu0 %v97
  %v169 = vpop.f32.mrb[0].mxu0
  %v170 = vadd.f32 %v38, %v169
  %v171 = vpop.f32.mrb[0].mxu0
  %v172 = vpop.f32.mrb[0].mxu0
  %v173 = vadd.f32 %v38, %v172
  %v174 = vpop.f32.mrb[0].mxu0
  %175 = vmatprep.mubr.bf16.mxu0 0
  %176 = vmatmul.mubr.bf16.gmra.mrb[0].mxu0 %v100
  %v177 = vpop.f32.mrb[0].mxu0
  %v178 = vadd.f32 %v38, %v177
  %v179 = vpop.f32.mrb[0].mxu0
  %v180 = vpop.f32.mrb[0].mxu0
  %v181 = vadd.f32 %v38, %v180
  %v182 = vpop.f32.mrb[0].mxu0
  %183 = vmatprep.mubr.bf16.mxu0 0
  %184 = vmatmul.mubr.bf16.gmra.mrb[0].mxu0 %v103
  %v185 = vpop.f32.mrb[0].mxu0
  %v186 = vadd.f32 %v38, %v185
  %v187 = vpop.f32.mrb[0].mxu0
  %v188 = vpop.f32.mrb[0].mxu0
  %v189 = vadd.f32 %v38, %v188
  %v190 = vpop.f32.mrb[0].mxu0
  %191 = vmatprep.mubr.bf16.mxu0 0
  %192 = vmatmul.mubr.bf16.gmra.mrb[0].mxu0 %v106
  %v193 = vpop.f32.mrb[0].mxu0
  %v194 = vadd.f32 %v38, %v193
  %v195 = vpop.f32.mrb[0].mxu0
  %v196 = vpop.f32.mrb[0].mxu0
  %v197 = vadd.f32 %v38, %v196
  %v198 = vpop.f32.mrb[0].mxu0
  %199 = vmatprep.mubr.bf16.mxu0 0
  %200 = vmatmul.mubr.bf16.gmra.mrb[0].mxu0 %v109
  %v201 = vpop.f32.mrb[0].mxu0
  %v202 = vadd.f32 %v38, %v201
  %v203 = vpop.f32.mrb[0].mxu0
  %v204 = vpop.f32.mrb[0].mxu0
  %v205 = vadd.f32 %v38, %v204
  %v206 = vpop.f32.mrb[0].mxu0
  %207 = vdwg.mxu0
  %vm208 = vcmp.ge.f32.partialorder %v146, 0.0
  %vm209 = vcmp.ge.f32.partialorder %v149, 0.0
  %vm210 = vcmp.ge.f32.partialorder %v154, 0.0
  %vm211 = vcmp.ge.f32.partialorder %v157, 0.0
  %vm212 = vcmp.ge.f32.partialorder %v162, 0.0
  %vm213 = vcmp.ge.f32.partialorder %v165, 0.0
  %vm214 = vcmp.ge.f32.partialorder %v170, 0.0
  %vm215 = vcmp.ge.f32.partialorder %v173, 0.0
  %vm216 = vcmp.ge.f32.partialorder %v178, 0.0
  %vm217 = vcmp.ge.f32.partialorder %v181, 0.0
  %vm218 = vcmp.ge.f32.partialorder %v186, 0.0
  %vm219 = vcmp.ge.f32.partialorder %v189, 0.0
  %vm220 = vcmp.ge.f32.partialorder %v194, 0.0
  %vm221 = vcmp.ge.f32.partialorder %v197, 0.0
  %vm222 = vcmp.ge.f32.partialorder %v202, 0.0
  %vm223 = vcmp.ge.f32.partialorder %v205, 0.0
  %v224 = vmul.f32 %v146, 0.01
  %v225 = vmul.f32 %v149, 0.01
  %v226 = vmul.f32 %v154, 0.01
  %v227 = vmul.f32 %v157, 0.01
  %v228 = vmul.f32 %v162, 0.01
  %v229 = vmul.f32 %v165, 0.01
  %v230 = vmul.f32 %v170, 0.01
  %v231 = vmul.f32 %v173, 0.01
  %v232 = vmul.f32 %v178, 0.01
  %v233 = vmul.f32 %v181, 0.01
  %v234 = vmul.f32 %v186, 0.01
  %v235 = vmul.f32 %v189, 0.01
  %v236 = vmul.f32 %v194, 0.01
  %v237 = vmul.f32 %v197, 0.01
  %v238 = vmul.f32 %v202, 0.01
  %v239 = vmul.f32 %v205, 0.01
  %v240 = vsel %vm208, %v146, %v224
  %v241 = vsel %vm209, %v149, %v225
  %v242 = vsel %vm210, %v154, %v226
  %v243 = vsel %vm211, %v157, %v227
  %v244 = vsel %vm212, %v162, %v228
  %v245 = vsel %vm213, %v165, %v229
  %v246 = vsel %vm214, %v170, %v230
  %v247 = vsel %vm215, %v173, %v231
  %v248 = vsel %vm216, %v178, %v232
  %v249 = vsel %vm217, %v181, %v233
  %v250 = vsel %vm218, %v186, %v234
  %v251 = vsel %vm219, %v189, %v235
  %v252 = vsel %vm220, %v194, %v236
  %v253 = vsel %vm221, %v197, %v237
  %v254 = vsel %vm222, %v202, %v238
  %v255 = vsel %vm223, %v205, %v239
  %v256 = vpack.c.bf16 %v241, %v240
  %v257 = vpack.c.bf16 %v243, %v242
  %v258 = vpack.c.bf16 %v245, %v244
  %v259 = vpack.c.bf16 %v247, %v246
  %v260 = vpack.c.bf16 %v249, %v248
  %v261 = vpack.c.bf16 %v251, %v250
  %v262 = vpack.c.bf16 %v253, %v252
  %v263 = vpack.c.bf16 %v255, %v254
  %v272 = vunpack.c.l.b16 %v256
  %v273 = vunpack.c.h.b16 %v256
  %v274 = vunpack.c.l.b16 %v257
  %v275 = vunpack.c.h.b16 %v257
  %v276 = vunpack.c.l.b16 %v258
  %v277 = vunpack.c.h.b16 %v258
  %v278 = vunpack.c.l.b16 %v259
  %v279 = vunpack.c.h.b16 %v259
  %v280 = vunpack.c.l.b16 %v260
  %v281 = vunpack.c.h.b16 %v260
  %v282 = vunpack.c.l.b16 %v261
  %v283 = vunpack.c.h.b16 %v261
  %v284 = vunpack.c.l.b16 %v262
  %v285 = vunpack.c.h.b16 %v262
  %v286 = vunpack.c.l.b16 %v263
  %v287 = vunpack.c.h.b16 %v263
  %v288 = vpack.c.b16 %v272, %v272
  %v289 = vpack.c.b16 %v273, %v273
  %v290 = vpack.c.b16 %v274, %v274
  %v291 = vpack.c.b16 %v275, %v275
  %v292 = vpack.c.b16 %v276, %v276
  %v293 = vpack.c.b16 %v277, %v277
  %v294 = vpack.c.b16 %v278, %v278
  %v295 = vpack.c.b16 %v279, %v279
  %v296 = vpack.c.b16 %v280, %v280
  %v297 = vpack.c.b16 %v281, %v281
  %v298 = vpack.c.b16 %v282, %v282
  %v299 = vpack.c.b16 %v283, %v283
  %v300 = vpack.c.b16 %v284, %v284
  %v301 = vpack.c.b16 %v285, %v285
  %v302 = vpack.c.b16 %v286, %v286
  %v303 = vpack.c.b16 %v287, %v287
  %vm320 = vcmask 27648
  %321 = vst.msk [vmem:[%s3] sm:$0xf] %vm320, %v288
  %322 = vst.msk [vmem:[%s3 + $0x4] sm:$0xf] %vm320, %v289
  %323 = vst.msk [vmem:[%s3 + $0x8] sm:$0xf] %vm320, %v290
  %324 = vst.msk [vmem:[%s3 + $0xc] sm:$0xf] %vm320, %v291
  %325 = vst.msk [vmem:[%s3 + $0x10] sm:$0xf] %vm320, %v292
  %326 = vst.msk [vmem:[%s3 + $0x14] sm:$0xf] %vm320, %v293
  %327 = vst.msk [vmem:[%s3 + $0x18] sm:$0xf] %vm320, %v294
  %328 = vst.msk [vmem:[%s3 + $0x1c] sm:$0xf] %vm320, %v295
  %329 = vst.msk [vmem:[%s3 + $0x20] sm:$0xf] %vm320, %v296
  %330 = vst.msk [vmem:[%s3 + $0x24] sm:$0xf] %vm320, %v297
  %331 = vst.msk [vmem:[%s3 + $0x28] sm:$0xf] %vm320, %v298
  %332 = vst.msk [vmem:[%s3 + $0x2c] sm:$0xf] %vm320, %v299
  %333 = vst.msk [vmem:[%s3 + $0x30] sm:$0xf] %vm320, %v300
  %334 = vst.msk [vmem:[%s3 + $0x34] sm:$0xf] %vm320, %v301
  %335 = vst.msk [vmem:[%s3 + $0x38] sm:$0xf] %vm320, %v302
  %336 = vst.msk [vmem:[%s3 + $0x3c] sm:$0xf] %vm320, %v303
  // Predicated region
  $region14: #{darknet_forward.17} parent=0 // pred_check
    _
  $region15: #{darknet_forward.17} parent=0 // pred_check_branch
    %338 = sbr.rel (0) target = $region17
  $region16: #{darknet_forward.17} parent=0 // pred_region
    _
  $region17: #{darknet_forward.17} parent=0 // pred_fallthru
    _
  // Predicated region
  $region18: #{darknet_forward.17} parent=0 // pred_check
    _
  $region19: #{darknet_forward.17} parent=0 // pred_check_branch
    %340 = sbr.rel (0) target = $region21
  $region20: #{darknet_forward.17} parent=0 // pred_region
    _
  $region21: #{darknet_forward.17} parent=0 // pred_fallthru
    _

// kernel: darknet_forward.18
$region0: #{darknet_forward.18}
  #allocation0 [shape = 'u32[]', space=smem, size = 0x4, offset = 0x4, fixed_abs, tag = 'smem constant byte address 0x4 - core index']
  #allocation1 [shape = 'u32[144,128]{1,0:T(1,128)}', space=vmem, size = 0x12000, scoped, tag = 'internal scratch']
  %s0 = inlined_call_operand.vmem [shape: bf16[128,36], index: 0, kind: input, shape index: {}]
  %s1 = inlined_call_operand.vmem [shape: bf16[36,16], index: 1, kind: input, shape index: {}]
  %s2 = inlined_call_operand.vmem [shape: f32[1,16], index: 2, kind: input, shape index: {}]
  %s3 = inlined_call_operand.vmem [shape: bf16[128,16], index: 3, kind: input, shape index: {}]
  %s4 = inlined_call_operand.vmem [shape: bf16[128,16], index: 4, kind: output, shape index: {}]
  %s5 = sld [smem:[#allocation0]]
  $region26: #{darknet_forward.18} parent=0
    _
  %s7 = ssub.s32 1, %s5
  %s8 = scalar_select 0, %s7, %s5
  // Predicated region
  $region2: #{darknet_forward.18} parent=0 // pred_check
    _
  $region3: #{darknet_forward.18} parent=0 // pred_check_branch
    %10 = sbr.rel (0) target = $region5
  $region4: #{darknet_forward.18} parent=0 // pred_region
    _
  $region5: #{darknet_forward.18} parent=0 // pred_fallthru
    _
  // Predicated region
  $region6: #{darknet_forward.18} parent=0 // pred_check
    _
  $region7: #{darknet_forward.18} parent=0 // pred_check_branch
    %12 = sbr.rel (0) target = $region9
  $region8: #{darknet_forward.18} parent=0 // pred_region
    _
  $region9: #{darknet_forward.18} parent=0 // pred_fallthru
    _
  // Predicated region
  $region10: #{darknet_forward.18} parent=0 // pred_check
    _
  $region11: #{darknet_forward.18} parent=0 // pred_check_branch
    %14 = sbr.rel (0) target = $region13
  $region12: #{darknet_forward.18} parent=0 // pred_region
    _
  $region13: #{darknet_forward.18} parent=0 // pred_fallthru
    _
  // Predicated region
  $region14: #{darknet_forward.18} parent=0 // pred_check
    _
  $region15: #{darknet_forward.18} parent=0 // pred_check_branch
    %16 = sbr.rel (0) target = $region17
  $region16: #{darknet_forward.18} parent=0 // pred_region
    _
  $region17: #{darknet_forward.18} parent=0 // pred_fallthru
    _
  %v18 = vld [vmem:[%s0] sm:$0xf]
  %v19 = vld [vmem:[%s0 + $0x4] sm:$0xf]
  %v20 = vld [vmem:[%s0 + $0x8] sm:$0xf]
  %v21 = vld [vmem:[%s0 + $0xc] sm:$0xf]
  %v22 = vld [vmem:[%s0 + $0x10] sm:$0xf]
  %v23 = vld [vmem:[%s0 + $0x14] sm:$0xf]
  %v24 = vld [vmem:[%s0 + $0x18] sm:$0xf]
  %v25 = vld [vmem:[%s0 + $0x1c] sm:$0xf]
  %v26 = vld [vmem:[%s0 + $0x20] sm:$0xf]
  %v27 = vld [vmem:[%s0 + $0x24] sm:$0xf]
  %v28 = vld [vmem:[%s0 + $0x28] sm:$0xf]
  %v29 = vld [vmem:[%s0 + $0x2c] sm:$0xf]
  %v30 = vld [vmem:[%s0 + $0x30] sm:$0xf]
  %v31 = vld [vmem:[%s0 + $0x34] sm:$0xf]
  %v32 = vld [vmem:[%s0 + $0x38] sm:$0xf]
  %v33 = vld [vmem:[%s0 + $0x3c] sm:$0xf]
  %v34 = vld [vmem:[%s1] sm:$0xf]
  %v35 = vld [vmem:[%s1 + $0x4] sm:$0xf]
  %v36 = vld [vmem:[%s1 + $0x8] sm:$0xf]
  %v37 = vld [vmem:[%s1 + $0xc] sm:$0xf]
  %v38 = vld [vmem:[%s1 + $0x10] sm:$0x3]
  %v39 = vld [vmem:[%s2] sm:$0x1]
  %v41 = vlaneseq
  %v42 = vshrl.u32 %v41, 7
  %v43 = vsub.s32 0, %v42
  %v44 = vrot.slane %v39, %v43
  %v62 = vunpack.c.l.b16 %v18
  %v63 = vunpack.c.l.b16 %v19
  %v64 = vunpack.c.l.b16 %v20
  %v65 = vunpack.c.l.b16 %v21
  %v66 = vunpack.c.l.b16 %v22
  %v67 = vunpack.c.l.b16 %v23
  %v68 = vunpack.c.l.b16 %v24
  %v69 = vunpack.c.l.b16 %v25
  %v70 = vunpack.c.l.b16 %v26
  %v71 = vunpack.c.l.b16 %v27
  %v72 = vunpack.c.l.b16 %v28
  %v73 = vunpack.c.l.b16 %v29
  %v74 = vunpack.c.l.b16 %v30
  %v75 = vunpack.c.l.b16 %v31
  %v76 = vunpack.c.l.b16 %v32
  %v77 = vunpack.c.l.b16 %v33
  %v78 = vpack.c.b16 %v63, %v62
  %v79 = vpack.c.b16 %v65, %v64
  %v80 = vpack.c.b16 %v67, %v66
  %v81 = vpack.c.b16 %v69, %v68
  %v82 = vpack.c.b16 %v71, %v70
  %v83 = vpack.c.b16 %v73, %v72
  %v84 = vpack.c.b16 %v75, %v74
  %v85 = vpack.c.b16 %v77, %v76
  %v91 = vunpack.c.l.b16 %v34
  %v92 = vunpack.c.l.b16 %v35
  %v93 = vunpack.c.l.b16 %v36
  %v94 = vunpack.c.l.b16 %v37
  %v95 = vunpack.c.l.b16 %v38
  %v96 = vpack.c.b16 %v92, %v91
  %v97 = vpack.c.b16 %v94, %v93
  %v98 = vpack.c.b16 %v95, %v95
  %vm101 = vcmask 293888
  %v103 = vsel %vm101, %v78, 0
  %v106 = vsel %vm101, %v79, 0
  %v109 = vsel %vm101, %v80, 0
  %v112 = vsel %vm101, %v81, 0
  %v115 = vsel %vm101, %v82, 0
  %v118 = vsel %vm101, %v83, 0
  %v121 = vsel %vm101, %v84, 0
  %v124 = vsel %vm101, %v85, 0
  %vm126 = vcmask 1041408
  %v128 = vsel %vm126, %v98, 0
  %130 = vmatprep.subr.bf16.mxu0 0
  %131 = vmatpush1.bf16.msra.mxu0 %v96
  %132 = vmatprep.subr.bf16.mxu0 0
  %133 = vmatpush1.bf16.msra.mxu0 %v97
  %134 = vmatprep.subr.bf16.mxu0 0
  %135 = vmatpush1.bf16.msra.mxu0 %v128
  %136 = vmatprep.subr.bf16.mxu0 0
  %137 = vmatpush1.bf16.msra.mxu0 0
  %138 = vmatprep.subr.bf16.mxu0 0
  %139 = vmatpush1.bf16.msra.mxu0 0
  %140 = vmatprep.subr.bf16.mxu0 0
  %141 = vmatpush1.bf16.msra.mxu0 0
  %142 = vmatprep.subr.bf16.mxu0 0
  %143 = vmatpush1.bf16.msra.mxu0 0
  %144 = vmatprep.subr.bf16.mxu0 0
  %145 = vmatpush1.bf16.msra.mxu0 0
  %146 = vmatprep.subr.bf16.mxu0 0
  %147 = vmatpush1.bf16.msra.mxu0 0
  %148 = vmatprep.subr.bf16.mxu0 0
  %149 = vmatpush1.bf16.msra.mxu0 0
  %150 = vmatprep.subr.bf16.mxu0 0
  %151 = vmatpush1.bf16.msra.mxu0 0
  %152 = vmatprep.subr.bf16.mxu0 0
  %153 = vmatpush1.bf16.msra.mxu0 0
  %154 = vmatprep.subr.bf16.mxu0 0
  %155 = vmatpush1.bf16.msra.mxu0 0
  %156 = vmatprep.subr.bf16.mxu0 0
  %157 = vmatpush1.bf16.msra.mxu0 0
  %158 = vmatprep.subr.bf16.mxu0 0
  %159 = vmatpush1.bf16.msra.mxu0 0
  %160 = vmatprep.subr.bf16.mxu0 0
  %161 = vmatpush1.bf16.msra.mxu0 0
  %162 = vmatprep.mubr.bf16.mxu0 0
  %163 = vmatmul.mubr.bf16.gmra.mrb[0].mxu0 %v103
  %v164 = vpop.f32.mrb[0].mxu0
  %v165 = vadd.f32 %v44, %v164
  %v166 = vpop.f32.mrb[0].mxu0
  %v167 = vpop.f32.mrb[0].mxu0
  %v168 = vadd.f32 %v44, %v167
  %v169 = vpop.f32.mrb[0].mxu0
  %170 = vmatprep.mubr.bf16.mxu0 0
  %171 = vmatmul.mubr.bf16.gmra.mrb[0].mxu0 %v106
  %v172 = vpop.f32.mrb[0].mxu0
  %v173 = vadd.f32 %v44, %v172
  %v174 = vpop.f32.mrb[0].mxu0
  %v175 = vpop.f32.mrb[0].mxu0
  %v176 = vadd.f32 %v44, %v175
  %v177 = vpop.f32.mrb[0].mxu0
  %178 = vmatprep.mubr.bf16.mxu0 0
  %179 = vmatmul.mubr.bf16.gmra.mrb[0].mxu0 %v109
  %v180 = vpop.f32.mrb[0].mxu0
  %v181 = vadd.f32 %v44, %v180
  %v182 = vpop.f32.mrb[0].mxu0
  %v183 = vpop.f32.mrb[0].mxu0
  %v184 = vadd.f32 %v44, %v183
  %v185 = vpop.f32.mrb[0].mxu0
  %186 = vmatprep.mubr.bf16.mxu0 0
  %187 = vmatmul.mubr.bf16.gmra.mrb[0].mxu0 %v112
  %v188 = vpop.f32.mrb[0].mxu0
  %v189 = vadd.f32 %v44, %v188
  %v190 = vpop.f32.mrb[0].mxu0
  %v191 = vpop.f32.mrb[0].mxu0
  %v192 = vadd.f32 %v44, %v191
  %v193 = vpop.f32.mrb[0].mxu0
  %194 = vmatprep.mubr.bf16.mxu0 0
  %195 = vmatmul.mubr.bf16.gmra.mrb[0].mxu0 %v115
  %v196 = vpop.f32.mrb[0].mxu0
  %v197 = vadd.f32 %v44, %v196
  %v198 = vpop.f32.mrb[0].mxu0
  %v199 = vpop.f32.mrb[0].mxu0
  %v200 = vadd.f32 %v44, %v199
  %v201 = vpop.f32.mrb[0].mxu0
  %202 = vmatprep.mubr.bf16.mxu0 0
  %203 = vmatmul.mubr.bf16.gmra.mrb[0].mxu0 %v118
  %v204 = vpop.f32.mrb[0].mxu0
  %v205 = vadd.f32 %v44, %v204
  %v206 = vpop.f32.mrb[0].mxu0
  %v207 = vpop.f32.mrb[0].mxu0
  %v208 = vadd.f32 %v44, %v207
  %v209 = vpop.f32.mrb[0].mxu0
  %210 = vmatprep.mubr.bf16.mxu0 0
  %211 = vmatmul.mubr.bf16.gmra.mrb[0].mxu0 %v121
  %v212 = vpop.f32.mrb[0].mxu0
  %v213 = vadd.f32 %v44, %v212
  %v214 = vpop.f32.mrb[0].mxu0
  %v215 = vpop.f32.mrb[0].mxu0
  %v216 = vadd.f32 %v44, %v215
  %v217 = vpop.f32.mrb[0].mxu0
  %218 = vmatprep.mubr.bf16.mxu0 0
  %219 = vmatmul.mubr.bf16.gmra.mrb[0].mxu0 %v124
  %v220 = vpop.f32.mrb[0].mxu0
  %v221 = vadd.f32 %v44, %v220
  %v222 = vpop.f32.mrb[0].mxu0
  %v223 = vpop.f32.mrb[0].mxu0
  %v224 = vadd.f32 %v44, %v223
  %v225 = vpop.f32.mrb[0].mxu0
  %226 = vdwg.mxu0
  %vm227 = vcmp.ge.f32.partialorder %v165, 0.0
  %vm228 = vcmp.ge.f32.partialorder %v168, 0.0
  %vm229 = vcmp.ge.f32.partialorder %v173, 0.0
  %vm230 = vcmp.ge.f32.partialorder %v176, 0.0
  %vm231 = vcmp.ge.f32.partialorder %v181, 0.0
  %vm232 = vcmp.ge.f32.partialorder %v184, 0.0
  %vm233 = vcmp.ge.f32.partialorder %v189, 0.0
  %vm234 = vcmp.ge.f32.partialorder %v192, 0.0
  %vm235 = vcmp.ge.f32.partialorder %v197, 0.0
  %vm236 = vcmp.ge.f32.partialorder %v200, 0.0
  %vm237 = vcmp.ge.f32.partialorder %v205, 0.0
  %vm238 = vcmp.ge.f32.partialorder %v208, 0.0
  %vm239 = vcmp.ge.f32.partialorder %v213, 0.0
  %vm240 = vcmp.ge.f32.partialorder %v216, 0.0
  %vm241 = vcmp.ge.f32.partialorder %v221, 0.0
  %vm242 = vcmp.ge.f32.partialorder %v224, 0.0
  %v243 = vmul.f32 %v165, 0.01
  %v244 = vmul.f32 %v168, 0.01
  %v245 = vmul.f32 %v173, 0.01
  %v246 = vmul.f32 %v176, 0.01
  %v247 = vmul.f32 %v181, 0.01
  %v248 = vmul.f32 %v184, 0.01
  %v249 = vmul.f32 %v189, 0.01
  %v250 = vmul.f32 %v192, 0.01
  %v251 = vmul.f32 %v197, 0.01
  %v252 = vmul.f32 %v200, 0.01
  %v253 = vmul.f32 %v205, 0.01
  %v254 = vmul.f32 %v208, 0.01
  %v255 = vmul.f32 %v213, 0.01
  %v256 = vmul.f32 %v216, 0.01
  %v257 = vmul.f32 %v221, 0.01
  %v258 = vmul.f32 %v224, 0.01
  %v259 = vsel %vm227, %v165, %v243
  %v260 = vsel %vm228, %v168, %v244
  %v261 = vsel %vm229, %v173, %v245
  %v262 = vsel %vm230, %v176, %v246
  %v263 = vsel %vm231, %v181, %v247
  %v264 = vsel %vm232, %v184, %v248
  %v265 = vsel %vm233, %v189, %v249
  %v266 = vsel %vm234, %v192, %v250
  %v267 = vsel %vm235, %v197, %v251
  %v268 = vsel %vm236, %v200, %v252
  %v269 = vsel %vm237, %v205, %v253
  %v270 = vsel %vm238, %v208, %v254
  %v271 = vsel %vm239, %v213, %v255
  %v272 = vsel %vm240, %v216, %v256
  %v273 = vsel %vm241, %v221, %v257
  %v274 = vsel %vm242, %v224, %v258
  %v275 = vld [vmem:[%s3] sm:$0xf]
  %v276 = vld [vmem:[%s3 + $0x4] sm:$0xf]
  %v277 = vld [vmem:[%s3 + $0x8] sm:$0xf]
  %v278 = vld [vmem:[%s3 + $0xc] sm:$0xf]
  %v279 = vld [vmem:[%s3 + $0x10] sm:$0xf]
  %v280 = vld [vmem:[%s3 + $0x14] sm:$0xf]
  %v281 = vld [vmem:[%s3 + $0x18] sm:$0xf]
  %v282 = vld [vmem:[%s3 + $0x1c] sm:$0xf]
  %v283 = vld [vmem:[%s3 + $0x20] sm:$0xf]
  %v284 = vld [vmem:[%s3 + $0x24] sm:$0xf]
  %v285 = vld [vmem:[%s3 + $0x28] sm:$0xf]
  %v286 = vld [vmem:[%s3 + $0x2c] sm:$0xf]
  %v287 = vld [vmem:[%s3 + $0x30] sm:$0xf]
  %v288 = vld [vmem:[%s3 + $0x34] sm:$0xf]
  %v289 = vld [vmem:[%s3 + $0x38] sm:$0xf]
  %v290 = vld [vmem:[%s3 + $0x3c] sm:$0xf]
  %v291 = vunpack.c.l.bf16 %v275
  %v292 = vunpack.c.l.bf16 %v276
  %v293 = vunpack.c.l.bf16 %v277
  %v294 = vunpack.c.l.bf16 %v278
  %v295 = vunpack.c.l.bf16 %v279
  %v296 = vunpack.c.l.bf16 %v280
  %v297 = vunpack.c.l.bf16 %v281
  %v298 = vunpack.c.l.bf16 %v282
  %v299 = vunpack.c.l.bf16 %v283
  %v300 = vunpack.c.l.bf16 %v284
  %v301 = vunpack.c.l.bf16 %v285
  %v302 = vunpack.c.l.bf16 %v286
  %v303 = vunpack.c.l.bf16 %v287
  %v304 = vunpack.c.l.bf16 %v288
  %v305 = vunpack.c.l.bf16 %v289
  %v306 = vunpack.c.l.bf16 %v290
  %v307 = vadd.f32 %v259, %v291
  %v308 = vadd.f32 %v260, %v292
  %v309 = vadd.f32 %v261, %v293
  %v310 = vadd.f32 %v262, %v294
  %v311 = vadd.f32 %v263, %v295
  %v312 = vadd.f32 %v264, %v296
  %v313 = vadd.f32 %v265, %v297
  %v314 = vadd.f32 %v266, %v298
  %v315 = vadd.f32 %v267, %v299
  %v316 = vadd.f32 %v268, %v300
  %v317 = vadd.f32 %v269, %v301
  %v318 = vadd.f32 %v270, %v302
  %v319 = vadd.f32 %v271, %v303
  %v320 = vadd.f32 %v272, %v304
  %v321 = vadd.f32 %v273, %v305
  %v322 = vadd.f32 %v274, %v306
  %v323 = vpack.c.bf16 %v308, %v307
  %v324 = vpack.c.bf16 %v310, %v309
  %v325 = vpack.c.bf16 %v312, %v311
  %v326 = vpack.c.bf16 %v314, %v313
  %v327 = vpack.c.bf16 %v316, %v315
  %v328 = vpack.c.bf16 %v318, %v317
  %v329 = vpack.c.bf16 %v320, %v319
  %v330 = vpack.c.bf16 %v322, %v321
  %v339 = vunpack.c.l.b16 %v323
  %v340 = vunpack.c.h.b16 %v323
  %v341 = vunpack.c.l.b16 %v324
  %v342 = vunpack.c.h.b16 %v324
  %v343 = vunpack.c.l.b16 %v325
  %v344 = vunpack.c.h.b16 %v325
  %v345 = vunpack.c.l.b16 %v326
  %v346 = vunpack.c.h.b16 %v326
  %v347 = vunpack.c.l.b16 %v327
  %v348 = vunpack.c.h.b16 %v327
  %v349 = vunpack.c.l.b16 %v328
  %v350 = vunpack.c.h.b16 %v328
  %v351 = vunpack.c.l.b16 %v329
  %v352 = vunpack.c.h.b16 %v329
  %v353 = vunpack.c.l.b16 %v330
  %v354 = vunpack.c.h.b16 %v330
  %v355 = vpack.c.b16 %v339, %v339
  %v356 = vpack.c.b16 %v340, %v340
  %v357 = vpack.c.b16 %v341, %v341
  %v358 = vpack.c.b16 %v342, %v342
  %v359 = vpack.c.b16 %v343, %v343
  %v360 = vpack.c.b16 %v344, %v344
  %v361 = vpack.c.b16 %v345, %v345
  %v362 = vpack.c.b16 %v346, %v346
  %v363 = vpack.c.b16 %v347, %v347
  %v364 = vpack.c.b16 %v348, %v348
  %v365 = vpack.c.b16 %v349, %v349
  %v366 = vpack.c.b16 %v350, %v350
  %v367 = vpack.c.b16 %v351, %v351
  %v368 = vpack.c.b16 %v352, %v352
  %v369 = vpack.c.b16 %v353, %v353
  %v370 = vpack.c.b16 %v354, %v354
  %vm387 = vcmask 125952
  %388 = vst.msk [vmem:[%s4] sm:$0xf] %vm387, %v355
  %389 = vst.msk [vmem:[%s4 + $0x4] sm:$0xf] %vm387, %v356
  %390 = vst.msk [vmem:[%s4 + $0x8] sm:$0xf] %vm387, %v357
  %391 = vst.msk [vmem:[%s4 + $0xc] sm:$0xf] %vm387, %v358
  %392 = vst.msk [vmem:[%s4 + $0x10] sm:$0xf] %vm387, %v359
  %393 = vst.msk [vmem:[%s4 + $0x14] sm:$0xf] %vm387, %v360
  %394 = vst.msk [vmem:[%s4 + $0x18] sm:$0xf] %vm387, %v361
  %395 = vst.msk [vmem:[%s4 + $0x1c] sm:$0xf] %vm387, %v362
  %396 = vst.msk [vmem:[%s4 + $0x20] sm:$0xf] %vm387, %v363
  %397 = vst.msk [vmem:[%s4 + $0x24] sm:$0xf] %vm387, %v364
  %398 = vst.msk [vmem:[%s4 + $0x28] sm:$0xf] %vm387, %v365
  %399 = vst.msk [vmem:[%s4 + $0x2c] sm:$0xf] %vm387, %v366
  %400 = vst.msk [vmem:[%s4 + $0x30] sm:$0xf] %vm387, %v367
  %401 = vst.msk [vmem:[%s4 + $0x34] sm:$0xf] %vm387, %v368
  %402 = vst.msk [vmem:[%s4 + $0x38] sm:$0xf] %vm387, %v369
  %403 = vst.msk [vmem:[%s4 + $0x3c] sm:$0xf] %vm387, %v370
  // Predicated region
  $region18: #{darknet_forward.18} parent=0 // pred_check
    _
  $region19: #{darknet_forward.18} parent=0 // pred_check_branch
    %405 = sbr.rel (0) target = $region21
  $region20: #{darknet_forward.18} parent=0 // pred_region
    _
  $region21: #{darknet_forward.18} parent=0 // pred_fallthru
    _
  // Predicated region
  $region22: #{darknet_forward.18} parent=0 // pred_check
    _
  $region23: #{darknet_forward.18} parent=0 // pred_check_branch
    %407 = sbr.rel (0) target = $region25
  $region24: #{darknet_forward.18} parent=0 // pred_region
    _
  $region25: #{darknet_forward.18} parent=0 // pred_fallthru
    _

// kernel: darknet_forward.20
$region0: #{darknet_forward.20}
  #allocation0 [shape = 'u32[]', space=smem, size = 0x4, offset = 0x4, fixed_abs, tag = 'smem constant byte address 0x4 - core index']
  #allocation1 [shape = 'u32[144,128]{1,0:T(1,128)}', space=vmem, size = 0x12000, scoped, tag = 'internal scratch']
  %s0 = inlined_call_operand.vmem [shape: bf16[32,32], index: 0, kind: input, shape index: {}]
  %s1 = inlined_call_operand.vmem [shape: bf16[32,8], index: 1, kind: input, shape index: {}]
  %s2 = inlined_call_operand.vmem [shape: f32[1,8], index: 2, kind: input, shape index: {}]
  %s3 = inlined_call_operand.vmem [shape: bf16[32,8], index: 3, kind: output, shape index: {}]
  %s4 = sld [smem:[#allocation0]]
  $region22: #{darknet_forward.20} parent=0
    _
  %s6 = ssub.s32 1, %s4
  %s7 = scalar_select 0, %s6, %s4
  // Predicated region
  $region2: #{darknet_forward.20} parent=0 // pred_check
    _
  $region3: #{darknet_forward.20} parent=0 // pred_check_branch
    %9 = sbr.rel (0) target = $region5
  $region4: #{darknet_forward.20} parent=0 // pred_region
    _
  $region5: #{darknet_forward.20} parent=0 // pred_fallthru
    _
  // Predicated region
  $region6: #{darknet_forward.20} parent=0 // pred_check
    _
  $region7: #{darknet_forward.20} parent=0 // pred_check_branch
    %11 = sbr.rel (0) target = $region9
  $region8: #{darknet_forward.20} parent=0 // pred_region
    _
  $region9: #{darknet_forward.20} parent=0 // pred_fallthru
    _
  // Predicated region
  $region10: #{darknet_forward.20} parent=0 // pred_check
    _
  $region11: #{darknet_forward.20} parent=0 // pred_check_branch
    %13 = sbr.rel (0) target = $region13
  $region12: #{darknet_forward.20} parent=0 // pred_region
    _
  $region13: #{darknet_forward.20} parent=0 // pred_fallthru
    _
  %v15 = vld [vmem:[%s0] sm:$0xf]
  %v16 = vld [vmem:[%s0 + $0x4] sm:$0xf]
  %v17 = vld [vmem:[%s0 + $0x8] sm:$0xf]
  %v18 = vld [vmem:[%s0 + $0xc] sm:$0xf]
  %v19 = vld [vmem:[%s1] sm:$0xf]
  %v20 = vld [vmem:[%s1 + $0x4] sm:$0xf]
  %v21 = vld [vmem:[%s1 + $0x8] sm:$0xf]
  %v22 = vld [vmem:[%s1 + $0xc] sm:$0xf]
  %v23 = vld [vmem:[%s2] sm:$0x1]
  %v25 = vlaneseq
  %v26 = vshrl.u32 %v25, 7
  %v27 = vsub.s32 0, %v26
  %v28 = vrot.slane %v23, %v27
  %v34 = vunpack.c.l.b16 %v15
  %v35 = vunpack.c.l.b16 %v16
  %v36 = vunpack.c.l.b16 %v17
  %v37 = vunpack.c.l.b16 %v18
  %v38 = vpack.c.b16 %v35, %v34
  %v39 = vpack.c.b16 %v37, %v36
  %v44 = vunpack.c.l.b16 %v19
  %v45 = vunpack.c.l.b16 %v20
  %v46 = vunpack.c.l.b16 %v21
  %v47 = vunpack.c.l.b16 %v22
  %v48 = vpack.c.b16 %v45, %v44
  %v49 = vpack.c.b16 %v47, %v46
  %vm52 = vcmask 261120
  %v54 = vsel %vm52, %v38, 0
  %v57 = vsel %vm52, %v39, 0
  %59 = vmatprep.subr.bf16.mxu0 0
  %60 = vmatpush1.bf16.msra.mxu0 %v48
  %61 = vmatprep.subr.bf16.mxu0 0
  %62 = vmatpush1.bf16.msra.mxu0 %v49
  %63 = vmatprep.subr.bf16.mxu0 0
  %64 = vmatpush1.bf16.msra.mxu0 0
  %65 = vmatprep.subr.bf16.mxu0 0
  %66 = vmatpush1.bf16.msra.mxu0 0
  %67 = vmatprep.subr.bf16.mxu0 0
  %68 = vmatpush1.bf16.msra.mxu0 0
  %69 = vmatprep.subr.bf16.mxu0 0
  %70 = vmatpush1.bf16.msra.mxu0 0
  %71 = vmatprep.subr.bf16.mxu0 0
  %72 = vmatpush1.bf16.msra.mxu0 0
  %73 = vmatprep.subr.bf16.mxu0 0
  %74 = vmatpush1.bf16.msra.mxu0 0
  %75 = vmatprep.subr.bf16.mxu0 0
  %76 = vmatpush1.bf16.msra.mxu0 0
  %77 = vmatprep.subr.bf16.mxu0 0
  %78 = vmatpush1.bf16.msra.mxu0 0
  %79 = vmatprep.subr.bf16.mxu0 0
  %80 = vmatpush1.bf16.msra.mxu0 0
  %81 = vmatprep.subr.bf16.mxu0 0
  %82 = vmatpush1.bf16.msra.mxu0 0
  %83 = vmatprep.subr.bf16.mxu0 0
  %84 = vmatpush1.bf16.msra.mxu0 0
  %85 = vmatprep.subr.bf16.mxu0 0
  %86 = vmatpush1.bf16.msra.mxu0 0
  %87 = vmatprep.subr.bf16.mxu0 0
  %88 = vmatpush1.bf16.msra.mxu0 0
  %89 = vmatprep.subr.bf16.mxu0 0
  %90 = vmatpush1.bf16.msra.mxu0 0
  %91 = vmatprep.mubr.bf16.mxu0 0
  %92 = vmatmul.mubr.bf16.gmra.mrb[0].mxu0 %v54
  %v93 = vpop.f32.mrb[0].mxu0
  %v94 = vadd.f32 %v28, %v93
  %v95 = vpop.f32.mrb[0].mxu0
  %v96 = vpop.f32.mrb[0].mxu0
  %v97 = vadd.f32 %v28, %v96
  %v98 = vpop.f32.mrb[0].mxu0
  %99 = vmatprep.mubr.bf16.mxu0 0
  %100 = vmatmul.mubr.bf16.gmra.mrb[0].mxu0 %v57
  %v101 = vpop.f32.mrb[0].mxu0
  %v102 = vadd.f32 %v28, %v101
  %v103 = vpop.f32.mrb[0].mxu0
  %v104 = vpop.f32.mrb[0].mxu0
  %v105 = vadd.f32 %v28, %v104
  %v106 = vpop.f32.mrb[0].mxu0
  %107 = vdwg.mxu0
  %vm108 = vcmp.ge.f32.partialorder %v94, 0.0
  %vm109 = vcmp.ge.f32.partialorder %v97, 0.0
  %vm110 = vcmp.ge.f32.partialorder %v102, 0.0
  %vm111 = vcmp.ge.f32.partialorder %v105, 0.0
  %v112 = vmul.f32 %v94, 0.01
  %v113 = vmul.f32 %v97, 0.01
  %v114 = vmul.f32 %v102, 0.01
  %v115 = vmul.f32 %v105, 0.01
  %v116 = vsel %vm108, %v94, %v112
  %v117 = vsel %vm109, %v97, %v113
  %v118 = vsel %vm110, %v102, %v114
  %v119 = vsel %vm111, %v105, %v115
  %v120 = vpack.c.bf16 %v117, %v116
  %v121 = vpack.c.bf16 %v119, %v118
  %v124 = vunpack.c.l.b16 %v120
  %v125 = vunpack.c.h.b16 %v120
  %v126 = vunpack.c.l.b16 %v121
  %v127 = vunpack.c.h.b16 %v121
  %v128 = vpack.c.b16 %v124, %v124
  %v129 = vpack.c.b16 %v125, %v125
  %v130 = vpack.c.b16 %v126, %v126
  %v131 = vpack.c.b16 %v127, %v127
  %vm136 = vcmask 60416
  %137 = vst.msk [vmem:[%s3] sm:$0xf] %vm136, %v128
  %138 = vst.msk [vmem:[%s3 + $0x4] sm:$0xf] %vm136, %v129
  %139 = vst.msk [vmem:[%s3 + $0x8] sm:$0xf] %vm136, %v130
  %140 = vst.msk [vmem:[%s3 + $0xc] sm:$0xf] %vm136, %v131
  // Predicated region
  $region14: #{darknet_forward.20} parent=0 // pred_check
    _
  $region15: #{darknet_forward.20} parent=0 // pred_check_branch
    %142 = sbr.rel (0) target = $region17
  $region16: #{darknet_forward.20} parent=0 // pred_region
    _
  $region17: #{darknet_forward.20} parent=0 // pred_fallthru
    _
  // Predicated region
  $region18: #{darknet_forward.20} parent=0 // pred_check
    _
  $region19: #{darknet_forward.20} parent=0 // pred_check_branch
    %144 = sbr.rel (0) target = $region21
  $region20: #{darknet_forward.20} parent=0 // pred_region
    _
  $region21: #{darknet_forward.20} parent=0 // pred_fallthru
    _

// kernel: darknet_forward.19
$region0: #{darknet_forward.19}
  #allocation0 [shape = 'u32[]', space=smem, size = 0x4, offset = 0x4, fixed_abs, tag = 'smem constant byte address 0x4 - core index']
  #allocation1 [shape = 'u32[144,128]{1,0:T(1,128)}', space=vmem, size = 0x12000, scoped, tag = 'internal scratch']
  %s0 = inlined_call_operand.vmem [shape: bf16[32,144], index: 0, kind: input, shape index: {}]
  %s1 = inlined_call_operand.vmem [shape: bf16[144,32], index: 1, kind: input, shape index: {}]
  %s2 = inlined_call_operand.vmem [shape: f32[1,32], index: 2, kind: input, shape index: {}]
  %s3 = inlined_call_operand.vmem [shape: bf16[32,32], index: 3, kind: output, shape index: {}]
  %s4 = sld [smem:[#allocation0]]
  $region22: #{darknet_forward.19} parent=0
    _
  %s6 = ssub.s32 1, %s4
  %s7 = scalar_select 0, %s6, %s4
  // Predicated region
  $region2: #{darknet_forward.19} parent=0 // pred_check
    _
  $region3: #{darknet_forward.19} parent=0 // pred_check_branch
    %9 = sbr.rel (0) target = $region5
  $region4: #{darknet_forward.19} parent=0 // pred_region
    _
  $region5: #{darknet_forward.19} parent=0 // pred_fallthru
    _
  // Predicated region
  $region6: #{darknet_forward.19} parent=0 // pred_check
    _
  $region7: #{darknet_forward.19} parent=0 // pred_check_branch
    %11 = sbr.rel (0) target = $region9
  $region8: #{darknet_forward.19} parent=0 // pred_region
    _
  $region9: #{darknet_forward.19} parent=0 // pred_fallthru
    _
  // Predicated region
  $region10: #{darknet_forward.19} parent=0 // pred_check
    _
  $region11: #{darknet_forward.19} parent=0 // pred_check_branch
    %13 = sbr.rel (0) target = $region13
  $region12: #{darknet_forward.19} parent=0 // pred_region
    _
  $region13: #{darknet_forward.19} parent=0 // pred_fallthru
    _
  %v15 = vld [vmem:[%s0] sm:$0xff]
  %v16 = vld [vmem:[%s0 + $0x8] sm:$0xff]
  %v17 = vld [vmem:[%s0 + $0x10] sm:$0xff]
  %v18 = vld [vmem:[%s0 + $0x18] sm:$0xff]
  %v19 = vld [vmem:[%s1] sm:$0xf]
  %v20 = vld [vmem:[%s1 + $0x4] sm:$0xf]
  %v21 = vld [vmem:[%s1 + $0x8] sm:$0xf]
  %v22 = vld [vmem:[%s1 + $0xc] sm:$0xf]
  %v23 = vld [vmem:[%s1 + $0x10] sm:$0xf]
  %v24 = vld [vmem:[%s1 + $0x14] sm:$0xf]
  %v25 = vld [vmem:[%s1 + $0x18] sm:$0xf]
  %v26 = vld [vmem:[%s1 + $0x1c] sm:$0xf]
  %v27 = vld [vmem:[%s1 + $0x20] sm:$0xf]
  %v28 = vld [vmem:[%s1 + $0x24] sm:$0xf]
  %v29 = vld [vmem:[%s1 + $0x28] sm:$0xf]
  %v30 = vld [vmem:[%s1 + $0x2c] sm:$0xf]
  %v31 = vld [vmem:[%s1 + $0x30] sm:$0xf]
  %v32 = vld [vmem:[%s1 + $0x34] sm:$0xf]
  %v33 = vld [vmem:[%s1 + $0x38] sm:$0xf]
  %v34 = vld [vmem:[%s1 + $0x3c] sm:$0xf]
  %v35 = vld [vmem:[%s1 + $0x40] sm:$0xf]
  %v36 = vld [vmem:[%s1 + $0x44] sm:$0xf]
  %v37 = vld [vmem:[%s2] sm:$0x1]
  %v39 = vlaneseq
  %v40 = vshrl.u32 %v39, 7
  %v41 = vsub.s32 0, %v40
  %v42 = vrot.slane %v37, %v41
  %v48 = vunpack.c.l.b16 %v15
  %v49 = vunpack.c.h.b16 %v15
  %v50 = vunpack.c.l.b16 %v16
  %v51 = vunpack.c.h.b16 %v16
  %v52 = vunpack.c.l.b16 %v17
  %v53 = vunpack.c.h.b16 %v17
  %v54 = vunpack.c.l.b16 %v18
  %v55 = vunpack.c.h.b16 %v18
  %v56 = vpack.c.b16 %v50, %v48
  %v57 = vpack.c.b16 %v51, %v49
  %v58 = vpack.c.b16 %v54, %v52
  %v59 = vpack.c.b16 %v55, %v53
  %v80 = vunpack.c.l.b16 %v19
  %v81 = vunpack.c.l.b16 %v20
  %v82 = vunpack.c.l.b16 %v21
  %v83 = vunpack.c.l.b16 %v22
  %v84 = vunpack.c.l.b16 %v23
  %v85 = vunpack.c.l.b16 %v24
  %v86 = vunpack.c.l.b16 %v25
  %v87 = vunpack.c.l.b16 %v26
  %v88 = vunpack.c.l.b16 %v27
  %v89 = vunpack.c.l.b16 %v28
  %v90 = vunpack.c.l.b16 %v29
  %v91 = vunpack.c.l.b16 %v30
  %v92 = vunpack.c.l.b16 %v31
  %v93 = vunpack.c.l.b16 %v32
  %v94 = vunpack.c.l.b16 %v33
  %v95 = vunpack.c.l.b16 %v34
  %v96 = vunpack.c.l.b16 %v35
  %v97 = vunpack.c.l.b16 %v36
  %v98 = vpack.c.b16 %v81, %v80
  %v99 = vpack.c.b16 %v83, %v82
  %v100 = vpack.c.b16 %v85, %v84
  %v101 = vpack.c.b16 %v87, %v86
  %v102 = vpack.c.b16 %v89, %v88
  %v103 = vpack.c.b16 %v91, %v90
  %v104 = vpack.c.b16 %v93, %v92
  %v105 = vpack.c.b16 %v95, %v94
  %v106 = vpack.c.b16 %v97, %v96
  %vm116 = vcmask 130048
  %v118 = vsel %vm116, %v57, 0
  %v121 = vsel %vm116, %v59, 0
  %123 = vmatprep.subr.bf16.mxu0 0
  %124 = vmatpush1.bf16.msra.mxu0 %v98
  %125 = vmatprep.subr.bf16.mxu0 0
  %126 = vmatpush1.bf16.msra.mxu0 %v99
  %127 = vmatprep.subr.bf16.mxu0 0
  %128 = vmatpush1.bf16.msra.mxu0 %v100
  %129 = vmatprep.subr.bf16.mxu0 0
  %130 = vmatpush1.bf16.msra.mxu0 %v101
  %131 = vmatprep.subr.bf16.mxu0 0
  %132 = vmatpush1.bf16.msra.mxu0 %v102
  %133 = vmatprep.subr.bf16.mxu0 0
  %134 = vmatpush1.bf16.msra.mxu0 %v103
  %135 = vmatprep.subr.bf16.mxu0 0
  %136 = vmatpush1.bf16.msra.mxu0 %v104
  %137 = vmatprep.subr.bf16.mxu0 0
  %138 = vmatpush1.bf16.msra.mxu0 %v105
  %139 = vmatprep.subr.bf16.mxu0 0
  %140 = vmatpush1.bf16.msra.mxu0 %v106
  %141 = vmatprep.subr.bf16.mxu0 0
  %142 = vmatpush1.bf16.msra.mxu0 0
  %143 = vmatprep.subr.bf16.mxu0 0
  %144 = vmatpush1.bf16.msra.mxu0 0
  %145 = vmatprep.subr.bf16.mxu0 0
  %146 = vmatpush1.bf16.msra.mxu0 0
  %147 = vmatprep.subr.bf16.mxu0 0
  %148 = vmatpush1.bf16.msra.mxu0 0
  %149 = vmatprep.subr.bf16.mxu0 0
  %150 = vmatpush1.bf16.msra.mxu0 0
  %151 = vmatprep.subr.bf16.mxu0 0
  %152 = vmatpush1.bf16.msra.mxu0 0
  %153 = vmatprep.subr.bf16.mxu0 0
  %154 = vmatpush1.bf16.msra.mxu0 0
  %155 = vmatprep.mubr.bf16.mxu0 %v118
  %156 = vmatmul.mubr.bf16.gmra.mrb[0].mxu0 %v56
  %v157 = vpop.f32.mrb[0].mxu0
  %v158 = vadd.f32 %v42, %v157
  %v159 = vpop.f32.mrb[0].mxu0
  %v160 = vpop.f32.mrb[0].mxu0
  %v161 = vadd.f32 %v42, %v160
  %v162 = vpop.f32.mrb[0].mxu0
  %163 = vmatprep.mubr.bf16.mxu0 %v121
  %164 = vmatmul.mubr.bf16.gmra.mrb[0].mxu0 %v58
  %v165 = vpop.f32.mrb[0].mxu0
  %v166 = vadd.f32 %v42, %v165
  %v167 = vpop.f32.mrb[0].mxu0
  %v168 = vpop.f32.mrb[0].mxu0
  %v169 = vadd.f32 %v42, %v168
  %v170 = vpop.f32.mrb[0].mxu0
  %171 = vdwg.mxu0
  %vm172 = vcmp.ge.f32.partialorder %v158, 0.0
  %vm173 = vcmp.ge.f32.partialorder %v161, 0.0
  %vm174 = vcmp.ge.f32.partialorder %v166, 0.0
  %vm175 = vcmp.ge.f32.partialorder %v169, 0.0
  %v176 = vmul.f32 %v158, 0.01
  %v177 = vmul.f32 %v161, 0.01
  %v178 = vmul.f32 %v166, 0.01
  %v179 = vmul.f32 %v169, 0.01
  %v180 = vsel %vm172, %v158, %v176
  %v181 = vsel %vm173, %v161, %v177
  %v182 = vsel %vm174, %v166, %v178
  %v183 = vsel %vm175, %v169, %v179
  %v184 = vpack.c.bf16 %v181, %v180
  %v185 = vpack.c.bf16 %v183, %v182
  %v188 = vunpack.c.l.b16 %v184
  %v189 = vunpack.c.h.b16 %v184
  %v190 = vunpack.c.l.b16 %v185
  %v191 = vunpack.c.h.b16 %v185
  %v192 = vpack.c.b16 %v188, %v188
  %v193 = vpack.c.b16 %v189, %v189
  %v194 = vpack.c.b16 %v190, %v190
  %v195 = vpack.c.b16 %v191, %v191
  %vm200 = vcmask 257024
  %201 = vst.msk [vmem:[%s3] sm:$0xf] %vm200, %v192
  %202 = vst.msk [vmem:[%s3 + $0x4] sm:$0xf] %vm200, %v193
  %203 = vst.msk [vmem:[%s3 + $0x8] sm:$0xf] %vm200, %v194
  %204 = vst.msk [vmem:[%s3 + $0xc] sm:$0xf] %vm200, %v195
  // Predicated region
  $region14: #{darknet_forward.19} parent=0 // pred_check
    _
  $region15: #{darknet_forward.19} parent=0 // pred_check_branch
    %206 = sbr.rel (0) target = $region17
  $region16: #{darknet_forward.19} parent=0 // pred_region
    _
  $region17: #{darknet_forward.19} parent=0 // pred_fallthru
    _
  // Predicated region
  $region18: #{darknet_forward.19} parent=0 // pred_check
    _
  $region19: #{darknet_forward.19} parent=0 // pred_check_branch
    %208 = sbr.rel (0) target = $region21
  $region20: #{darknet_forward.19} parent=0 // pred_region
    _
  $region21: #{darknet_forward.19} parent=0 // pred_fallthru
    _

// kernel: darknet_forward.21
$region0: #{darknet_forward.21}
  #allocation0 [shape = 'u32[]', space=smem, size = 0x4, offset = 0x4, fixed_abs, tag = 'smem constant byte address 0x4 - core index']
  #allocation1 [shape = 'u32[144,128]{1,0:T(1,128)}', space=vmem, size = 0x12000, scoped, tag = 'internal scratch']
  %s0 = inlined_call_operand.vmem [shape: bf16[32,72], index: 0, kind: input, shape index: {}]
  %s1 = inlined_call_operand.vmem [shape: bf16[72,32], index: 1, kind: input, shape index: {}]
  %s2 = inlined_call_operand.vmem [shape: f32[1,32], index: 2, kind: input, shape index: {}]
  %s3 = inlined_call_operand.vmem [shape: bf16[32,32], index: 3, kind: input, shape index: {}]
  %s4 = inlined_call_operand.vmem [shape: bf16[32,32], index: 4, kind: output, shape index: {}]
  %s5 = sld [smem:[#allocation0]]
  $region26: #{darknet_forward.21} parent=0
    _
  %s7 = ssub.s32 1, %s5
  %s8 = scalar_select 0, %s7, %s5
  // Predicated region
  $region2: #{darknet_forward.21} parent=0 // pred_check
    _
  $region3: #{darknet_forward.21} parent=0 // pred_check_branch
    %10 = sbr.rel (0) target = $region5
  $region4: #{darknet_forward.21} parent=0 // pred_region
    _
  $region5: #{darknet_forward.21} parent=0 // pred_fallthru
    _
  // Predicated region
  $region6: #{darknet_forward.21} parent=0 // pred_check
    _
  $region7: #{darknet_forward.21} parent=0 // pred_check_branch
    %12 = sbr.rel (0) target = $region9
  $region8: #{darknet_forward.21} parent=0 // pred_region
    _
  $region9: #{darknet_forward.21} parent=0 // pred_fallthru
    _
  // Predicated region
  $region10: #{darknet_forward.21} parent=0 // pred_check
    _
  $region11: #{darknet_forward.21} parent=0 // pred_check_branch
    %14 = sbr.rel (0) target = $region13
  $region12: #{darknet_forward.21} parent=0 // pred_region
    _
  $region13: #{darknet_forward.21} parent=0 // pred_fallthru
    _
  // Predicated region
  $region14: #{darknet_forward.21} parent=0 // pred_check
    _
  $region15: #{darknet_forward.21} parent=0 // pred_check_branch
    %16 = sbr.rel (0) target = $region17
  $region16: #{darknet_forward.21} parent=0 // pred_region
    _
  $region17: #{darknet_forward.21} parent=0 // pred_fallthru
    _
  %v18 = vld [vmem:[%s0] sm:$0xf]
  %v19 = vld [vmem:[%s0 + $0x4] sm:$0xf]
  %v20 = vld [vmem:[%s0 + $0x8] sm:$0xf]
  %v21 = vld [vmem:[%s0 + $0xc] sm:$0xf]
  %v22 = vld [vmem:[%s1] sm:$0xf]
  %v23 = vld [vmem:[%s1 + $0x4] sm:$0xf]
  %v24 = vld [vmem:[%s1 + $0x8] sm:$0xf]
  %v25 = vld [vmem:[%s1 + $0xc] sm:$0xf]
  %v26 = vld [vmem:[%s1 + $0x10] sm:$0xf]
  %v27 = vld [vmem:[%s1 + $0x14] sm:$0xf]
  %v28 = vld [vmem:[%s1 + $0x18] sm:$0xf]
  %v29 = vld [vmem:[%s1 + $0x1c] sm:$0xf]
  %v30 = vld [vmem:[%s1 + $0x20] sm:$0xf]
  %v31 = vld [vmem:[%s2] sm:$0x1]
  %v33 = vlaneseq
  %v34 = vshrl.u32 %v33, 7
  %v35 = vsub.s32 0, %v34
  %v36 = vrot.slane %v31, %v35
  %v42 = vunpack.c.l.b16 %v18
  %v43 = vunpack.c.l.b16 %v19
  %v44 = vunpack.c.l.b16 %v20
  %v45 = vunpack.c.l.b16 %v21
  %v46 = vpack.c.b16 %v43, %v42
  %v47 = vpack.c.b16 %v45, %v44
  %v57 = vunpack.c.l.b16 %v22
  %v58 = vunpack.c.l.b16 %v23
  %v59 = vunpack.c.l.b16 %v24
  %v60 = vunpack.c.l.b16 %v25
  %v61 = vunpack.c.l.b16 %v26
  %v62 = vunpack.c.l.b16 %v27
  %v63 = vunpack.c.l.b16 %v28
  %v64 = vunpack.c.l.b16 %v29
  %v65 = vunpack.c.l.b16 %v30
  %v66 = vpack.c.b16 %v58, %v57
  %v67 = vpack.c.b16 %v60, %v59
  %v68 = vpack.c.b16 %v62, %v61
  %v69 = vpack.c.b16 %v64, %v63
  %v70 = vpack.c.b16 %v65, %v65
  %vm75 = vcmask 588800
  %v77 = vsel %vm75, %v46, 0
  %v80 = vsel %vm75, %v47, 0
  %vm82 = vcmask 1043456
  %v84 = vsel %vm82, %v70, 0
  %86 = vmatprep.subr.bf16.mxu0 0
  %87 = vmatpush1.bf16.msra.mxu0 %v66
  %88 = vmatprep.subr.bf16.mxu0 0
  %89 = vmatpush1.bf16.msra.mxu0 %v67
  %90 = vmatprep.subr.bf16.mxu0 0
  %91 = vmatpush1.bf16.msra.mxu0 %v68
  %92 = vmatprep.subr.bf16.mxu0 0
  %93 = vmatpush1.bf16.msra.mxu0 %v69
  %94 = vmatprep.subr.bf16.mxu0 0
  %95 = vmatpush1.bf16.msra.mxu0 %v84
  %96 = vmatprep.subr.bf16.mxu0 0
  %97 = vmatpush1.bf16.msra.mxu0 0
  %98 = vmatprep.subr.bf16.mxu0 0
  %99 = vmatpush1.bf16.msra.mxu0 0
  %100 = vmatprep.subr.bf16.mxu0 0
  %101 = vmatpush1.bf16.msra.mxu0 0
  %102 = vmatprep.subr.bf16.mxu0 0
  %103 = vmatpush1.bf16.msra.mxu0 0
  %104 = vmatprep.subr.bf16.mxu0 0
  %105 = vmatpush1.bf16.msra.mxu0 0
  %106 = vmatprep.subr.bf16.mxu0 0
  %107 = vmatpush1.bf16.msra.mxu0 0
  %108 = vmatprep.subr.bf16.mxu0 0
  %109 = vmatpush1.bf16.msra.mxu0 0
  %110 = vmatprep.subr.bf16.mxu0 0
  %111 = vmatpush1.bf16.msra.mxu0 0
  %112 = vmatprep.subr.bf16.mxu0 0
  %113 = vmatpush1.bf16.msra.mxu0 0
  %114 = vmatprep.subr.bf16.mxu0 0
  %115 = vmatpush1.bf16.msra.mxu0 0
  %116 = vmatprep.subr.bf16.mxu0 0
  %117 = vmatpush1.bf16.msra.mxu0 0
  %118 = vmatprep.mubr.bf16.mxu0 0
  %119 = vmatmul.mubr.bf16.gmra.mrb[0].mxu0 %v77
  %v120 = vpop.f32.mrb[0].mxu0
  %v121 = vadd.f32 %v36, %v120
  %v122 = vpop.f32.mrb[0].mxu0
  %v123 = vpop.f32.mrb[0].mxu0
  %v124 = vadd.f32 %v36, %v123
  %v125 = vpop.f32.mrb[0].mxu0
  %126 = vmatprep.mubr.bf16.mxu0 0
  %127 = vmatmul.mubr.bf16.gmra.mrb[0].mxu0 %v80
  %v128 = vpop.f32.mrb[0].mxu0
  %v129 = vadd.f32 %v36, %v128
  %v130 = vpop.f32.mrb[0].mxu0
  %v131 = vpop.f32.mrb[0].mxu0
  %v132 = vadd.f32 %v36, %v131
  %v133 = vpop.f32.mrb[0].mxu0
  %134 = vdwg.mxu0
  %vm135 = vcmp.ge.f32.partialorder %v121, 0.0
  %vm136 = vcmp.ge.f32.partialorder %v124, 0.0
  %vm137 = vcmp.ge.f32.partialorder %v129, 0.0
  %vm138 = vcmp.ge.f32.partialorder %v132, 0.0
  %v139 = vmul.f32 %v121, 0.01
  %v140 = vmul.f32 %v124, 0.01
  %v141 = vmul.f32 %v129, 0.01
  %v142 = vmul.f32 %v132, 0.01
  %v143 = vsel %vm135, %v121, %v139
  %v144 = vsel %vm136, %v124, %v140
  %v145 = vsel %vm137, %v129, %v141
  %v146 = vsel %vm138, %v132, %v142
  %v147 = vld [vmem:[%s3] sm:$0xf]
  %v148 = vld [vmem:[%s3 + $0x4] sm:$0xf]
  %v149 = vld [vmem:[%s3 + $0x8] sm:$0xf]
  %v150 = vld [vmem:[%s3 + $0xc] sm:$0xf]
  %v151 = vunpack.c.l.bf16 %v147
  %v152 = vunpack.c.l.bf16 %v148
  %v153 = vunpack.c.l.bf16 %v149
  %v154 = vunpack.c.l.bf16 %v150
  %v155 = vadd.f32 %v143, %v151
  %v156 = vadd.f32 %v144, %v152
  %v157 = vadd.f32 %v145, %v153
  %v158 = vadd.f32 %v146, %v154
  %v159 = vpack.c.bf16 %v156, %v155
  %v160 = vpack.c.bf16 %v158, %v157
  %v163 = vunpack.c.l.b16 %v159
  %v164 = vunpack.c.h.b16 %v159
  %v165 = vunpack.c.l.b16 %v160
  %v166 = vunpack.c.h.b16 %v160
  %v167 = vpack.c.b16 %v163, %v163
  %v168 = vpack.c.b16 %v164, %v164
  %v169 = vpack.c.b16 %v165, %v165
  %v170 = vpack.c.b16 %v166, %v166
  %vm175 = vcmask 257024
  %176 = vst.msk [vmem:[%s4] sm:$0xf] %vm175, %v167
  %177 = vst.msk [vmem:[%s4 + $0x4] sm:$0xf] %vm175, %v168
  %178 = vst.msk [vmem:[%s4 + $0x8] sm:$0xf] %vm175, %v169
  %179 = vst.msk [vmem:[%s4 + $0xc] sm:$0xf] %vm175, %v170
  // Predicated region
  $region18: #{darknet_forward.21} parent=0 // pred_check
    _
  $region19: #{darknet_forward.21} parent=0 // pred_check_branch
    %181 = sbr.rel (0) target = $region21
  $region20: #{darknet_forward.21} parent=0 // pred_region
    _
  $region21: #{darknet_forward.21} parent=0 // pred_fallthru
    _
  // Predicated region
  $region22: #{darknet_forward.21} parent=0 // pred_check
    _
  $region23: #{darknet_forward.21} parent=0 // pred_check_branch
    %183 = sbr.rel (0) target = $region25
  $region24: #{darknet_forward.21} parent=0 // pred_region
    _
  $region25: #{darknet_forward.21} parent=0 // pred_fallthru
    _

// kernel: darknet_forward.22
$region0: #{darknet_forward.22}
  #allocation0 [shape = 'u32[]', space=smem, size = 0x4, offset = 0x4, fixed_abs, tag = 'smem constant byte address 0x4 - core index']
  #allocation1 [shape = 'u32[144,128]{1,0:T(1,128)}', space=vmem, size = 0x12000, scoped, tag = 'internal scratch']
  %s0 = inlined_call_operand.vmem [shape: bf16[8,288], index: 0, kind: input, shape index: {}]
  %s1 = inlined_call_operand.vmem [shape: bf16[288,64], index: 1, kind: input, shape index: {}]
  %s2 = inlined_call_operand.vmem [shape: f32[1,64], index: 2, kind: input, shape index: {}]
  %s3 = inlined_call_operand.vmem [shape: bf16[8,64], index: 3, kind: output, shape index: {}]
  %s4 = sld [smem:[#allocation0]]
  $region22: #{darknet_forward.22} parent=0
    _
  %s6 = ssub.s32 1, %s4
  %s7 = scalar_select 0, %s6, %s4
  // Predicated region
  $region2: #{darknet_forward.22} parent=0 // pred_check
    _
  $region3: #{darknet_forward.22} parent=0 // pred_check_branch
    %9 = sbr.rel (0) target = $region5
  $region4: #{darknet_forward.22} parent=0 // pred_region
    _
  $region5: #{darknet_forward.22} parent=0 // pred_fallthru
    _
  // Predicated region
  $region6: #{darknet_forward.22} parent=0 // pred_check
    _
  $region7: #{darknet_forward.22} parent=0 // pred_check_branch
    %11 = sbr.rel (0) target = $region9
  $region8: #{darknet_forward.22} parent=0 // pred_region
    _
  $region9: #{darknet_forward.22} parent=0 // pred_fallthru
    _
  // Predicated region
  $region10: #{darknet_forward.22} parent=0 // pred_check
    _
  $region11: #{darknet_forward.22} parent=0 // pred_check_branch
    %13 = sbr.rel (0) target = $region13
  $region12: #{darknet_forward.22} parent=0 // pred_region
    _
  $region13: #{darknet_forward.22} parent=0 // pred_fallthru
    _
  %v15 = vld [vmem:[%s0] sm:$0xff]
  %v16 = vld [vmem:[%s0 + $0x8] sm:$0xf]
  %v17 = vld [vmem:[%s1] sm:$0xf]
  %v18 = vld [vmem:[%s1 + $0x4] sm:$0xf]
  %v19 = vld [vmem:[%s1 + $0x8] sm:$0xf]
  %v20 = vld [vmem:[%s1 + $0xc] sm:$0xf]
  %v21 = vld [vmem:[%s1 + $0x10] sm:$0xf]
  %v22 = vld [vmem:[%s1 + $0x14] sm:$0xf]
  %v23 = vld [vmem:[%s1 + $0x18] sm:$0xf]
  %v24 = vld [vmem:[%s1 + $0x1c] sm:$0xf]
  %v25 = vld [vmem:[%s1 + $0x20] sm:$0xf]
  %v26 = vld [vmem:[%s1 + $0x24] sm:$0xf]
  %v27 = vld [vmem:[%s1 + $0x28] sm:$0xf]
  %v28 = vld [vmem:[%s1 + $0x2c] sm:$0xf]
  %v29 = vld [vmem:[%s1 + $0x30] sm:$0xf]
  %v30 = vld [vmem:[%s1 + $0x34] sm:$0xf]
  %v31 = vld [vmem:[%s1 + $0x38] sm:$0xf]
  %v32 = vld [vmem:[%s1 + $0x3c] sm:$0xf]
  %v33 = vld [vmem:[%s1 + $0x40] sm:$0xf]
  %v34 = vld [vmem:[%s1 + $0x44] sm:$0xf]
  %v35 = vld [vmem:[%s1 + $0x48] sm:$0xf]
  %v36 = vld [vmem:[%s1 + $0x4c] sm:$0xf]
  %v37 = vld [vmem:[%s1 + $0x50] sm:$0xf]
  %v38 = vld [vmem:[%s1 + $0x54] sm:$0xf]
  %v39 = vld [vmem:[%s1 + $0x58] sm:$0xf]
  %v40 = vld [vmem:[%s1 + $0x5c] sm:$0xf]
  %v41 = vld [vmem:[%s1 + $0x60] sm:$0xf]
  %v42 = vld [vmem:[%s1 + $0x64] sm:$0xf]
  %v43 = vld [vmem:[%s1 + $0x68] sm:$0xf]
  %v44 = vld [vmem:[%s1 + $0x6c] sm:$0xf]
  %v45 = vld [vmem:[%s1 + $0x70] sm:$0xf]
  %v46 = vld [vmem:[%s1 + $0x74] sm:$0xf]
  %v47 = vld [vmem:[%s1 + $0x78] sm:$0xf]
  %v48 = vld [vmem:[%s1 + $0x7c] sm:$0xf]
  %v49 = vld [vmem:[%s1 + $0x80] sm:$0xf]
  %v50 = vld [vmem:[%s1 + $0x84] sm:$0xf]
  %v51 = vld [vmem:[%s1 + $0x88] sm:$0xf]
  %v52 = vld [vmem:[%s1 + $0x8c] sm:$0xf]
  %v53 = vld [vmem:[%s2] sm:$0x1]
  %v55 = vlaneseq
  %v56 = vshrl.u32 %v55, 7
  %v57 = vsub.s32 0, %v56
  %v58 = vrot.slane %v53, %v57
  %v62 = vunpack.c.l.b16 %v15
  %v63 = vunpack.c.h.b16 %v15
  %v64 = vunpack.c.l.b16 %v16
  %v65 = vpack.c.b16 %v62, %v62
  %v66 = vpack.c.b16 %v63, %v63
  %v67 = vpack.c.b16 %v64, %v64
  %v106 = vunpack.c.l.b16 %v17
  %v107 = vunpack.c.l.b16 %v18
  %v108 = vunpack.c.l.b16 %v19
  %v109 = vunpack.c.l.b16 %v20
  %v110 = vunpack.c.l.b16 %v21
  %v111 = vunpack.c.l.b16 %v22
  %v112 = vunpack.c.l.b16 %v23
  %v113 = vunpack.c.l.b16 %v24
  %v114 = vunpack.c.l.b16 %v25
  %v115 = vunpack.c.l.b16 %v26
  %v116 = vunpack.c.l.b16 %v27
  %v117 = vunpack.c.l.b16 %v28
  %v118 = vunpack.c.l.b16 %v29
  %v119 = vunpack.c.l.b16 %v30
  %v120 = vunpack.c.l.b16 %v31
  %v121 = vunpack.c.l.b16 %v32
  %v122 = vunpack.c.l.b16 %v33
  %v123 = vunpack.c.l.b16 %v34
  %v124 = vunpack.c.l.b16 %v35
  %v125 = vunpack.c.l.b16 %v36
  %v126 = vunpack.c.l.b16 %v37
  %v127 = vunpack.c.l.b16 %v38
  %v128 = vunpack.c.l.b16 %v39
  %v129 = vunpack.c.l.b16 %v40
  %v130 = vunpack.c.l.b16 %v41
  %v131 = vunpack.c.l.b16 %v42
  %v132 = vunpack.c.l.b16 %v43
  %v133 = vunpack.c.l.b16 %v44
  %v134 = vunpack.c.l.b16 %v45
  %v135 = vunpack.c.l.b16 %v46
  %v136 = vunpack.c.l.b16 %v47
  %v137 = vunpack.c.l.b16 %v48
  %v138 = vunpack.c.l.b16 %v49
  %v139 = vunpack.c.l.b16 %v50
  %v140 = vunpack.c.l.b16 %v51
  %v141 = vunpack.c.l.b16 %v52
  %v142 = vpack.c.b16 %v107, %v106
  %v143 = vpack.c.b16 %v109, %v108
  %v144 = vpack.c.b16 %v111, %v110
  %v145 = vpack.c.b16 %v113, %v112
  %v146 = vpack.c.b16 %v115, %v114
  %v147 = vpack.c.b16 %v117, %v116
  %v148 = vpack.c.b16 %v119, %v118
  %v149 = vpack.c.b16 %v121, %v120
  %v150 = vpack.c.b16 %v123, %v122
  %v151 = vpack.c.b16 %v125, %v124
  %v152 = vpack.c.b16 %v127, %v126
  %v153 = vpack.c.b16 %v129, %v128
  %v154 = vpack.c.b16 %v131, %v130
  %v155 = vpack.c.b16 %v133, %v132
  %v156 = vpack.c.b16 %v135, %v134
  %v157 = vpack.c.b16 %v137, %v136
  %v158 = vpack.c.b16 %v139, %v138
  %v159 = vpack.c.b16 %v141, %v140
  %vm178 = vcmask 261120
  %v180 = vsel %vm178, %v67, 0
  %182 = vmatprep.subr.bf16.mxu0 0
  %183 = vmatpush1.bf16.msra.mxu0 %v142
  %184 = vmatprep.subr.bf16.mxu0 0
  %185 = vmatpush1.bf16.msra.mxu0 %v143
  %186 = vmatprep.subr.bf16.mxu0 0
  %187 = vmatpush1.bf16.msra.mxu0 %v144
  %188 = vmatprep.subr.bf16.mxu0 0
  %189 = vmatpush1.bf16.msra.mxu0 %v145
  %190 = vmatprep.subr.bf16.mxu0 0
  %191 = vmatpush1.bf16.msra.mxu0 %v146
  %192 = vmatprep.subr.bf16.mxu0 0
  %193 = vmatpush1.bf16.msra.mxu0 %v147
  %194 = vmatprep.subr.bf16.mxu0 0
  %195 = vmatpush1.bf16.msra.mxu0 %v148
  %196 = vmatprep.subr.bf16.mxu0 0
  %197 = vmatpush1.bf16.msra.mxu0 %v149
  %198 = vmatprep.subr.bf16.mxu0 0
  %199 = vmatpush1.bf16.msra.mxu0 %v150
  %200 = vmatprep.subr.bf16.mxu0 0
  %201 = vmatpush1.bf16.msra.mxu0 %v151
  %202 = vmatprep.subr.bf16.mxu0 0
  %203 = vmatpush1.bf16.msra.mxu0 %v152
  %204 = vmatprep.subr.bf16.mxu0 0
  %205 = vmatpush1.bf16.msra.mxu0 %v153
  %206 = vmatprep.subr.bf16.mxu0 0
  %207 = vmatpush1.bf16.msra.mxu0 %v154
  %208 = vmatprep.subr.bf16.mxu0 0
  %209 = vmatpush1.bf16.msra.mxu0 %v155
  %210 = vmatprep.subr.bf16.mxu0 0
  %211 = vmatpush1.bf16.msra.mxu0 %v156
  %212 = vmatprep.subr.bf16.mxu0 0
  %213 = vmatpush1.bf16.msra.mxu0 %v157
  %214 = vmatprep.mubr.bf16.mxu0 %v66
  %215 = vmatmul.mubr.bf16.gmra.mrb[0].mxu0 %v65
  %v216 = vpop.f32.mrb[0].mxu0
  %v217 = vadd.f32 %v58, %v216
  %v218 = vpop.f32.mrb[0].mxu0
  %v219 = vpop.f32.mrb[0].mxu0
  %v220 = vpop.f32.mrb[0].mxu0
  %221 = vdwg.mxu0
  %222 = vmatprep.subr.bf16.mxu0 0
  %223 = vmatpush1.bf16.msra.mxu0 %v158
  %224 = vmatprep.subr.bf16.mxu0 0
  %225 = vmatpush1.bf16.msra.mxu0 %v159
  %226 = vmatprep.subr.bf16.mxu0 0
  %227 = vmatpush1.bf16.msra.mxu0 0
  %228 = vmatprep.subr.bf16.mxu0 0
  %229 = vmatpush1.bf16.msra.mxu0 0
  %230 = vmatprep.subr.bf16.mxu0 0
  %231 = vmatpush1.bf16.msra.mxu0 0
  %232 = vmatprep.subr.bf16.mxu0 0
  %233 = vmatpush1.bf16.msra.mxu0 0
  %234 = vmatprep.subr.bf16.mxu0 0
  %235 = vmatpush1.bf16.msra.mxu0 0
  %236 = vmatprep.subr.bf16.mxu0 0
  %237 = vmatpush1.bf16.msra.mxu0 0
  %238 = vmatprep.subr.bf16.mxu0 0
  %239 = vmatpush1.bf16.msra.mxu0 0
  %240 = vmatprep.subr.bf16.mxu0 0
  %241 = vmatpush1.bf16.msra.mxu0 0
  %242 = vmatprep.subr.bf16.mxu0 0
  %243 = vmatpush1.bf16.msra.mxu0 0
  %244 = vmatprep.subr.bf16.mxu0 0
  %245 = vmatpush1.bf16.msra.mxu0 0
  %246 = vmatprep.subr.bf16.mxu0 0
  %247 = vmatpush1.bf16.msra.mxu0 0
  %248 = vmatprep.subr.bf16.mxu0 0
  %249 = vmatpush1.bf16.msra.mxu0 0
  %250 = vmatprep.subr.bf16.mxu0 0
  %251 = vmatpush1.bf16.msra.mxu0 0
  %252 = vmatprep.subr.bf16.mxu0 0
  %253 = vmatpush1.bf16.msra.mxu0 0
  %254 = vmatprep.mubr.bf16.mxu0 0
  %255 = vmatmul.mubr.bf16.gmra.mrb[0].mxu0 %v180
  %v256 = vpop.f32.mrb[0].mxu0
  %v257 = vadd.f32 %v217, %v256
  %v258 = vpop.f32.mrb[0].mxu0
  %v259 = vpop.f32.mrb[0].mxu0
  %v260 = vpop.f32.mrb[0].mxu0
  %261 = vdwg.mxu0
  %vm262 = vcmp.ge.f32.partialorder %v257, 0.0
  %v263 = vmul.f32 %v257, 0.01
  %v264 = vsel %vm262, %v257, %v263
  %v265 = vpack.c.bf16 %v264, %v264
  %vm266 = vcmask 519168
  %267 = vst.msk [vmem:[%s3] sm:$0xf] %vm266, %v265
  // Predicated region
  $region14: #{darknet_forward.22} parent=0 // pred_check
    _
  $region15: #{darknet_forward.22} parent=0 // pred_check_branch
    %269 = sbr.rel (0) target = $region17
  $region16: #{darknet_forward.22} parent=0 // pred_region
    _
  $region17: #{darknet_forward.22} parent=0 // pred_fallthru
    _
  // Predicated region
  $region18: #{darknet_forward.22} parent=0 // pred_check
    _
  $region19: #{darknet_forward.22} parent=0 // pred_check_branch
    %271 = sbr.rel (0) target = $region21
  $region20: #{darknet_forward.22} parent=0 // pred_region
    _
  $region21: #{darknet_forward.22} parent=0 // pred_fallthru
    _

// kernel: darknet_forward.23
$region0: #{darknet_forward.23}
  #allocation0 [shape = 'u32[]', space=smem, size = 0x4, offset = 0x4, fixed_abs, tag = 'smem constant byte address 0x4 - core index']
  #allocation1 [shape = 'u32[144,128]{1,0:T(1,128)}', space=vmem, size = 0x12000, scoped, tag = 'internal scratch']
  %s0 = inlined_call_operand.vmem [shape: bf16[8,64], index: 0, kind: input, shape index: {}]
  %s1 = inlined_call_operand.vmem [shape: bf16[64,16], index: 1, kind: input, shape index: {}]
  %s2 = inlined_call_operand.vmem [shape: f32[1,16], index: 2, kind: input, shape index: {}]
  %s3 = inlined_call_operand.vmem [shape: bf16[8,16], index: 3, kind: output, shape index: {}]
  %s4 = sld [smem:[#allocation0]]
  $region22: #{darknet_forward.23} parent=0
    _
  %s6 = ssub.s32 1, %s4
  %s7 = scalar_select 0, %s6, %s4
  // Predicated region
  $region2: #{darknet_forward.23} parent=0 // pred_check
    _
  $region3: #{darknet_forward.23} parent=0 // pred_check_branch
    %9 = sbr.rel (0) target = $region5
  $region4: #{darknet_forward.23} parent=0 // pred_region
    _
  $region5: #{darknet_forward.23} parent=0 // pred_fallthru
    _
  // Predicated region
  $region6: #{darknet_forward.23} parent=0 // pred_check
    _
  $region7: #{darknet_forward.23} parent=0 // pred_check_branch
    %11 = sbr.rel (0) target = $region9
  $region8: #{darknet_forward.23} parent=0 // pred_region
    _
  $region9: #{darknet_forward.23} parent=0 // pred_fallthru
    _
  // Predicated region
  $region10: #{darknet_forward.23} parent=0 // pred_check
    _
  $region11: #{darknet_forward.23} parent=0 // pred_check_branch
    %13 = sbr.rel (0) target = $region13
  $region12: #{darknet_forward.23} parent=0 // pred_region
    _
  $region13: #{darknet_forward.23} parent=0 // pred_fallthru
    _
  %v15 = vld [vmem:[%s0] sm:$0xf]
  %v16 = vld [vmem:[%s1] sm:$0xf]
  %v17 = vld [vmem:[%s1 + $0x4] sm:$0xf]
  %v18 = vld [vmem:[%s1 + $0x8] sm:$0xf]
  %v19 = vld [vmem:[%s1 + $0xc] sm:$0xf]
  %v20 = vld [vmem:[%s1 + $0x10] sm:$0xf]
  %v21 = vld [vmem:[%s1 + $0x14] sm:$0xf]
  %v22 = vld [vmem:[%s1 + $0x18] sm:$0xf]
  %v23 = vld [vmem:[%s1 + $0x1c] sm:$0xf]
  %v24 = vld [vmem:[%s2] sm:$0x1]
  %v26 = vlaneseq
  %v27 = vshrl.u32 %v26, 7
  %v28 = vsub.s32 0, %v27
  %v29 = vrot.slane %v24, %v28
  %v39 = vunpack.c.l.b16 %v16
  %v40 = vunpack.c.l.b16 %v17
  %v41 = vunpack.c.l.b16 %v18
  %v42 = vunpack.c.l.b16 %v19
  %v43 = vunpack.c.l.b16 %v20
  %v44 = vunpack.c.l.b16 %v21
  %v45 = vunpack.c.l.b16 %v22
  %v46 = vunpack.c.l.b16 %v23
  %v47 = vpack.c.b16 %v40, %v39
  %v48 = vpack.c.b16 %v42, %v41
  %v49 = vpack.c.b16 %v44, %v43
  %v50 = vpack.c.b16 %v46, %v45
  %vm55 = vcmask 523264
  %v57 = vsel %vm55, %v15, 0
  %59 = vmatprep.subr.bf16.mxu0 0
  %60 = vmatpush1.bf16.msra.mxu0 %v47
  %61 = vmatprep.subr.bf16.mxu0 0
  %62 = vmatpush1.bf16.msra.mxu0 %v48
  %63 = vmatprep.subr.bf16.mxu0 0
  %64 = vmatpush1.bf16.msra.mxu0 %v49
  %65 = vmatprep.subr.bf16.mxu0 0
  %66 = vmatpush1.bf16.msra.mxu0 %v50
  %67 = vmatprep.subr.bf16.mxu0 0
  %68 = vmatpush1.bf16.msra.mxu0 0
  %69 = vmatprep.subr.bf16.mxu0 0
  %70 = vmatpush1.bf16.msra.mxu0 0
  %71 = vmatprep.subr.bf16.mxu0 0
  %72 = vmatpush1.bf16.msra.mxu0 0
  %73 = vmatprep.subr.bf16.mxu0 0
  %74 = vmatpush1.bf16.msra.mxu0 0
  %75 = vmatprep.subr.bf16.mxu0 0
  %76 = vmatpush1.bf16.msra.mxu0 0
  %77 = vmatprep.subr.bf16.mxu0 0
  %78 = vmatpush1.bf16.msra.mxu0 0
  %79 = vmatprep.subr.bf16.mxu0 0
  %80 = vmatpush1.bf16.msra.mxu0 0
  %81 = vmatprep.subr.bf16.mxu0 0
  %82 = vmatpush1.bf16.msra.mxu0 0
  %83 = vmatprep.subr.bf16.mxu0 0
  %84 = vmatpush1.bf16.msra.mxu0 0
  %85 = vmatprep.subr.bf16.mxu0 0
  %86 = vmatpush1.bf16.msra.mxu0 0
  %87 = vmatprep.subr.bf16.mxu0 0
  %88 = vmatpush1.bf16.msra.mxu0 0
  %89 = vmatprep.subr.bf16.mxu0 0
  %90 = vmatpush1.bf16.msra.mxu0 0
  %91 = vmatprep.mubr.bf16.mxu0 0
  %92 = vmatmul.mubr.bf16.gmra.mrb[0].mxu0 %v57
  %v93 = vpop.f32.mrb[0].mxu0
  %v94 = vadd.f32 %v29, %v93
  %v95 = vpop.f32.mrb[0].mxu0
  %v96 = vpop.f32.mrb[0].mxu0
  %v97 = vpop.f32.mrb[0].mxu0
  %98 = vdwg.mxu0
  %vm99 = vcmp.ge.f32.partialorder %v94, 0.0
  %v100 = vmul.f32 %v94, 0.01
  %v101 = vsel %vm99, %v94, %v100
  %v102 = vpack.c.bf16 %v101, %v101
  %vm103 = vcmask 125952
  %104 = vst.msk [vmem:[%s3] sm:$0xf] %vm103, %v102
  // Predicated region
  $region14: #{darknet_forward.23} parent=0 // pred_check
    _
  $region15: #{darknet_forward.23} parent=0 // pred_check_branch
    %106 = sbr.rel (0) target = $region17
  $region16: #{darknet_forward.23} parent=0 // pred_region
    _
  $region17: #{darknet_forward.23} parent=0 // pred_fallthru
    _
  // Predicated region
  $region18: #{darknet_forward.23} parent=0 // pred_check
    _
  $region19: #{darknet_forward.23} parent=0 // pred_check_branch
    %108 = sbr.rel (0) target = $region21
  $region20: #{darknet_forward.23} parent=0 // pred_region
    _
  $region21: #{darknet_forward.23} parent=0 // pred_fallthru
    _

// kernel: darknet_forward.24
$region0: #{darknet_forward.24}
  #allocation0 [shape = 'u32[]', space=smem, size = 0x4, offset = 0x4, fixed_abs, tag = 'smem constant byte address 0x4 - core index']
  #allocation1 [shape = 'u32[144,128]{1,0:T(1,128)}', space=vmem, size = 0x12000, scoped, tag = 'internal scratch']
  %s0 = inlined_call_operand.vmem [shape: bf16[8,144], index: 0, kind: input, shape index: {}]
  %s1 = inlined_call_operand.vmem [shape: bf16[144,64], index: 1, kind: input, shape index: {}]
  %s2 = inlined_call_operand.vmem [shape: f32[1,64], index: 2, kind: input, shape index: {}]
  %s3 = inlined_call_operand.vmem [shape: bf16[8,64], index: 3, kind: input, shape index: {}]
  %s4 = inlined_call_operand.vmem [shape: bf16[8,64], index: 4, kind: output, shape index: {}]
  %s5 = sld [smem:[#allocation0]]
  $region26: #{darknet_forward.24} parent=0
    _
  %s7 = ssub.s32 1, %s5
  %s8 = scalar_select 0, %s7, %s5
  // Predicated region
  $region2: #{darknet_forward.24} parent=0 // pred_check
    _
  $region3: #{darknet_forward.24} parent=0 // pred_check_branch
    %10 = sbr.rel (0) target = $region5
  $region4: #{darknet_forward.24} parent=0 // pred_region
    _
  $region5: #{darknet_forward.24} parent=0 // pred_fallthru
    _
  // Predicated region
  $region6: #{darknet_forward.24} parent=0 // pred_check
    _
  $region7: #{darknet_forward.24} parent=0 // pred_check_branch
    %12 = sbr.rel (0) target = $region9
  $region8: #{darknet_forward.24} parent=0 // pred_region
    _
  $region9: #{darknet_forward.24} parent=0 // pred_fallthru
    _
  // Predicated region
  $region10: #{darknet_forward.24} parent=0 // pred_check
    _
  $region11: #{darknet_forward.24} parent=0 // pred_check_branch
    %14 = sbr.rel (0) target = $region13
  $region12: #{darknet_forward.24} parent=0 // pred_region
    _
  $region13: #{darknet_forward.24} parent=0 // pred_fallthru
    _
  // Predicated region
  $region14: #{darknet_forward.24} parent=0 // pred_check
    _
  $region15: #{darknet_forward.24} parent=0 // pred_check_branch
    %16 = sbr.rel (0) target = $region17
  $region16: #{darknet_forward.24} parent=0 // pred_region
    _
  $region17: #{darknet_forward.24} parent=0 // pred_fallthru
    _
  %v18 = vld [vmem:[%s0] sm:$0xff]
  %v19 = vld [vmem:[%s1] sm:$0xf]
  %v20 = vld [vmem:[%s1 + $0x4] sm:$0xf]
  %v21 = vld [vmem:[%s1 + $0x8] sm:$0xf]
  %v22 = vld [vmem:[%s1 + $0xc] sm:$0xf]
  %v23 = vld [vmem:[%s1 + $0x10] sm:$0xf]
  %v24 = vld [vmem:[%s1 + $0x14] sm:$0xf]
  %v25 = vld [vmem:[%s1 + $0x18] sm:$0xf]
  %v26 = vld [vmem:[%s1 + $0x1c] sm:$0xf]
  %v27 = vld [vmem:[%s1 + $0x20] sm:$0xf]
  %v28 = vld [vmem:[%s1 + $0x24] sm:$0xf]
  %v29 = vld [vmem:[%s1 + $0x28] sm:$0xf]
  %v30 = vld [vmem:[%s1 + $0x2c] sm:$0xf]
  %v31 = vld [vmem:[%s1 + $0x30] sm:$0xf]
  %v32 = vld [vmem:[%s1 + $0x34] sm:$0xf]
  %v33 = vld [vmem:[%s1 + $0x38] sm:$0xf]
  %v34 = vld [vmem:[%s1 + $0x3c] sm:$0xf]
  %v35 = vld [vmem:[%s1 + $0x40] sm:$0xf]
  %v36 = vld [vmem:[%s1 + $0x44] sm:$0xf]
  %v37 = vld [vmem:[%s2] sm:$0x1]
  %v39 = vlaneseq
  %v40 = vshrl.u32 %v39, 7
  %v41 = vsub.s32 0, %v40
  %v42 = vrot.slane %v37, %v41
  %v45 = vunpack.c.l.b16 %v18
  %v46 = vunpack.c.h.b16 %v18
  %v47 = vpack.c.b16 %v45, %v45
  %v48 = vpack.c.b16 %v46, %v46
  %v68 = vunpack.c.l.b16 %v19
  %v69 = vunpack.c.l.b16 %v20
  %v70 = vunpack.c.l.b16 %v21
  %v71 = vunpack.c.l.b16 %v22
  %v72 = vunpack.c.l.b16 %v23
  %v73 = vunpack.c.l.b16 %v24
  %v74 = vunpack.c.l.b16 %v25
  %v75 = vunpack.c.l.b16 %v26
  %v76 = vunpack.c.l.b16 %v27
  %v77 = vunpack.c.l.b16 %v28
  %v78 = vunpack.c.l.b16 %v29
  %v79 = vunpack.c.l.b16 %v30
  %v80 = vunpack.c.l.b16 %v31
  %v81 = vunpack.c.l.b16 %v32
  %v82 = vunpack.c.l.b16 %v33
  %v83 = vunpack.c.l.b16 %v34
  %v84 = vunpack.c.l.b16 %v35
  %v85 = vunpack.c.l.b16 %v36
  %v86 = vpack.c.b16 %v69, %v68
  %v87 = vpack.c.b16 %v71, %v70
  %v88 = vpack.c.b16 %v73, %v72
  %v89 = vpack.c.b16 %v75, %v74
  %v90 = vpack.c.b16 %v77, %v76
  %v91 = vpack.c.b16 %v79, %v78
  %v92 = vpack.c.b16 %v81, %v80
  %v93 = vpack.c.b16 %v83, %v82
  %v94 = vpack.c.b16 %v85, %v84
  %vm104 = vcmask 130048
  %v106 = vsel %vm104, %v48, 0
  %108 = vmatprep.subr.bf16.mxu0 0
  %109 = vmatpush1.bf16.msra.mxu0 %v86
  %110 = vmatprep.subr.bf16.mxu0 0
  %111 = vmatpush1.bf16.msra.mxu0 %v87
  %112 = vmatprep.subr.bf16.mxu0 0
  %113 = vmatpush1.bf16.msra.mxu0 %v88
  %114 = vmatprep.subr.bf16.mxu0 0
  %115 = vmatpush1.bf16.msra.mxu0 %v89
  %116 = vmatprep.subr.bf16.mxu0 0
  %117 = vmatpush1.bf16.msra.mxu0 %v90
  %118 = vmatprep.subr.bf16.mxu0 0
  %119 = vmatpush1.bf16.msra.mxu0 %v91
  %120 = vmatprep.subr.bf16.mxu0 0
  %121 = vmatpush1.bf16.msra.mxu0 %v92
  %122 = vmatprep.subr.bf16.mxu0 0
  %123 = vmatpush1.bf16.msra.mxu0 %v93
  %124 = vmatprep.subr.bf16.mxu0 0
  %125 = vmatpush1.bf16.msra.mxu0 %v94
  %126 = vmatprep.subr.bf16.mxu0 0
  %127 = vmatpush1.bf16.msra.mxu0 0
  %128 = vmatprep.subr.bf16.mxu0 0
  %129 = vmatpush1.bf16.msra.mxu0 0
  %130 = vmatprep.subr.bf16.mxu0 0
  %131 = vmatpush1.bf16.msra.mxu0 0
  %132 = vmatprep.subr.bf16.mxu0 0
  %133 = vmatpush1.bf16.msra.mxu0 0
  %134 = vmatprep.subr.bf16.mxu0 0
  %135 = vmatpush1.bf16.msra.mxu0 0
  %136 = vmatprep.subr.bf16.mxu0 0
  %137 = vmatpush1.bf16.msra.mxu0 0
  %138 = vmatprep.subr.bf16.mxu0 0
  %139 = vmatpush1.bf16.msra.mxu0 0
  %140 = vmatprep.mubr.bf16.mxu0 %v106
  %141 = vmatmul.mubr.bf16.gmra.mrb[0].mxu0 %v47
  %v142 = vpop.f32.mrb[0].mxu0
  %v143 = vadd.f32 %v42, %v142
  %v144 = vpop.f32.mrb[0].mxu0
  %v145 = vpop.f32.mrb[0].mxu0
  %v146 = vpop.f32.mrb[0].mxu0
  %147 = vdwg.mxu0
  %vm148 = vcmp.ge.f32.partialorder %v143, 0.0
  %v149 = vmul.f32 %v143, 0.01
  %v150 = vsel %vm148, %v143, %v149
  %v151 = vld [vmem:[%s3] sm:$0xf]
  %v152 = vunpack.c.l.bf16 %v151
  %v153 = vadd.f32 %v150, %v152
  %v154 = vpack.c.bf16 %v153, %v153
  %vm155 = vcmask 519168
  %156 = vst.msk [vmem:[%s4] sm:$0xf] %vm155, %v154
  // Predicated region
  $region18: #{darknet_forward.24} parent=0 // pred_check
    _
  $region19: #{darknet_forward.24} parent=0 // pred_check_branch
    %158 = sbr.rel (0) target = $region21
  $region20: #{darknet_forward.24} parent=0 // pred_region
    _
  $region21: #{darknet_forward.24} parent=0 // pred_fallthru
    _
  // Predicated region
  $region22: #{darknet_forward.24} parent=0 // pred_check
    _
  $region23: #{darknet_forward.24} parent=0 // pred_check_branch
    %160 = sbr.rel (0) target = $region25
  $region24: #{darknet_forward.24} parent=0 // pred_region
    _
  $region25: #{darknet_forward.24} parent=0 // pred_fallthru
    _

// kernel: darknet_forward.26
$region0: #{darknet_forward.26}
  #allocation0 [shape = 'u32[]', space=smem, size = 0x4, offset = 0x4, fixed_abs, tag = 'smem constant byte address 0x4 - core index']
  #allocation1 [shape = 'u32[144,128]{1,0:T(1,128)}', space=vmem, size = 0x12000, scoped, tag = 'internal scratch']
  %s0 = inlined_call_operand.vmem [shape: bf16[2,128], index: 0, kind: input, shape index: {}]
  %s1 = inlined_call_operand.vmem [shape: bf16[128,32], index: 1, kind: input, shape index: {}]
  %s2 = inlined_call_operand.vmem [shape: f32[1,32], index: 2, kind: input, shape index: {}]
  %s3 = inlined_call_operand.vmem [shape: bf16[2,32], index: 3, kind: output, shape index: {}]
  %s4 = sld [smem:[#allocation0]]
  $region52: #{darknet_forward.26} parent=0
    _
  %s6 = ssub.s32 1, %s4
  %s7 = scalar_select 0, %s6, %s4
  $region1: #{darknet_forward.26} parent=0
    #allocation2 [shape = 'u8[2048]{0}', space=vmem, size = 0x800, scoped, tag = 'output window, operand 0, single buffered']
    // Predicated region
    $region2: #{darknet_forward.26} parent=1 // pred_check
      _
    $region3: #{darknet_forward.26} parent=1 // pred_check_branch
      %9 = sbr.rel (0) target = $region5
    $region4: #{darknet_forward.26} parent=1 // pred_region
      _
    $region5: #{darknet_forward.26} parent=1 // pred_fallthru
      _
    // Predicated region
    $region6: #{darknet_forward.26} parent=1 // pred_check
      _
    $region7: #{darknet_forward.26} parent=1 // pred_check_branch
      %11 = sbr.rel (0) target = $region9
    $region8: #{darknet_forward.26} parent=1 // pred_region
      _
    $region9: #{darknet_forward.26} parent=1 // pred_fallthru
      _
    // Predicated region
    $region10: #{darknet_forward.26} parent=1 // pred_check
      _
    $region11: #{darknet_forward.26} parent=1 // pred_check_branch
      %13 = sbr.rel (0) target = $region13
    $region12: #{darknet_forward.26} parent=1 // pred_region
      _
    $region13: #{darknet_forward.26} parent=1 // pred_fallthru
      _
    %v15 = vld [vmem:[%s0] sm:$0x1]
    %v16 = vld [vmem:[%s0 + $0x1] sm:$0x1]
    %v17 = vld [vmem:[%s0 + $0x2] sm:$0x1]
    %v18 = vld [vmem:[%s0 + $0x3] sm:$0x1]
    %v19 = vld [vmem:[%s1] sm:$0xf]
    %v20 = vld [vmem:[%s1 + $0x4] sm:$0xf]
    %v21 = vld [vmem:[%s1 + $0x8] sm:$0xf]
    %v22 = vld [vmem:[%s1 + $0xc] sm:$0xf]
    %v23 = vld [vmem:[%s1 + $0x10] sm:$0xf]
    %v24 = vld [vmem:[%s1 + $0x14] sm:$0xf]
    %v25 = vld [vmem:[%s1 + $0x18] sm:$0xf]
    %v26 = vld [vmem:[%s1 + $0x1c] sm:$0xf]
    %v27 = vld [vmem:[%s1 + $0x20] sm:$0xf]
    %v28 = vld [vmem:[%s1 + $0x24] sm:$0xf]
    %v29 = vld [vmem:[%s1 + $0x28] sm:$0xf]
    %v30 = vld [vmem:[%s1 + $0x2c] sm:$0xf]
    %v31 = vld [vmem:[%s1 + $0x30] sm:$0xf]
    %v32 = vld [vmem:[%s1 + $0x34] sm:$0xf]
    %v33 = vld [vmem:[%s1 + $0x38] sm:$0xf]
    %v34 = vld [vmem:[%s1 + $0x3c] sm:$0xf]
    %v35 = vld [vmem:[%s2] sm:$0x1]
    %v37 = vlaneseq
    %v38 = vshrl.u32 %v37, 7
    %v39 = vsub.s32 0, %v38
    %v40 = vrot.slane %v35, %v39
    %v46 = vcombine.low %v15, %v16
    %v47 = vcombine.low %v17, %v18
    %v49 = vunpack.c.l.s4 1966171168
    %v50 = vunpack.c.0.s8 %v49
    %v51 = vlaneseq
    %v52 = vshrl.u32 %v51, 7
    %v53 = vsub.s32 %v50, %v52
    %v54 = vrot.slane %v46, %v53
    %v56 = vunpack.c.l.s4 1966171168
    %v57 = vunpack.c.0.s8 %v56
    %v58 = vlaneseq
    %v59 = vshrl.u32 %v58, 7
    %v60 = vsub.s32 %v57, %v59
    %v61 = vrot.slane %v47, %v60
    %v62 = vcombine.low %v54, %v61
    %v64 = vunpack.c.l.s4 1966171168
    %v65 = vunpack.c.0.s8 %v64
    %v66 = vlaneseq
    %v67 = vshrl.u32 %v66, 7
    %v68 = vsub.s32 %v65, %v67
    %v69 = vrot.slane %v62, %v68
    %v87 = vunpack.c.l.b16 %v19
    %v88 = vunpack.c.l.b16 %v20
    %v89 = vunpack.c.l.b16 %v21
    %v90 = vunpack.c.l.b16 %v22
    %v91 = vunpack.c.l.b16 %v23
    %v92 = vunpack.c.l.b16 %v24
    %v93 = vunpack.c.l.b16 %v25
    %v94 = vunpack.c.l.b16 %v26
    %v95 = vunpack.c.l.b16 %v27
    %v96 = vunpack.c.l.b16 %v28
    %v97 = vunpack.c.l.b16 %v29
    %v98 = vunpack.c.l.b16 %v30
    %v99 = vunpack.c.l.b16 %v31
    %v100 = vunpack.c.l.b16 %v32
    %v101 = vunpack.c.l.b16 %v33
    %v102 = vunpack.c.l.b16 %v34
    %v103 = vpack.c.b16 %v88, %v87
    %v104 = vpack.c.b16 %v90, %v89
    %v105 = vpack.c.b16 %v92, %v91
    %v106 = vpack.c.b16 %v94, %v93
    %v107 = vpack.c.b16 %v96, %v95
    %v108 = vpack.c.b16 %v98, %v97
    %v109 = vpack.c.b16 %v100, %v99
    %v110 = vpack.c.b16 %v102, %v101
    %119 = vmatprep.subr.bf16.mxu0 0
    %120 = vmatpush1.bf16.msra.mxu0 %v103
    %121 = vmatprep.subr.bf16.mxu0 0
    %122 = vmatpush1.bf16.msra.mxu0 %v104
    %123 = vmatprep.subr.bf16.mxu0 0
    %124 = vmatpush1.bf16.msra.mxu0 %v105
    %125 = vmatprep.subr.bf16.mxu0 0
    %126 = vmatpush1.bf16.msra.mxu0 %v106
    %127 = vmatprep.subr.bf16.mxu0 0
    %128 = vmatpush1.bf16.msra.mxu0 %v107
    %129 = vmatprep.subr.bf16.mxu0 0
    %130 = vmatpush1.bf16.msra.mxu0 %v108
    %131 = vmatprep.subr.bf16.mxu0 0
    %132 = vmatpush1.bf16.msra.mxu0 %v109
    %133 = vmatprep.subr.bf16.mxu0 0
    %134 = vmatpush1.bf16.msra.mxu0 %v110
    %135 = vmatprep.subr.bf16.mxu0 0
    %136 = vmatpush1.bf16.msra.mxu0 0
    %137 = vmatprep.subr.bf16.mxu0 0
    %138 = vmatpush1.bf16.msra.mxu0 0
    %139 = vmatprep.subr.bf16.mxu0 0
    %140 = vmatpush1.bf16.msra.mxu0 0
    %141 = vmatprep.subr.bf16.mxu0 0
    %142 = vmatpush1.bf16.msra.mxu0 0
    %143 = vmatprep.subr.bf16.mxu0 0
    %144 = vmatpush1.bf16.msra.mxu0 0
    %145 = vmatprep.subr.bf16.mxu0 0
    %146 = vmatpush1.bf16.msra.mxu0 0
    %147 = vmatprep.subr.bf16.mxu0 0
    %148 = vmatpush1.bf16.msra.mxu0 0
    %149 = vmatprep.subr.bf16.mxu0 0
    %150 = vmatpush1.bf16.msra.mxu0 0
    %151 = vmatprep.mubr.bf16.mxu0 0
    %152 = vmatmul.mubr.bf16.gmra.mrb[0].mxu0 %v69
    %v153 = vpop.f32.mrb[0].mxu0
    %v154 = vadd.f32 %v40, %v153
    %v155 = vpop.f32.mrb[0].mxu0
    %v156 = vpop.f32.mrb[0].mxu0
    %v157 = vpop.f32.mrb[0].mxu0
    %158 = vdwg.mxu0
    %vm159 = vcmp.ge.f32.partialorder %v154, 0.0
    %v160 = vmul.f32 %v154, 0.01
    %v161 = vsel %vm159, %v154, %v160
    %v162 = vpack.c.bf16 %v161, %v161
    %v165 = vunpack.c.l.s4 1966171168
    %v166 = vunpack.c.0.s8 %v165
    %v167 = vlaneseq
    %v168 = vshrl.u32 %v167, 7
    %v169 = vsub.s32 %v166, %v168
    %v170 = vrot.slane %v162, %v169
    %v171 = vcombine.high %v170, %v170
    %v173 = vunpack.c.l.s4 1966171168
    %v174 = vunpack.c.0.s8 %v173
    %v175 = vlaneseq
    %v176 = vshrl.u32 %v175, 7
    %v177 = vsub.s32 %v174, %v176
    %v178 = vrot.slane %v170, %v177
    %v180 = vunpack.c.l.s4 1966171168
    %v181 = vunpack.c.0.s8 %v180
    %v182 = vlaneseq
    %v183 = vshrl.u32 %v182, 7
    %v184 = vsub.s32 %v181, %v183
    %v185 = vrot.slane %v171, %v184
    %v186 = vcombine.high %v178, %v178
    %v187 = vcombine.high %v185, %v185
    %vm192 = vcmask 253952
    %193 = vst.msk [vmem:[#allocation2] sm:$0x1] %vm192, %v178
    %194 = vst.msk [vmem:[#allocation2 + $0x1] sm:$0x1] %vm192, %v185
    %195 = vst.msk [vmem:[#allocation2 + $0x2] sm:$0x1] %vm192, %v186
    %196 = vst.msk [vmem:[#allocation2 + $0x3] sm:$0x1] %vm192, %v187
    // Predicated region
    $region14: #{darknet_forward.26} parent=1 // pred_check
      _
    $region15: #{darknet_forward.26} parent=1 // pred_check_branch
      %198 = sbr.rel (0) target = $region17
    $region16: #{darknet_forward.26} parent=1 // pred_region
      // Predicated region
      $region18: #{darknet_forward.26} parent=16 // pred_check
        _
      $region19: #{darknet_forward.26} parent=16 // pred_check_branch
        %200 = sbr.rel (0) target = $region21
      $region20: #{darknet_forward.26} parent=16 // pred_region
        // Predicated region
        $region22: #{darknet_forward.26} parent=20 // pred_check
          _
        $region23: #{darknet_forward.26} parent=20 // pred_check_branch
          %202 = sbr.rel target = $region25
        $region24: #{darknet_forward.26} parent=20 // pred_region
          // Predicated region
          $region37: #{darknet_forward.26} parent=24 // pred_check
            _
          $region38: #{darknet_forward.26} parent=24 // pred_check_branch
            %217 = sbr.rel (0) target = $region40
          $region39: #{darknet_forward.26} parent=24 // pred_region
            loop: start=0, step=1, limit=1
            $region41: #{darknet_forward.26} parent=39 // loop_pre_header
              _
            $region42: #{darknet_forward.26} parent=39 // loop_header
              %s220 = sphi 0, %s224
              %p221 = scmp.ge.s32.totalorder %s220, 1
              %s225 = sphi [#allocation2], [#allocation2]
              %s226 = sphi %s3, %s3
            $region43: #{darknet_forward.26} parent=39 // loop_header_branch
              %223 = sbr.rel (%p221) target = $region47
            $region44: #{darknet_forward.26} parent=39 // loop_body
              %v227 = vld [vmem:[%s225] sm:$0x1]
              %228 = vst [vmem:[%s226] sm:$0x1] %v227
            $region45: #{darknet_forward.26} parent=39 // loop_footer
              %s224 = sadd.s32 1, %s220
            $region46: #{darknet_forward.26} parent=39 // loop_footer_branch
              %219 = sbr.rel target = $region42
            $region47: #{darknet_forward.26} parent=39 // loop_exit
              _
          $region40: #{darknet_forward.26} parent=24 // pred_fallthru
            _
        $region25: #{darknet_forward.26} parent=20 // pred_fallthru
          _
        // Predicated region
        $region26: #{darknet_forward.26} parent=20 // pred_check
          _
        $region27: #{darknet_forward.26} parent=20 // pred_check_branch
          %204 = sbr.rel (0) target = $region29
        $region28: #{darknet_forward.26} parent=20 // pred_region
          loop: start=0, step=1, limit=1
          $region30: #{darknet_forward.26} parent=28 // loop_pre_header
            _
          $region31: #{darknet_forward.26} parent=28 // loop_header
            %s207 = sphi 0, %s211
            %p208 = scmp.ge.s32.totalorder %s207, 1
            %s212 = sphi [#allocation2], [#allocation2]
            %s213 = sphi %s3, %s3
          $region32: #{darknet_forward.26} parent=28 // loop_header_branch
            %210 = sbr.rel (%p208) target = $region36
          $region33: #{darknet_forward.26} parent=28 // loop_body
            %v214 = vld [vmem:[%s212] sm:$0x1]
            %215 = vst [vmem:[%s213] sm:$0x1] %v214
          $region34: #{darknet_forward.26} parent=28 // loop_footer
            %s211 = sadd.s32 1, %s207
          $region35: #{darknet_forward.26} parent=28 // loop_footer_branch
            %206 = sbr.rel target = $region31
          $region36: #{darknet_forward.26} parent=28 // loop_exit
            _
        $region29: #{darknet_forward.26} parent=20 // pred_fallthru
          _
      $region21: #{darknet_forward.26} parent=16 // pred_fallthru
        _
      %229 = vnop
    $region17: #{darknet_forward.26} parent=1 // pred_fallthru
      _
    // Predicated region
    $region48: #{darknet_forward.26} parent=1 // pred_check
      _
    $region49: #{darknet_forward.26} parent=1 // pred_check_branch
      %231 = sbr.rel (0) target = $region51
    $region50: #{darknet_forward.26} parent=1 // pred_region
      _
    $region51: #{darknet_forward.26} parent=1 // pred_fallthru
      _

// kernel: darknet_forward.27
$region0: #{darknet_forward.27}
  #allocation0 [shape = 'u32[]', space=smem, size = 0x4, offset = 0x4, fixed_abs, tag = 'smem constant byte address 0x4 - core index']
  #allocation1 [shape = 'u32[144,128]{1,0:T(1,128)}', space=vmem, size = 0x12000, scoped, tag = 'internal scratch']
  %s0 = inlined_call_operand.vmem [shape: bf16[2,288], index: 0, kind: input, shape index: {}]
  %s1 = inlined_call_operand.vmem [shape: bf16[288,128], index: 1, kind: input, shape index: {}]
  %s2 = inlined_call_operand.vmem [shape: f32[1,128], index: 2, kind: input, shape index: {}]
  %s3 = inlined_call_operand.vmem [shape: bf16[2,128], index: 3, kind: input, shape index: {}]
  %s4 = inlined_call_operand.vmem [shape: bf16[2,128], index: 4, kind: output, shape index: {}]
  %s5 = sld [smem:[#allocation0]]
  $region56: #{darknet_forward.27} parent=0
    _
  %s7 = ssub.s32 1, %s5
  %s8 = scalar_select 0, %s7, %s5
  $region1: #{darknet_forward.27} parent=0
    #allocation2 [shape = 'u8[2048]{0}', space=vmem, size = 0x800, scoped, tag = 'output window, operand 0, single buffered']
    // Predicated region
    $region2: #{darknet_forward.27} parent=1 // pred_check
      _
    $region3: #{darknet_forward.27} parent=1 // pred_check_branch
      %10 = sbr.rel (0) target = $region5
    $region4: #{darknet_forward.27} parent=1 // pred_region
      _
    $region5: #{darknet_forward.27} parent=1 // pred_fallthru
      _
    // Predicated region
    $region6: #{darknet_forward.27} parent=1 // pred_check
      _
    $region7: #{darknet_forward.27} parent=1 // pred_check_branch
      %12 = sbr.rel (0) target = $region9
    $region8: #{darknet_forward.27} parent=1 // pred_region
      _
    $region9: #{darknet_forward.27} parent=1 // pred_fallthru
      _
    // Predicated region
    $region10: #{darknet_forward.27} parent=1 // pred_check
      _
    $region11: #{darknet_forward.27} parent=1 // pred_check_branch
      %14 = sbr.rel (0) target = $region13
    $region12: #{darknet_forward.27} parent=1 // pred_region
      _
    $region13: #{darknet_forward.27} parent=1 // pred_fallthru
      _
    // Predicated region
    $region14: #{darknet_forward.27} parent=1 // pred_check
      _
    $region15: #{darknet_forward.27} parent=1 // pred_check_branch
      %16 = sbr.rel (0) target = $region17
    $region16: #{darknet_forward.27} parent=1 // pred_region
      _
    $region17: #{darknet_forward.27} parent=1 // pred_fallthru
      _
    %v18 = vld [vmem:[%s0] sm:$0x7]
    %v19 = vld [vmem:[%s0 + $0x3] sm:$0x7]
    %v20 = vld [vmem:[%s0 + $0x6] sm:$0x7]
    %v21 = vld [vmem:[%s0 + $0x9] sm:$0x7]
    %v22 = vld [vmem:[%s1] sm:$0xf]
    %v23 = vld [vmem:[%s1 + $0x4] sm:$0xf]
    %v24 = vld [vmem:[%s1 + $0x8] sm:$0xf]
    %v25 = vld [vmem:[%s1 + $0xc] sm:$0xf]
    %v26 = vld [vmem:[%s1 + $0x10] sm:$0xf]
    %v27 = vld [vmem:[%s1 + $0x14] sm:$0xf]
    %v28 = vld [vmem:[%s1 + $0x18] sm:$0xf]
    %v29 = vld [vmem:[%s1 + $0x1c] sm:$0xf]
    %v30 = vld [vmem:[%s1 + $0x20] sm:$0xf]
    %v31 = vld [vmem:[%s1 + $0x24] sm:$0xf]
    %v32 = vld [vmem:[%s1 + $0x28] sm:$0xf]
    %v33 = vld [vmem:[%s1 + $0x2c] sm:$0xf]
    %v34 = vld [vmem:[%s1 + $0x30] sm:$0xf]
    %v35 = vld [vmem:[%s1 + $0x34] sm:$0xf]
    %v36 = vld [vmem:[%s1 + $0x38] sm:$0xf]
    %v37 = vld [vmem:[%s1 + $0x3c] sm:$0xf]
    %v38 = vld [vmem:[%s1 + $0x40] sm:$0xf]
    %v39 = vld [vmem:[%s1 + $0x44] sm:$0xf]
    %v40 = vld [vmem:[%s1 + $0x48] sm:$0xf]
    %v41 = vld [vmem:[%s1 + $0x4c] sm:$0xf]
    %v42 = vld [vmem:[%s1 + $0x50] sm:$0xf]
    %v43 = vld [vmem:[%s1 + $0x54] sm:$0xf]
    %v44 = vld [vmem:[%s1 + $0x58] sm:$0xf]
    %v45 = vld [vmem:[%s1 + $0x5c] sm:$0xf]
    %v46 = vld [vmem:[%s1 + $0x60] sm:$0xf]
    %v47 = vld [vmem:[%s1 + $0x64] sm:$0xf]
    %v48 = vld [vmem:[%s1 + $0x68] sm:$0xf]
    %v49 = vld [vmem:[%s1 + $0x6c] sm:$0xf]
    %v50 = vld [vmem:[%s1 + $0x70] sm:$0xf]
    %v51 = vld [vmem:[%s1 + $0x74] sm:$0xf]
    %v52 = vld [vmem:[%s1 + $0x78] sm:$0xf]
    %v53 = vld [vmem:[%s1 + $0x7c] sm:$0xf]
    %v54 = vld [vmem:[%s1 + $0x80] sm:$0xf]
    %v55 = vld [vmem:[%s1 + $0x84] sm:$0xf]
    %v56 = vld [vmem:[%s1 + $0x88] sm:$0xf]
    %v57 = vld [vmem:[%s1 + $0x8c] sm:$0xf]
    %v58 = vld [vmem:[%s2] sm:$0x1]
    %v60 = vlaneseq
    %v61 = vshrl.u32 %v60, 7
    %v62 = vsub.s32 0, %v61
    %v63 = vrot.slane %v58, %v62
    %v69 = vcombine.low %v18, %v19
    %v70 = vcombine.low %v20, %v21
    %v72 = vunpack.c.l.s4 1966171168
    %v73 = vunpack.c.0.s8 %v72
    %v74 = vlaneseq
    %v75 = vshrl.u32 %v74, 7
    %v76 = vsub.s32 %v73, %v75
    %v77 = vrot.slane %v69, %v76
    %v79 = vunpack.c.l.s4 1966171168
    %v80 = vunpack.c.0.s8 %v79
    %v81 = vlaneseq
    %v82 = vshrl.u32 %v81, 7
    %v83 = vsub.s32 %v80, %v82
    %v84 = vrot.slane %v70, %v83
    %v85 = vcombine.low %v77, %v84
    %v86 = vcombine.high %v77, %v84
    %v88 = vunpack.c.l.s4 1966171168
    %v89 = vunpack.c.0.s8 %v88
    %v90 = vlaneseq
    %v91 = vshrl.u32 %v90, 7
    %v92 = vsub.s32 %v89, %v91
    %v93 = vrot.slane %v85, %v92
    %v95 = vunpack.c.l.s4 1966171168
    %v96 = vunpack.c.0.s8 %v95
    %v97 = vlaneseq
    %v98 = vshrl.u32 %v97, 7
    %v99 = vsub.s32 %v96, %v98
    %v100 = vrot.slane %v86, %v99
    %v101 = vcombine.high %v93, %v93
    %v140 = vunpack.c.l.b16 %v22
    %v141 = vunpack.c.l.b16 %v23
    %v142 = vunpack.c.l.b16 %v24
    %v143 = vunpack.c.l.b16 %v25
    %v144 = vunpack.c.l.b16 %v26
    %v145 = vunpack.c.l.b16 %v27
    %v146 = vunpack.c.l.b16 %v28
    %v147 = vunpack.c.l.b16 %v29
    %v148 = vunpack.c.l.b16 %v30
    %v149 = vunpack.c.l.b16 %v31
    %v150 = vunpack.c.l.b16 %v32
    %v151 = vunpack.c.l.b16 %v33
    %v152 = vunpack.c.l.b16 %v34
    %v153 = vunpack.c.l.b16 %v35
    %v154 = vunpack.c.l.b16 %v36
    %v155 = vunpack.c.l.b16 %v37
    %v156 = vunpack.c.l.b16 %v38
    %v157 = vunpack.c.l.b16 %v39
    %v158 = vunpack.c.l.b16 %v40
    %v159 = vunpack.c.l.b16 %v41
    %v160 = vunpack.c.l.b16 %v42
    %v161 = vunpack.c.l.b16 %v43
    %v162 = vunpack.c.l.b16 %v44
    %v163 = vunpack.c.l.b16 %v45
    %v164 = vunpack.c.l.b16 %v46
    %v165 = vunpack.c.l.b16 %v47
    %v166 = vunpack.c.l.b16 %v48
    %v167 = vunpack.c.l.b16 %v49
    %v168 = vunpack.c.l.b16 %v50
    %v169 = vunpack.c.l.b16 %v51
    %v170 = vunpack.c.l.b16 %v52
    %v171 = vunpack.c.l.b16 %v53
    %v172 = vunpack.c.l.b16 %v54
    %v173 = vunpack.c.l.b16 %v55
    %v174 = vunpack.c.l.b16 %v56
    %v175 = vunpack.c.l.b16 %v57
    %v176 = vpack.c.b16 %v141, %v140
    %v177 = vpack.c.b16 %v143, %v142
    %v178 = vpack.c.b16 %v145, %v144
    %v179 = vpack.c.b16 %v147, %v146
    %v180 = vpack.c.b16 %v149, %v148
    %v181 = vpack.c.b16 %v151, %v150
    %v182 = vpack.c.b16 %v153, %v152
    %v183 = vpack.c.b16 %v155, %v154
    %v184 = vpack.c.b16 %v157, %v156
    %v185 = vpack.c.b16 %v159, %v158
    %v186 = vpack.c.b16 %v161, %v160
    %v187 = vpack.c.b16 %v163, %v162
    %v188 = vpack.c.b16 %v165, %v164
    %v189 = vpack.c.b16 %v167, %v166
    %v190 = vpack.c.b16 %v169, %v168
    %v191 = vpack.c.b16 %v171, %v170
    %v192 = vpack.c.b16 %v173, %v172
    %v193 = vpack.c.b16 %v175, %v174
    %vm212 = vcmask 261120
    %v214 = vsel %vm212, %v101, 0
    %216 = vmatprep.subr.bf16.mxu0 0
    %217 = vmatpush1.bf16.msra.mxu0 %v176
    %218 = vmatprep.subr.bf16.mxu0 0
    %219 = vmatpush1.bf16.msra.mxu0 %v177
    %220 = vmatprep.subr.bf16.mxu0 0
    %221 = vmatpush1.bf16.msra.mxu0 %v178
    %222 = vmatprep.subr.bf16.mxu0 0
    %223 = vmatpush1.bf16.msra.mxu0 %v179
    %224 = vmatprep.subr.bf16.mxu0 0
    %225 = vmatpush1.bf16.msra.mxu0 %v180
    %226 = vmatprep.subr.bf16.mxu0 0
    %227 = vmatpush1.bf16.msra.mxu0 %v181
    %228 = vmatprep.subr.bf16.mxu0 0
    %229 = vmatpush1.bf16.msra.mxu0 %v182
    %230 = vmatprep.subr.bf16.mxu0 0
    %231 = vmatpush1.bf16.msra.mxu0 %v183
    %232 = vmatprep.subr.bf16.mxu0 0
    %233 = vmatpush1.bf16.msra.mxu0 %v184
    %234 = vmatprep.subr.bf16.mxu0 0
    %235 = vmatpush1.bf16.msra.mxu0 %v185
    %236 = vmatprep.subr.bf16.mxu0 0
    %237 = vmatpush1.bf16.msra.mxu0 %v186
    %238 = vmatprep.subr.bf16.mxu0 0
    %239 = vmatpush1.bf16.msra.mxu0 %v187
    %240 = vmatprep.subr.bf16.mxu0 0
    %241 = vmatpush1.bf16.msra.mxu0 %v188
    %242 = vmatprep.subr.bf16.mxu0 0
    %243 = vmatpush1.bf16.msra.mxu0 %v189
    %244 = vmatprep.subr.bf16.mxu0 0
    %245 = vmatpush1.bf16.msra.mxu0 %v190
    %246 = vmatprep.subr.bf16.mxu0 0
    %247 = vmatpush1.bf16.msra.mxu0 %v191
    %248 = vmatprep.mubr.bf16.mxu0 %v100
    %249 = vmatmul.mubr.bf16.gmra.mrb[0].mxu0 %v93
    %v250 = vpop.f32.mrb[0].mxu0
    %v251 = vadd.f32 %v63, %v250
    %v252 = vpop.f32.mrb[0].mxu0
    %v253 = vpop.f32.mrb[0].mxu0
    %v254 = vpop.f32.mrb[0].mxu0
    %255 = vdwg.mxu0
    %256 = vmatprep.subr.bf16.mxu0 0
    %257 = vmatpush1.bf16.msra.mxu0 %v192
    %258 = vmatprep.subr.bf16.mxu0 0
    %259 = vmatpush1.bf16.msra.mxu0 %v193
    %260 = vmatprep.subr.bf16.mxu0 0
    %261 = vmatpush1.bf16.msra.mxu0 0
    %262 = vmatprep.subr.bf16.mxu0 0
    %263 = vmatpush1.bf16.msra.mxu0 0
    %264 = vmatprep.subr.bf16.mxu0 0
    %265 = vmatpush1.bf16.msra.mxu0 0
    %266 = vmatprep.subr.bf16.mxu0 0
    %267 = vmatpush1.bf16.msra.mxu0 0
    %268 = vmatprep.subr.bf16.mxu0 0
    %269 = vmatpush1.bf16.msra.mxu0 0
    %270 = vmatprep.subr.bf16.mxu0 0
    %271 = vmatpush1.bf16.msra.mxu0 0
    %272 = vmatprep.subr.bf16.mxu0 0
    %273 = vmatpush1.bf16.msra.mxu0 0
    %274 = vmatprep.subr.bf16.mxu0 0
    %275 = vmatpush1.bf16.msra.mxu0 0
    %276 = vmatprep.subr.bf16.mxu0 0
    %277 = vmatpush1.bf16.msra.mxu0 0
    %278 = vmatprep.subr.bf16.mxu0 0
    %279 = vmatpush1.bf16.msra.mxu0 0
    %280 = vmatprep.subr.bf16.mxu0 0
    %281 = vmatpush1.bf16.msra.mxu0 0
    %282 = vmatprep.subr.bf16.mxu0 0
    %283 = vmatpush1.bf16.msra.mxu0 0
    %284 = vmatprep.subr.bf16.mxu0 0
    %285 = vmatpush1.bf16.msra.mxu0 0
    %286 = vmatprep.subr.bf16.mxu0 0
    %287 = vmatpush1.bf16.msra.mxu0 0
    %288 = vmatprep.mubr.bf16.mxu0 0
    %289 = vmatmul.mubr.bf16.gmra.mrb[0].mxu0 %v214
    %v290 = vpop.f32.mrb[0].mxu0
    %v291 = vadd.f32 %v251, %v290
    %v292 = vpop.f32.mrb[0].mxu0
    %v293 = vpop.f32.mrb[0].mxu0
    %v294 = vpop.f32.mrb[0].mxu0
    %295 = vdwg.mxu0
    %vm296 = vcmp.ge.f32.partialorder %v291, 0.0
    %v297 = vmul.f32 %v291, 0.01
    %v298 = vsel %vm296, %v291, %v297
    %v299 = vld [vmem:[%s3] sm:$0x1]
    %v300 = vld [vmem:[%s3 + $0x1] sm:$0x1]
    %v301 = vld [vmem:[%s3 + $0x2] sm:$0x1]
    %v302 = vld [vmem:[%s3 + $0x3] sm:$0x1]
    %v303 = vunpack.c.l.bf16 %v299
    %v304 = vunpack.c.l.bf16 %v300
    %v305 = vunpack.c.l.bf16 %v301
    %v306 = vunpack.c.l.bf16 %v302
    %v311 = vcombine.low %v303, %v304
    %v312 = vcombine.low %v305, %v306
    %v314 = vunpack.c.l.s4 1983009808
    %v315 = vunpack.c.0.s8 %v314
    %v316 = vlaneseq
    %v317 = vshrl.u32 %v316, 7
    %v318 = vsub.s32 %v315, %v317
    %v319 = vrot.slane %v311, %v318
    %v321 = vunpack.c.l.s4 1983009808
    %v322 = vunpack.c.0.s8 %v321
    %v323 = vlaneseq
    %v324 = vshrl.u32 %v323, 7
    %v325 = vsub.s32 %v322, %v324
    %v326 = vrot.slane %v312, %v325
    %v327 = vcombine.low %v319, %v326
    %v329 = vadd.f32 %v298, %v327
    %v330 = vpack.c.bf16 %v329, %v329
    %v333 = vunpack.c.l.s4 1966171168
    %v334 = vunpack.c.0.s8 %v333
    %v335 = vlaneseq
    %v336 = vshrl.u32 %v335, 7
    %v337 = vsub.s32 %v334, %v336
    %v338 = vrot.slane %v330, %v337
    %v339 = vcombine.high %v338, %v338
    %v341 = vunpack.c.l.s4 1966171168
    %v342 = vunpack.c.0.s8 %v341
    %v343 = vlaneseq
    %v344 = vshrl.u32 %v343, 7
    %v345 = vsub.s32 %v342, %v344
    %v346 = vrot.slane %v338, %v345
    %v348 = vunpack.c.l.s4 1966171168
    %v349 = vunpack.c.0.s8 %v348
    %v350 = vlaneseq
    %v351 = vshrl.u32 %v350, 7
    %v352 = vsub.s32 %v349, %v351
    %v353 = vrot.slane %v339, %v352
    %v354 = vcombine.high %v346, %v346
    %v355 = vcombine.high %v353, %v353
    %360 = vst [vmem:[#allocation2] sm:$0x1] %v346
    %361 = vst [vmem:[#allocation2 + $0x1] sm:$0x1] %v353
    %362 = vst [vmem:[#allocation2 + $0x2] sm:$0x1] %v354
    %363 = vst [vmem:[#allocation2 + $0x3] sm:$0x1] %v355
    // Predicated region
    $region18: #{darknet_forward.27} parent=1 // pred_check
      _
    $region19: #{darknet_forward.27} parent=1 // pred_check_branch
      %365 = sbr.rel (0) target = $region21
    $region20: #{darknet_forward.27} parent=1 // pred_region
      // Predicated region
      $region22: #{darknet_forward.27} parent=20 // pred_check
        _
      $region23: #{darknet_forward.27} parent=20 // pred_check_branch
        %367 = sbr.rel (0) target = $region25
      $region24: #{darknet_forward.27} parent=20 // pred_region
        // Predicated region
        $region26: #{darknet_forward.27} parent=24 // pred_check
          _
        $region27: #{darknet_forward.27} parent=24 // pred_check_branch
          %369 = sbr.rel target = $region29
        $region28: #{darknet_forward.27} parent=24 // pred_region
          // Predicated region
          $region41: #{darknet_forward.27} parent=28 // pred_check
            _
          $region42: #{darknet_forward.27} parent=28 // pred_check_branch
            %384 = sbr.rel (0) target = $region44
          $region43: #{darknet_forward.27} parent=28 // pred_region
            loop: start=0, step=1, limit=1
            $region45: #{darknet_forward.27} parent=43 // loop_pre_header
              _
            $region46: #{darknet_forward.27} parent=43 // loop_header
              %s387 = sphi 0, %s391
              %p388 = scmp.ge.s32.totalorder %s387, 1
              %s392 = sphi [#allocation2], [#allocation2]
              %s393 = sphi %s4, %s4
            $region47: #{darknet_forward.27} parent=43 // loop_header_branch
              %390 = sbr.rel (%p388) target = $region51
            $region48: #{darknet_forward.27} parent=43 // loop_body
              %v394 = vld [vmem:[%s392] sm:$0x1]
              %395 = vst [vmem:[%s393] sm:$0x1] %v394
            $region49: #{darknet_forward.27} parent=43 // loop_footer
              %s391 = sadd.s32 1, %s387
            $region50: #{darknet_forward.27} parent=43 // loop_footer_branch
              %386 = sbr.rel target = $region46
            $region51: #{darknet_forward.27} parent=43 // loop_exit
              _
          $region44: #{darknet_forward.27} parent=28 // pred_fallthru
            _
        $region29: #{darknet_forward.27} parent=24 // pred_fallthru
          _
        // Predicated region
        $region30: #{darknet_forward.27} parent=24 // pred_check
          _
        $region31: #{darknet_forward.27} parent=24 // pred_check_branch
          %371 = sbr.rel (0) target = $region33
        $region32: #{darknet_forward.27} parent=24 // pred_region
          loop: start=0, step=1, limit=1
          $region34: #{darknet_forward.27} parent=32 // loop_pre_header
            _
          $region35: #{darknet_forward.27} parent=32 // loop_header
            %s374 = sphi 0, %s378
            %p375 = scmp.ge.s32.totalorder %s374, 1
            %s379 = sphi [#allocation2], [#allocation2]
            %s380 = sphi %s4, %s4
          $region36: #{darknet_forward.27} parent=32 // loop_header_branch
            %377 = sbr.rel (%p375) target = $region40
          $region37: #{darknet_forward.27} parent=32 // loop_body
            %v381 = vld [vmem:[%s379] sm:$0x1]
            %382 = vst [vmem:[%s380] sm:$0x1] %v381
          $region38: #{darknet_forward.27} parent=32 // loop_footer
            %s378 = sadd.s32 1, %s374
          $region39: #{darknet_forward.27} parent=32 // loop_footer_branch
            %373 = sbr.rel target = $region35
          $region40: #{darknet_forward.27} parent=32 // loop_exit
            _
        $region33: #{darknet_forward.27} parent=24 // pred_fallthru
          _
      $region25: #{darknet_forward.27} parent=20 // pred_fallthru
        _
      %396 = vnop
    $region21: #{darknet_forward.27} parent=1 // pred_fallthru
      _
    // Predicated region
    $region52: #{darknet_forward.27} parent=1 // pred_check
      _
    $region53: #{darknet_forward.27} parent=1 // pred_check_branch
      %398 = sbr.rel (0) target = $region55
    $region54: #{darknet_forward.27} parent=1 // pred_region
      _
    $region55: #{darknet_forward.27} parent=1 // pred_fallthru
      _

// kernel: darknet_forward.25
$region0: #{darknet_forward.25}
  #allocation0 [shape = 'u32[]', space=smem, size = 0x4, offset = 0x4, fixed_abs, tag = 'smem constant byte address 0x4 - core index']
  #allocation1 [shape = 'u32[144,128]{1,0:T(1,128)}', space=vmem, size = 0x12000, scoped, tag = 'internal scratch']
  %s0 = inlined_call_operand.vmem [shape: bf16[2,576], index: 0, kind: input, shape index: {}]
  %s1 = inlined_call_operand.vmem [shape: bf16[576,128], index: 1, kind: input, shape index: {}]
  %s2 = inlined_call_operand.vmem [shape: f32[1,128], index: 2, kind: input, shape index: {}]
  %s3 = inlined_call_operand.vmem [shape: bf16[2,128], index: 3, kind: output, shape index: {}]
  %s4 = sld [smem:[#allocation0]]
  $region52: #{darknet_forward.25} parent=0
    _
  %s6 = ssub.s32 1, %s4
  %s7 = scalar_select 0, %s6, %s4
  $region1: #{darknet_forward.25} parent=0
    #allocation2 [shape = 'u8[2048]{0}', space=vmem, size = 0x800, scoped, tag = 'output window, operand 0, single buffered']
    // Predicated region
    $region2: #{darknet_forward.25} parent=1 // pred_check
      _
    $region3: #{darknet_forward.25} parent=1 // pred_check_branch
      %9 = sbr.rel (0) target = $region5
    $region4: #{darknet_forward.25} parent=1 // pred_region
      _
    $region5: #{darknet_forward.25} parent=1 // pred_fallthru
      _
    // Predicated region
    $region6: #{darknet_forward.25} parent=1 // pred_check
      _
    $region7: #{darknet_forward.25} parent=1 // pred_check_branch
      %11 = sbr.rel (0) target = $region9
    $region8: #{darknet_forward.25} parent=1 // pred_region
      _
    $region9: #{darknet_forward.25} parent=1 // pred_fallthru
      _
    // Predicated region
    $region10: #{darknet_forward.25} parent=1 // pred_check
      _
    $region11: #{darknet_forward.25} parent=1 // pred_check_branch
      %13 = sbr.rel (0) target = $region13
    $region12: #{darknet_forward.25} parent=1 // pred_region
      _
    $region13: #{darknet_forward.25} parent=1 // pred_fallthru
      _
    %v15 = vld [vmem:[%s0] sm:$0x1f]
    %v16 = vld [vmem:[%s0 + $0x5] sm:$0x1f]
    %v17 = vld [vmem:[%s0 + $0xa] sm:$0x1f]
    %v18 = vld [vmem:[%s0 + $0xf] sm:$0x1f]
    %v19 = vld [vmem:[%s1] sm:$0xf]
    %v20 = vld [vmem:[%s1 + $0x4] sm:$0xf]
    %v21 = vld [vmem:[%s1 + $0x8] sm:$0xf]
    %v22 = vld [vmem:[%s1 + $0xc] sm:$0xf]
    %v23 = vld [vmem:[%s1 + $0x10] sm:$0xf]
    %v24 = vld [vmem:[%s1 + $0x14] sm:$0xf]
    %v25 = vld [vmem:[%s1 + $0x18] sm:$0xf]
    %v26 = vld [vmem:[%s1 + $0x1c] sm:$0xf]
    %v27 = vld [vmem:[%s1 + $0x20] sm:$0xf]
    %v28 = vld [vmem:[%s1 + $0x24] sm:$0xf]
    %v29 = vld [vmem:[%s1 + $0x28] sm:$0xf]
    %v30 = vld [vmem:[%s1 + $0x2c] sm:$0xf]
    %v31 = vld [vmem:[%s1 + $0x30] sm:$0xf]
    %v32 = vld [vmem:[%s1 + $0x34] sm:$0xf]
    %v33 = vld [vmem:[%s1 + $0x38] sm:$0xf]
    %v34 = vld [vmem:[%s1 + $0x3c] sm:$0xf]
    %v35 = vld [vmem:[%s1 + $0x40] sm:$0xf]
    %v36 = vld [vmem:[%s1 + $0x44] sm:$0xf]
    %v37 = vld [vmem:[%s1 + $0x48] sm:$0xf]
    %v38 = vld [vmem:[%s1 + $0x4c] sm:$0xf]
    %v39 = vld [vmem:[%s1 + $0x50] sm:$0xf]
    %v40 = vld [vmem:[%s1 + $0x54] sm:$0xf]
    %v41 = vld [vmem:[%s1 + $0x58] sm:$0xf]
    %v42 = vld [vmem:[%s1 + $0x5c] sm:$0xf]
    %v43 = vld [vmem:[%s1 + $0x60] sm:$0xf]
    %v44 = vld [vmem:[%s1 + $0x64] sm:$0xf]
    %v45 = vld [vmem:[%s1 + $0x68] sm:$0xf]
    %v46 = vld [vmem:[%s1 + $0x6c] sm:$0xf]
    %v47 = vld [vmem:[%s1 + $0x70] sm:$0xf]
    %v48 = vld [vmem:[%s1 + $0x74] sm:$0xf]
    %v49 = vld [vmem:[%s1 + $0x78] sm:$0xf]
    %v50 = vld [vmem:[%s1 + $0x7c] sm:$0xf]
    %v51 = vld [vmem:[%s1 + $0x80] sm:$0xf]
    %v52 = vld [vmem:[%s1 + $0x84] sm:$0xf]
    %v53 = vld [vmem:[%s1 + $0x88] sm:$0xf]
    %v54 = vld [vmem:[%s1 + $0x8c] sm:$0xf]
    %v55 = vld [vmem:[%s1 + $0x90] sm:$0xf]
    %v56 = vld [vmem:[%s1 + $0x94] sm:$0xf]
    %v57 = vld [vmem:[%s1 + $0x98] sm:$0xf]
    %v58 = vld [vmem:[%s1 + $0x9c] sm:$0xf]
    %v59 = vld [vmem:[%s1 + $0xa0] sm:$0xf]
    %v60 = vld [vmem:[%s1 + $0xa4] sm:$0xf]
    %v61 = vld [vmem:[%s1 + $0xa8] sm:$0xf]
    %v62 = vld [vmem:[%s1 + $0xac] sm:$0xf]
    %v63 = vld [vmem:[%s1 + $0xb0] sm:$0xf]
    %v64 = vld [vmem:[%s1 + $0xb4] sm:$0xf]
    %v65 = vld [vmem:[%s1 + $0xb8] sm:$0xf]
    %v66 = vld [vmem:[%s1 + $0xbc] sm:$0xf]
    %v67 = vld [vmem:[%s1 + $0xc0] sm:$0xf]
    %v68 = vld [vmem:[%s1 + $0xc4] sm:$0xf]
    %v69 = vld [vmem:[%s1 + $0xc8] sm:$0xf]
    %v70 = vld [vmem:[%s1 + $0xcc] sm:$0xf]
    %v71 = vld [vmem:[%s1 + $0xd0] sm:$0xf]
    %v72 = vld [vmem:[%s1 + $0xd4] sm:$0xf]
    %v73 = vld [vmem:[%s1 + $0xd8] sm:$0xf]
    %v74 = vld [vmem:[%s1 + $0xdc] sm:$0xf]
    %v75 = vld [vmem:[%s1 + $0xe0] sm:$0xf]
    %v76 = vld [vmem:[%s1 + $0xe4] sm:$0xf]
    %v77 = vld [vmem:[%s1 + $0xe8] sm:$0xf]
    %v78 = vld [vmem:[%s1 + $0xec] sm:$0xf]
    %v79 = vld [vmem:[%s1 + $0xf0] sm:$0xf]
    %v80 = vld [vmem:[%s1 + $0xf4] sm:$0xf]
    %v81 = vld [vmem:[%s1 + $0xf8] sm:$0xf]
    %v82 = vld [vmem:[%s1 + $0xfc] sm:$0xf]
    %v83 = vld [vmem:[%s1 + $0x100] sm:$0xf]
    %v84 = vld [vmem:[%s1 + $0x104] sm:$0xf]
    %v85 = vld [vmem:[%s1 + $0x108] sm:$0xf]
    %v86 = vld [vmem:[%s1 + $0x10c] sm:$0xf]
    %v87 = vld [vmem:[%s1 + $0x110] sm:$0xf]
    %v88 = vld [vmem:[%s1 + $0x114] sm:$0xf]
    %v89 = vld [vmem:[%s1 + $0x118] sm:$0xf]
    %v90 = vld [vmem:[%s1 + $0x11c] sm:$0xf]
    %v91 = vld [vmem:[%s2] sm:$0x1]
    %v93 = vlaneseq
    %v94 = vshrl.u32 %v93, 7
    %v95 = vsub.s32 0, %v94
    %v96 = vrot.slane %v91, %v95
    %v102 = vcombine.low %v15, %v16
    %v103 = vcombine.high %v15, %v16
    %v104 = vcombine.low %v17, %v18
    %v105 = vcombine.high %v17, %v18
    %v107 = vunpack.c.l.s4 1966171168
    %v108 = vunpack.c.0.s8 %v107
    %v109 = vlaneseq
    %v110 = vshrl.u32 %v109, 7
    %v111 = vsub.s32 %v108, %v110
    %v112 = vrot.slane %v102, %v111
    %v114 = vunpack.c.l.s4 1966171168
    %v115 = vunpack.c.0.s8 %v114
    %v116 = vlaneseq
    %v117 = vshrl.u32 %v116, 7
    %v118 = vsub.s32 %v115, %v117
    %v119 = vrot.slane %v103, %v118
    %v121 = vunpack.c.l.s4 1966171168
    %v122 = vunpack.c.0.s8 %v121
    %v123 = vlaneseq
    %v124 = vshrl.u32 %v123, 7
    %v125 = vsub.s32 %v122, %v124
    %v126 = vrot.slane %v104, %v125
    %v128 = vunpack.c.l.s4 1966171168
    %v129 = vunpack.c.0.s8 %v128
    %v130 = vlaneseq
    %v131 = vshrl.u32 %v130, 7
    %v132 = vsub.s32 %v129, %v131
    %v133 = vrot.slane %v105, %v132
    %v134 = vcombine.low %v112, %v126
    %v135 = vcombine.high %v112, %v126
    %v136 = vcombine.low %v119, %v133
    %v138 = vunpack.c.l.s4 1966171168
    %v139 = vunpack.c.0.s8 %v138
    %v140 = vlaneseq
    %v141 = vshrl.u32 %v140, 7
    %v142 = vsub.s32 %v139, %v141
    %v143 = vrot.slane %v134, %v142
    %v145 = vunpack.c.l.s4 1966171168
    %v146 = vunpack.c.0.s8 %v145
    %v147 = vlaneseq
    %v148 = vshrl.u32 %v147, 7
    %v149 = vsub.s32 %v146, %v148
    %v150 = vrot.slane %v136, %v149
    %v152 = vunpack.c.l.s4 1966171168
    %v153 = vunpack.c.0.s8 %v152
    %v154 = vlaneseq
    %v155 = vshrl.u32 %v154, 7
    %v156 = vsub.s32 %v153, %v155
    %v157 = vrot.slane %v135, %v156
    %v158 = vcombine.high %v143, %v143
    %v159 = vcombine.high %v157, %v157
    %v236 = vunpack.c.l.b16 %v19
    %v237 = vunpack.c.l.b16 %v20
    %v238 = vunpack.c.l.b16 %v21
    %v239 = vunpack.c.l.b16 %v22
    %v240 = vunpack.c.l.b16 %v23
    %v241 = vunpack.c.l.b16 %v24
    %v242 = vunpack.c.l.b16 %v25
    %v243 = vunpack.c.l.b16 %v26
    %v244 = vunpack.c.l.b16 %v27
    %v245 = vunpack.c.l.b16 %v28
    %v246 = vunpack.c.l.b16 %v29
    %v247 = vunpack.c.l.b16 %v30
    %v248 = vunpack.c.l.b16 %v31
    %v249 = vunpack.c.l.b16 %v32
    %v250 = vunpack.c.l.b16 %v33
    %v251 = vunpack.c.l.b16 %v34
    %v252 = vunpack.c.l.b16 %v35
    %v253 = vunpack.c.l.b16 %v36
    %v254 = vunpack.c.l.b16 %v37
    %v255 = vunpack.c.l.b16 %v38
    %v256 = vunpack.c.l.b16 %v39
    %v257 = vunpack.c.l.b16 %v40
    %v258 = vunpack.c.l.b16 %v41
    %v259 = vunpack.c.l.b16 %v42
    %v260 = vunpack.c.l.b16 %v43
    %v261 = vunpack.c.l.b16 %v44
    %v262 = vunpack.c.l.b16 %v45
    %v263 = vunpack.c.l.b16 %v46
    %v264 = vunpack.c.l.b16 %v47
    %v265 = vunpack.c.l.b16 %v48
    %v266 = vunpack.c.l.b16 %v49
    %v267 = vunpack.c.l.b16 %v50
    %v268 = vunpack.c.l.b16 %v51
    %v269 = vunpack.c.l.b16 %v52
    %v270 = vunpack.c.l.b16 %v53
    %v271 = vunpack.c.l.b16 %v54
    %v272 = vunpack.c.l.b16 %v55
    %v273 = vunpack.c.l.b16 %v56
    %v274 = vunpack.c.l.b16 %v57
    %v275 = vunpack.c.l.b16 %v58
    %v276 = vunpack.c.l.b16 %v59
    %v277 = vunpack.c.l.b16 %v60
    %v278 = vunpack.c.l.b16 %v61
    %v279 = vunpack.c.l.b16 %v62
    %v280 = vunpack.c.l.b16 %v63
    %v281 = vunpack.c.l.b16 %v64
    %v282 = vunpack.c.l.b16 %v65
    %v283 = vunpack.c.l.b16 %v66
    %v284 = vunpack.c.l.b16 %v67
    %v285 = vunpack.c.l.b16 %v68
    %v286 = vunpack.c.l.b16 %v69
    %v287 = vunpack.c.l.b16 %v70
    %v288 = vunpack.c.l.b16 %v71
    %v289 = vunpack.c.l.b16 %v72
    %v290 = vunpack.c.l.b16 %v73
    %v291 = vunpack.c.l.b16 %v74
    %v292 = vunpack.c.l.b16 %v75
    %v293 = vunpack.c.l.b16 %v76
    %v294 = vunpack.c.l.b16 %v77
    %v295 = vunpack.c.l.b16 %v78
    %v296 = vunpack.c.l.b16 %v79
    %v297 = vunpack.c.l.b16 %v80
    %v298 = vunpack.c.l.b16 %v81
    %v299 = vunpack.c.l.b16 %v82
    %v300 = vunpack.c.l.b16 %v83
    %v301 = vunpack.c.l.b16 %v84
    %v302 = vunpack.c.l.b16 %v85
    %v303 = vunpack.c.l.b16 %v86
    %v304 = vunpack.c.l.b16 %v87
    %v305 = vunpack.c.l.b16 %v88
    %v306 = vunpack.c.l.b16 %v89
    %v307 = vunpack.c.l.b16 %v90
    %v308 = vpack.c.b16 %v237, %v236
    %v309 = vpack.c.b16 %v239, %v238
    %v310 = vpack.c.b16 %v241, %v240
    %v311 = vpack.c.b16 %v243, %v242
    %v312 = vpack.c.b16 %v245, %v244
    %v313 = vpack.c.b16 %v247, %v246
    %v314 = vpack.c.b16 %v249, %v248
    %v315 = vpack.c.b16 %v251, %v250
    %v316 = vpack.c.b16 %v253, %v252
    %v317 = vpack.c.b16 %v255, %v254
    %v318 = vpack.c.b16 %v257, %v256
    %v319 = vpack.c.b16 %v259, %v258
    %v320 = vpack.c.b16 %v261, %v260
    %v321 = vpack.c.b16 %v263, %v262
    %v322 = vpack.c.b16 %v265, %v264
    %v323 = vpack.c.b16 %v267, %v266
    %v324 = vpack.c.b16 %v269, %v268
    %v325 = vpack.c.b16 %v271, %v270
    %v326 = vpack.c.b16 %v273, %v272
    %v327 = vpack.c.b16 %v275, %v274
    %v328 = vpack.c.b16 %v277, %v276
    %v329 = vpack.c.b16 %v279, %v278
    %v330 = vpack.c.b16 %v281, %v280
    %v331 = vpack.c.b16 %v283, %v282
    %v332 = vpack.c.b16 %v285, %v284
    %v333 = vpack.c.b16 %v287, %v286
    %v334 = vpack.c.b16 %v289, %v288
    %v335 = vpack.c.b16 %v291, %v290
    %v336 = vpack.c.b16 %v293, %v292
    %v337 = vpack.c.b16 %v295, %v294
    %v338 = vpack.c.b16 %v297, %v296
    %v339 = vpack.c.b16 %v299, %v298
    %v340 = vpack.c.b16 %v301, %v300
    %v341 = vpack.c.b16 %v303, %v302
    %v342 = vpack.c.b16 %v305, %v304
    %v343 = vpack.c.b16 %v307, %v306
    %vm380 = vcmask 523264
    %v382 = vsel %vm380, %v150, 0
    %384 = vmatprep.subr.bf16.mxu0 0
    %385 = vmatpush1.bf16.msra.mxu0 %v308
    %386 = vmatprep.subr.bf16.mxu0 0
    %387 = vmatpush1.bf16.msra.mxu0 %v309
    %388 = vmatprep.subr.bf16.mxu0 0
    %389 = vmatpush1.bf16.msra.mxu0 %v310
    %390 = vmatprep.subr.bf16.mxu0 0
    %391 = vmatpush1.bf16.msra.mxu0 %v311
    %392 = vmatprep.subr.bf16.mxu0 0
    %393 = vmatpush1.bf16.msra.mxu0 %v312
    %394 = vmatprep.subr.bf16.mxu0 0
    %395 = vmatpush1.bf16.msra.mxu0 %v313
    %396 = vmatprep.subr.bf16.mxu0 0
    %397 = vmatpush1.bf16.msra.mxu0 %v314
    %398 = vmatprep.subr.bf16.mxu0 0
    %399 = vmatpush1.bf16.msra.mxu0 %v315
    %400 = vmatprep.subr.bf16.mxu0 0
    %401 = vmatpush1.bf16.msra.mxu0 %v316
    %402 = vmatprep.subr.bf16.mxu0 0
    %403 = vmatpush1.bf16.msra.mxu0 %v317
    %404 = vmatprep.subr.bf16.mxu0 0
    %405 = vmatpush1.bf16.msra.mxu0 %v318
    %406 = vmatprep.subr.bf16.mxu0 0
    %407 = vmatpush1.bf16.msra.mxu0 %v319
    %408 = vmatprep.subr.bf16.mxu0 0
    %409 = vmatpush1.bf16.msra.mxu0 %v320
    %410 = vmatprep.subr.bf16.mxu0 0
    %411 = vmatpush1.bf16.msra.mxu0 %v321
    %412 = vmatprep.subr.bf16.mxu0 0
    %413 = vmatpush1.bf16.msra.mxu0 %v322
    %414 = vmatprep.subr.bf16.mxu0 0
    %415 = vmatpush1.bf16.msra.mxu0 %v323
    %416 = vmatprep.mubr.bf16.mxu0 %v157
    %417 = vmatmul.mubr.bf16.gmra.mrb[0].mxu0 %v143
    %v418 = vpop.f32.mrb[0].mxu0
    %v419 = vadd.f32 %v96, %v418
    %v420 = vpop.f32.mrb[0].mxu0
    %v421 = vpop.f32.mrb[0].mxu0
    %v422 = vpop.f32.mrb[0].mxu0
    %423 = vdwg.mxu0
    %424 = vmatprep.subr.bf16.mxu0 0
    %425 = vmatpush1.bf16.msra.mxu0 %v324
    %426 = vmatprep.subr.bf16.mxu0 0
    %427 = vmatpush1.bf16.msra.mxu0 %v325
    %428 = vmatprep.subr.bf16.mxu0 0
    %429 = vmatpush1.bf16.msra.mxu0 %v326
    %430 = vmatprep.subr.bf16.mxu0 0
    %431 = vmatpush1.bf16.msra.mxu0 %v327
    %432 = vmatprep.subr.bf16.mxu0 0
    %433 = vmatpush1.bf16.msra.mxu0 %v328
    %434 = vmatprep.subr.bf16.mxu0 0
    %435 = vmatpush1.bf16.msra.mxu0 %v329
    %436 = vmatprep.subr.bf16.mxu0 0
    %437 = vmatpush1.bf16.msra.mxu0 %v330
    %438 = vmatprep.subr.bf16.mxu0 0
    %439 = vmatpush1.bf16.msra.mxu0 %v331
    %440 = vmatprep.subr.bf16.mxu0 0
    %441 = vmatpush1.bf16.msra.mxu0 %v332
    %442 = vmatprep.subr.bf16.mxu0 0
    %443 = vmatpush1.bf16.msra.mxu0 %v333
    %444 = vmatprep.subr.bf16.mxu0 0
    %445 = vmatpush1.bf16.msra.mxu0 %v334
    %446 = vmatprep.subr.bf16.mxu0 0
    %447 = vmatpush1.bf16.msra.mxu0 %v335
    %448 = vmatprep.subr.bf16.mxu0 0
    %449 = vmatpush1.bf16.msra.mxu0 %v336
    %450 = vmatprep.subr.bf16.mxu0 0
    %451 = vmatpush1.bf16.msra.mxu0 %v337
    %452 = vmatprep.subr.bf16.mxu0 0
    %453 = vmatpush1.bf16.msra.mxu0 %v338
    %454 = vmatprep.subr.bf16.mxu0 0
    %455 = vmatpush1.bf16.msra.mxu0 %v339
    %456 = vmatprep.mubr.bf16.mxu0 %v159
    %457 = vmatmul.mubr.bf16.gmra.mrb[0].mxu0 %v158
    %v458 = vpop.f32.mrb[0].mxu0
    %v459 = vadd.f32 %v419, %v458
    %v460 = vpop.f32.mrb[0].mxu0
    %v461 = vpop.f32.mrb[0].mxu0
    %v462 = vpop.f32.mrb[0].mxu0
    %463 = vdwg.mxu0
    %464 = vmatprep.subr.bf16.mxu0 0
    %465 = vmatpush1.bf16.msra.mxu0 %v340
    %466 = vmatprep.subr.bf16.mxu0 0
    %467 = vmatpush1.bf16.msra.mxu0 %v341
    %468 = vmatprep.subr.bf16.mxu0 0
    %469 = vmatpush1.bf16.msra.mxu0 %v342
    %470 = vmatprep.subr.bf16.mxu0 0
    %471 = vmatpush1.bf16.msra.mxu0 %v343
    %472 = vmatprep.subr.bf16.mxu0 0
    %473 = vmatpush1.bf16.msra.mxu0 0
    %474 = vmatprep.subr.bf16.mxu0 0
    %475 = vmatpush1.bf16.msra.mxu0 0
    %476 = vmatprep.subr.bf16.mxu0 0
    %477 = vmatpush1.bf16.msra.mxu0 0
    %478 = vmatprep.subr.bf16.mxu0 0
    %479 = vmatpush1.bf16.msra.mxu0 0
    %480 = vmatprep.subr.bf16.mxu0 0
    %481 = vmatpush1.bf16.msra.mxu0 0
    %482 = vmatprep.subr.bf16.mxu0 0
    %483 = vmatpush1.bf16.msra.mxu0 0
    %484 = vmatprep.subr.bf16.mxu0 0
    %485 = vmatpush1.bf16.msra.mxu0 0
    %486 = vmatprep.subr.bf16.mxu0 0
    %487 = vmatpush1.bf16.msra.mxu0 0
    %488 = vmatprep.subr.bf16.mxu0 0
    %489 = vmatpush1.bf16.msra.mxu0 0
    %490 = vmatprep.subr.bf16.mxu0 0
    %491 = vmatpush1.bf16.msra.mxu0 0
    %492 = vmatprep.subr.bf16.mxu0 0
    %493 = vmatpush1.bf16.msra.mxu0 0
    %494 = vmatprep.subr.bf16.mxu0 0
    %495 = vmatpush1.bf16.msra.mxu0 0
    %496 = vmatprep.mubr.bf16.mxu0 0
    %497 = vmatmul.mubr.bf16.gmra.mrb[0].mxu0 %v382
    %v498 = vpop.f32.mrb[0].mxu0
    %v499 = vadd.f32 %v459, %v498
    %v500 = vpop.f32.mrb[0].mxu0
    %v501 = vpop.f32.mrb[0].mxu0
    %v502 = vpop.f32.mrb[0].mxu0
    %503 = vdwg.mxu0
    %vm504 = vcmp.ge.f32.partialorder %v499, 0.0
    %v505 = vmul.f32 %v499, 0.01
    %v506 = vsel %vm504, %v499, %v505
    %v507 = vpack.c.bf16 %v506, %v506
    %v510 = vunpack.c.l.s4 1966171168
    %v511 = vunpack.c.0.s8 %v510
    %v512 = vlaneseq
    %v513 = vshrl.u32 %v512, 7
    %v514 = vsub.s32 %v511, %v513
    %v515 = vrot.slane %v507, %v514
    %v516 = vcombine.high %v515, %v515
    %v518 = vunpack.c.l.s4 1966171168
    %v519 = vunpack.c.0.s8 %v518
    %v520 = vlaneseq
    %v521 = vshrl.u32 %v520, 7
    %v522 = vsub.s32 %v519, %v521
    %v523 = vrot.slane %v515, %v522
    %v525 = vunpack.c.l.s4 1966171168
    %v526 = vunpack.c.0.s8 %v525
    %v527 = vlaneseq
    %v528 = vshrl.u32 %v527, 7
    %v529 = vsub.s32 %v526, %v528
    %v530 = vrot.slane %v516, %v529
    %v531 = vcombine.high %v523, %v523
    %v532 = vcombine.high %v530, %v530
    %537 = vst [vmem:[#allocation2] sm:$0x1] %v523
    %538 = vst [vmem:[#allocation2 + $0x1] sm:$0x1] %v530
    %539 = vst [vmem:[#allocation2 + $0x2] sm:$0x1] %v531
    %540 = vst [vmem:[#allocation2 + $0x3] sm:$0x1] %v532
    // Predicated region
    $region14: #{darknet_forward.25} parent=1 // pred_check
      _
    $region15: #{darknet_forward.25} parent=1 // pred_check_branch
      %542 = sbr.rel (0) target = $region17
    $region16: #{darknet_forward.25} parent=1 // pred_region
      // Predicated region
      $region18: #{darknet_forward.25} parent=16 // pred_check
        _
      $region19: #{darknet_forward.25} parent=16 // pred_check_branch
        %544 = sbr.rel (0) target = $region21
      $region20: #{darknet_forward.25} parent=16 // pred_region
        // Predicated region
        $region22: #{darknet_forward.25} parent=20 // pred_check
          _
        $region23: #{darknet_forward.25} parent=20 // pred_check_branch
          %546 = sbr.rel target = $region25
        $region24: #{darknet_forward.25} parent=20 // pred_region
          // Predicated region
          $region37: #{darknet_forward.25} parent=24 // pred_check
            _
          $region38: #{darknet_forward.25} parent=24 // pred_check_branch
            %561 = sbr.rel (0) target = $region40
          $region39: #{darknet_forward.25} parent=24 // pred_region
            loop: start=0, step=1, limit=1
            $region41: #{darknet_forward.25} parent=39 // loop_pre_header
              _
            $region42: #{darknet_forward.25} parent=39 // loop_header
              %s564 = sphi 0, %s568
              %p565 = scmp.ge.s32.totalorder %s564, 1
              %s569 = sphi [#allocation2], [#allocation2]
              %s570 = sphi %s3, %s3
            $region43: #{darknet_forward.25} parent=39 // loop_header_branch
              %567 = sbr.rel (%p565) target = $region47
            $region44: #{darknet_forward.25} parent=39 // loop_body
              %v571 = vld [vmem:[%s569] sm:$0x1]
              %572 = vst [vmem:[%s570] sm:$0x1] %v571
            $region45: #{darknet_forward.25} parent=39 // loop_footer
              %s568 = sadd.s32 1, %s564
            $region46: #{darknet_forward.25} parent=39 // loop_footer_branch
              %563 = sbr.rel target = $region42
            $region47: #{darknet_forward.25} parent=39 // loop_exit
              _
          $region40: #{darknet_forward.25} parent=24 // pred_fallthru
            _
        $region25: #{darknet_forward.25} parent=20 // pred_fallthru
          _
        // Predicated region
        $region26: #{darknet_forward.25} parent=20 // pred_check
          _
        $region27: #{darknet_forward.25} parent=20 // pred_check_branch
          %548 = sbr.rel (0) target = $region29
        $region28: #{darknet_forward.25} parent=20 // pred_region
          loop: start=0, step=1, limit=1
          $region30: #{darknet_forward.25} parent=28 // loop_pre_header
            _
          $region31: #{darknet_forward.25} parent=28 // loop_header
            %s551 = sphi 0, %s555
            %p552 = scmp.ge.s32.totalorder %s551, 1
            %s556 = sphi [#allocation2], [#allocation2]
            %s557 = sphi %s3, %s3
          $region32: #{darknet_forward.25} parent=28 // loop_header_branch
            %554 = sbr.rel (%p552) target = $region36
          $region33: #{darknet_forward.25} parent=28 // loop_body
            %v558 = vld [vmem:[%s556] sm:$0x1]
            %559 = vst [vmem:[%s557] sm:$0x1] %v558
          $region34: #{darknet_forward.25} parent=28 // loop_footer
            %s555 = sadd.s32 1, %s551
          $region35: #{darknet_forward.25} parent=28 // loop_footer_branch
            %550 = sbr.rel target = $region31
          $region36: #{darknet_forward.25} parent=28 // loop_exit
            _
        $region29: #{darknet_forward.25} parent=20 // pred_fallthru
          _
      $region21: #{darknet_forward.25} parent=16 // pred_fallthru
        _
      %573 = vnop
    $region17: #{darknet_forward.25} parent=1 // pred_fallthru
      _
    // Predicated region
    $region48: #{darknet_forward.25} parent=1 // pred_check
      _
    $region49: #{darknet_forward.25} parent=1 // pred_check_branch
      %575 = sbr.rel (0) target = $region51
    $region50: #{darknet_forward.25} parent=1 // pred_region
      _
    $region51: #{darknet_forward.25} parent=1 // pred_fallthru
      _

// kernel: darknet_forward.28
$region0: #{darknet_forward.28}
  #allocation0 [shape = 'u32[]', space=smem, size = 0x4, offset = 0x4, fixed_abs, tag = 'smem constant byte address 0x4 - core index']
  #allocation1 [shape = 'u32[144,128]{1,0:T(1,128)}', space=vmem, size = 0x12000, scoped, tag = 'internal scratch']
  %s0 = inlined_call_operand.vmem [shape: bf16[2,128], index: 0, kind: input, shape index: {}]
  %s1 = inlined_call_operand.vmem [shape: bf16[128,2048], index: 1, kind: input, shape index: {}]
  %s2 = inlined_call_operand.vmem [shape: f32[1,2048], index: 2, kind: input, shape index: {}]
  %s3 = inlined_call_operand.vmem [shape: bf16[2,2048], index: 3, kind: output, shape index: {}]
  %s4 = sld [smem:[#allocation0]]
  $region98: #{darknet_forward.28} parent=0
    _
  %s6 = ssub.s32 1, %s4
  %s7 = scalar_select 0, %s6, %s4
  $region1: #{darknet_forward.28} parent=0
    #allocation2 [shape = 'u8[262144]{0}', space=vmem, size = 0x40000, scoped, tag = 'input window, operand 1']
    #allocation3 [shape = 'u8[16384]{0}', space=vmem, size = 0x4000, scoped, tag = 'output window, operand 0']
    loop: start=0, step=1, limit=6
    $region2: #{darknet_forward.28} parent=1 // loop_pre_header
      _
    $region3: #{darknet_forward.28} parent=1 // loop_header
      %s9 = sphi 0, %s13
      %p10 = scmp.ge.s32.totalorder %s9, 6
      %s16 = sphi 0, %s28
      %s17 = sphi 0, %s24
      %s18 = sphi 0, %s16
      %s19 = sphi 0, %s17
      %s20 = sphi 0, %s18
      %s21 = sphi 0, %s19
      %s31 = sphi 0, %s33
      %s34 = sphi 0, %s31
      %s35 = sphi 0, %s34
      %s51 = sphi 0, %s35
      %s57 = sphi 0, %s59
      %s60 = sphi 0, %s57
      %s61 = sphi 0, %s60
      %s77 = sphi 0, %s61
      %s83 = sphi 0, %s85
      %s86 = sphi 0, %s83
      %s87 = sphi 0, %s86
      %s103 = sphi 0, %s87
      %s111 = sphi 0, %s113
      %s114 = sphi 0, %s111
      %s115 = sphi 0, %s114
      %s131 = sphi 0, %s115
    $region4: #{darknet_forward.28} parent=1 // loop_header_branch
      %12 = sbr.rel (%p10) target = $region8
    $region5: #{darknet_forward.28} parent=1 // loop_body
      %s14 = ssub.s32 %s9, 1
      %s15 = ssub.s32 %s9, 2
      %s22 = sadd.s32 1, %s17
      %p23 = scmp.ge.s32.totalorder %s22, 4
      %s24 = scalar_select %p23, 0, %s22
      %s25 = sadd.s32 1, %s16
      %s26 = scalar_select %p23, %s25, %s16
      %p27 = scmp.ge.s32.totalorder %s26, 1
      %s28 = scalar_select %p27, 0, %s26
      %s29 = ssub.s32 %s16, %s28
      %p30 = scmp.eq.s32.totalorder %s29, 0
      %s32 = sadd.s32 %s31, 1
      %s33 = scalar_select %p30, %s31, %s32
      %p36 = pneg %p30
      %p37 = scmp.eq.s32.totalorder %s9, 3
      %p38 = por %p36, %p37
      %p39 = scmp.ne.s32.totalorder %s31, %s34
      %p40 = scmp.eq.s32.totalorder %s9, 0
      %p41 = por %p39, %p40
      %p42 = scmp.ne.s32.totalorder %s31, %s34
      %p43 = scmp.eq.s32.totalorder %s14, 3
      %p44 = por %p42, %p43
      %p45 = scmp.ne.s32.totalorder %s34, %s35
      %p46 = scmp.eq.s32.totalorder %s14, 0
      %p47 = por %p45, %p46
      %p48 = scmp.ne.s32.totalorder %s34, %s35
      %p49 = scmp.eq.s32.totalorder %s15, 3
      %p50 = por %p48, %p49
      %p52 = scmp.ne.s32.totalorder %s35, %s51
      %p53 = scmp.eq.s32.totalorder %s15, 0
      %p54 = por %p52, %p53
      %s55 = ssub.s32 %s17, %s24
      %p56 = scmp.eq.s32.totalorder %s55, 0
      %s58 = sadd.s32 %s57, 1
      %s59 = scalar_select %p56, %s57, %s58
      %p62 = pneg %p56
      %p63 = scmp.eq.s32.totalorder %s9, 3
      %p64 = por %p62, %p63
      %p65 = scmp.ne.s32.totalorder %s57, %s60
      %p66 = scmp.eq.s32.totalorder %s9, 0
      %p67 = por %p65, %p66
      %p68 = scmp.ne.s32.totalorder %s57, %s60
      %p69 = scmp.eq.s32.totalorder %s14, 3
      %p70 = por %p68, %p69
      %p71 = scmp.ne.s32.totalorder %s60, %s61
      %p72 = scmp.eq.s32.totalorder %s14, 0
      %p73 = por %p71, %p72
      %p74 = scmp.ne.s32.totalorder %s60, %s61
      %p75 = scmp.eq.s32.totalorder %s15, 3
      %p76 = por %p74, %p75
      %p78 = scmp.ne.s32.totalorder %s61, %s77
      %p79 = scmp.eq.s32.totalorder %s15, 0
      %p80 = por %p78, %p79
      %s81 = ssub.s32 %s17, %s24
      %p82 = scmp.eq.s32.totalorder %s81, 0
      %s84 = sadd.s32 %s83, 1
      %s85 = scalar_select %p82, %s83, %s84
      %p88 = pneg %p82
      %p89 = scmp.eq.s32.totalorder %s9, 3
      %p90 = por %p88, %p89
      %p91 = scmp.ne.s32.totalorder %s83, %s86
      %p92 = scmp.eq.s32.totalorder %s9, 0
      %p93 = por %p91, %p92
      %p94 = scmp.ne.s32.totalorder %s83, %s86
      %p95 = scmp.eq.s32.totalorder %s14, 3
      %p96 = por %p94, %p95
      %p97 = scmp.ne.s32.totalorder %s86, %s87
      %p98 = scmp.eq.s32.totalorder %s14, 0
      %p99 = por %p97, %p98
      %p100 = scmp.ne.s32.totalorder %s86, %s87
      %p101 = scmp.eq.s32.totalorder %s15, 3
      %p102 = por %p100, %p101
      %p104 = scmp.ne.s32.totalorder %s87, %s103
      %p105 = scmp.eq.s32.totalorder %s15, 0
      %p106 = por %p104, %p105
      %s107 = ssub.s32 %s16, %s28
      %s108 = ssub.s32 %s17, %s24
      %s109 = sor.u32 %s107, %s108
      %p110 = scmp.eq.s32.totalorder %s109, 0
      %s112 = sadd.s32 %s111, 1
      %s113 = scalar_select %p110, %s111, %s112
      %p116 = pneg %p110
      %p117 = scmp.eq.s32.totalorder %s9, 3
      %p118 = por %p116, %p117
      %p119 = scmp.ne.s32.totalorder %s111, %s114
      %p120 = scmp.eq.s32.totalorder %s9, 0
      %p121 = por %p119, %p120
      %p122 = scmp.ne.s32.totalorder %s111, %s114
      %p123 = scmp.eq.s32.totalorder %s14, 3
      %p124 = por %p122, %p123
      %p125 = scmp.ne.s32.totalorder %s114, %s115
      %p126 = scmp.eq.s32.totalorder %s14, 0
      %p127 = por %p125, %p126
      %p128 = scmp.ne.s32.totalorder %s114, %s115
      %p129 = scmp.eq.s32.totalorder %s15, 3
      %p130 = por %p128, %p129
      %p132 = scmp.ne.s32.totalorder %s115, %s131
      %p133 = scmp.eq.s32.totalorder %s15, 0
      %p134 = por %p132, %p133
      %p135 = scmp.le.s32.totalorder 1, %s9
      %p136 = scmp.lt.s32.totalorder %s9, 5
      %p137 = pnand %p135, %p136
      %p138 = pneg %p137
      // Predicated region
      $region9: #{darknet_forward.28} parent=5 // pred_check
        _
      $region10: #{darknet_forward.28} parent=5 // pred_check_branch
        %140 = sbr.rel (%p137) target = $region12
      $region11: #{darknet_forward.28} parent=5 // pred_region
        %s141 = ssub.s32 %s9, 1
        // Predicated region
        $region13: #{darknet_forward.28} parent=11 // pred_check
          %p142 = pneg %p47
        $region14: #{darknet_forward.28} parent=11 // pred_check_branch
          %144 = sbr.rel (%p142) target = $region16
        $region15: #{darknet_forward.28} parent=11 // pred_region
          %s145 = smul.u32 4, %s18
          %s146 = ssub.s32 1, %s145
          %s147 = smul.u32 16, %s146
          %p148 = scmp.lt.s32.totalorder %s145, 0
          %s149 = scalar_select %p148, %s145, 0
          %s150 = scalar_lea.vmem %s0, %s149
          %s151 = smul.u32 4, %s18
          %s152 = ssub.s32 1, %s151
          %s153 = smul.u32 16, %s152
        $region16: #{darknet_forward.28} parent=11 // pred_fallthru
          _
      $region12: #{darknet_forward.28} parent=5 // pred_fallthru
        _
      %p154 = scmp.lt.s32.totalorder %s9, 4
      // Predicated region
      $region17: #{darknet_forward.28} parent=5 // pred_check
        %p155 = pneg %p154
      $region18: #{darknet_forward.28} parent=5 // pred_check_branch
        %157 = sbr.rel (%p155) target = $region20
      $region19: #{darknet_forward.28} parent=5 // pred_region
        // Predicated region
        $region21: #{darknet_forward.28} parent=19 // pred_check
          %p158 = pneg %p67
        $region22: #{darknet_forward.28} parent=19 // pred_check_branch
          %160 = sbr.rel (%p158) target = $region24
        $region23: #{darknet_forward.28} parent=19 // pred_region
          %s161 = sand.u32 %s57, 1
          %s162 = sand.u32 %s57, 1
          %s163 = smul.addr %s162, 256
          %s164 = scalar_lea.vmem [#allocation2], %s163
          %s165 = smul.u32 4, %s17
          %s166 = smul.addr %s165, 4
          %s167 = scalar_lea.vmem %s1, %s166
          // Predicated region
          $region25: #{darknet_forward.28} parent=23 // pred_check
            _
          $region26: #{darknet_forward.28} parent=23 // pred_check_branch
            %169 = sbr.rel (0) target = $region28
          $region27: #{darknet_forward.28} parent=23 // pred_region
            // Predicated region
            $region29: #{darknet_forward.28} parent=27 // pred_check
              _
            $region30: #{darknet_forward.28} parent=27 // pred_check_branch
              %171 = sbr.rel (0) target = $region32
            $region31: #{darknet_forward.28} parent=27 // pred_region
              loop: start=0, step=1, limit=1
              $region33: #{darknet_forward.28} parent=31 // loop_pre_header
                _
              $region34: #{darknet_forward.28} parent=31 // loop_header
                %s173 = sphi 0, %s177
                %p174 = scmp.ge.s32.totalorder %s173, 1
                %s178 = sphi %s167, %s167
                %s179 = sphi %s164, %s164
              $region35: #{darknet_forward.28} parent=31 // loop_header_branch
                %176 = sbr.rel (%p174) target = $region39
              $region36: #{darknet_forward.28} parent=31 // loop_body
                %v180 = vld [vmem:[%s178] sm:$0xff]
                %181 = vst [vmem:[%s179] sm:$0xff] %v180
                %v182 = vld [vmem:[%s178 + $0x8] sm:$0xff]
                %183 = vst [vmem:[%s179 + $0x8] sm:$0xff] %v182
                %v184 = vld [vmem:[%s178 + $0x40] sm:$0xff]
                %185 = vst [vmem:[%s179 + $0x10] sm:$0xff] %v184
                %v186 = vld [vmem:[%s178 + $0x48] sm:$0xff]
                %187 = vst [vmem:[%s179 + $0x18] sm:$0xff] %v186
                %v188 = vld [vmem:[%s178 + $0x80] sm:$0xff]
                %189 = vst [vmem:[%s179 + $0x20] sm:$0xff] %v188
                %v190 = vld [vmem:[%s178 + $0x88] sm:$0xff]
                %191 = vst [vmem:[%s179 + $0x28] sm:$0xff] %v190
                %v192 = vld [vmem:[%s178 + $0xc0] sm:$0xff]
                %193 = vst [vmem:[%s179 + $0x30] sm:$0xff] %v192
                %v194 = vld [vmem:[%s178 + $0xc8] sm:$0xff]
                %195 = vst [vmem:[%s179 + $0x38] sm:$0xff] %v194
                %v196 = vld [vmem:[%s178 + $0x100] sm:$0xff]
                %197 = vst [vmem:[%s179 + $0x40] sm:$0xff] %v196
                %v198 = vld [vmem:[%s178 + $0x108] sm:$0xff]
                %199 = vst [vmem:[%s179 + $0x48] sm:$0xff] %v198
                %v200 = vld [vmem:[%s178 + $0x140] sm:$0xff]
                %201 = vst [vmem:[%s179 + $0x50] sm:$0xff] %v200
                %v202 = vld [vmem:[%s178 + $0x148] sm:$0xff]
                %203 = vst [vmem:[%s179 + $0x58] sm:$0xff] %v202
                %v204 = vld [vmem:[%s178 + $0x180] sm:$0xff]
                %205 = vst [vmem:[%s179 + $0x60] sm:$0xff] %v204
                %v206 = vld [vmem:[%s178 + $0x188] sm:$0xff]
                %207 = vst [vmem:[%s179 + $0x68] sm:$0xff] %v206
                %v208 = vld [vmem:[%s178 + $0x1c0] sm:$0xff]
                %209 = vst [vmem:[%s179 + $0x70] sm:$0xff] %v208
                %v210 = vld [vmem:[%s178 + $0x1c8] sm:$0xff]
                %211 = vst [vmem:[%s179 + $0x78] sm:$0xff] %v210
                %v212 = vld [vmem:[%s178 + $0x200] sm:$0xff]
                %213 = vst [vmem:[%s179 + $0x80] sm:$0xff] %v212
                %v214 = vld [vmem:[%s178 + $0x208] sm:$0xff]
                %215 = vst [vmem:[%s179 + $0x88] sm:$0xff] %v214
                %v216 = vld [vmem:[%s178 + $0x240] sm:$0xff]
                %217 = vst [vmem:[%s179 + $0x90] sm:$0xff] %v216
                %v218 = vld [vmem:[%s178 + $0x248] sm:$0xff]
                %219 = vst [vmem:[%s179 + $0x98] sm:$0xff] %v218
                %v220 = vld [vmem:[%s178 + $0x280] sm:$0xff]
                %221 = vst [vmem:[%s179 + $0xa0] sm:$0xff] %v220
                %v222 = vld [vmem:[%s178 + $0x288] sm:$0xff]
                %223 = vst [vmem:[%s179 + $0xa8] sm:$0xff] %v222
                %v224 = vld [vmem:[%s178 + $0x2c0] sm:$0xff]
                %225 = vst [vmem:[%s179 + $0xb0] sm:$0xff] %v224
                %v226 = vld [vmem:[%s178 + $0x2c8] sm:$0xff]
                %227 = vst [vmem:[%s179 + $0xb8] sm:$0xff] %v226
                %v228 = vld [vmem:[%s178 + $0x300] sm:$0xff]
                %229 = vst [vmem:[%s179 + $0xc0] sm:$0xff] %v228
                %v230 = vld [vmem:[%s178 + $0x308] sm:$0xff]
                %231 = vst [vmem:[%s179 + $0xc8] sm:$0xff] %v230
                %v232 = vld [vmem:[%s178 + $0x340] sm:$0xff]
                %233 = vst [vmem:[%s179 + $0xd0] sm:$0xff] %v232
                %v234 = vld [vmem:[%s178 + $0x348] sm:$0xff]
                %235 = vst [vmem:[%s179 + $0xd8] sm:$0xff] %v234
                %v236 = vld [vmem:[%s178 + $0x380] sm:$0xff]
                %237 = vst [vmem:[%s179 + $0xe0] sm:$0xff] %v236
                %v238 = vld [vmem:[%s178 + $0x388] sm:$0xff]
                %239 = vst [vmem:[%s179 + $0xe8] sm:$0xff] %v238
                %v240 = vld [vmem:[%s178 + $0x3c0] sm:$0xff]
                %241 = vst [vmem:[%s179 + $0xf0] sm:$0xff] %v240
                %v242 = vld [vmem:[%s178 + $0x3c8] sm:$0xff]
                %243 = vst [vmem:[%s179 + $0xf8] sm:$0xff] %v242
              $region37: #{darknet_forward.28} parent=31 // loop_footer
                %s177 = sadd.s32 1, %s173
              $region38: #{darknet_forward.28} parent=31 // loop_footer_branch
                %172 = sbr.rel target = $region34
              $region39: #{darknet_forward.28} parent=31 // loop_exit
                _
            $region32: #{darknet_forward.28} parent=27 // pred_fallthru
              _
            // Predicated region
            $region40: #{darknet_forward.28} parent=27 // pred_check
              _
            $region41: #{darknet_forward.28} parent=27 // pred_check_branch
              %245 = sbr.rel target = $region43
            $region42: #{darknet_forward.28} parent=27 // pred_region
              _
            $region43: #{darknet_forward.28} parent=27 // pred_fallthru
              _
          $region28: #{darknet_forward.28} parent=23 // pred_fallthru
            _
          %246 = vnop
        $region24: #{darknet_forward.28} parent=19 // pred_fallthru
          _
        // Predicated region
        $region44: #{darknet_forward.28} parent=19 // pred_check
          %p247 = pneg %p93
        $region45: #{darknet_forward.28} parent=19 // pred_check_branch
          %249 = sbr.rel (%p247) target = $region47
        $region46: #{darknet_forward.28} parent=19 // pred_region
          %s250 = smul.u32 4, %s17
          %p251 = scmp.lt.s32.totalorder %s250, 15
          %s252 = scalar_select %p251, %s250, 15
          %s253 = scalar_lea.vmem %s2, %s252
          %s254 = smul.u32 4, %s17
        $region47: #{darknet_forward.28} parent=19 // pred_fallthru
          _
      $region20: #{darknet_forward.28} parent=5 // pred_fallthru
        _
      %p255 = scmp.le.s32.totalorder 1, %s9
      %p256 = scmp.lt.s32.totalorder %s9, 5
      %p257 = pnand %p255, %p256
      %p258 = pneg %p257
      // Predicated region
      $region48: #{darknet_forward.28} parent=5 // pred_check
        _
      $region49: #{darknet_forward.28} parent=5 // pred_check_branch
        %260 = sbr.rel (%p257) target = $region51
      $region50: #{darknet_forward.28} parent=5 // pred_region
        %s261 = ssub.s32 %s9, 1
        %s262 = sand.u32 %s60, 1
        %s263 = sand.u32 %s60, 1
        %s264 = smul.addr %s263, 256
        %s265 = scalar_lea.vmem [#allocation2], %s264
        // Predicated region
        $region52: #{darknet_forward.28} parent=50 // pred_check
          %p266 = pneg %p73
        $region53: #{darknet_forward.28} parent=50 // pred_check_branch
          %268 = sbr.rel (%p266) target = $region55
        $region54: #{darknet_forward.28} parent=50 // pred_region
          _
        $region55: #{darknet_forward.28} parent=50 // pred_fallthru
          _
        %s269 = smul.u32 4, %s18
        %s270 = ssub.s32 1, %s269
        %s271 = smul.u32 16, %s270
        %p272 = scmp.lt.s32.totalorder %s269, 0
        %s273 = scalar_select %p272, %s269, 0
        %s274 = scalar_lea.vmem %s0, %s273
        %p275 = pneg %p47
        %p276 = pneg %p44
        %s277 = sand.u32 %s60, 1
        %s278 = sand.u32 %s60, 1
        %s279 = smul.addr %s278, 256
        %s280 = scalar_lea.vmem [#allocation2], %s279
        %p281 = pneg %p73
        %p282 = pneg %p70
        %s283 = smul.u32 4, %s19
        %p284 = scmp.lt.s32.totalorder %s283, 15
        %s285 = scalar_select %p284, %s283, 15
        %s286 = scalar_lea.vmem %s2, %s285
        %p287 = pneg %p99
        %p288 = pneg %p96
        %p289 = pneg %p127
        %p290 = pneg %p124
        %s291 = sand.u32 %s114, 1
        %s292 = sand.u32 %s114, 1
        %s293 = smul.addr %s292, 16
        %s294 = scalar_lea.vmem [#allocation3], %s293
        %s295 = smul.u32 4, %s18
        %s296 = ssub.s32 1, %s295
        %s297 = smul.u32 16, %s296
        %p298 = scmp.lt.s32.totalorder %s295, 0
        %s299 = scalar_select %p298, %s295, 0
        %s300 = scalar_lea.vmem %s0, %s299
        %s301 = smul.u32 4, %s18
        %s302 = ssub.s32 1, %s301
        %s303 = smul.u32 16, %s302
        %s304 = smul.u32 4, %s19
        %s305 = smul.u32 4, %s19
        %p306 = scmp.lt.s32.totalorder %s305, 15
        %s307 = scalar_select %p306, %s305, 15
        %s308 = scalar_lea.vmem %s2, %s307
        %s309 = smul.u32 4, %s19
        %s310 = smul.u32 4, %s18
        %s311 = smul.u32 4, %s19
        %s312 = ssub.s32 1, %s310
        %s313 = smul.u32 16, %s312
        %s314 = smul.u32 %s313, 4
        %v316 = vld [vmem:[%s300] sm:$0x1]
        %v317 = vld [vmem:[%s300 + $0x1] sm:$0x1]
        %v318 = vld [vmem:[%s300 + $0x2] sm:$0x1]
        %v319 = vld [vmem:[%s300 + $0x3] sm:$0x1]
        %v320 = vld [vmem:[%s265] sm:$0xff]
        %v321 = vld [vmem:[%s265 + $0x8] sm:$0xff]
        %v322 = vld [vmem:[%s265 + $0x10] sm:$0xff]
        %v323 = vld [vmem:[%s265 + $0x18] sm:$0xff]
        %v324 = vld [vmem:[%s265 + $0x20] sm:$0xff]
        %v325 = vld [vmem:[%s265 + $0x28] sm:$0xff]
        %v326 = vld [vmem:[%s265 + $0x30] sm:$0xff]
        %v327 = vld [vmem:[%s265 + $0x38] sm:$0xff]
        %v328 = vld [vmem:[%s265 + $0x40] sm:$0xff]
        %v329 = vld [vmem:[%s265 + $0x48] sm:$0xff]
        %v330 = vld [vmem:[%s265 + $0x50] sm:$0xff]
        %v331 = vld [vmem:[%s265 + $0x58] sm:$0xff]
        %v332 = vld [vmem:[%s265 + $0x60] sm:$0xff]
        %v333 = vld [vmem:[%s265 + $0x68] sm:$0xff]
        %v334 = vld [vmem:[%s265 + $0x70] sm:$0xff]
        %v335 = vld [vmem:[%s265 + $0x78] sm:$0xff]
        %v336 = vld [vmem:[%s265 + $0x80] sm:$0xff]
        %v337 = vld [vmem:[%s265 + $0x88] sm:$0xff]
        %v338 = vld [vmem:[%s265 + $0x90] sm:$0xff]
        %v339 = vld [vmem:[%s265 + $0x98] sm:$0xff]
        %v340 = vld [vmem:[%s265 + $0xa0] sm:$0xff]
        %v341 = vld [vmem:[%s265 + $0xa8] sm:$0xff]
        %v342 = vld [vmem:[%s265 + $0xb0] sm:$0xff]
        %v343 = vld [vmem:[%s265 + $0xb8] sm:$0xff]
        %v344 = vld [vmem:[%s265 + $0xc0] sm:$0xff]
        %v345 = vld [vmem:[%s265 + $0xc8] sm:$0xff]
        %v346 = vld [vmem:[%s265 + $0xd0] sm:$0xff]
        %v347 = vld [vmem:[%s265 + $0xd8] sm:$0xff]
        %v348 = vld [vmem:[%s265 + $0xe0] sm:$0xff]
        %v349 = vld [vmem:[%s265 + $0xe8] sm:$0xff]
        %v350 = vld [vmem:[%s265 + $0xf0] sm:$0xff]
        %v351 = vld [vmem:[%s265 + $0xf8] sm:$0xff]
        %v352 = vld [vmem:[%s308] sm:$0xf]
        %v354 = vlaneseq
        %v355 = vshrl.u32 %v354, 7
        %v356 = vsub.s32 0, %v355
        %v357 = vrot.slane %v352, %v356
        %v358 = vlaneseq
        %v359 = vshrl.u32 %v358, 7
        %v360 = vsub.s32 1, %v359
        %v361 = vrot.slane %v352, %v360
        %v362 = vlaneseq
        %v363 = vshrl.u32 %v362, 7
        %v364 = vsub.s32 2, %v363
        %v365 = vrot.slane %v352, %v364
        %v366 = vlaneseq
        %v367 = vshrl.u32 %v366, 7
        %v368 = vsub.s32 3, %v367
        %v369 = vrot.slane %v352, %v368
        %v378 = vcombine.low %v316, %v317
        %v379 = vcombine.low %v318, %v319
        %v381 = vunpack.c.l.s4 1966171168
        %v382 = vunpack.c.0.s8 %v381
        %v383 = vlaneseq
        %v384 = vshrl.u32 %v383, 7
        %v385 = vsub.s32 %v382, %v384
        %v386 = vrot.slane %v378, %v385
        %v388 = vunpack.c.l.s4 1966171168
        %v389 = vunpack.c.0.s8 %v388
        %v390 = vlaneseq
        %v391 = vshrl.u32 %v390, 7
        %v392 = vsub.s32 %v389, %v391
        %v393 = vrot.slane %v379, %v392
        %v394 = vcombine.low %v386, %v393
        %v396 = vunpack.c.l.s4 1966171168
        %v397 = vunpack.c.0.s8 %v396
        %v398 = vlaneseq
        %v399 = vshrl.u32 %v398, 7
        %v400 = vsub.s32 %v397, %v399
        %v401 = vrot.slane %v394, %v400
        %v435 = vunpack.c.l.b16 %v320
        %v436 = vunpack.c.h.b16 %v320
        %v437 = vunpack.c.l.b16 %v321
        %v438 = vunpack.c.h.b16 %v321
        %v439 = vunpack.c.l.b16 %v322
        %v440 = vunpack.c.h.b16 %v322
        %v441 = vunpack.c.l.b16 %v323
        %v442 = vunpack.c.h.b16 %v323
        %v443 = vunpack.c.l.b16 %v324
        %v444 = vunpack.c.h.b16 %v324
        %v445 = vunpack.c.l.b16 %v325
        %v446 = vunpack.c.h.b16 %v325
        %v447 = vunpack.c.l.b16 %v326
        %v448 = vunpack.c.h.b16 %v326
        %v449 = vunpack.c.l.b16 %v327
        %v450 = vunpack.c.h.b16 %v327
        %v451 = vunpack.c.l.b16 %v328
        %v452 = vunpack.c.h.b16 %v328
        %v453 = vunpack.c.l.b16 %v329
        %v454 = vunpack.c.h.b16 %v329
        %v455 = vunpack.c.l.b16 %v330
        %v456 = vunpack.c.h.b16 %v330
        %v457 = vunpack.c.l.b16 %v331
        %v458 = vunpack.c.h.b16 %v331
        %v459 = vunpack.c.l.b16 %v332
        %v460 = vunpack.c.h.b16 %v332
        %v461 = vunpack.c.l.b16 %v333
        %v462 = vunpack.c.h.b16 %v333
        %v463 = vunpack.c.l.b16 %v334
        %v464 = vunpack.c.h.b16 %v334
        %v465 = vunpack.c.l.b16 %v335
        %v466 = vunpack.c.h.b16 %v335
        %v467 = vunpack.c.l.b16 %v336
        %v468 = vunpack.c.h.b16 %v336
        %v469 = vunpack.c.l.b16 %v337
        %v470 = vunpack.c.h.b16 %v337
        %v471 = vunpack.c.l.b16 %v338
        %v472 = vunpack.c.h.b16 %v338
        %v473 = vunpack.c.l.b16 %v339
        %v474 = vunpack.c.h.b16 %v339
        %v475 = vunpack.c.l.b16 %v340
        %v476 = vunpack.c.h.b16 %v340
        %v477 = vunpack.c.l.b16 %v341
        %v478 = vunpack.c.h.b16 %v341
        %v479 = vunpack.c.l.b16 %v342
        %v480 = vunpack.c.h.b16 %v342
        %v481 = vunpack.c.l.b16 %v343
        %v482 = vunpack.c.h.b16 %v343
        %v483 = vunpack.c.l.b16 %v344
        %v484 = vunpack.c.h.b16 %v344
        %v485 = vunpack.c.l.b16 %v345
        %v486 = vunpack.c.h.b16 %v345
        %v487 = vunpack.c.l.b16 %v346
        %v488 = vunpack.c.h.b16 %v346
        %v489 = vunpack.c.l.b16 %v347
        %v490 = vunpack.c.h.b16 %v347
        %v491 = vunpack.c.l.b16 %v348
        %v492 = vunpack.c.h.b16 %v348
        %v493 = vunpack.c.l.b16 %v349
        %v494 = vunpack.c.h.b16 %v349
        %v495 = vunpack.c.l.b16 %v350
        %v496 = vunpack.c.h.b16 %v350
        %v497 = vunpack.c.l.b16 %v351
        %v498 = vunpack.c.h.b16 %v351
        %v499 = vpack.c.b16 %v439, %v435
        %v500 = vpack.c.b16 %v440, %v436
        %v501 = vpack.c.b16 %v441, %v437
        %v502 = vpack.c.b16 %v442, %v438
        %v503 = vpack.c.b16 %v447, %v443
        %v504 = vpack.c.b16 %v448, %v444
        %v505 = vpack.c.b16 %v449, %v445
        %v506 = vpack.c.b16 %v450, %v446
        %v507 = vpack.c.b16 %v455, %v451
        %v508 = vpack.c.b16 %v456, %v452
        %v509 = vpack.c.b16 %v457, %v453
        %v510 = vpack.c.b16 %v458, %v454
        %v511 = vpack.c.b16 %v463, %v459
        %v512 = vpack.c.b16 %v464, %v460
        %v513 = vpack.c.b16 %v465, %v461
        %v514 = vpack.c.b16 %v466, %v462
        %v515 = vpack.c.b16 %v471, %v467
        %v516 = vpack.c.b16 %v472, %v468
        %v517 = vpack.c.b16 %v473, %v469
        %v518 = vpack.c.b16 %v474, %v470
        %v519 = vpack.c.b16 %v479, %v475
        %v520 = vpack.c.b16 %v480, %v476
        %v521 = vpack.c.b16 %v481, %v477
        %v522 = vpack.c.b16 %v482, %v478
        %v523 = vpack.c.b16 %v487, %v483
        %v524 = vpack.c.b16 %v488, %v484
        %v525 = vpack.c.b16 %v489, %v485
        %v526 = vpack.c.b16 %v490, %v486
        %v527 = vpack.c.b16 %v495, %v491
        %v528 = vpack.c.b16 %v496, %v492
        %v529 = vpack.c.b16 %v497, %v493
        %v530 = vpack.c.b16 %v498, %v494
        %563 = vmatprep.subr.bf16.mxu0 %v500
        %564 = vmatpush1.bf16.msra.mxu0 %v499
        %565 = vmatprep.subr.bf16.mxu0 %v504
        %566 = vmatpush1.bf16.msra.mxu0 %v503
        %567 = vmatprep.subr.bf16.mxu0 %v508
        %568 = vmatpush1.bf16.msra.mxu0 %v507
        %569 = vmatprep.subr.bf16.mxu0 %v512
        %570 = vmatpush1.bf16.msra.mxu0 %v511
        %571 = vmatprep.subr.bf16.mxu0 %v516
        %572 = vmatpush1.bf16.msra.mxu0 %v515
        %573 = vmatprep.subr.bf16.mxu0 %v520
        %574 = vmatpush1.bf16.msra.mxu0 %v519
        %575 = vmatprep.subr.bf16.mxu0 %v524
        %576 = vmatpush1.bf16.msra.mxu0 %v523
        %577 = vmatprep.subr.bf16.mxu0 %v528
        %578 = vmatpush1.bf16.msra.mxu0 %v527
        %579 = vmatprep.subr.bf16.mxu0 0
        %580 = vmatpush1.bf16.msra.mxu0 0
        %581 = vmatprep.subr.bf16.mxu0 0
        %582 = vmatpush1.bf16.msra.mxu0 0
        %583 = vmatprep.subr.bf16.mxu0 0
        %584 = vmatpush1.bf16.msra.mxu0 0
        %585 = vmatprep.subr.bf16.mxu0 0
        %586 = vmatpush1.bf16.msra.mxu0 0
        %587 = vmatprep.subr.bf16.mxu0 0
        %588 = vmatpush1.bf16.msra.mxu0 0
        %589 = vmatprep.subr.bf16.mxu0 0
        %590 = vmatpush1.bf16.msra.mxu0 0
        %591 = vmatprep.subr.bf16.mxu0 0
        %592 = vmatpush1.bf16.msra.mxu0 0
        %593 = vmatprep.subr.bf16.mxu0 0
        %594 = vmatpush1.bf16.msra.mxu0 0
        %595 = vmatprep.mubr.bf16.mxu0 0
        %596 = vmatmul.mubr.bf16.gmra.mrb[0].mxu0 %v401
        %v597 = vpop.f32.mrb[0].mxu0
        %v598 = vadd.f32 %v357, %v597
        %v599 = vpop.f32.mrb[0].mxu0
        %v600 = vadd.f32 %v361, %v599
        %v601 = vpop.f32.mrb[0].mxu0
        %v602 = vpop.f32.mrb[0].mxu0
        %603 = vdwg.mxu0
        %604 = vmatprep.subr.bf16.mxu0 %v502
        %605 = vmatpush1.bf16.msra.mxu0 %v501
        %606 = vmatprep.subr.bf16.mxu0 %v506
        %607 = vmatpush1.bf16.msra.mxu0 %v505
        %608 = vmatprep.subr.bf16.mxu0 %v510
        %609 = vmatpush1.bf16.msra.mxu0 %v509
        %610 = vmatprep.subr.bf16.mxu0 %v514
        %611 = vmatpush1.bf16.msra.mxu0 %v513
        %612 = vmatprep.subr.bf16.mxu0 %v518
        %613 = vmatpush1.bf16.msra.mxu0 %v517
        %614 = vmatprep.subr.bf16.mxu0 %v522
        %615 = vmatpush1.bf16.msra.mxu0 %v521
        %616 = vmatprep.subr.bf16.mxu0 %v526
        %617 = vmatpush1.bf16.msra.mxu0 %v525
        %618 = vmatprep.subr.bf16.mxu0 %v530
        %619 = vmatpush1.bf16.msra.mxu0 %v529
        %620 = vmatprep.subr.bf16.mxu0 0
        %621 = vmatpush1.bf16.msra.mxu0 0
        %622 = vmatprep.subr.bf16.mxu0 0
        %623 = vmatpush1.bf16.msra.mxu0 0
        %624 = vmatprep.subr.bf16.mxu0 0
        %625 = vmatpush1.bf16.msra.mxu0 0
        %626 = vmatprep.subr.bf16.mxu0 0
        %627 = vmatpush1.bf16.msra.mxu0 0
        %628 = vmatprep.subr.bf16.mxu0 0
        %629 = vmatpush1.bf16.msra.mxu0 0
        %630 = vmatprep.subr.bf16.mxu0 0
        %631 = vmatpush1.bf16.msra.mxu0 0
        %632 = vmatprep.subr.bf16.mxu0 0
        %633 = vmatpush1.bf16.msra.mxu0 0
        %634 = vmatprep.subr.bf16.mxu0 0
        %635 = vmatpush1.bf16.msra.mxu0 0
        %636 = vmatprep.mubr.bf16.mxu0 0
        %637 = vmatmul.mubr.bf16.gmra.mrb[0].mxu0 %v401
        %v638 = vpop.f32.mrb[0].mxu0
        %v639 = vadd.f32 %v365, %v638
        %v640 = vpop.f32.mrb[0].mxu0
        %v641 = vadd.f32 %v369, %v640
        %v642 = vpop.f32.mrb[0].mxu0
        %v643 = vpop.f32.mrb[0].mxu0
        %644 = vdwg.mxu0
        %vm645 = vcmp.ge.f32.partialorder %v598, 0.0
        %vm646 = vcmp.ge.f32.partialorder %v600, 0.0
        %vm647 = vcmp.ge.f32.partialorder %v639, 0.0
        %vm648 = vcmp.ge.f32.partialorder %v641, 0.0
        %v649 = vmul.f32 %v598, 0.01
        %v650 = vmul.f32 %v600, 0.01
        %v651 = vmul.f32 %v639, 0.01
        %v652 = vmul.f32 %v641, 0.01
        %v653 = vsel %vm645, %v598, %v649
        %v654 = vsel %vm646, %v600, %v650
        %v655 = vsel %vm647, %v639, %v651
        %v656 = vsel %vm648, %v641, %v652
        %v657 = vpack.c.bf16 %v653, %v653
        %v658 = vpack.c.bf16 %v654, %v654
        %v659 = vpack.c.bf16 %v655, %v655
        %v660 = vpack.c.bf16 %v656, %v656
        %v665 = vcombine.low %v657, %v658
        %v666 = vcombine.low %v659, %v660
        %v668 = vunpack.c.l.s4 1966171168
        %v669 = vunpack.c.0.s8 %v668
        %v670 = vlaneseq
        %v671 = vshrl.u32 %v670, 7
        %v672 = vsub.s32 %v669, %v671
        %v673 = vrot.slane %v665, %v672
        %v675 = vunpack.c.l.s4 1966171168
        %v676 = vunpack.c.0.s8 %v675
        %v677 = vlaneseq
        %v678 = vshrl.u32 %v677, 7
        %v679 = vsub.s32 %v676, %v678
        %v680 = vrot.slane %v666, %v679
        %v681 = vcombine.low %v673, %v680
        %v682 = vcombine.high %v673, %v680
        %v684 = vunpack.c.l.s4 1966171168
        %v685 = vunpack.c.0.s8 %v684
        %v686 = vlaneseq
        %v687 = vshrl.u32 %v686, 7
        %v688 = vsub.s32 %v685, %v687
        %v689 = vrot.slane %v681, %v688
        %v691 = vunpack.c.l.s4 1966171168
        %v692 = vunpack.c.0.s8 %v691
        %v693 = vlaneseq
        %v694 = vshrl.u32 %v693, 7
        %v695 = vsub.s32 %v692, %v694
        %v696 = vrot.slane %v682, %v695
        %v697 = vcombine.high %v689, %v689
        %v698 = vcombine.high %v696, %v696
        %703 = vst [vmem:[%s294] sm:$0xf] %v689
        %704 = vst [vmem:[%s294 + $0x4] sm:$0xf] %v696
        %705 = vst [vmem:[%s294 + $0x8] sm:$0xf] %v697
        %706 = vst [vmem:[%s294 + $0xc] sm:$0xf] %v698
        %s707 = sand.u32 %s114, 1
        %s708 = sand.u32 %s114, 1
        %s709 = smul.addr %s708, 16
        %s710 = scalar_lea.vmem [#allocation3], %s709
        // Predicated region
        $region56: #{darknet_forward.28} parent=50 // pred_check
          %p711 = pneg %p124
        $region57: #{darknet_forward.28} parent=50 // pred_check_branch
          %713 = sbr.rel (%p711) target = $region59
        $region58: #{darknet_forward.28} parent=50 // pred_region
          %s714 = smul.u32 4, %s18
          %s715 = smul.u32 4, %s19
          %s716 = ssub.s32 1, %s714
          %s717 = smul.u32 16, %s716
          %s718 = smul.u32 %s717, 4
          %p719 = scmp.ne.s32.totalorder 0, %s718
          %s720 = smul.addr %s714, 16
          %s721 = sadd.s32 %s715, %s720
          %s722 = scalar_lea.vmem %s3, %s721
          // Predicated region
          $region60: #{darknet_forward.28} parent=58 // pred_check
            %p723 = pneg %p719
          $region61: #{darknet_forward.28} parent=58 // pred_check_branch
            %725 = sbr.rel (%p723) target = $region63
          $region62: #{darknet_forward.28} parent=58 // pred_region
            // Predicated region
            $region64: #{darknet_forward.28} parent=62 // pred_check
              _
            $region65: #{darknet_forward.28} parent=62 // pred_check_branch
              %727 = sbr.rel target = $region67
            $region66: #{darknet_forward.28} parent=62 // pred_region
              // Predicated region
              $region79: #{darknet_forward.28} parent=66 // pred_check
                _
              $region80: #{darknet_forward.28} parent=66 // pred_check_branch
                %750 = sbr.rel (0) target = $region82
              $region81: #{darknet_forward.28} parent=66 // pred_region
                // While loop
                $region83: #{darknet_forward.28} parent=81 // loop_pre_header
                  _
                $region84: #{darknet_forward.28} parent=81 // loop_header
                  %s753 = sphi 0, %s755
                  %p754 = scmp.ge.s32.totalorder %s753, %s716
                  %s758 = sphi 0, %s765
                  %s759 = sphi %s710, %s768
                  %s760 = sphi %s722, %s769
                $region85: #{darknet_forward.28} parent=81 // loop_header_branch
                  %757 = sbr.rel (%p754) target = $region89
                $region86: #{darknet_forward.28} parent=81 // loop_body
                  %v761 = vld [vmem:[%s759] sm:$0xf]
                  %762 = vst [vmem:[%s760] sm:$0xf] %v761
                  %s763 = sadd.s32 1, %s758
                  %p764 = scmp.ge.s32.totalorder %s763, %s716
                  %s765 = scalar_select %p764, 0, %s763
                  %s766 = smul.u32 %s765, 4
                  %s767 = smul.u32 %s765, 16
                  %s768 = scalar_lea.vmem %s710, %s766 [#allocation3]
                  %s769 = scalar_lea.vmem %s722, %s767
                $region87: #{darknet_forward.28} parent=81 // loop_footer
                  %s755 = sadd.s32 %s753, 1
                $region88: #{darknet_forward.28} parent=81 // loop_footer_branch
                  %752 = sbr.rel target = $region84
                $region89: #{darknet_forward.28} parent=81 // loop_exit
                  _
              $region82: #{darknet_forward.28} parent=66 // pred_fallthru
                _
            $region67: #{darknet_forward.28} parent=62 // pred_fallthru
              _
            // Predicated region
            $region68: #{darknet_forward.28} parent=62 // pred_check
              _
            $region69: #{darknet_forward.28} parent=62 // pred_check_branch
              %729 = sbr.rel (0) target = $region71
            $region70: #{darknet_forward.28} parent=62 // pred_region
              // While loop
              $region72: #{darknet_forward.28} parent=70 // loop_pre_header
                _
              $region73: #{darknet_forward.28} parent=70 // loop_header
                %s732 = sphi 0, %s734
                %p733 = scmp.ge.s32.totalorder %s732, %s716
                %s737 = sphi 0, %s744
                %s738 = sphi %s710, %s747
                %s739 = sphi %s722, %s748
              $region74: #{darknet_forward.28} parent=70 // loop_header_branch
                %736 = sbr.rel (%p733) target = $region78
              $region75: #{darknet_forward.28} parent=70 // loop_body
                %v740 = vld [vmem:[%s738] sm:$0xf]
                %741 = vst [vmem:[%s739] sm:$0xf] %v740
                %s742 = sadd.s32 1, %s737
                %p743 = scmp.ge.s32.totalorder %s742, %s716
                %s744 = scalar_select %p743, 0, %s742
                %s745 = smul.u32 %s744, 4
                %s746 = smul.u32 %s744, 16
                %s747 = scalar_lea.vmem %s710, %s745 [#allocation3]
                %s748 = scalar_lea.vmem %s722, %s746
              $region76: #{darknet_forward.28} parent=70 // loop_footer
                %s734 = sadd.s32 %s732, 1
              $region77: #{darknet_forward.28} parent=70 // loop_footer_branch
                %731 = sbr.rel target = $region73
              $region78: #{darknet_forward.28} parent=70 // loop_exit
                _
            $region71: #{darknet_forward.28} parent=62 // pred_fallthru
              _
          $region63: #{darknet_forward.28} parent=58 // pred_fallthru
            _
          %770 = vnop
        $region59: #{darknet_forward.28} parent=50 // pred_fallthru
          _
      $region51: #{darknet_forward.28} parent=5 // pred_fallthru
        _
      %p771 = scmp.le.s32.totalorder 2, %s9
      // Predicated region
      $region90: #{darknet_forward.28} parent=5 // pred_check
        %p772 = pneg %p771
      $region91: #{darknet_forward.28} parent=5 // pred_check_branch
        %774 = sbr.rel (%p772) target = $region93
      $region92: #{darknet_forward.28} parent=5 // pred_region
        %s775 = ssub.s32 %s9, 2
        // Predicated region
        $region94: #{darknet_forward.28} parent=92 // pred_check
          %p776 = pneg %p130
        $region95: #{darknet_forward.28} parent=92 // pred_check_branch
          %778 = sbr.rel (%p776) target = $region97
        $region96: #{darknet_forward.28} parent=92 // pred_region
          %s779 = sand.u32 %s115, 1
          %s780 = sand.u32 %s115, 1
          %s781 = smul.addr %s780, 16
          %s782 = scalar_lea.vmem [#allocation3], %s781
        $region97: #{darknet_forward.28} parent=92 // pred_fallthru
          _
      $region93: #{darknet_forward.28} parent=5 // pred_fallthru
        _
    $region6: #{darknet_forward.28} parent=1 // loop_footer
      %s13 = sadd.s32 1, %s9
    $region7: #{darknet_forward.28} parent=1 // loop_footer_branch
      %8 = sbr.rel target = $region3
    $region8: #{darknet_forward.28} parent=1 // loop_exit
      _

// kernel: darknet_forward.29
$region0: #{darknet_forward.29}
  #allocation0 [shape = 'u32[]', space=smem, size = 0x4, offset = 0x4, fixed_abs, tag = 'smem constant byte address 0x4 - core index']
  #allocation1 [shape = 'u32[144,128]{1,0:T(1,128)}', space=vmem, size = 0x12000, scoped, tag = 'internal scratch']
  %s0 = inlined_call_operand.vmem [shape: bf16[2,2048], index: 0, kind: input, shape index: {}]
  %s1 = inlined_call_operand.vmem [shape: bf16[2048,16], index: 1, kind: input, shape index: {}]
  %s2 = inlined_call_operand.vmem [shape: f32[1,16], index: 2, kind: input, shape index: {}]
  %s3 = inlined_call_operand.hbm [shape: f32[2,16], index: 3, kind: output, shape index: {}]
  %s4 = sld [smem:[#allocation0]]
  $region22: #{darknet_forward.29} parent=0
    _
  %s6 = ssub.s32 1, %s4
  %s7 = scalar_select 0, %s6, %s4
  $region1: #{darknet_forward.29} parent=0
    #allocation2 [shape = 'u8[4096]{0}', space=vmem, size = 0x1000, scoped, tag = 'output window, operand 0, single buffered']
    #allocation3 [shape = 's32[1]{0}', space=sflag, size = 0x4, scoped, tag = 'scoped memory for darknet_forward.29']
    %8 = vsyncpa [#allocation3], 0
    // Predicated region
    $region2: #{darknet_forward.29} parent=1 // pred_check
      _
    $region3: #{darknet_forward.29} parent=1 // pred_check_branch
      %10 = sbr.rel (0) target = $region5
    $region4: #{darknet_forward.29} parent=1 // pred_region
      _
    $region5: #{darknet_forward.29} parent=1 // pred_fallthru
      _
    // Predicated region
    $region6: #{darknet_forward.29} parent=1 // pred_check
      _
    $region7: #{darknet_forward.29} parent=1 // pred_check_branch
      %12 = sbr.rel (0) target = $region9
    $region8: #{darknet_forward.29} parent=1 // pred_region
      _
    $region9: #{darknet_forward.29} parent=1 // pred_fallthru
      _
    // Predicated region
    $region10: #{darknet_forward.29} parent=1 // pred_check
      _
    $region11: #{darknet_forward.29} parent=1 // pred_check_branch
      %14 = sbr.rel (0) target = $region13
    $region12: #{darknet_forward.29} parent=1 // pred_region
      _
    $region13: #{darknet_forward.29} parent=1 // pred_fallthru
      _
    %v16 = vld [vmem:[%s0] sm:$0xff]
    %v17 = vld [vmem:[%s0 + $0x8] sm:$0xff]
    %v18 = vld [vmem:[%s0 + $0x10] sm:$0xff]
    %v19 = vld [vmem:[%s0 + $0x18] sm:$0xff]
    %v20 = vld [vmem:[%s0 + $0x20] sm:$0xff]
    %v21 = vld [vmem:[%s0 + $0x28] sm:$0xff]
    %v22 = vld [vmem:[%s0 + $0x30] sm:$0xff]
    %v23 = vld [vmem:[%s0 + $0x38] sm:$0xff]
    %v24 = vld [vmem:[%s1] sm:$0xf]
    %v25 = vld [vmem:[%s1 + $0x4] sm:$0xf]
    %v26 = vld [vmem:[%s1 + $0x8] sm:$0xf]
    %v27 = vld [vmem:[%s1 + $0xc] sm:$0xf]
    %v28 = vld [vmem:[%s1 + $0x10] sm:$0xf]
    %v29 = vld [vmem:[%s1 + $0x14] sm:$0xf]
    %v30 = vld [vmem:[%s1 + $0x18] sm:$0xf]
    %v31 = vld [vmem:[%s1 + $0x1c] sm:$0xf]
    %v32 = vld [vmem:[%s1 + $0x20] sm:$0xf]
    %v33 = vld [vmem:[%s1 + $0x24] sm:$0xf]
    %v34 = vld [vmem:[%s1 + $0x28] sm:$0xf]
    %v35 = vld [vmem:[%s1 + $0x2c] sm:$0xf]
    %v36 = vld [vmem:[%s1 + $0x30] sm:$0xf]
    %v37 = vld [vmem:[%s1 + $0x34] sm:$0xf]
    %v38 = vld [vmem:[%s1 + $0x38] sm:$0xf]
    %v39 = vld [vmem:[%s1 + $0x3c] sm:$0xf]
    %v40 = vld [vmem:[%s1 + $0x40] sm:$0xf]
    %v41 = vld [vmem:[%s1 + $0x44] sm:$0xf]
    %v42 = vld [vmem:[%s1 + $0x48] sm:$0xf]
    %v43 = vld [vmem:[%s1 + $0x4c] sm:$0xf]
    %v44 = vld [vmem:[%s1 + $0x50] sm:$0xf]
    %v45 = vld [vmem:[%s1 + $0x54] sm:$0xf]
    %v46 = vld [vmem:[%s1 + $0x58] sm:$0xf]
    %v47 = vld [vmem:[%s1 + $0x5c] sm:$0xf]
    %v48 = vld [vmem:[%s1 + $0x60] sm:$0xf]
    %v49 = vld [vmem:[%s1 + $0x64] sm:$0xf]
    %v50 = vld [vmem:[%s1 + $0x68] sm:$0xf]
    %v51 = vld [vmem:[%s1 + $0x6c] sm:$0xf]
    %v52 = vld [vmem:[%s1 + $0x70] sm:$0xf]
    %v53 = vld [vmem:[%s1 + $0x74] sm:$0xf]
    %v54 = vld [vmem:[%s1 + $0x78] sm:$0xf]
    %v55 = vld [vmem:[%s1 + $0x7c] sm:$0xf]
    %v56 = vld [vmem:[%s1 + $0x80] sm:$0xf]
    %v57 = vld [vmem:[%s1 + $0x84] sm:$0xf]
    %v58 = vld [vmem:[%s1 + $0x88] sm:$0xf]
    %v59 = vld [vmem:[%s1 + $0x8c] sm:$0xf]
    %v60 = vld [vmem:[%s1 + $0x90] sm:$0xf]
    %v61 = vld [vmem:[%s1 + $0x94] sm:$0xf]
    %v62 = vld [vmem:[%s1 + $0x98] sm:$0xf]
    %v63 = vld [vmem:[%s1 + $0x9c] sm:$0xf]
    %v64 = vld [vmem:[%s1 + $0xa0] sm:$0xf]
    %v65 = vld [vmem:[%s1 + $0xa4] sm:$0xf]
    %v66 = vld [vmem:[%s1 + $0xa8] sm:$0xf]
    %v67 = vld [vmem:[%s1 + $0xac] sm:$0xf]
    %v68 = vld [vmem:[%s1 + $0xb0] sm:$0xf]
    %v69 = vld [vmem:[%s1 + $0xb4] sm:$0xf]
    %v70 = vld [vmem:[%s1 + $0xb8] sm:$0xf]
    %v71 = vld [vmem:[%s1 + $0xbc] sm:$0xf]
    %v72 = vld [vmem:[%s1 + $0xc0] sm:$0xf]
    %v73 = vld [vmem:[%s1 + $0xc4] sm:$0xf]
    %v74 = vld [vmem:[%s1 + $0xc8] sm:$0xf]
    %v75 = vld [vmem:[%s1 + $0xcc] sm:$0xf]
    %v76 = vld [vmem:[%s1 + $0xd0] sm:$0xf]
    %v77 = vld [vmem:[%s1 + $0xd4] sm:$0xf]
    %v78 = vld [vmem:[%s1 + $0xd8] sm:$0xf]
    %v79 = vld [vmem:[%s1 + $0xdc] sm:$0xf]
    %v80 = vld [vmem:[%s1 + $0xe0] sm:$0xf]
    %v81 = vld [vmem:[%s1 + $0xe4] sm:$0xf]
    %v82 = vld [vmem:[%s1 + $0xe8] sm:$0xf]
    %v83 = vld [vmem:[%s1 + $0xec] sm:$0xf]
    %v84 = vld [vmem:[%s1 + $0xf0] sm:$0xf]
    %v85 = vld [vmem:[%s1 + $0xf4] sm:$0xf]
    %v86 = vld [vmem:[%s1 + $0xf8] sm:$0xf]
    %v87 = vld [vmem:[%s1 + $0xfc] sm:$0xf]
    %v88 = vld [vmem:[%s1 + $0x100] sm:$0xf]
    %v89 = vld [vmem:[%s1 + $0x104] sm:$0xf]
    %v90 = vld [vmem:[%s1 + $0x108] sm:$0xf]
    %v91 = vld [vmem:[%s1 + $0x10c] sm:$0xf]
    %v92 = vld [vmem:[%s1 + $0x110] sm:$0xf]
    %v93 = vld [vmem:[%s1 + $0x114] sm:$0xf]
    %v94 = vld [vmem:[%s1 + $0x118] sm:$0xf]
    %v95 = vld [vmem:[%s1 + $0x11c] sm:$0xf]
    %v96 = vld [vmem:[%s1 + $0x120] sm:$0xf]
    %v97 = vld [vmem:[%s1 + $0x124] sm:$0xf]
    %v98 = vld [vmem:[%s1 + $0x128] sm:$0xf]
    %v99 = vld [vmem:[%s1 + $0x12c] sm:$0xf]
    %v100 = vld [vmem:[%s1 + $0x130] sm:$0xf]
    %v101 = vld [vmem:[%s1 + $0x134] sm:$0xf]
    %v102 = vld [vmem:[%s1 + $0x138] sm:$0xf]
    %v103 = vld [vmem:[%s1 + $0x13c] sm:$0xf]
    %v104 = vld [vmem:[%s1 + $0x140] sm:$0xf]
    %v105 = vld [vmem:[%s1 + $0x144] sm:$0xf]
    %v106 = vld [vmem:[%s1 + $0x148] sm:$0xf]
    %v107 = vld [vmem:[%s1 + $0x14c] sm:$0xf]
    %v108 = vld [vmem:[%s1 + $0x150] sm:$0xf]
    %v109 = vld [vmem:[%s1 + $0x154] sm:$0xf]
    %v110 = vld [vmem:[%s1 + $0x158] sm:$0xf]
    %v111 = vld [vmem:[%s1 + $0x15c] sm:$0xf]
    %v112 = vld [vmem:[%s1 + $0x160] sm:$0xf]
    %v113 = vld [vmem:[%s1 + $0x164] sm:$0xf]
    %v114 = vld [vmem:[%s1 + $0x168] sm:$0xf]
    %v115 = vld [vmem:[%s1 + $0x16c] sm:$0xf]
    %v116 = vld [vmem:[%s1 + $0x170] sm:$0xf]
    %v117 = vld [vmem:[%s1 + $0x174] sm:$0xf]
    %v118 = vld [vmem:[%s1 + $0x178] sm:$0xf]
    %v119 = vld [vmem:[%s1 + $0x17c] sm:$0xf]
    %v120 = vld [vmem:[%s1 + $0x180] sm:$0xf]
    %v121 = vld [vmem:[%s1 + $0x184] sm:$0xf]
    %v122 = vld [vmem:[%s1 + $0x188] sm:$0xf]
    %v123 = vld [vmem:[%s1 + $0x18c] sm:$0xf]
    %v124 = vld [vmem:[%s1 + $0x190] sm:$0xf]
    %v125 = vld [vmem:[%s1 + $0x194] sm:$0xf]
    %v126 = vld [vmem:[%s1 + $0x198] sm:$0xf]
    %v127 = vld [vmem:[%s1 + $0x19c] sm:$0xf]
    %v128 = vld [vmem:[%s1 + $0x1a0] sm:$0xf]
    %v129 = vld [vmem:[%s1 + $0x1a4] sm:$0xf]
    %v130 = vld [vmem:[%s1 + $0x1a8] sm:$0xf]
    %v131 = vld [vmem:[%s1 + $0x1ac] sm:$0xf]
    %v132 = vld [vmem:[%s1 + $0x1b0] sm:$0xf]
    %v133 = vld [vmem:[%s1 + $0x1b4] sm:$0xf]
    %v134 = vld [vmem:[%s1 + $0x1b8] sm:$0xf]
    %v135 = vld [vmem:[%s1 + $0x1bc] sm:$0xf]
    %v136 = vld [vmem:[%s1 + $0x1c0] sm:$0xf]
    %v137 = vld [vmem:[%s1 + $0x1c4] sm:$0xf]
    %v138 = vld [vmem:[%s1 + $0x1c8] sm:$0xf]
    %v139 = vld [vmem:[%s1 + $0x1cc] sm:$0xf]
    %v140 = vld [vmem:[%s1 + $0x1d0] sm:$0xf]
    %v141 = vld [vmem:[%s1 + $0x1d4] sm:$0xf]
    %v142 = vld [vmem:[%s1 + $0x1d8] sm:$0xf]
    %v143 = vld [vmem:[%s1 + $0x1dc] sm:$0xf]
    %v144 = vld [vmem:[%s1 + $0x1e0] sm:$0xf]
    %v145 = vld [vmem:[%s1 + $0x1e4] sm:$0xf]
    %v146 = vld [vmem:[%s1 + $0x1e8] sm:$0xf]
    %v147 = vld [vmem:[%s1 + $0x1ec] sm:$0xf]
    %v148 = vld [vmem:[%s1 + $0x1f0] sm:$0xf]
    %v149 = vld [vmem:[%s1 + $0x1f4] sm:$0xf]
    %v150 = vld [vmem:[%s1 + $0x1f8] sm:$0xf]
    %v151 = vld [vmem:[%s1 + $0x1fc] sm:$0xf]
    %v152 = vld [vmem:[%s1 + $0x200] sm:$0xf]
    %v153 = vld [vmem:[%s1 + $0x204] sm:$0xf]
    %v154 = vld [vmem:[%s1 + $0x208] sm:$0xf]
    %v155 = vld [vmem:[%s1 + $0x20c] sm:$0xf]
    %v156 = vld [vmem:[%s1 + $0x210] sm:$0xf]
    %v157 = vld [vmem:[%s1 + $0x214] sm:$0xf]
    %v158 = vld [vmem:[%s1 + $0x218] sm:$0xf]
    %v159 = vld [vmem:[%s1 + $0x21c] sm:$0xf]
    %v160 = vld [vmem:[%s1 + $0x220] sm:$0xf]
    %v161 = vld [vmem:[%s1 + $0x224] sm:$0xf]
    %v162 = vld [vmem:[%s1 + $0x228] sm:$0xf]
    %v163 = vld [vmem:[%s1 + $0x22c] sm:$0xf]
    %v164 = vld [vmem:[%s1 + $0x230] sm:$0xf]
    %v165 = vld [vmem:[%s1 + $0x234] sm:$0xf]
    %v166 = vld [vmem:[%s1 + $0x238] sm:$0xf]
    %v167 = vld [vmem:[%s1 + $0x23c] sm:$0xf]
    %v168 = vld [vmem:[%s1 + $0x240] sm:$0xf]
    %v169 = vld [vmem:[%s1 + $0x244] sm:$0xf]
    %v170 = vld [vmem:[%s1 + $0x248] sm:$0xf]
    %v171 = vld [vmem:[%s1 + $0x24c] sm:$0xf]
    %v172 = vld [vmem:[%s1 + $0x250] sm:$0xf]
    %v173 = vld [vmem:[%s1 + $0x254] sm:$0xf]
    %v174 = vld [vmem:[%s1 + $0x258] sm:$0xf]
    %v175 = vld [vmem:[%s1 + $0x25c] sm:$0xf]
    %v176 = vld [vmem:[%s1 + $0x260] sm:$0xf]
    %v177 = vld [vmem:[%s1 + $0x264] sm:$0xf]
    %v178 = vld [vmem:[%s1 + $0x268] sm:$0xf]
    %v179 = vld [vmem:[%s1 + $0x26c] sm:$0xf]
    %v180 = vld [vmem:[%s1 + $0x270] sm:$0xf]
    %v181 = vld [vmem:[%s1 + $0x274] sm:$0xf]
    %v182 = vld [vmem:[%s1 + $0x278] sm:$0xf]
    %v183 = vld [vmem:[%s1 + $0x27c] sm:$0xf]
    %v184 = vld [vmem:[%s1 + $0x280] sm:$0xf]
    %v185 = vld [vmem:[%s1 + $0x284] sm:$0xf]
    %v186 = vld [vmem:[%s1 + $0x288] sm:$0xf]
    %v187 = vld [vmem:[%s1 + $0x28c] sm:$0xf]
    %v188 = vld [vmem:[%s1 + $0x290] sm:$0xf]
    %v189 = vld [vmem:[%s1 + $0x294] sm:$0xf]
    %v190 = vld [vmem:[%s1 + $0x298] sm:$0xf]
    %v191 = vld [vmem:[%s1 + $0x29c] sm:$0xf]
    %v192 = vld [vmem:[%s1 + $0x2a0] sm:$0xf]
    %v193 = vld [vmem:[%s1 + $0x2a4] sm:$0xf]
    %v194 = vld [vmem:[%s1 + $0x2a8] sm:$0xf]
    %v195 = vld [vmem:[%s1 + $0x2ac] sm:$0xf]
    %v196 = vld [vmem:[%s1 + $0x2b0] sm:$0xf]
    %v197 = vld [vmem:[%s1 + $0x2b4] sm:$0xf]
    %v198 = vld [vmem:[%s1 + $0x2b8] sm:$0xf]
    %v199 = vld [vmem:[%s1 + $0x2bc] sm:$0xf]
    %v200 = vld [vmem:[%s1 + $0x2c0] sm:$0xf]
    %v201 = vld [vmem:[%s1 + $0x2c4] sm:$0xf]
    %v202 = vld [vmem:[%s1 + $0x2c8] sm:$0xf]
    %v203 = vld [vmem:[%s1 + $0x2cc] sm:$0xf]
    %v204 = vld [vmem:[%s1 + $0x2d0] sm:$0xf]
    %v205 = vld [vmem:[%s1 + $0x2d4] sm:$0xf]
    %v206 = vld [vmem:[%s1 + $0x2d8] sm:$0xf]
    %v207 = vld [vmem:[%s1 + $0x2dc] sm:$0xf]
    %v208 = vld [vmem:[%s1 + $0x2e0] sm:$0xf]
    %v209 = vld [vmem:[%s1 + $0x2e4] sm:$0xf]
    %v210 = vld [vmem:[%s1 + $0x2e8] sm:$0xf]
    %v211 = vld [vmem:[%s1 + $0x2ec] sm:$0xf]
    %v212 = vld [vmem:[%s1 + $0x2f0] sm:$0xf]
    %v213 = vld [vmem:[%s1 + $0x2f4] sm:$0xf]
    %v214 = vld [vmem:[%s1 + $0x2f8] sm:$0xf]
    %v215 = vld [vmem:[%s1 + $0x2fc] sm:$0xf]
    %v216 = vld [vmem:[%s1 + $0x300] sm:$0xf]
    %v217 = vld [vmem:[%s1 + $0x304] sm:$0xf]
    %v218 = vld [vmem:[%s1 + $0x308] sm:$0xf]
    %v219 = vld [vmem:[%s1 + $0x30c] sm:$0xf]
    %v220 = vld [vmem:[%s1 + $0x310] sm:$0xf]
    %v221 = vld [vmem:[%s1 + $0x314] sm:$0xf]
    %v222 = vld [vmem:[%s1 + $0x318] sm:$0xf]
    %v223 = vld [vmem:[%s1 + $0x31c] sm:$0xf]
    %v224 = vld [vmem:[%s1 + $0x320] sm:$0xf]
    %v225 = vld [vmem:[%s1 + $0x324] sm:$0xf]
    %v226 = vld [vmem:[%s1 + $0x328] sm:$0xf]
    %v227 = vld [vmem:[%s1 + $0x32c] sm:$0xf]
    %v228 = vld [vmem:[%s1 + $0x330] sm:$0xf]
    %v229 = vld [vmem:[%s1 + $0x334] sm:$0xf]
    %v230 = vld [vmem:[%s1 + $0x338] sm:$0xf]
    %v231 = vld [vmem:[%s1 + $0x33c] sm:$0xf]
    %v232 = vld [vmem:[%s1 + $0x340] sm:$0xf]
    %v233 = vld [vmem:[%s1 + $0x344] sm:$0xf]
    %v234 = vld [vmem:[%s1 + $0x348] sm:$0xf]
    %v235 = vld [vmem:[%s1 + $0x34c] sm:$0xf]
    %v236 = vld [vmem:[%s1 + $0x350] sm:$0xf]
    %v237 = vld [vmem:[%s1 + $0x354] sm:$0xf]
    %v238 = vld [vmem:[%s1 + $0x358] sm:$0xf]
    %v239 = vld [vmem:[%s1 + $0x35c] sm:$0xf]
    %v240 = vld [vmem:[%s1 + $0x360] sm:$0xf]
    %v241 = vld [vmem:[%s1 + $0x364] sm:$0xf]
    %v242 = vld [vmem:[%s1 + $0x368] sm:$0xf]
    %v243 = vld [vmem:[%s1 + $0x36c] sm:$0xf]
    %v244 = vld [vmem:[%s1 + $0x370] sm:$0xf]
    %v245 = vld [vmem:[%s1 + $0x374] sm:$0xf]
    %v246 = vld [vmem:[%s1 + $0x378] sm:$0xf]
    %v247 = vld [vmem:[%s1 + $0x37c] sm:$0xf]
    %v248 = vld [vmem:[%s1 + $0x380] sm:$0xf]
    %v249 = vld [vmem:[%s1 + $0x384] sm:$0xf]
    %v250 = vld [vmem:[%s1 + $0x388] sm:$0xf]
    %v251 = vld [vmem:[%s1 + $0x38c] sm:$0xf]
    %v252 = vld [vmem:[%s1 + $0x390] sm:$0xf]
    %v253 = vld [vmem:[%s1 + $0x394] sm:$0xf]
    %v254 = vld [vmem:[%s1 + $0x398] sm:$0xf]
    %v255 = vld [vmem:[%s1 + $0x39c] sm:$0xf]
    %v256 = vld [vmem:[%s1 + $0x3a0] sm:$0xf]
    %v257 = vld [vmem:[%s1 + $0x3a4] sm:$0xf]
    %v258 = vld [vmem:[%s1 + $0x3a8] sm:$0xf]
    %v259 = vld [vmem:[%s1 + $0x3ac] sm:$0xf]
    %v260 = vld [vmem:[%s1 + $0x3b0] sm:$0xf]
    %v261 = vld [vmem:[%s1 + $0x3b4] sm:$0xf]
    %v262 = vld [vmem:[%s1 + $0x3b8] sm:$0xf]
    %v263 = vld [vmem:[%s1 + $0x3bc] sm:$0xf]
    %v264 = vld [vmem:[%s1 + $0x3c0] sm:$0xf]
    %v265 = vld [vmem:[%s1 + $0x3c4] sm:$0xf]
    %v266 = vld [vmem:[%s1 + $0x3c8] sm:$0xf]
    %v267 = vld [vmem:[%s1 + $0x3cc] sm:$0xf]
    %v268 = vld [vmem:[%s1 + $0x3d0] sm:$0xf]
    %v269 = vld [vmem:[%s1 + $0x3d4] sm:$0xf]
    %v270 = vld [vmem:[%s1 + $0x3d8] sm:$0xf]
    %v271 = vld [vmem:[%s1 + $0x3dc] sm:$0xf]
    %v272 = vld [vmem:[%s1 + $0x3e0] sm:$0xf]
    %v273 = vld [vmem:[%s1 + $0x3e4] sm:$0xf]
    %v274 = vld [vmem:[%s1 + $0x3e8] sm:$0xf]
    %v275 = vld [vmem:[%s1 + $0x3ec] sm:$0xf]
    %v276 = vld [vmem:[%s1 + $0x3f0] sm:$0xf]
    %v277 = vld [vmem:[%s1 + $0x3f4] sm:$0xf]
    %v278 = vld [vmem:[%s1 + $0x3f8] sm:$0xf]
    %v279 = vld [vmem:[%s1 + $0x3fc] sm:$0xf]
    %v280 = vld [vmem:[%s2] sm:$0x1]
    %v282 = vlaneseq
    %v283 = vshrl.u32 %v282, 7
    %v284 = vsub.s32 0, %v283
    %v285 = vrot.slane %v280, %v284
    %v295 = vcombine.low %v16, %v18
    %v296 = vcombine.high %v16, %v18
    %v297 = vcombine.low %v20, %v22
    %v298 = vcombine.high %v20, %v22
    %v300 = vunpack.c.l.s4 1966171168
    %v301 = vunpack.c.0.s8 %v300
    %v302 = vlaneseq
    %v303 = vshrl.u32 %v302, 7
    %v304 = vsub.s32 %v301, %v303
    %v305 = vrot.slane %v295, %v304
    %v307 = vunpack.c.l.s4 1966171168
    %v308 = vunpack.c.0.s8 %v307
    %v309 = vlaneseq
    %v310 = vshrl.u32 %v309, 7
    %v311 = vsub.s32 %v308, %v310
    %v312 = vrot.slane %v296, %v311
    %v314 = vunpack.c.l.s4 1966171168
    %v315 = vunpack.c.0.s8 %v314
    %v316 = vlaneseq
    %v317 = vshrl.u32 %v316, 7
    %v318 = vsub.s32 %v315, %v317
    %v319 = vrot.slane %v297, %v318
    %v321 = vunpack.c.l.s4 1966171168
    %v322 = vunpack.c.0.s8 %v321
    %v323 = vlaneseq
    %v324 = vshrl.u32 %v323, 7
    %v325 = vsub.s32 %v322, %v324
    %v326 = vrot.slane %v298, %v325
    %v327 = vcombine.low %v305, %v319
    %v328 = vcombine.high %v305, %v319
    %v329 = vcombine.low %v312, %v326
    %v330 = vcombine.high %v312, %v326
    %v332 = vunpack.c.l.s4 1966171168
    %v333 = vunpack.c.0.s8 %v332
    %v334 = vlaneseq
    %v335 = vshrl.u32 %v334, 7
    %v336 = vsub.s32 %v333, %v335
    %v337 = vrot.slane %v327, %v336
    %v339 = vunpack.c.l.s4 1966171168
    %v340 = vunpack.c.0.s8 %v339
    %v341 = vlaneseq
    %v342 = vshrl.u32 %v341, 7
    %v343 = vsub.s32 %v340, %v342
    %v344 = vrot.slane %v329, %v343
    %v346 = vunpack.c.l.s4 1966171168
    %v347 = vunpack.c.0.s8 %v346
    %v348 = vlaneseq
    %v349 = vshrl.u32 %v348, 7
    %v350 = vsub.s32 %v347, %v349
    %v351 = vrot.slane %v328, %v350
    %v353 = vunpack.c.l.s4 1966171168
    %v354 = vunpack.c.0.s8 %v353
    %v355 = vlaneseq
    %v356 = vshrl.u32 %v355, 7
    %v357 = vsub.s32 %v354, %v356
    %v358 = vrot.slane %v330, %v357
    %v359 = vcombine.high %v337, %v337
    %v360 = vcombine.high %v344, %v344
    %v361 = vcombine.high %v351, %v351
    %v362 = vcombine.high %v358, %v358
    %v363 = vcombine.low %v17, %v19
    %v364 = vcombine.high %v17, %v19
    %v365 = vcombine.low %v21, %v23
    %v366 = vcombine.high %v21, %v23
    %v368 = vunpack.c.l.s4 1966171168
    %v369 = vunpack.c.0.s8 %v368
    %v370 = vlaneseq
    %v371 = vshrl.u32 %v370, 7
    %v372 = vsub.s32 %v369, %v371
    %v373 = vrot.slane %v363, %v372
    %v375 = vunpack.c.l.s4 1966171168
    %v376 = vunpack.c.0.s8 %v375
    %v377 = vlaneseq
    %v378 = vshrl.u32 %v377, 7
    %v379 = vsub.s32 %v376, %v378
    %v380 = vrot.slane %v364, %v379
    %v382 = vunpack.c.l.s4 1966171168
    %v383 = vunpack.c.0.s8 %v382
    %v384 = vlaneseq
    %v385 = vshrl.u32 %v384, 7
    %v386 = vsub.s32 %v383, %v385
    %v387 = vrot.slane %v365, %v386
    %v389 = vunpack.c.l.s4 1966171168
    %v390 = vunpack.c.0.s8 %v389
    %v391 = vlaneseq
    %v392 = vshrl.u32 %v391, 7
    %v393 = vsub.s32 %v390, %v392
    %v394 = vrot.slane %v366, %v393
    %v395 = vcombine.low %v373, %v387
    %v396 = vcombine.high %v373, %v387
    %v397 = vcombine.low %v380, %v394
    %v398 = vcombine.high %v380, %v394
    %v400 = vunpack.c.l.s4 1966171168
    %v401 = vunpack.c.0.s8 %v400
    %v402 = vlaneseq
    %v403 = vshrl.u32 %v402, 7
    %v404 = vsub.s32 %v401, %v403
    %v405 = vrot.slane %v395, %v404
    %v407 = vunpack.c.l.s4 1966171168
    %v408 = vunpack.c.0.s8 %v407
    %v409 = vlaneseq
    %v410 = vshrl.u32 %v409, 7
    %v411 = vsub.s32 %v408, %v410
    %v412 = vrot.slane %v397, %v411
    %v414 = vunpack.c.l.s4 1966171168
    %v415 = vunpack.c.0.s8 %v414
    %v416 = vlaneseq
    %v417 = vshrl.u32 %v416, 7
    %v418 = vsub.s32 %v415, %v417
    %v419 = vrot.slane %v396, %v418
    %v421 = vunpack.c.l.s4 1966171168
    %v422 = vunpack.c.0.s8 %v421
    %v423 = vlaneseq
    %v424 = vshrl.u32 %v423, 7
    %v425 = vsub.s32 %v422, %v424
    %v426 = vrot.slane %v398, %v425
    %v427 = vcombine.high %v405, %v405
    %v428 = vcombine.high %v412, %v412
    %v429 = vcombine.high %v419, %v419
    %v430 = vcombine.high %v426, %v426
    %v703 = vunpack.c.l.b16 %v24
    %v704 = vunpack.c.l.b16 %v25
    %v705 = vunpack.c.l.b16 %v26
    %v706 = vunpack.c.l.b16 %v27
    %v707 = vunpack.c.l.b16 %v28
    %v708 = vunpack.c.l.b16 %v29
    %v709 = vunpack.c.l.b16 %v30
    %v710 = vunpack.c.l.b16 %v31
    %v711 = vunpack.c.l.b16 %v32
    %v712 = vunpack.c.l.b16 %v33
    %v713 = vunpack.c.l.b16 %v34
    %v714 = vunpack.c.l.b16 %v35
    %v715 = vunpack.c.l.b16 %v36
    %v716 = vunpack.c.l.b16 %v37
    %v717 = vunpack.c.l.b16 %v38
    %v718 = vunpack.c.l.b16 %v39
    %v719 = vunpack.c.l.b16 %v40
    %v720 = vunpack.c.l.b16 %v41
    %v721 = vunpack.c.l.b16 %v42
    %v722 = vunpack.c.l.b16 %v43
    %v723 = vunpack.c.l.b16 %v44
    %v724 = vunpack.c.l.b16 %v45
    %v725 = vunpack.c.l.b16 %v46
    %v726 = vunpack.c.l.b16 %v47
    %v727 = vunpack.c.l.b16 %v48
    %v728 = vunpack.c.l.b16 %v49
    %v729 = vunpack.c.l.b16 %v50
    %v730 = vunpack.c.l.b16 %v51
    %v731 = vunpack.c.l.b16 %v52
    %v732 = vunpack.c.l.b16 %v53
    %v733 = vunpack.c.l.b16 %v54
    %v734 = vunpack.c.l.b16 %v55
    %v735 = vunpack.c.l.b16 %v56
    %v736 = vunpack.c.l.b16 %v57
    %v737 = vunpack.c.l.b16 %v58
    %v738 = vunpack.c.l.b16 %v59
    %v739 = vunpack.c.l.b16 %v60
    %v740 = vunpack.c.l.b16 %v61
    %v741 = vunpack.c.l.b16 %v62
    %v742 = vunpack.c.l.b16 %v63
    %v743 = vunpack.c.l.b16 %v64
    %v744 = vunpack.c.l.b16 %v65
    %v745 = vunpack.c.l.b16 %v66
    %v746 = vunpack.c.l.b16 %v67
    %v747 = vunpack.c.l.b16 %v68
    %v748 = vunpack.c.l.b16 %v69
    %v749 = vunpack.c.l.b16 %v70
    %v750 = vunpack.c.l.b16 %v71
    %v751 = vunpack.c.l.b16 %v72
    %v752 = vunpack.c.l.b16 %v73
    %v753 = vunpack.c.l.b16 %v74
    %v754 = vunpack.c.l.b16 %v75
    %v755 = vunpack.c.l.b16 %v76
    %v756 = vunpack.c.l.b16 %v77
    %v757 = vunpack.c.l.b16 %v78
    %v758 = vunpack.c.l.b16 %v79
    %v759 = vunpack.c.l.b16 %v80
    %v760 = vunpack.c.l.b16 %v81
    %v761 = vunpack.c.l.b16 %v82
    %v762 = vunpack.c.l.b16 %v83
    %v763 = vunpack.c.l.b16 %v84
    %v764 = vunpack.c.l.b16 %v85
    %v765 = vunpack.c.l.b16 %v86
    %v766 = vunpack.c.l.b16 %v87
    %v767 = vunpack.c.l.b16 %v88
    %v768 = vunpack.c.l.b16 %v89
    %v769 = vunpack.c.l.b16 %v90
    %v770 = vunpack.c.l.b16 %v91
    %v771 = vunpack.c.l.b16 %v92
    %v772 = vunpack.c.l.b16 %v93
    %v773 = vunpack.c.l.b16 %v94
    %v774 = vunpack.c.l.b16 %v95
    %v775 = vunpack.c.l.b16 %v96
    %v776 = vunpack.c.l.b16 %v97
    %v777 = vunpack.c.l.b16 %v98
    %v778 = vunpack.c.l.b16 %v99
    %v779 = vunpack.c.l.b16 %v100
    %v780 = vunpack.c.l.b16 %v101
    %v781 = vunpack.c.l.b16 %v102
    %v782 = vunpack.c.l.b16 %v103
    %v783 = vunpack.c.l.b16 %v104
    %v784 = vunpack.c.l.b16 %v105
    %v785 = vunpack.c.l.b16 %v106
    %v786 = vunpack.c.l.b16 %v107
    %v787 = vunpack.c.l.b16 %v108
    %v788 = vunpack.c.l.b16 %v109
    %v789 = vunpack.c.l.b16 %v110
    %v790 = vunpack.c.l.b16 %v111
    %v791 = vunpack.c.l.b16 %v112
    %v792 = vunpack.c.l.b16 %v113
    %v793 = vunpack.c.l.b16 %v114
    %v794 = vunpack.c.l.b16 %v115
    %v795 = vunpack.c.l.b16 %v116
    %v796 = vunpack.c.l.b16 %v117
    %v797 = vunpack.c.l.b16 %v118
    %v798 = vunpack.c.l.b16 %v119
    %v799 = vunpack.c.l.b16 %v120
    %v800 = vunpack.c.l.b16 %v121
    %v801 = vunpack.c.l.b16 %v122
    %v802 = vunpack.c.l.b16 %v123
    %v803 = vunpack.c.l.b16 %v124
    %v804 = vunpack.c.l.b16 %v125
    %v805 = vunpack.c.l.b16 %v126
    %v806 = vunpack.c.l.b16 %v127
    %v807 = vunpack.c.l.b16 %v128
    %v808 = vunpack.c.l.b16 %v129
    %v809 = vunpack.c.l.b16 %v130
    %v810 = vunpack.c.l.b16 %v131
    %v811 = vunpack.c.l.b16 %v132
    %v812 = vunpack.c.l.b16 %v133
    %v813 = vunpack.c.l.b16 %v134
    %v814 = vunpack.c.l.b16 %v135
    %v815 = vunpack.c.l.b16 %v136
    %v816 = vunpack.c.l.b16 %v137
    %v817 = vunpack.c.l.b16 %v138
    %v818 = vunpack.c.l.b16 %v139
    %v819 = vunpack.c.l.b16 %v140
    %v820 = vunpack.c.l.b16 %v141
    %v821 = vunpack.c.l.b16 %v142
    %v822 = vunpack.c.l.b16 %v143
    %v823 = vunpack.c.l.b16 %v144
    %v824 = vunpack.c.l.b16 %v145
    %v825 = vunpack.c.l.b16 %v146
    %v826 = vunpack.c.l.b16 %v147
    %v827 = vunpack.c.l.b16 %v148
    %v828 = vunpack.c.l.b16 %v149
    %v829 = vunpack.c.l.b16 %v150
    %v830 = vunpack.c.l.b16 %v151
    %v831 = vunpack.c.l.b16 %v152
    %v832 = vunpack.c.l.b16 %v153
    %v833 = vunpack.c.l.b16 %v154
    %v834 = vunpack.c.l.b16 %v155
    %v835 = vunpack.c.l.b16 %v156
    %v836 = vunpack.c.l.b16 %v157
    %v837 = vunpack.c.l.b16 %v158
    %v838 = vunpack.c.l.b16 %v159
    %v839 = vunpack.c.l.b16 %v160
    %v840 = vunpack.c.l.b16 %v161
    %v841 = vunpack.c.l.b16 %v162
    %v842 = vunpack.c.l.b16 %v163
    %v843 = vunpack.c.l.b16 %v164
    %v844 = vunpack.c.l.b16 %v165
    %v845 = vunpack.c.l.b16 %v166
    %v846 = vunpack.c.l.b16 %v167
    %v847 = vunpack.c.l.b16 %v168
    %v848 = vunpack.c.l.b16 %v169
    %v849 = vunpack.c.l.b16 %v170
    %v850 = vunpack.c.l.b16 %v171
    %v851 = vunpack.c.l.b16 %v172
    %v852 = vunpack.c.l.b16 %v173
    %v853 = vunpack.c.l.b16 %v174
    %v854 = vunpack.c.l.b16 %v175
    %v855 = vunpack.c.l.b16 %v176
    %v856 = vunpack.c.l.b16 %v177
    %v857 = vunpack.c.l.b16 %v178
    %v858 = vunpack.c.l.b16 %v179
    %v859 = vunpack.c.l.b16 %v180
    %v860 = vunpack.c.l.b16 %v181
    %v861 = vunpack.c.l.b16 %v182
    %v862 = vunpack.c.l.b16 %v183
    %v863 = vunpack.c.l.b16 %v184
    %v864 = vunpack.c.l.b16 %v185
    %v865 = vunpack.c.l.b16 %v186
    %v866 = vunpack.c.l.b16 %v187
    %v867 = vunpack.c.l.b16 %v188
    %v868 = vunpack.c.l.b16 %v189
    %v869 = vunpack.c.l.b16 %v190
    %v870 = vunpack.c.l.b16 %v191
    %v871 = vunpack.c.l.b16 %v192
    %v872 = vunpack.c.l.b16 %v193
    %v873 = vunpack.c.l.b16 %v194
    %v874 = vunpack.c.l.b16 %v195
    %v875 = vunpack.c.l.b16 %v196
    %v876 = vunpack.c.l.b16 %v197
    %v877 = vunpack.c.l.b16 %v198
    %v878 = vunpack.c.l.b16 %v199
    %v879 = vunpack.c.l.b16 %v200
    %v880 = vunpack.c.l.b16 %v201
    %v881 = vunpack.c.l.b16 %v202
    %v882 = vunpack.c.l.b16 %v203
    %v883 = vunpack.c.l.b16 %v204
    %v884 = vunpack.c.l.b16 %v205
    %v885 = vunpack.c.l.b16 %v206
    %v886 = vunpack.c.l.b16 %v207
    %v887 = vunpack.c.l.b16 %v208
    %v888 = vunpack.c.l.b16 %v209
    %v889 = vunpack.c.l.b16 %v210
    %v890 = vunpack.c.l.b16 %v211
    %v891 = vunpack.c.l.b16 %v212
    %v892 = vunpack.c.l.b16 %v213
    %v893 = vunpack.c.l.b16 %v214
    %v894 = vunpack.c.l.b16 %v215
    %v895 = vunpack.c.l.b16 %v216
    %v896 = vunpack.c.l.b16 %v217
    %v897 = vunpack.c.l.b16 %v218
    %v898 = vunpack.c.l.b16 %v219
    %v899 = vunpack.c.l.b16 %v220
    %v900 = vunpack.c.l.b16 %v221
    %v901 = vunpack.c.l.b16 %v222
    %v902 = vunpack.c.l.b16 %v223
    %v903 = vunpack.c.l.b16 %v224
    %v904 = vunpack.c.l.b16 %v225
    %v905 = vunpack.c.l.b16 %v226
    %v906 = vunpack.c.l.b16 %v227
    %v907 = vunpack.c.l.b16 %v228
    %v908 = vunpack.c.l.b16 %v229
    %v909 = vunpack.c.l.b16 %v230
    %v910 = vunpack.c.l.b16 %v231
    %v911 = vunpack.c.l.b16 %v232
    %v912 = vunpack.c.l.b16 %v233
    %v913 = vunpack.c.l.b16 %v234
    %v914 = vunpack.c.l.b16 %v235
    %v915 = vunpack.c.l.b16 %v236
    %v916 = vunpack.c.l.b16 %v237
    %v917 = vunpack.c.l.b16 %v238
    %v918 = vunpack.c.l.b16 %v239
    %v919 = vunpack.c.l.b16 %v240
    %v920 = vunpack.c.l.b16 %v241
    %v921 = vunpack.c.l.b16 %v242
    %v922 = vunpack.c.l.b16 %v243
    %v923 = vunpack.c.l.b16 %v244
    %v924 = vunpack.c.l.b16 %v245
    %v925 = vunpack.c.l.b16 %v246
    %v926 = vunpack.c.l.b16 %v247
    %v927 = vunpack.c.l.b16 %v248
    %v928 = vunpack.c.l.b16 %v249
    %v929 = vunpack.c.l.b16 %v250
    %v930 = vunpack.c.l.b16 %v251
    %v931 = vunpack.c.l.b16 %v252
    %v932 = vunpack.c.l.b16 %v253
    %v933 = vunpack.c.l.b16 %v254
    %v934 = vunpack.c.l.b16 %v255
    %v935 = vunpack.c.l.b16 %v256
    %v936 = vunpack.c.l.b16 %v257
    %v937 = vunpack.c.l.b16 %v258
    %v938 = vunpack.c.l.b16 %v259
    %v939 = vunpack.c.l.b16 %v260
    %v940 = vunpack.c.l.b16 %v261
    %v941 = vunpack.c.l.b16 %v262
    %v942 = vunpack.c.l.b16 %v263
    %v943 = vunpack.c.l.b16 %v264
    %v944 = vunpack.c.l.b16 %v265
    %v945 = vunpack.c.l.b16 %v266
    %v946 = vunpack.c.l.b16 %v267
    %v947 = vunpack.c.l.b16 %v268
    %v948 = vunpack.c.l.b16 %v269
    %v949 = vunpack.c.l.b16 %v270
    %v950 = vunpack.c.l.b16 %v271
    %v951 = vunpack.c.l.b16 %v272
    %v952 = vunpack.c.l.b16 %v273
    %v953 = vunpack.c.l.b16 %v274
    %v954 = vunpack.c.l.b16 %v275
    %v955 = vunpack.c.l.b16 %v276
    %v956 = vunpack.c.l.b16 %v277
    %v957 = vunpack.c.l.b16 %v278
    %v958 = vunpack.c.l.b16 %v279
    %v959 = vpack.c.b16 %v704, %v703
    %v960 = vpack.c.b16 %v706, %v705
    %v961 = vpack.c.b16 %v708, %v707
    %v962 = vpack.c.b16 %v710, %v709
    %v963 = vpack.c.b16 %v712, %v711
    %v964 = vpack.c.b16 %v714, %v713
    %v965 = vpack.c.b16 %v716, %v715
    %v966 = vpack.c.b16 %v718, %v717
    %v967 = vpack.c.b16 %v720, %v719
    %v968 = vpack.c.b16 %v722, %v721
    %v969 = vpack.c.b16 %v724, %v723
    %v970 = vpack.c.b16 %v726, %v725
    %v971 = vpack.c.b16 %v728, %v727
    %v972 = vpack.c.b16 %v730, %v729
    %v973 = vpack.c.b16 %v732, %v731
    %v974 = vpack.c.b16 %v734, %v733
    %v975 = vpack.c.b16 %v736, %v735
    %v976 = vpack.c.b16 %v738, %v737
    %v977 = vpack.c.b16 %v740, %v739
    %v978 = vpack.c.b16 %v742, %v741
    %v979 = vpack.c.b16 %v744, %v743
    %v980 = vpack.c.b16 %v746, %v745
    %v981 = vpack.c.b16 %v748, %v747
    %v982 = vpack.c.b16 %v750, %v749
    %v983 = vpack.c.b16 %v752, %v751
    %v984 = vpack.c.b16 %v754, %v753
    %v985 = vpack.c.b16 %v756, %v755
    %v986 = vpack.c.b16 %v758, %v757
    %v987 = vpack.c.b16 %v760, %v759
    %v988 = vpack.c.b16 %v762, %v761
    %v989 = vpack.c.b16 %v764, %v763
    %v990 = vpack.c.b16 %v766, %v765
    %v991 = vpack.c.b16 %v768, %v767
    %v992 = vpack.c.b16 %v770, %v769
    %v993 = vpack.c.b16 %v772, %v771
    %v994 = vpack.c.b16 %v774, %v773
    %v995 = vpack.c.b16 %v776, %v775
    %v996 = vpack.c.b16 %v778, %v777
    %v997 = vpack.c.b16 %v780, %v779
    %v998 = vpack.c.b16 %v782, %v781
    %v999 = vpack.c.b16 %v784, %v783
    %v1000 = vpack.c.b16 %v786, %v785
    %v1001 = vpack.c.b16 %v788, %v787
    %v1002 = vpack.c.b16 %v790, %v789
    %v1003 = vpack.c.b16 %v792, %v791
    %v1004 = vpack.c.b16 %v794, %v793
    %v1005 = vpack.c.b16 %v796, %v795
    %v1006 = vpack.c.b16 %v798, %v797
    %v1007 = vpack.c.b16 %v800, %v799
    %v1008 = vpack.c.b16 %v802, %v801
    %v1009 = vpack.c.b16 %v804, %v803
    %v1010 = vpack.c.b16 %v806, %v805
    %v1011 = vpack.c.b16 %v808, %v807
    %v1012 = vpack.c.b16 %v810, %v809
    %v1013 = vpack.c.b16 %v812, %v811
    %v1014 = vpack.c.b16 %v814, %v813
    %v1015 = vpack.c.b16 %v816, %v815
    %v1016 = vpack.c.b16 %v818, %v817
    %v1017 = vpack.c.b16 %v820, %v819
    %v1018 = vpack.c.b16 %v822, %v821
    %v1019 = vpack.c.b16 %v824, %v823
    %v1020 = vpack.c.b16 %v826, %v825
    %v1021 = vpack.c.b16 %v828, %v827
    %v1022 = vpack.c.b16 %v830, %v829
    %v1023 = vpack.c.b16 %v832, %v831
    %v1024 = vpack.c.b16 %v834, %v833
    %v1025 = vpack.c.b16 %v836, %v835
    %v1026 = vpack.c.b16 %v838, %v837
    %v1027 = vpack.c.b16 %v840, %v839
    %v1028 = vpack.c.b16 %v842, %v841
    %v1029 = vpack.c.b16 %v844, %v843
    %v1030 = vpack.c.b16 %v846, %v845
    %v1031 = vpack.c.b16 %v848, %v847
    %v1032 = vpack.c.b16 %v850, %v849
    %v1033 = vpack.c.b16 %v852, %v851
    %v1034 = vpack.c.b16 %v854, %v853
    %v1035 = vpack.c.b16 %v856, %v855
    %v1036 = vpack.c.b16 %v858, %v857
    %v1037 = vpack.c.b16 %v860, %v859
    %v1038 = vpack.c.b16 %v862, %v861
    %v1039 = vpack.c.b16 %v864, %v863
    %v1040 = vpack.c.b16 %v866, %v865
    %v1041 = vpack.c.b16 %v868, %v867
    %v1042 = vpack.c.b16 %v870, %v869
    %v1043 = vpack.c.b16 %v872, %v871
    %v1044 = vpack.c.b16 %v874, %v873
    %v1045 = vpack.c.b16 %v876, %v875
    %v1046 = vpack.c.b16 %v878, %v877
    %v1047 = vpack.c.b16 %v880, %v879
    %v1048 = vpack.c.b16 %v882, %v881
    %v1049 = vpack.c.b16 %v884, %v883
    %v1050 = vpack.c.b16 %v886, %v885
    %v1051 = vpack.c.b16 %v888, %v887
    %v1052 = vpack.c.b16 %v890, %v889
    %v1053 = vpack.c.b16 %v892, %v891
    %v1054 = vpack.c.b16 %v894, %v893
    %v1055 = vpack.c.b16 %v896, %v895
    %v1056 = vpack.c.b16 %v898, %v897
    %v1057 = vpack.c.b16 %v900, %v899
    %v1058 = vpack.c.b16 %v902, %v901
    %v1059 = vpack.c.b16 %v904, %v903
    %v1060 = vpack.c.b16 %v906, %v905
    %v1061 = vpack.c.b16 %v908, %v907
    %v1062 = vpack.c.b16 %v910, %v909
    %v1063 = vpack.c.b16 %v912, %v911
    %v1064 = vpack.c.b16 %v914, %v913
    %v1065 = vpack.c.b16 %v916, %v915
    %v1066 = vpack.c.b16 %v918, %v917
    %v1067 = vpack.c.b16 %v920, %v919
    %v1068 = vpack.c.b16 %v922, %v921
    %v1069 = vpack.c.b16 %v924, %v923
    %v1070 = vpack.c.b16 %v926, %v925
    %v1071 = vpack.c.b16 %v928, %v927
    %v1072 = vpack.c.b16 %v930, %v929
    %v1073 = vpack.c.b16 %v932, %v931
    %v1074 = vpack.c.b16 %v934, %v933
    %v1075 = vpack.c.b16 %v936, %v935
    %v1076 = vpack.c.b16 %v938, %v937
    %v1077 = vpack.c.b16 %v940, %v939
    %v1078 = vpack.c.b16 %v942, %v941
    %v1079 = vpack.c.b16 %v944, %v943
    %v1080 = vpack.c.b16 %v946, %v945
    %v1081 = vpack.c.b16 %v948, %v947
    %v1082 = vpack.c.b16 %v950, %v949
    %v1083 = vpack.c.b16 %v952, %v951
    %v1084 = vpack.c.b16 %v954, %v953
    %v1085 = vpack.c.b16 %v956, %v955
    %v1086 = vpack.c.b16 %v958, %v957
    %1215 = vmatprep.subr.bf16.mxu0 0
    %1216 = vmatpush1.bf16.msra.mxu0 %v959
    %1217 = vmatprep.subr.bf16.mxu0 0
    %1218 = vmatpush1.bf16.msra.mxu0 %v960
    %1219 = vmatprep.subr.bf16.mxu0 0
    %1220 = vmatpush1.bf16.msra.mxu0 %v961
    %1221 = vmatprep.subr.bf16.mxu0 0
    %1222 = vmatpush1.bf16.msra.mxu0 %v962
    %1223 = vmatprep.subr.bf16.mxu0 0
    %1224 = vmatpush1.bf16.msra.mxu0 %v963
    %1225 = vmatprep.subr.bf16.mxu0 0
    %1226 = vmatpush1.bf16.msra.mxu0 %v964
    %1227 = vmatprep.subr.bf16.mxu0 0
    %1228 = vmatpush1.bf16.msra.mxu0 %v965
    %1229 = vmatprep.subr.bf16.mxu0 0
    %1230 = vmatpush1.bf16.msra.mxu0 %v966
    %1231 = vmatprep.subr.bf16.mxu0 0
    %1232 = vmatpush1.bf16.msra.mxu0 %v967
    %1233 = vmatprep.subr.bf16.mxu0 0
    %1234 = vmatpush1.bf16.msra.mxu0 %v968
    %1235 = vmatprep.subr.bf16.mxu0 0
    %1236 = vmatpush1.bf16.msra.mxu0 %v969
    %1237 = vmatprep.subr.bf16.mxu0 0
    %1238 = vmatpush1.bf16.msra.mxu0 %v970
    %1239 = vmatprep.subr.bf16.mxu0 0
    %1240 = vmatpush1.bf16.msra.mxu0 %v971
    %1241 = vmatprep.subr.bf16.mxu0 0
    %1242 = vmatpush1.bf16.msra.mxu0 %v972
    %1243 = vmatprep.subr.bf16.mxu0 0
    %1244 = vmatpush1.bf16.msra.mxu0 %v973
    %1245 = vmatprep.subr.bf16.mxu0 0
    %1246 = vmatpush1.bf16.msra.mxu0 %v974
    %1247 = vmatprep.mubr.bf16.mxu0 %v351
    %1248 = vmatmul.mubr.bf16.gmra.mrb[0].mxu0 %v337
    %v1249 = vpop.f32.mrb[0].mxu0
    %v1250 = vadd.f32 %v285, %v1249
    %v1251 = vpop.f32.mrb[0].mxu0
    %v1252 = vpop.f32.mrb[0].mxu0
    %v1253 = vpop.f32.mrb[0].mxu0
    %1254 = vdwg.mxu0
    %1255 = vmatprep.subr.bf16.mxu0 0
    %1256 = vmatpush1.bf16.msra.mxu0 %v975
    %1257 = vmatprep.subr.bf16.mxu0 0
    %1258 = vmatpush1.bf16.msra.mxu0 %v976
    %1259 = vmatprep.subr.bf16.mxu0 0
    %1260 = vmatpush1.bf16.msra.mxu0 %v977
    %1261 = vmatprep.subr.bf16.mxu0 0
    %1262 = vmatpush1.bf16.msra.mxu0 %v978
    %1263 = vmatprep.subr.bf16.mxu0 0
    %1264 = vmatpush1.bf16.msra.mxu0 %v979
    %1265 = vmatprep.subr.bf16.mxu0 0
    %1266 = vmatpush1.bf16.msra.mxu0 %v980
    %1267 = vmatprep.subr.bf16.mxu0 0
    %1268 = vmatpush1.bf16.msra.mxu0 %v981
    %1269 = vmatprep.subr.bf16.mxu0 0
    %1270 = vmatpush1.bf16.msra.mxu0 %v982
    %1271 = vmatprep.subr.bf16.mxu0 0
    %1272 = vmatpush1.bf16.msra.mxu0 %v983
    %1273 = vmatprep.subr.bf16.mxu0 0
    %1274 = vmatpush1.bf16.msra.mxu0 %v984
    %1275 = vmatprep.subr.bf16.mxu0 0
    %1276 = vmatpush1.bf16.msra.mxu0 %v985
    %1277 = vmatprep.subr.bf16.mxu0 0
    %1278 = vmatpush1.bf16.msra.mxu0 %v986
    %1279 = vmatprep.subr.bf16.mxu0 0
    %1280 = vmatpush1.bf16.msra.mxu0 %v987
    %1281 = vmatprep.subr.bf16.mxu0 0
    %1282 = vmatpush1.bf16.msra.mxu0 %v988
    %1283 = vmatprep.subr.bf16.mxu0 0
    %1284 = vmatpush1.bf16.msra.mxu0 %v989
    %1285 = vmatprep.subr.bf16.mxu0 0
    %1286 = vmatpush1.bf16.msra.mxu0 %v990
    %1287 = vmatprep.mubr.bf16.mxu0 %v361
    %1288 = vmatmul.mubr.bf16.gmra.mrb[0].mxu0 %v359
    %v1289 = vpop.f32.mrb[0].mxu0
    %v1290 = vadd.f32 %v1250, %v1289
    %v1291 = vpop.f32.mrb[0].mxu0
    %v1292 = vpop.f32.mrb[0].mxu0
    %v1293 = vpop.f32.mrb[0].mxu0
    %1294 = vdwg.mxu0
    %1295 = vmatprep.subr.bf16.mxu0 0
    %1296 = vmatpush1.bf16.msra.mxu0 %v991
    %1297 = vmatprep.subr.bf16.mxu0 0
    %1298 = vmatpush1.bf16.msra.mxu0 %v992
    %1299 = vmatprep.subr.bf16.mxu0 0
    %1300 = vmatpush1.bf16.msra.mxu0 %v993
    %1301 = vmatprep.subr.bf16.mxu0 0
    %1302 = vmatpush1.bf16.msra.mxu0 %v994
    %1303 = vmatprep.subr.bf16.mxu0 0
    %1304 = vmatpush1.bf16.msra.mxu0 %v995
    %1305 = vmatprep.subr.bf16.mxu0 0
    %1306 = vmatpush1.bf16.msra.mxu0 %v996
    %1307 = vmatprep.subr.bf16.mxu0 0
    %1308 = vmatpush1.bf16.msra.mxu0 %v997
    %1309 = vmatprep.subr.bf16.mxu0 0
    %1310 = vmatpush1.bf16.msra.mxu0 %v998
    %1311 = vmatprep.subr.bf16.mxu0 0
    %1312 = vmatpush1.bf16.msra.mxu0 %v999
    %1313 = vmatprep.subr.bf16.mxu0 0
    %1314 = vmatpush1.bf16.msra.mxu0 %v1000
    %1315 = vmatprep.subr.bf16.mxu0 0
    %1316 = vmatpush1.bf16.msra.mxu0 %v1001
    %1317 = vmatprep.subr.bf16.mxu0 0
    %1318 = vmatpush1.bf16.msra.mxu0 %v1002
    %1319 = vmatprep.subr.bf16.mxu0 0
    %1320 = vmatpush1.bf16.msra.mxu0 %v1003
    %1321 = vmatprep.subr.bf16.mxu0 0
    %1322 = vmatpush1.bf16.msra.mxu0 %v1004
    %1323 = vmatprep.subr.bf16.mxu0 0
    %1324 = vmatpush1.bf16.msra.mxu0 %v1005
    %1325 = vmatprep.subr.bf16.mxu0 0
    %1326 = vmatpush1.bf16.msra.mxu0 %v1006
    %1327 = vmatprep.mubr.bf16.mxu0 %v358
    %1328 = vmatmul.mubr.bf16.gmra.mrb[0].mxu0 %v344
    %v1329 = vpop.f32.mrb[0].mxu0
    %v1330 = vadd.f32 %v1290, %v1329
    %v1331 = vpop.f32.mrb[0].mxu0
    %v1332 = vpop.f32.mrb[0].mxu0
    %v1333 = vpop.f32.mrb[0].mxu0
    %1334 = vdwg.mxu0
    %1335 = vmatprep.subr.bf16.mxu0 0
    %1336 = vmatpush1.bf16.msra.mxu0 %v1007
    %1337 = vmatprep.subr.bf16.mxu0 0
    %1338 = vmatpush1.bf16.msra.mxu0 %v1008
    %1339 = vmatprep.subr.bf16.mxu0 0
    %1340 = vmatpush1.bf16.msra.mxu0 %v1009
    %1341 = vmatprep.subr.bf16.mxu0 0
    %1342 = vmatpush1.bf16.msra.mxu0 %v1010
    %1343 = vmatprep.subr.bf16.mxu0 0
    %1344 = vmatpush1.bf16.msra.mxu0 %v1011
    %1345 = vmatprep.subr.bf16.mxu0 0
    %1346 = vmatpush1.bf16.msra.mxu0 %v1012
    %1347 = vmatprep.subr.bf16.mxu0 0
    %1348 = vmatpush1.bf16.msra.mxu0 %v1013
    %1349 = vmatprep.subr.bf16.mxu0 0
    %1350 = vmatpush1.bf16.msra.mxu0 %v1014
    %1351 = vmatprep.subr.bf16.mxu0 0
    %1352 = vmatpush1.bf16.msra.mxu0 %v1015
    %1353 = vmatprep.subr.bf16.mxu0 0
    %1354 = vmatpush1.bf16.msra.mxu0 %v1016
    %1355 = vmatprep.subr.bf16.mxu0 0
    %1356 = vmatpush1.bf16.msra.mxu0 %v1017
    %1357 = vmatprep.subr.bf16.mxu0 0
    %1358 = vmatpush1.bf16.msra.mxu0 %v1018
    %1359 = vmatprep.subr.bf16.mxu0 0
    %1360 = vmatpush1.bf16.msra.mxu0 %v1019
    %1361 = vmatprep.subr.bf16.mxu0 0
    %1362 = vmatpush1.bf16.msra.mxu0 %v1020
    %1363 = vmatprep.subr.bf16.mxu0 0
    %1364 = vmatpush1.bf16.msra.mxu0 %v1021
    %1365 = vmatprep.subr.bf16.mxu0 0
    %1366 = vmatpush1.bf16.msra.mxu0 %v1022
    %1367 = vmatprep.mubr.bf16.mxu0 %v362
    %1368 = vmatmul.mubr.bf16.gmra.mrb[0].mxu0 %v360
    %v1369 = vpop.f32.mrb[0].mxu0
    %v1370 = vadd.f32 %v1330, %v1369
    %v1371 = vpop.f32.mrb[0].mxu0
    %v1372 = vpop.f32.mrb[0].mxu0
    %v1373 = vpop.f32.mrb[0].mxu0
    %1374 = vdwg.mxu0
    %1375 = vmatprep.subr.bf16.mxu0 0
    %1376 = vmatpush1.bf16.msra.mxu0 %v1023
    %1377 = vmatprep.subr.bf16.mxu0 0
    %1378 = vmatpush1.bf16.msra.mxu0 %v1024
    %1379 = vmatprep.subr.bf16.mxu0 0
    %1380 = vmatpush1.bf16.msra.mxu0 %v1025
    %1381 = vmatprep.subr.bf16.mxu0 0
    %1382 = vmatpush1.bf16.msra.mxu0 %v1026
    %1383 = vmatprep.subr.bf16.mxu0 0
    %1384 = vmatpush1.bf16.msra.mxu0 %v1027
    %1385 = vmatprep.subr.bf16.mxu0 0
    %1386 = vmatpush1.bf16.msra.mxu0 %v1028
    %1387 = vmatprep.subr.bf16.mxu0 0
    %1388 = vmatpush1.bf16.msra.mxu0 %v1029
    %1389 = vmatprep.subr.bf16.mxu0 0
    %1390 = vmatpush1.bf16.msra.mxu0 %v1030
    %1391 = vmatprep.subr.bf16.mxu0 0
    %1392 = vmatpush1.bf16.msra.mxu0 %v1031
    %1393 = vmatprep.subr.bf16.mxu0 0
    %1394 = vmatpush1.bf16.msra.mxu0 %v1032
    %1395 = vmatprep.subr.bf16.mxu0 0
    %1396 = vmatpush1.bf16.msra.mxu0 %v1033
    %1397 = vmatprep.subr.bf16.mxu0 0
    %1398 = vmatpush1.bf16.msra.mxu0 %v1034
    %1399 = vmatprep.subr.bf16.mxu0 0
    %1400 = vmatpush1.bf16.msra.mxu0 %v1035
    %1401 = vmatprep.subr.bf16.mxu0 0
    %1402 = vmatpush1.bf16.msra.mxu0 %v1036
    %1403 = vmatprep.subr.bf16.mxu0 0
    %1404 = vmatpush1.bf16.msra.mxu0 %v1037
    %1405 = vmatprep.subr.bf16.mxu0 0
    %1406 = vmatpush1.bf16.msra.mxu0 %v1038
    %1407 = vmatprep.mubr.bf16.mxu0 %v419
    %1408 = vmatmul.mubr.bf16.gmra.mrb[0].mxu0 %v405
    %v1409 = vpop.f32.mrb[0].mxu0
    %v1410 = vadd.f32 %v1370, %v1409
    %v1411 = vpop.f32.mrb[0].mxu0
    %v1412 = vpop.f32.mrb[0].mxu0
    %v1413 = vpop.f32.mrb[0].mxu0
    %1414 = vdwg.mxu0
    %1415 = vmatprep.subr.bf16.mxu0 0
    %1416 = vmatpush1.bf16.msra.mxu0 %v1039
    %1417 = vmatprep.subr.bf16.mxu0 0
    %1418 = vmatpush1.bf16.msra.mxu0 %v1040
    %1419 = vmatprep.subr.bf16.mxu0 0
    %1420 = vmatpush1.bf16.msra.mxu0 %v1041
    %1421 = vmatprep.subr.bf16.mxu0 0
    %1422 = vmatpush1.bf16.msra.mxu0 %v1042
    %1423 = vmatprep.subr.bf16.mxu0 0
    %1424 = vmatpush1.bf16.msra.mxu0 %v1043
    %1425 = vmatprep.subr.bf16.mxu0 0
    %1426 = vmatpush1.bf16.msra.mxu0 %v1044
    %1427 = vmatprep.subr.bf16.mxu0 0
    %1428 = vmatpush1.bf16.msra.mxu0 %v1045
    %1429 = vmatprep.subr.bf16.mxu0 0
    %1430 = vmatpush1.bf16.msra.mxu0 %v1046
    %1431 = vmatprep.subr.bf16.mxu0 0
    %1432 = vmatpush1.bf16.msra.mxu0 %v1047
    %1433 = vmatprep.subr.bf16.mxu0 0
    %1434 = vmatpush1.bf16.msra.mxu0 %v1048
    %1435 = vmatprep.subr.bf16.mxu0 0
    %1436 = vmatpush1.bf16.msra.mxu0 %v1049
    %1437 = vmatprep.subr.bf16.mxu0 0
    %1438 = vmatpush1.bf16.msra.mxu0 %v1050
    %1439 = vmatprep.subr.bf16.mxu0 0
    %1440 = vmatpush1.bf16.msra.mxu0 %v1051
    %1441 = vmatprep.subr.bf16.mxu0 0
    %1442 = vmatpush1.bf16.msra.mxu0 %v1052
    %1443 = vmatprep.subr.bf16.mxu0 0
    %1444 = vmatpush1.bf16.msra.mxu0 %v1053
    %1445 = vmatprep.subr.bf16.mxu0 0
    %1446 = vmatpush1.bf16.msra.mxu0 %v1054
    %1447 = vmatprep.mubr.bf16.mxu0 %v429
    %1448 = vmatmul.mubr.bf16.gmra.mrb[0].mxu0 %v427
    %v1449 = vpop.f32.mrb[0].mxu0
    %v1450 = vadd.f32 %v1410, %v1449
    %v1451 = vpop.f32.mrb[0].mxu0
    %v1452 = vpop.f32.mrb[0].mxu0
    %v1453 = vpop.f32.mrb[0].mxu0
    %1454 = vdwg.mxu0
    %1455 = vmatprep.subr.bf16.mxu0 0
    %1456 = vmatpush1.bf16.msra.mxu0 %v1055
    %1457 = vmatprep.subr.bf16.mxu0 0
    %1458 = vmatpush1.bf16.msra.mxu0 %v1056
    %1459 = vmatprep.subr.bf16.mxu0 0
    %1460 = vmatpush1.bf16.msra.mxu0 %v1057
    %1461 = vmatprep.subr.bf16.mxu0 0
    %1462 = vmatpush1.bf16.msra.mxu0 %v1058
    %1463 = vmatprep.subr.bf16.mxu0 0
    %1464 = vmatpush1.bf16.msra.mxu0 %v1059
    %1465 = vmatprep.subr.bf16.mxu0 0
    %1466 = vmatpush1.bf16.msra.mxu0 %v1060
    %1467 = vmatprep.subr.bf16.mxu0 0
    %1468 = vmatpush1.bf16.msra.mxu0 %v1061
    %1469 = vmatprep.subr.bf16.mxu0 0
    %1470 = vmatpush1.bf16.msra.mxu0 %v1062
    %1471 = vmatprep.subr.bf16.mxu0 0
    %1472 = vmatpush1.bf16.msra.mxu0 %v1063
    %1473 = vmatprep.subr.bf16.mxu0 0
    %1474 = vmatpush1.bf16.msra.mxu0 %v1064
    %1475 = vmatprep.subr.bf16.mxu0 0
    %1476 = vmatpush1.bf16.msra.mxu0 %v1065
    %1477 = vmatprep.subr.bf16.mxu0 0
    %1478 = vmatpush1.bf16.msra.mxu0 %v1066
    %1479 = vmatprep.subr.bf16.mxu0 0
    %1480 = vmatpush1.bf16.msra.mxu0 %v1067
    %1481 = vmatprep.subr.bf16.mxu0 0
    %1482 = vmatpush1.bf16.msra.mxu0 %v1068
    %1483 = vmatprep.subr.bf16.mxu0 0
    %1484 = vmatpush1.bf16.msra.mxu0 %v1069
    %1485 = vmatprep.subr.bf16.mxu0 0
    %1486 = vmatpush1.bf16.msra.mxu0 %v1070
    %1487 = vmatprep.mubr.bf16.mxu0 %v426
    %1488 = vmatmul.mubr.bf16.gmra.mrb[0].mxu0 %v412
    %v1489 = vpop.f32.mrb[0].mxu0
    %v1490 = vadd.f32 %v1450, %v1489
    %v1491 = vpop.f32.mrb[0].mxu0
    %v1492 = vpop.f32.mrb[0].mxu0
    %v1493 = vpop.f32.mrb[0].mxu0
    %1494 = vdwg.mxu0
    %1495 = vmatprep.subr.bf16.mxu0 0
    %1496 = vmatpush1.bf16.msra.mxu0 %v1071
    %1497 = vmatprep.subr.bf16.mxu0 0
    %1498 = vmatpush1.bf16.msra.mxu0 %v1072
    %1499 = vmatprep.subr.bf16.mxu0 0
    %1500 = vmatpush1.bf16.msra.mxu0 %v1073
    %1501 = vmatprep.subr.bf16.mxu0 0
    %1502 = vmatpush1.bf16.msra.mxu0 %v1074
    %1503 = vmatprep.subr.bf16.mxu0 0
    %1504 = vmatpush1.bf16.msra.mxu0 %v1075
    %1505 = vmatprep.subr.bf16.mxu0 0
    %1506 = vmatpush1.bf16.msra.mxu0 %v1076
    %1507 = vmatprep.subr.bf16.mxu0 0
    %1508 = vmatpush1.bf16.msra.mxu0 %v1077
    %1509 = vmatprep.subr.bf16.mxu0 0
    %1510 = vmatpush1.bf16.msra.mxu0 %v1078
    %1511 = vmatprep.subr.bf16.mxu0 0
    %1512 = vmatpush1.bf16.msra.mxu0 %v1079
    %1513 = vmatprep.subr.bf16.mxu0 0
    %1514 = vmatpush1.bf16.msra.mxu0 %v1080
    %1515 = vmatprep.subr.bf16.mxu0 0
    %1516 = vmatpush1.bf16.msra.mxu0 %v1081
    %1517 = vmatprep.subr.bf16.mxu0 0
    %1518 = vmatpush1.bf16.msra.mxu0 %v1082
    %1519 = vmatprep.subr.bf16.mxu0 0
    %1520 = vmatpush1.bf16.msra.mxu0 %v1083
    %1521 = vmatprep.subr.bf16.mxu0 0
    %1522 = vmatpush1.bf16.msra.mxu0 %v1084
    %1523 = vmatprep.subr.bf16.mxu0 0
    %1524 = vmatpush1.bf16.msra.mxu0 %v1085
    %1525 = vmatprep.subr.bf16.mxu0 0
    %1526 = vmatpush1.bf16.msra.mxu0 %v1086
    %1527 = vmatprep.mubr.bf16.mxu0 %v430
    %1528 = vmatmul.mubr.bf16.gmra.mrb[0].mxu0 %v428
    %v1529 = vpop.f32.mrb[0].mxu0
    %v1530 = vadd.f32 %v1490, %v1529
    %v1531 = vpop.f32.mrb[0].mxu0
    %v1532 = vpop.f32.mrb[0].mxu0
    %v1533 = vpop.f32.mrb[0].mxu0
    %1534 = vdwg.mxu0
    %vm1535 = vcmask 130048
    %1536 = vst.msk [vmem:[#allocation2] sm:$0xff] %vm1535, %v1530
    // Predicated region
    $region14: #{darknet_forward.29} parent=1 // pred_check
      _
    $region15: #{darknet_forward.29} parent=1 // pred_check_branch
      %1538 = sbr.rel (0) target = $region17
    $region16: #{darknet_forward.29} parent=1 // pred_region
      %s1540 = ssub.s32 128, 32
      %1541 = vsyncadd [#allocation3], %s1540
      %s1542 = sshll.u32 [#allocation2], 4
      %s1543 = int_to_ptr.vmem [resolvable:$true] %s1542
      %1548 = dma.vmem_to_hbm [thread:$0]  %s1543, 32, %s3, [#allocation3], 32, 32, 2
    $region17: #{darknet_forward.29} parent=1 // pred_fallthru
      _
    // Predicated region
    $region18: #{darknet_forward.29} parent=1 // pred_check
      _
    $region19: #{darknet_forward.29} parent=1 // pred_check_branch
      %1550 = sbr.rel (0) target = $region21
    $region20: #{darknet_forward.29} parent=1 // pred_region
      %1551 = dma.done [#allocation3], 128
    $region21: #{darknet_forward.29} parent=1 // pred_fallthru
      _
    %1552 = vsyncpa [#allocation3], 1

</llo_original>
